<compile_context>
chip_gen: v5e
topology: v5e:2x2
jax: 0.10.0
libtpu: 0.0.40
codegen_flags: <defaults>
</compile_context>

<pallas_src>
import functools
import math

import jax
import jax.numpy as jnp
from jax.experimental import pallas as pl
from jax.experimental.pallas import tpu as pltpu

_BF = jnp.bfloat16


# --------------------------------------------------------------------------
# In-kernel helpers (operate on values already loaded from VMEM refs)
# --------------------------------------------------------------------------

def _layernorm(x, g, b, eps):
    mu = jnp.mean(x, axis=-1, keepdims=True)
    var = jnp.mean((x - mu) ** 2, axis=-1, keepdims=True)
    return (x - mu) * jax.lax.rsqrt(var + eps) * g + b


def _mha(xq, xkv, bias, wq, bq, wkv, bkv, wo, bo, g, bln, n_head, eps):
    """Q / fused-KV projections -> softmax attention -> single output
    projection -> residual -> LayerNorm.  Returns (y, probs) with probs
    flattened to (n_head * Tq, Tk)."""
    Tq, D = xq.shape
    dk = D // n_head
    scale = 1.0 / math.sqrt(dk)

    q = jnp.dot(xq.astype(_BF), wq, preferred_element_type=jnp.float32) + bq
    kv = jnp.dot(xkv.astype(_BF), wkv, preferred_element_type=jnp.float32) + bkv
    k = kv[:, :D]
    v = kv[:, D:]

    ctxs, probs = [], []
    for h in range(n_head):                      # statically unrolled (tiny H)
        lo, hi = h * dk, (h + 1) * dk
        s = jax.lax.dot_general(
            q[:, lo:hi].astype(_BF), k[:, lo:hi].astype(_BF),
            dimension_numbers=(((1,), (1,)), ((), ())),
            preferred_element_type=jnp.float32) * scale           # (Tq, Tk)
        s = s + bias                                              # additive mask
        s = s - jnp.max(s, axis=-1, keepdims=True)
        p = jnp.exp(s)                                            # f32 softmax
        p = p * pl.reciprocal(jnp.sum(p, axis=-1, keepdims=True), approx=True)
        probs.append(p)
        ctxs.append(jnp.dot(p.astype(_BF), v[:, lo:hi].astype(_BF),
                            preferred_element_type=jnp.float32))  # (Tq, dk)

    ctx = jnp.concatenate(ctxs, axis=1)                           # (Tq, D)
    o = jnp.dot(ctx.astype(_BF), wo, preferred_element_type=jnp.float32) + bo
    y = _layernorm(xq + o, g, bln, eps)
    return y, jnp.concatenate(probs, axis=0)                      # (H*Tq, Tk)


def _conv1d_same(x, w_flat, b, K):
    """1-D conv with 'same' zero padding.  x: (T, Cin) f32,
    w_flat: (K*Cin, Cout) bf16 (k-major).  Padding and im2col are built in
    registers (no scratch-buffer round trip); single matmul, contraction
    K*Cin."""
    T, Cin = x.shape
    pad_l = (K - 1) // 2
    pad_r = K - 1 - pad_l
    parts = []
    if pad_l:
        parts.append(jnp.zeros((pad_l, Cin), x.dtype))
    parts.append(x)
    if pad_r:
        parts.append(jnp.zeros((pad_r, Cin), x.dtype))
    xp = jnp.concatenate(parts, axis=0) if len(parts) > 1 else x  # (T+K-1, Cin)
    cols = [xp[k:k + T, :] for k in range(K)]
    xcol = jnp.concatenate(cols, axis=1).astype(_BF)              # (T, K*Cin)
    return jnp.dot(xcol, w_flat, preferred_element_type=jnp.float32) + b


def _conv_ffn(x, w1, b1, w2, b2, g, bln, K, eps):
    """conv('same') + ReLU + conv('same') + residual + LayerNorm."""
    h = jnp.maximum(_conv1d_same(x, w1, b1, K), 0.0)
    o = _conv1d_same(h, w2, b2, K)
    return _layernorm(x + o, g, bln, eps)


# --------------------------------------------------------------------------
# The fused whole-forward kernel (one grid step per batch element)
# --------------------------------------------------------------------------

def _fused_forward_kernel(
        # per-batch inputs
        xenc_ref, sbias_ref, trg_ref, tbias_ref, pe_dec_ref,
        # encoder (stacked over layers)
        e_wq, e_bq, e_wkv, e_bkv, e_wo, e_bo, e_g1, e_b1,
        e_w1, e_bc1, e_w2, e_bc2, e_g2, e_b2, e_gf, e_bf,
        # decoder prenet / proj
        p_w1, p_b1, p_w2, p_b2, p_wp, p_bp,
        # decoder self-attention (stacked)
        s_wq, s_bq, s_wkv, s_bkv, s_wo, s_bo, d_g1, d_b1,
        # decoder cross-attention (stacked)
        c_wq, c_bq, c_wkv, c_bkv, c_wo, c_bo, d_g2, d_b2,
        # decoder conv-FFN (stacked)
        d_w1, d_bc1, d_w2, d_bc2, d_g3, d_b3,
        # decoder final LN + fused mel/stop head
        d_gf, d_bf, h_w, h_b,
        # *rest = postnet (w, b) pairs followed by the 5 output refs
        *rest,
        N_e, N_d, n_head_e, n_head_d, K_e, K_d, K_p, n_post, mel, eps):

    pn_w = [rest[2 * i] for i in range(n_post)]
    pn_b = [rest[2 * i + 1] for i in range(n_post)]
    yh_ref, post_ref, ae_ref, add_ref, ade_ref = rest[2 * n_post:]

    S = xenc_ref.shape[1]
    T = trg_ref.shape[1]
    D = xenc_ref.shape[2]

    # --------------------------- Encoder ---------------------------
    # TODO(synk): dropout layers are identity here (inference semantics).
    sbias = sbias_ref[0]                       # (1, S) additive mask bias
    x = xenc_ref[0]                            # (S, D): embed*sqrt(D) + PE
    for i in range(N_e):
        x, p = _mha(x, x, sbias,
                    e_wq[i], e_bq[i], e_wkv[i], e_bkv[i], e_wo[i], e_bo[i],
                    e_g1[i], e_b1[i], n_head_e, eps)
        ae_ref[0, pl.ds(i * n_head_e * S, n_head_e * S), :] = p
        x = _conv_ffn(x, e_w1[i], e_bc1[i], e_w2[i], e_bc2[i],
                      e_g2[i], e_b2[i], K_e, eps)
    e_out = _layernorm(x, e_gf[...], e_bf[...], eps)   # fused final encoder LN

    # --------------------------- Decoder ---------------------------
    # TODO(synk): prenet dropout is identity here (inference semantics).
    t = trg_ref[0]                                            # (T, n_mel)
    h = jnp.maximum(jnp.dot(t.astype(_BF), p_w1[...],
                            preferred_element_type=jnp.float32) + p_b1[...], 0.)
    h = jnp.maximum(jnp.dot(h.astype(_BF), p_w2[...],
                            preferred_element_type=jnp.float32) + p_b2[...], 0.)
    y = jnp.dot(h.astype(_BF), p_wp[...],
                preferred_element_type=jnp.float32) + p_bp[...]
    y = y * math.sqrt(D) + pe_dec_ref[...]

    tbias = tbias_ref[0]                                      # (T, T)
    for i in range(N_d):
        y, p1 = _mha(y, y, tbias,
                     s_wq[i], s_bq[i], s_wkv[i], s_bkv[i], s_wo[i], s_bo[i],
                     d_g1[i], d_b1[i], n_head_d, eps)
        add_ref[0, pl.ds(i * n_head_d * T, n_head_d * T), :] = p1
        y, p2 = _mha(y, e_out, sbias,
                     c_wq[i], c_bq[i], c_wkv[i], c_bkv[i], c_wo[i], c_bo[i],
                     d_g2[i], d_b2[i], n_head_d, eps)
        ade_ref[0, pl.ds(i * n_head_d * T, n_head_d * T), :] = p2
        y = _conv_ffn(y, d_w1[i], d_bc1[i], d_w2[i], d_bc2[i],
                      d_g3[i], d_b3[i], K_d, eps)

    # ------------- final LN + fused mel / stop-token head -------------
    yn = _layernorm(y, d_gf[...], d_bf[...], eps)
    head = jnp.dot(yn.astype(_BF), h_w[...],
                   preferred_element_type=jnp.float32) + h_b[...]   # (T, mel+R)
    yh_ref[0] = head

    # --------------------------- Postnet ---------------------------
    # TODO(synk): PostConvNet BatchNorm1d omitted (needs running stats);
    # postnet dropout is identity.
    mel_prenet = head[:, :mel]
    cur = mel_prenet
    for i in range(n_post):
        cur = _conv1d_same(cur, pn_w[i][...], pn_b[i][...], K_p)
        if i < n_post - 1:
            cur = jnp.tanh(cur)
    post_ref[0] = mel_prenet + cur


# --------------------------------------------------------------------------
# Parameter init (deterministic, in-script) and kernel-ready preparation
# --------------------------------------------------------------------------

def _init_linear(key, din, dout):
    return {"w": jax.random.normal(key, (din, dout), jnp.float32) * 0.02,
            "b": jnp.zeros((dout,), jnp.float32)}


def _init_ln(d):
    return {"g": jnp.ones((d,), jnp.float32), "b": jnp.zeros((d,), jnp.float32)}


def _init_conv(key, k, cin, cout):
    return {"w": jax.random.normal(key, (k, cin, cout), jnp.float32) * 0.02,
            "b": jnp.zeros((cout,), jnp.float32)}


def _init_mha(key, d):
    ks = jax.random.split(key, 3)
    return {"wq": jax.random.normal(ks[0], (d, d), jnp.float32) * 0.02,
            "bq": jnp.zeros((d,), jnp.float32),
            # K and V projections are stored fused (mathematically identical).
            "wkv": jax.random.normal(ks[1], (d, 2 * d), jnp.float32) * 0.02,
            "bkv": jnp.zeros((2 * d,), jnp.float32),
            "wo": jax.random.normal(ks[2], (d, d), jnp.float32) * 0.02,
            "bo": jnp.zeros((d,), jnp.float32)}


def _init_enc_layer(key, d, d_ff, k_conv):
    ks = jax.random.split(key, 3)
    return {"mha": _init_mha(ks[0], d),
            "ff1": _init_conv(ks[1], k_conv, d, d_ff),
            "ff2": _init_conv(ks[2], k_conv, d_ff, d),
            "ln1": _init_ln(d), "ln2": _init_ln(d)}


def _init_dec_layer(key, d, d_ff, k_conv):
    ks = jax.random.split(key, 4)
    return {"self": _init_mha(ks[0], d),
            "cross": _init_mha(ks[1], d),
            "ff1": _init_conv(ks[2], k_conv, d, d_ff),
            "ff2": _init_conv(ks[3], k_conv, d_ff, d),
            "ln1": _init_ln(d), "ln2": _init_ln(d), "ln3": _init_ln(d)}


def init_transformer_params(key, cfg):
    ks = jax.random.split(key, 10)
    de, dd = cfg["d_model_encoder"], cfg["d_model_decoder"]
    enc = {
        "embed": jax.random.normal(ks[0], (cfg["src_vocab"], de),
                                   jnp.float32) * 0.02,
        "layers": [_init_enc_layer(k, de, cfg["d_ff"],
                                   cfg["ff_conv_kernel_size_encoder"])
                   for k in jax.random.split(ks[1], cfg["N_e"])],
        "ln": _init_ln(de),
    }
    dec = {
        "prenet1": _init_linear(ks[2], cfg["trg_vocab"], dd),
        "prenet2": _init_linear(ks[3], dd, dd),
        "proj": _init_linear(ks[4], dd, dd),
        "layers": [_init_dec_layer(k, dd, cfg["d_ff"],
                                   cfg["ff_conv_kernel_size_decoder"])
                   for k in jax.random.split(ks[5], cfg["N_d"])],
        "ln": _init_ln(dd),
    }
    mel_out = cfg["trg_vocab"] * cfg["reduction_rate"]
    chans = [mel_out] + [cfg["postnet_hidden"]] * (cfg["postnet_layers"] - 1) \
            + [mel_out]
    pk = jax.random.split(ks[8], cfg["postnet_layers"])
    convs = [_init_conv(pk[i], cfg["postnet_kernel"], chans[i], chans[i + 1])
             for i in range(cfg["postnet_layers"])]
    return {
        "encoder": enc,
        "decoder": dec,
        "out": _init_linear(ks[7], dd, mel_out),
        "stop": _init_linear(ks[9], dd, cfg["reduction_rate"]),
        "postnet": {"convs": convs},
    }


def prepare_params(params, cfg):
    """Fuse / flatten / pre-cast (bf16) the parameters into the flat list
    consumed positionally by the fused kernel (order mirrors the kernel
    signature)."""
    de, dd = cfg["d_model_encoder"], cfg["d_model_decoder"]
    # TODO(synk): d_model_encoder != d_model_decoder bridge (self.linear) not
    # implemented in the fused kernel; this config uses equal dims.
    assert de == dd
    d_ff = cfg["d_ff"]
    Ke = cfg["ff_conv_kernel_size_encoder"]
    Kd = cfg["ff_conv_kernel_size_decoder"]
    mel = cfg["trg_vocab"] * cfg["reduction_rate"]
    R = cfg["reduction_rate"]
    bf = jnp.bfloat16

    def sw(layers, k1, k2):                     # stacked weight, bf16
        return jnp.stack([l[k1][k2] for l in layers]).astype(bf)

    def sb(layers, k1, k2):                     # stacked bias / LN param, f32
        return jnp.stack([l[k1][k2].reshape(1, -1) for l in layers])

    def sc(layers, k1):                         # stacked conv, flattened, bf16
        return jnp.stack([l[k1]["w"].reshape(-1, l[k1]["w"].shape[2])
                          for l in layers]).astype(bf)

    el = params["encoder"]["layers"]
    dl = params["decoder"]["layers"]
    dp = params["decoder"]

    flat = []
    # encoder (16)
    flat += [sw(el, "mha", "wq"), sb(el, "mha", "bq"),
             sw(el, "mha", "wkv"), sb(el, "mha", "bkv"),
             sw(el, "mha", "wo"), sb(el, "mha", "bo"),
             sb(el, "ln1", "g"), sb(el, "ln1", "b"),
             sc(el, "ff1"), sb(el, "ff1", "b"),
             sc(el, "ff2"), sb(el, "ff2", "b"),
             sb(el, "ln2", "g"), sb(el, "ln2", "b"),
             params["encoder"]["ln"]["g"].reshape(1, de),
             params["encoder"]["ln"]["b"].reshape(1, de)]
    # decoder prenet / proj (6)
    flat += [dp["prenet1"]["w"].astype(bf), dp["prenet1"]["b"].reshape(1, dd),
             dp["prenet2"]["w"].astype(bf), dp["prenet2"]["b"].reshape(1, dd),
             dp["proj"]["w"].astype(bf), dp["proj"]["b"].reshape(1, dd)]
    # decoder self-attention (8)
    flat += [sw(dl, "self", "wq"), sb(dl, "self", "bq"),
             sw(dl, "self", "wkv"), sb(dl, "self", "bkv"),
             sw(dl, "self", "wo"), sb(dl, "self", "bo"),
             sb(dl, "ln1", "g"), sb(dl, "ln1", "b")]
    # decoder cross-attention (8)
    flat += [sw(dl, "cross", "wq"), sb(dl, "cross", "bq"),
             sw(dl, "cross", "wkv"), sb(dl, "cross", "bkv"),
             sw(dl, "cross", "wo"), sb(dl, "cross", "bo"),
             sb(dl, "ln2", "g"), sb(dl, "ln2", "b")]
    # decoder conv-FFN (6)
    flat += [sc(dl, "ff1"), sb(dl, "ff1", "b"),
             sc(dl, "ff2"), sb(dl, "ff2", "b"),
             sb(dl, "ln3", "g"), sb(dl, "ln3", "b")]
    # decoder final LN + fused mel/stop head (4)
    flat += [dp["ln"]["g"].reshape(1, dd), dp["ln"]["b"].reshape(1, dd),
             jnp.concatenate([params["out"]["w"], params["stop"]["w"]],
                             axis=1).astype(bf),
             jnp.concatenate([params["out"]["b"], params["stop"]["b"]]
                             ).reshape(1, mel + R)]
    # postnet convs (2 * n_layers)
    for c in params["postnet"]["convs"]:
        k, cin, cout = c["w"].shape
        flat += [c["w"].reshape(k * cin, cout).astype(bf),
                 c["b"].reshape(1, cout)]

    return {"embed": params["encoder"]["embed"], "flat": flat}


# --------------------------------------------------------------------------
# Model forward: one fused pallas_call per batch of inputs
# --------------------------------------------------------------------------

def positional_encoding(T, d):
    pos = jnp.arange(T, dtype=jnp.float32)[:, None]
    i = jnp.arange(d)[None, :]
    angle = pos / jnp.power(10000.0, (2 * (i // 2)).astype(jnp.float32) / d)
    return jnp.where(i % 2 == 0, jnp.sin(angle), jnp.cos(angle))


def transformer_forward(prep, src, trg, src_mask, trg_mask, pe_enc, pe_dec,
                        cfg):
    # gst=False and spk_emb_vers==1: style-embedding / spk_proj branches skipped.
    B, S = src.shape
    T = trg.shape[1]
    D = cfg["d_model_encoder"]
    He, Hd = cfg["n_head_encoder"], cfg["n_head_decoder"]
    Ne, Nd = cfg["N_e"], cfg["N_d"]
    mel = cfg["trg_vocab"] * cfg["reduction_rate"]
    R = cfg["reduction_rate"]

    # Embedding gather + scale + positional encoding (plain JAX glue).
    x_enc = (jnp.take(prep["embed"], src, axis=0) * math.sqrt(D)
             + pe_enc[None]).astype(jnp.float32)
    # Masks converted once to additive biases (kernel just adds them).
    src_bias = (1.0 - src_mask.astype(jnp.float32)) * -1e9        # (B, 1, S)
    trg_bias = (1.0 - trg_mask.astype(jnp.float32)) * -1e9        # (B, T, T)

    batch_args = [x_enc, src_bias, trg.astype(jnp.float32), trg_bias]
    shared_args = [pe_dec.astype(jnp.float32)] + prep["flat"]

    def batch_spec(a):
        return pl.BlockSpec((1,) + a.shape[1:],
                            lambda b, _n=a.ndim: (b,) + (0,) * (_n - 1))

    def full_spec(a):
        return pl.BlockSpec(a.shape, lambda b, _n=a.ndim: (0,) * _n)

    in_specs = ([batch_spec(a) for a in batch_args]
                + [full_spec(a) for a in shared_args])

    out_shape = (
        jax.ShapeDtypeStruct((B, T, mel + R), jnp.float32),    # mel | stop
        jax.ShapeDtypeStruct((B, T, mel), jnp.float32),        # postnet out
        jax.ShapeDtypeStruct((B, Ne * He * S, S), jnp.float32),
        jax.ShapeDtypeStruct((B, Nd * Hd * T, T), jnp.float32),
        jax.ShapeDtypeStruct((B, Nd * Hd * T, S), jnp.float32),
    )
    out_specs = tuple(
        pl.BlockSpec((1,) + s.shape[1:],
                     lambda b, _n=len(s.shape): (b,) + (0,) * (_n - 1))
        for s in out_shape)

    kernel = functools.partial(
        _fused_forward_kernel,
        N_e=Ne, N_d=Nd, n_head_e=He, n_head_d=Hd,
        K_e=cfg["ff_conv_kernel_size_encoder"],
        K_d=cfg["ff_conv_kernel_size_decoder"],
        K_p=cfg["postnet_kernel"], n_post=cfg["postnet_layers"],
        mel=mel, eps=1e-5)

    yh, post, ae, add, ade = pl.pallas_call(
        kernel,
        out_shape=out_shape,
        grid=(B,),
        in_specs=in_specs,
        out_specs=out_specs,
        compiler_params=pltpu.CompilerParams(
            dimension_semantics=("parallel",),
            vmem_limit_bytes=32 * 1024 * 1024),
    )(*(batch_args + shared_args))

    outputs_prenet = yh[:, :, :mel]
    stop_token = jnp.squeeze(yh[:, :, mel:], axis=2)          # reduction_rate=1
    attn_enc = jnp.transpose(ae.reshape(B, Ne, He, S, S), (1, 0, 2, 3, 4))
    attn_dec_dec = jnp.transpose(add.reshape(B, Nd, Hd, T, T), (1, 0, 2, 3, 4))
    attn_dec_enc = jnp.transpose(ade.reshape(B, Nd, Hd, T, S), (1, 0, 2, 3, 4))
    return (outputs_prenet, post, stop_token,
            attn_enc, attn_dec_dec, attn_dec_enc)


# --------------------------------------------------------------------------
# Main
# --------------------------------------------------------------------------

CFG = dict(
    src_vocab=40, trg_vocab=16,
    d_model_encoder=32, N_e=2, n_head_encoder=2, ff_conv_kernel_size_encoder=3,
    d_model_decoder=32, N_d=2, n_head_decoder=2, ff_conv_kernel_size_decoder=3,
    reduction_rate=1, d_ff=64,
    postnet_hidden=32, postnet_layers=5, postnet_kernel=5,
)


if __name__ == "__main__":
    key = jax.random.PRNGKey(0)
    kp, ksrc, ktrg = jax.random.split(key, 3)
    params = init_transformer_params(kp, CFG)
    prep = prepare_params(params, CFG)          # bf16 cast / fuse once

    B, S_src, T_trg = 2, 8, 8
    src = jax.random.randint(ksrc, (B, S_src), 0, CFG["src_vocab"])
    trg = jax.random.normal(ktrg, (B, T_trg, CFG["trg_vocab"]), jnp.float32)
    src_mask = jnp.ones((B, 1, S_src), jnp.float32)
    trg_mask = jnp.broadcast_to(
        jnp.tril(jnp.ones((T_trg, T_trg), jnp.float32)), (B, T_trg, T_trg))

    # Positional encodings precomputed once (hoisted out of the forward pass).
    pe_enc = positional_encoding(S_src, CFG["d_model_encoder"])
    pe_dec = positional_encoding(T_trg, CFG["d_model_decoder"])

    fwd = jax.jit(functools.partial(transformer_forward, cfg=CFG))
    outs = fwd(prep, src, trg, src_mask, trg_mask, pe_enc, pe_dec)
    outs = jax.block_until_ready(outs)

    mel_out = CFG["trg_vocab"] * CFG["reduction_rate"]
    assert outs[0].shape == (B, T_trg, mel_out)          # outputs_prenet
    assert outs[1].shape == (B, T_trg, mel_out)          # outputs_postnet
    assert outs[2].shape == (B, T_trg)                   # stop_token
    assert outs[3].shape == (CFG["N_e"], B, CFG["n_head_encoder"], S_src, S_src)
    assert outs[4].shape == (CFG["N_d"], B, CFG["n_head_decoder"], T_trg, T_trg)
    assert outs[5].shape == (CFG["N_d"], B, CFG["n_head_decoder"], T_trg, S_src)
    assert all(bool(jnp.all(jnp.isfinite(o))) for o in outs)
    print("KERNEL_OK")
</pallas_src>

<mosaic_0001>
module attributes {stable_mosaic.version = 11 : i64} {
  func.func @_fused_forward_kernel(%arg0: i32, %arg1: memref<1x8x32xf32, #tpu.memory_space<vmem>>, %arg2: memref<1x1x8xf32, #tpu.memory_space<vmem>>, %arg3: memref<1x8x16xf32, #tpu.memory_space<vmem>>, %arg4: memref<1x8x8xf32, #tpu.memory_space<vmem>>, %arg5: memref<8x32xf32, #tpu.memory_space<vmem>>, %arg6: memref<2x32x32xbf16, #tpu.memory_space<vmem>>, %arg7: memref<2x1x32xf32, #tpu.memory_space<vmem>>, %arg8: memref<2x32x64xbf16, #tpu.memory_space<vmem>>, %arg9: memref<2x1x64xf32, #tpu.memory_space<vmem>>, %arg10: memref<2x32x32xbf16, #tpu.memory_space<vmem>>, %arg11: memref<2x1x32xf32, #tpu.memory_space<vmem>>, %arg12: memref<2x1x32xf32, #tpu.memory_space<vmem>>, %arg13: memref<2x1x32xf32, #tpu.memory_space<vmem>>, %arg14: memref<2x96x64xbf16, #tpu.memory_space<vmem>>, %arg15: memref<2x1x64xf32, #tpu.memory_space<vmem>>, %arg16: memref<2x192x32xbf16, #tpu.memory_space<vmem>>, %arg17: memref<2x1x32xf32, #tpu.memory_space<vmem>>, %arg18: memref<2x1x32xf32, #tpu.memory_space<vmem>>, %arg19: memref<2x1x32xf32, #tpu.memory_space<vmem>>, %arg20: memref<1x32xf32, #tpu.memory_space<vmem>>, %arg21: memref<1x32xf32, #tpu.memory_space<vmem>>, %arg22: memref<16x32xbf16, #tpu.memory_space<vmem>>, %arg23: memref<1x32xf32, #tpu.memory_space<vmem>>, %arg24: memref<32x32xbf16, #tpu.memory_space<vmem>>, %arg25: memref<1x32xf32, #tpu.memory_space<vmem>>, %arg26: memref<32x32xbf16, #tpu.memory_space<vmem>>, %arg27: memref<1x32xf32, #tpu.memory_space<vmem>>, %arg28: memref<2x32x32xbf16, #tpu.memory_space<vmem>>, %arg29: memref<2x1x32xf32, #tpu.memory_space<vmem>>, %arg30: memref<2x32x64xbf16, #tpu.memory_space<vmem>>, %arg31: memref<2x1x64xf32, #tpu.memory_space<vmem>>, %arg32: memref<2x32x32xbf16, #tpu.memory_space<vmem>>, %arg33: memref<2x1x32xf32, #tpu.memory_space<vmem>>, %arg34: memref<2x1x32xf32, #tpu.memory_space<vmem>>, %arg35: memref<2x1x32xf32, #tpu.memory_space<vmem>>, %arg36: memref<2x32x32xbf16, #tpu.memory_space<vmem>>, %arg37: memref<2x1x32xf32, #tpu.memory_space<vmem>>, %arg38: memref<2x32x64xbf16, #tpu.memory_space<vmem>>, %arg39: memref<2x1x64xf32, #tpu.memory_space<vmem>>, %arg40: memref<2x32x32xbf16, #tpu.memory_space<vmem>>, %arg41: memref<2x1x32xf32, #tpu.memory_space<vmem>>, %arg42: memref<2x1x32xf32, #tpu.memory_space<vmem>>, %arg43: memref<2x1x32xf32, #tpu.memory_space<vmem>>, %arg44: memref<2x96x64xbf16, #tpu.memory_space<vmem>>, %arg45: memref<2x1x64xf32, #tpu.memory_space<vmem>>, %arg46: memref<2x192x32xbf16, #tpu.memory_space<vmem>>, %arg47: memref<2x1x32xf32, #tpu.memory_space<vmem>>, %arg48: memref<2x1x32xf32, #tpu.memory_space<vmem>>, %arg49: memref<2x1x32xf32, #tpu.memory_space<vmem>>, %arg50: memref<1x32xf32, #tpu.memory_space<vmem>>, %arg51: memref<1x32xf32, #tpu.memory_space<vmem>>, %arg52: memref<32x17xbf16, #tpu.memory_space<vmem>>, %arg53: memref<1x17xf32, #tpu.memory_space<vmem>>, %arg54: memref<80x32xbf16, #tpu.memory_space<vmem>>, %arg55: memref<1x32xf32, #tpu.memory_space<vmem>>, %arg56: memref<160x32xbf16, #tpu.memory_space<vmem>>, %arg57: memref<1x32xf32, #tpu.memory_space<vmem>>, %arg58: memref<160x32xbf16, #tpu.memory_space<vmem>>, %arg59: memref<1x32xf32, #tpu.memory_space<vmem>>, %arg60: memref<160x32xbf16, #tpu.memory_space<vmem>>, %arg61: memref<1x32xf32, #tpu.memory_space<vmem>>, %arg62: memref<160x16xbf16, #tpu.memory_space<vmem>>, %arg63: memref<1x16xf32, #tpu.memory_space<vmem>>, %arg64: memref<1x8x17xf32, #tpu.memory_space<vmem>>, %arg65: memref<1x8x16xf32, #tpu.memory_space<vmem>>, %arg66: memref<1x32x8xf32, #tpu.memory_space<vmem>>, %arg67: memref<1x32x8xf32, #tpu.memory_space<vmem>>, %arg68: memref<1x32x8xf32, #tpu.memory_space<vmem>>) attributes {dimension_semantics = [#tpu.dimension_semantics<parallel>], iteration_bounds = array<i64: 2>, scalar_prefetch = 0 : i64, scratch_operands = 0 : i64, tpu.core_type = #tpu.core_type<tc>, window_params = [{transform_indices = @transform_0, window_bounds = array<i64: 1, 8, 32>}, {transform_indices = @transform_1, window_bounds = array<i64: 1, 1, 8>}, {transform_indices = @transform_2, window_bounds = array<i64: 1, 8, 16>}, {transform_indices = @transform_3, window_bounds = array<i64: 1, 8, 8>}, {pipeline_mode = #tpu.pipeline_mode<synchronous>, transform_indices = @transform_4, window_bounds = array<i64: 8, 32>}, {pipeline_mode = #tpu.pipeline_mode<synchronous>, transform_indices = @transform_5, window_bounds = array<i64: 2, 32, 32>}, {pipeline_mode = #tpu.pipeline_mode<synchronous>, transform_indices = @transform_6, window_bounds = array<i64: 2, 1, 32>}, {pipeline_mode = #tpu.pipeline_mode<synchronous>, transform_indices = @transform_7, window_bounds = array<i64: 2, 32, 64>}, {pipeline_mode = #tpu.pipeline_mode<synchronous>, transform_indices = @transform_8, window_bounds = array<i64: 2, 1, 64>}, {pipeline_mode = #tpu.pipeline_mode<synchronous>, transform_indices = @transform_9, window_bounds = array<i64: 2, 32, 32>}, {pipeline_mode = #tpu.pipeline_mode<synchronous>, transform_indices = @transform_10, window_bounds = array<i64: 2, 1, 32>}, {pipeline_mode = #tpu.pipeline_mode<synchronous>, transform_indices = @transform_11, window_bounds = array<i64: 2, 1, 32>}, {pipeline_mode = #tpu.pipeline_mode<synchronous>, transform_indices = @transform_12, window_bounds = array<i64: 2, 1, 32>}, {pipeline_mode = #tpu.pipeline_mode<synchronous>, transform_indices = @transform_13, window_bounds = array<i64: 2, 96, 64>}, {pipeline_mode = #tpu.pipeline_mode<synchronous>, transform_indices = @transform_14, window_bounds = array<i64: 2, 1, 64>}, {pipeline_mode = #tpu.pipeline_mode<synchronous>, transform_indices = @transform_15, window_bounds = array<i64: 2, 192, 32>}, {pipeline_mode = #tpu.pipeline_mode<synchronous>, transform_indices = @transform_16, window_bounds = array<i64: 2, 1, 32>}, {pipeline_mode = #tpu.pipeline_mode<synchronous>, transform_indices = @transform_17, window_bounds = array<i64: 2, 1, 32>}, {pipeline_mode = #tpu.pipeline_mode<synchronous>, transform_indices = @transform_18, window_bounds = array<i64: 2, 1, 32>}, {pipeline_mode = #tpu.pipeline_mode<synchronous>, transform_indices = @transform_19, window_bounds = array<i64: 1, 32>}, {pipeline_mode = #tpu.pipeline_mode<synchronous>, transform_indices = @transform_20, window_bounds = array<i64: 1, 32>}, {pipeline_mode = #tpu.pipeline_mode<synchronous>, transform_indices = @transform_21, window_bounds = array<i64: 16, 32>}, {pipeline_mode = #tpu.pipeline_mode<synchronous>, transform_indices = @transform_22, window_bounds = array<i64: 1, 32>}, {pipeline_mode = #tpu.pipeline_mode<synchronous>, transform_indices = @transform_23, window_bounds = array<i64: 32, 32>}, {pipeline_mode = #tpu.pipeline_mode<synchronous>, transform_indices = @transform_24, window_bounds = array<i64: 1, 32>}, {pipeline_mode = #tpu.pipeline_mode<synchronous>, transform_indices = @transform_25, window_bounds = array<i64: 32, 32>}, {pipeline_mode = #tpu.pipeline_mode<synchronous>, transform_indices = @transform_26, window_bounds = array<i64: 1, 32>}, {pipeline_mode = #tpu.pipeline_mode<synchronous>, transform_indices = @transform_27, window_bounds = array<i64: 2, 32, 32>}, {pipeline_mode = #tpu.pipeline_mode<synchronous>, transform_indices = @transform_28, window_bounds = array<i64: 2, 1, 32>}, {pipeline_mode = #tpu.pipeline_mode<synchronous>, transform_indices = @transform_29, window_bounds = array<i64: 2, 32, 64>}, {pipeline_mode = #tpu.pipeline_mode<synchronous>, transform_indices = @transform_30, window_bounds = array<i64: 2, 1, 64>}, {pipeline_mode = #tpu.pipeline_mode<synchronous>, transform_indices = @transform_31, window_bounds = array<i64: 2, 32, 32>}, {pipeline_mode = #tpu.pipeline_mode<synchronous>, transform_indices = @transform_32, window_bounds = array<i64: 2, 1, 32>}, {pipeline_mode = #tpu.pipeline_mode<synchronous>, transform_indices = @transform_33, window_bounds = array<i64: 2, 1, 32>}, {pipeline_mode = #tpu.pipeline_mode<synchronous>, transform_indices = @transform_34, window_bounds = array<i64: 2, 1, 32>}, {pipeline_mode = #tpu.pipeline_mode<synchronous>, transform_indices = @transform_35, window_bounds = array<i64: 2, 32, 32>}, {pipeline_mode = #tpu.pipeline_mode<synchronous>, transform_indices = @transform_36, window_bounds = array<i64: 2, 1, 32>}, {pipeline_mode = #tpu.pipeline_mode<synchronous>, transform_indices = @transform_37, window_bounds = array<i64: 2, 32, 64>}, {pipeline_mode = #tpu.pipeline_mode<synchronous>, transform_indices = @transform_38, window_bounds = array<i64: 2, 1, 64>}, {pipeline_mode = #tpu.pipeline_mode<synchronous>, transform_indices = @transform_39, window_bounds = array<i64: 2, 32, 32>}, {pipeline_mode = #tpu.pipeline_mode<synchronous>, transform_indices = @transform_40, window_bounds = array<i64: 2, 1, 32>}, {pipeline_mode = #tpu.pipeline_mode<synchronous>, transform_indices = @transform_41, window_bounds = array<i64: 2, 1, 32>}, {pipeline_mode = #tpu.pipeline_mode<synchronous>, transform_indices = @transform_42, window_bounds = array<i64: 2, 1, 32>}, {pipeline_mode = #tpu.pipeline_mode<synchronous>, transform_indices = @transform_43, window_bounds = array<i64: 2, 96, 64>}, {pipeline_mode = #tpu.pipeline_mode<synchronous>, transform_indices = @transform_44, window_bounds = array<i64: 2, 1, 64>}, {pipeline_mode = #tpu.pipeline_mode<synchronous>, transform_indices = @transform_45, window_bounds = array<i64: 2, 192, 32>}, {pipeline_mode = #tpu.pipeline_mode<synchronous>, transform_indices = @transform_46, window_bounds = array<i64: 2, 1, 32>}, {pipeline_mode = #tpu.pipeline_mode<synchronous>, transform_indices = @transform_47, window_bounds = array<i64: 2, 1, 32>}, {pipeline_mode = #tpu.pipeline_mode<synchronous>, transform_indices = @transform_48, window_bounds = array<i64: 2, 1, 32>}, {pipeline_mode = #tpu.pipeline_mode<synchronous>, transform_indices = @transform_49, window_bounds = array<i64: 1, 32>}, {pipeline_mode = #tpu.pipeline_mode<synchronous>, transform_indices = @transform_50, window_bounds = array<i64: 1, 32>}, {pipeline_mode = #tpu.pipeline_mode<synchronous>, transform_indices = @transform_51, window_bounds = array<i64: 32, 17>}, {pipeline_mode = #tpu.pipeline_mode<synchronous>, transform_indices = @transform_52, window_bounds = array<i64: 1, 17>}, {pipeline_mode = #tpu.pipeline_mode<synchronous>, transform_indices = @transform_53, window_bounds = array<i64: 80, 32>}, {pipeline_mode = #tpu.pipeline_mode<synchronous>, transform_indices = @transform_54, window_bounds = array<i64: 1, 32>}, {pipeline_mode = #tpu.pipeline_mode<synchronous>, transform_indices = @transform_55, window_bounds = array<i64: 160, 32>}, {pipeline_mode = #tpu.pipeline_mode<synchronous>, transform_indices = @transform_56, window_bounds = array<i64: 1, 32>}, {pipeline_mode = #tpu.pipeline_mode<synchronous>, transform_indices = @transform_57, window_bounds = array<i64: 160, 32>}, {pipeline_mode = #tpu.pipeline_mode<synchronous>, transform_indices = @transform_58, window_bounds = array<i64: 1, 32>}, {pipeline_mode = #tpu.pipeline_mode<synchronous>, transform_indices = @transform_59, window_bounds = array<i64: 160, 32>}, {pipeline_mode = #tpu.pipeline_mode<synchronous>, transform_indices = @transform_60, window_bounds = array<i64: 1, 32>}, {pipeline_mode = #tpu.pipeline_mode<synchronous>, transform_indices = @transform_61, window_bounds = array<i64: 160, 16>}, {pipeline_mode = #tpu.pipeline_mode<synchronous>, transform_indices = @transform_62, window_bounds = array<i64: 1, 16>}, {transform_indices = @transform_63, window_bounds = array<i64: 1, 8, 17>}, {transform_indices = @transform_64, window_bounds = array<i64: 1, 8, 16>}, {transform_indices = @transform_65, window_bounds = array<i64: 1, 32, 8>}, {transform_indices = @transform_66, window_bounds = array<i64: 1, 32, 8>}, {transform_indices = @transform_67, window_bounds = array<i64: 1, 32, 8>}]} {
    %c0 = arith.constant 0 : index
    %c0_0 = arith.constant 0 : index
    %c0_1 = arith.constant 0 : index
    %0 = vector.load %arg2[%c0, %c0_0, %c0_1] : memref<1x1x8xf32, #tpu.memory_space<vmem>>, vector<1x1x8xf32>
    %1 = vector.shape_cast %0 : vector<1x1x8xf32> to vector<1x8xf32>
    %c0_2 = arith.constant 0 : index
    %c0_3 = arith.constant 0 : index
    %c0_4 = arith.constant 0 : index
    %2 = vector.load %arg1[%c0_2, %c0_3, %c0_4] : memref<1x8x32xf32, #tpu.memory_space<vmem>>, vector<1x8x32xf32>
    %3 = vector.shape_cast %2 : vector<1x8x32xf32> to vector<8x32xf32>
    %c0_5 = arith.constant 0 : index
    %c0_6 = arith.constant 0 : index
    %c0_7 = arith.constant 0 : index
    %4 = vector.load %arg6[%c0_5, %c0_6, %c0_7] : memref<2x32x32xbf16, #tpu.memory_space<vmem>>, vector<1x32x32xbf16>
    %5 = vector.shape_cast %4 : vector<1x32x32xbf16> to vector<32x32xbf16>
    %c0_8 = arith.constant 0 : index
    %c0_9 = arith.constant 0 : index
    %c0_10 = arith.constant 0 : index
    %6 = vector.load %arg7[%c0_8, %c0_9, %c0_10] : memref<2x1x32xf32, #tpu.memory_space<vmem>>, vector<1x1x32xf32>
    %7 = vector.shape_cast %6 : vector<1x1x32xf32> to vector<1x32xf32>
    %c0_11 = arith.constant 0 : index
    %c0_12 = arith.constant 0 : index
    %c0_13 = arith.constant 0 : index
    %8 = vector.load %arg8[%c0_11, %c0_12, %c0_13] : memref<2x32x64xbf16, #tpu.memory_space<vmem>>, vector<1x32x64xbf16>
    %9 = vector.shape_cast %8 : vector<1x32x64xbf16> to vector<32x64xbf16>
    %c0_14 = arith.constant 0 : index
    %c0_15 = arith.constant 0 : index
    %c0_16 = arith.constant 0 : index
    %10 = vector.load %arg9[%c0_14, %c0_15, %c0_16] : memref<2x1x64xf32, #tpu.memory_space<vmem>>, vector<1x1x64xf32>
    %11 = vector.shape_cast %10 : vector<1x1x64xf32> to vector<1x64xf32>
    %c0_17 = arith.constant 0 : index
    %c0_18 = arith.constant 0 : index
    %c0_19 = arith.constant 0 : index
    %12 = vector.load %arg10[%c0_17, %c0_18, %c0_19] : memref<2x32x32xbf16, #tpu.memory_space<vmem>>, vector<1x32x32xbf16>
    %13 = vector.shape_cast %12 : vector<1x32x32xbf16> to vector<32x32xbf16>
    %c0_20 = arith.constant 0 : index
    %c0_21 = arith.constant 0 : index
    %c0_22 = arith.constant 0 : index
    %14 = vector.load %arg11[%c0_20, %c0_21, %c0_22] : memref<2x1x32xf32, #tpu.memory_space<vmem>>, vector<1x1x32xf32>
    %15 = vector.shape_cast %14 : vector<1x1x32xf32> to vector<1x32xf32>
    %c0_23 = arith.constant 0 : index
    %c0_24 = arith.constant 0 : index
    %c0_25 = arith.constant 0 : index
    %16 = vector.load %arg12[%c0_23, %c0_24, %c0_25] : memref<2x1x32xf32, #tpu.memory_space<vmem>>, vector<1x1x32xf32>
    %17 = vector.shape_cast %16 : vector<1x1x32xf32> to vector<1x32xf32>
    %c0_26 = arith.constant 0 : index
    %c0_27 = arith.constant 0 : index
    %c0_28 = arith.constant 0 : index
    %18 = vector.load %arg13[%c0_26, %c0_27, %c0_28] : memref<2x1x32xf32, #tpu.memory_space<vmem>>, vector<1x1x32xf32>
    %19 = vector.shape_cast %18 : vector<1x1x32xf32> to vector<1x32xf32>
    %20 = arith.truncf %3 : vector<8x32xf32> to vector<8x32xbf16>
    %cst = arith.constant dense<0.000000e+00> : vector<8x32xf32>
    %21 = tpu.matmul %20, %5, %cst {dimension_numbers = #tpu.dot_dimension_numbers<[1], [0], [0], [1], [0, 0, 1, 1], [], []>} : vector<8x32xbf16>, vector<32x32xbf16>, vector<8x32xf32> -> vector<8x32xf32>
    %22 = vector.broadcast %7 : vector<1x32xf32> to vector<8x32xf32>
    %23 = arith.addf %21, %22 : vector<8x32xf32>
    %24 = arith.truncf %3 : vector<8x32xf32> to vector<8x32xbf16>
    %cst_29 = arith.constant dense<0.000000e+00> : vector<8x64xf32>
    %25 = tpu.matmul %24, %9, %cst_29 {dimension_numbers = #tpu.dot_dimension_numbers<[1], [0], [0], [1], [0, 0, 1, 1], [], []>} : vector<8x32xbf16>, vector<32x64xbf16>, vector<8x64xf32> -> vector<8x64xf32>
    %26 = vector.broadcast %11 : vector<1x64xf32> to vector<8x64xf32>
    %27 = arith.addf %25, %26 : vector<8x64xf32>
    %28 = vector.extract_strided_slice %27 {offsets = [0, 0], sizes = [8, 32], strides = [1, 1]} : vector<8x64xf32> to vector<8x32xf32>
    %29 = vector.extract_strided_slice %27 {offsets = [0, 32], sizes = [8, 32], strides = [1, 1]} : vector<8x64xf32> to vector<8x32xf32>
    %30 = vector.extract_strided_slice %23 {offsets = [0, 0], sizes = [8, 16], strides = [1, 1]} : vector<8x32xf32> to vector<8x16xf32>
    %31 = arith.truncf %30 : vector<8x16xf32> to vector<8x16xbf16>
    %32 = vector.extract_strided_slice %28 {offsets = [0, 0], sizes = [8, 16], strides = [1, 1]} : vector<8x32xf32> to vector<8x16xf32>
    %33 = arith.truncf %32 : vector<8x16xf32> to vector<8x16xbf16>
    %cst_30 = arith.constant dense<0.000000e+00> : vector<8x8xf32>
    %34 = tpu.matmul %31, %33, %cst_30 {dimension_numbers = #tpu.dot_dimension_numbers<[1], [1], [0], [0], [0, 0, 1, 0], [], []>} : vector<8x16xbf16>, vector<8x16xbf16>, vector<8x8xf32> -> vector<8x8xf32>
    %cst_31 = arith.constant 2.500000e-01 : f32
    %35 = vector.broadcast %cst_31 : f32 to vector<8x8xf32>
    %36 = arith.mulf %34, %35 : vector<8x8xf32>
    %37 = vector.broadcast %1 : vector<1x8xf32> to vector<8x8xf32>
    %38 = arith.addf %36, %37 : vector<8x8xf32>
    %cst_32 = arith.constant dense<0xFF800000> : vector<8xf32>
    %39 = vector.multi_reduction <maximumf>, %38, %cst_32 [1] : vector<8x8xf32> to vector<8xf32>
    %40 = vector.shape_cast %39 : vector<8xf32> to vector<8x1xf32>
    %41 = vector.broadcast %40 : vector<8x1xf32> to vector<8x8xf32>
    %42 = arith.subf %38, %41 : vector<8x8xf32>
    %43 = math.exp %42 : vector<8x8xf32>
    %cst_33 = arith.constant dense<0.000000e+00> : vector<8xf32>
    %44 = vector.multi_reduction <add>, %43, %cst_33 [1] : vector<8x8xf32> to vector<8xf32>
    %45 = vector.shape_cast %44 : vector<8xf32> to vector<8x1xf32>
    %46 = tpu.reciprocal %45 {approx = true} : vector<8x1xf32> -> vector<8x1xf32>
    %47 = vector.broadcast %46 : vector<8x1xf32> to vector<8x8xf32>
    %48 = arith.mulf %43, %47 : vector<8x8xf32>
    %49 = arith.truncf %48 : vector<8x8xf32> to vector<8x8xbf16>
    %50 = vector.extract_strided_slice %29 {offsets = [0, 0], sizes = [8, 16], strides = [1, 1]} : vector<8x32xf32> to vector<8x16xf32>
    %51 = arith.truncf %50 : vector<8x16xf32> to vector<8x16xbf16>
    %cst_34 = arith.constant dense<0.000000e+00> : vector<8x16xf32>
    %52 = tpu.matmul %49, %51, %cst_34 {dimension_numbers = #tpu.dot_dimension_numbers<[1], [0], [0], [1], [0, 0, 1, 1], [], []>} : vector<8x8xbf16>, vector<8x16xbf16>, vector<8x16xf32> -> vector<8x16xf32>
    %53 = vector.extract_strided_slice %23 {offsets = [0, 16], sizes = [8, 16], strides = [1, 1]} : vector<8x32xf32> to vector<8x16xf32>
    %54 = arith.truncf %53 : vector<8x16xf32> to vector<8x16xbf16>
    %55 = vector.extract_strided_slice %28 {offsets = [0, 16], sizes = [8, 16], strides = [1, 1]} : vector<8x32xf32> to vector<8x16xf32>
    %56 = arith.truncf %55 : vector<8x16xf32> to vector<8x16xbf16>
    %cst_35 = arith.constant dense<0.000000e+00> : vector<8x8xf32>
    %57 = tpu.matmul %54, %56, %cst_35 {dimension_numbers = #tpu.dot_dimension_numbers<[1], [1], [0], [0], [0, 0, 1, 0], [], []>} : vector<8x16xbf16>, vector<8x16xbf16>, vector<8x8xf32> -> vector<8x8xf32>
    %cst_36 = arith.constant 2.500000e-01 : f32
    %58 = vector.broadcast %cst_36 : f32 to vector<8x8xf32>
    %59 = arith.mulf %57, %58 : vector<8x8xf32>
    %60 = vector.broadcast %1 : vector<1x8xf32> to vector<8x8xf32>
    %61 = arith.addf %59, %60 : vector<8x8xf32>
    %cst_37 = arith.constant dense<0xFF800000> : vector<8xf32>
    %62 = vector.multi_reduction <maximumf>, %61, %cst_37 [1] : vector<8x8xf32> to vector<8xf32>
    %63 = vector.shape_cast %62 : vector<8xf32> to vector<8x1xf32>
    %64 = vector.broadcast %63 : vector<8x1xf32> to vector<8x8xf32>
    %65 = arith.subf %61, %64 : vector<8x8xf32>
    %66 = math.exp %65 : vector<8x8xf32>
    %cst_38 = arith.constant dense<0.000000e+00> : vector<8xf32>
    %67 = vector.multi_reduction <add>, %66, %cst_38 [1] : vector<8x8xf32> to vector<8xf32>
    %68 = vector.shape_cast %67 : vector<8xf32> to vector<8x1xf32>
    %69 = tpu.reciprocal %68 {approx = true} : vector<8x1xf32> -> vector<8x1xf32>
    %70 = vector.broadcast %69 : vector<8x1xf32> to vector<8x8xf32>
    %71 = arith.mulf %66, %70 : vector<8x8xf32>
    %72 = arith.truncf %71 : vector<8x8xf32> to vector<8x8xbf16>
    %73 = vector.extract_strided_slice %29 {offsets = [0, 16], sizes = [8, 16], strides = [1, 1]} : vector<8x32xf32> to vector<8x16xf32>
    %74 = arith.truncf %73 : vector<8x16xf32> to vector<8x16xbf16>
    %cst_39 = arith.constant dense<0.000000e+00> : vector<8x16xf32>
    %75 = tpu.matmul %72, %74, %cst_39 {dimension_numbers = #tpu.dot_dimension_numbers<[1], [0], [0], [1], [0, 0, 1, 1], [], []>} : vector<8x8xbf16>, vector<8x16xbf16>, vector<8x16xf32> -> vector<8x16xf32>
    %76 = tpu.concatenate %52, %75 in 1 : vector<8x16xf32>, vector<8x16xf32> -> vector<8x32xf32>
    %77 = arith.truncf %76 : vector<8x32xf32> to vector<8x32xbf16>
    %cst_40 = arith.constant dense<0.000000e+00> : vector<8x32xf32>
    %78 = tpu.matmul %77, %13, %cst_40 {dimension_numbers = #tpu.dot_dimension_numbers<[1], [0], [0], [1], [0, 0, 1, 1], [], []>} : vector<8x32xbf16>, vector<32x32xbf16>, vector<8x32xf32> -> vector<8x32xf32>
    %79 = vector.broadcast %15 : vector<1x32xf32> to vector<8x32xf32>
    %80 = arith.addf %78, %79 : vector<8x32xf32>
    %81 = arith.addf %3, %80 : vector<8x32xf32>
    %cst_41 = arith.constant dense<0.000000e+00> : vector<8xf32>
    %82 = vector.multi_reduction <add>, %81, %cst_41 [1] : vector<8x32xf32> to vector<8xf32>
    %83 = vector.shape_cast %82 : vector<8xf32> to vector<8x1xf32>
    %cst_42 = arith.constant 3.200000e+01 : f32
    %84 = vector.broadcast %cst_42 : f32 to vector<8x1xf32>
    %85 = arith.divf %83, %84 : vector<8x1xf32>
    %86 = vector.broadcast %85 : vector<8x1xf32> to vector<8x32xf32>
    %87 = arith.subf %81, %86 : vector<8x32xf32>
    %88 = arith.mulf %87, %87 : vector<8x32xf32>
    %cst_43 = arith.constant dense<0.000000e+00> : vector<8xf32>
    %89 = vector.multi_reduction <add>, %88, %cst_43 [1] : vector<8x32xf32> to vector<8xf32>
    %90 = vector.shape_cast %89 : vector<8xf32> to vector<8x1xf32>
    %cst_44 = arith.constant 3.200000e+01 : f32
    %91 = vector.broadcast %cst_44 : f32 to vector<8x1xf32>
    %92 = arith.divf %90, %91 : vector<8x1xf32>
    %93 = vector.broadcast %85 : vector<8x1xf32> to vector<8x32xf32>
    %94 = arith.subf %81, %93 : vector<8x32xf32>
    %cst_45 = arith.constant 9.99999974E-6 : f32
    %95 = vector.broadcast %cst_45 : f32 to vector<8x1xf32>
    %96 = arith.addf %92, %95 : vector<8x1xf32>
    %97 = math.rsqrt %96 : vector<8x1xf32>
    %98 = vector.broadcast %97 : vector<8x1xf32> to vector<8x32xf32>
    %99 = arith.mulf %94, %98 : vector<8x32xf32>
    %100 = vector.broadcast %17 : vector<1x32xf32> to vector<8x32xf32>
    %101 = arith.mulf %99, %100 : vector<8x32xf32>
    %102 = vector.broadcast %19 : vector<1x32xf32> to vector<8x32xf32>
    %103 = arith.addf %101, %102 : vector<8x32xf32>
    %104 = tpu.concatenate %48, %71 in 0 : vector<8x8xf32>, vector<8x8xf32> -> vector<16x8xf32>
    %c0_46 = arith.constant 0 : index
    %c0_47 = arith.constant 0 : index
    %c0_48 = arith.constant 0 : index
    %105 = vector.load %arg66[%c0_46, %c0_47, %c0_48] : memref<1x32x8xf32, #tpu.memory_space<vmem>>, vector<1x16x8xf32>
    %106 = vector.shape_cast %105 : vector<1x16x8xf32> to vector<16x8xf32>
    %107 = vector.shape_cast %104 : vector<16x8xf32> to vector<1x16x8xf32>
    tpu.vector_store %arg66[%c0_46, %c0_47, %c0_48], %107 {strides = array<i32>} : memref<1x32x8xf32, #tpu.memory_space<vmem>>, vector<1x16x8xf32>,
    %c0_49 = arith.constant 0 : index
    %c0_50 = arith.constant 0 : index
    %c0_51 = arith.constant 0 : index
    %108 = vector.load %arg14[%c0_49, %c0_50, %c0_51] : memref<2x96x64xbf16, #tpu.memory_space<vmem>>, vector<1x96x64xbf16>
    %109 = vector.shape_cast %108 : vector<1x96x64xbf16> to vector<96x64xbf16>
    %c0_52 = arith.constant 0 : index
    %c0_53 = arith.constant 0 : index
    %c0_54 = arith.constant 0 : index
    %110 = vector.load %arg15[%c0_52, %c0_53, %c0_54] : memref<2x1x64xf32, #tpu.memory_space<vmem>>, vector<1x1x64xf32>
    %111 = vector.shape_cast %110 : vector<1x1x64xf32> to vector<1x64xf32>
    %c0_55 = arith.constant 0 : index
    %c0_56 = arith.constant 0 : index
    %c0_57 = arith.constant 0 : index
    %112 = vector.load %arg16[%c0_55, %c0_56, %c0_57] : memref<2x192x32xbf16, #tpu.memory_space<vmem>>, vector<1x192x32xbf16>
    %113 = vector.shape_cast %112 : vector<1x192x32xbf16> to vector<192x32xbf16>
    %c0_58 = arith.constant 0 : index
    %c0_59 = arith.constant 0 : index
    %c0_60 = arith.constant 0 : index
    %114 = vector.load %arg17[%c0_58, %c0_59, %c0_60] : memref<2x1x32xf32, #tpu.memory_space<vmem>>, vector<1x1x32xf32>
    %115 = vector.shape_cast %114 : vector<1x1x32xf32> to vector<1x32xf32>
    %c0_61 = arith.constant 0 : index
    %c0_62 = arith.constant 0 : index
    %c0_63 = arith.constant 0 : index
    %116 = vector.load %arg18[%c0_61, %c0_62, %c0_63] : memref<2x1x32xf32, #tpu.memory_space<vmem>>, vector<1x1x32xf32>
    %117 = vector.shape_cast %116 : vector<1x1x32xf32> to vector<1x32xf32>
    %c0_64 = arith.constant 0 : index
    %c0_65 = arith.constant 0 : index
    %c0_66 = arith.constant 0 : index
    %118 = vector.load %arg19[%c0_64, %c0_65, %c0_66] : memref<2x1x32xf32, #tpu.memory_space<vmem>>, vector<1x1x32xf32>
    %119 = vector.shape_cast %118 : vector<1x1x32xf32> to vector<1x32xf32>
    %cst_67 = arith.constant 0.000000e+00 : f32
    %120 = vector.broadcast %cst_67 : f32 to vector<1x32xf32>
    %cst_68 = arith.constant 0.000000e+00 : f32
    %121 = vector.broadcast %cst_68 : f32 to vector<1x32xf32>
    %122 = tpu.concatenate %120, %103, %121 in 0 : vector<1x32xf32>, vector<8x32xf32>, vector<1x32xf32> -> vector<10x32xf32>
    %123 = vector.extract_strided_slice %122 {offsets = [0, 0], sizes = [8, 32], strides = [1, 1]} : vector<10x32xf32> to vector<8x32xf32>
    %124 = vector.extract_strided_slice %122 {offsets = [1, 0], sizes = [8, 32], strides = [1, 1]} : vector<10x32xf32> to vector<8x32xf32>
    %125 = vector.extract_strided_slice %122 {offsets = [2, 0], sizes = [8, 32], strides = [1, 1]} : vector<10x32xf32> to vector<8x32xf32>
    %126 = tpu.concatenate %123, %124, %125 in 1 : vector<8x32xf32>, vector<8x32xf32>, vector<8x32xf32> -> vector<8x96xf32>
    %127 = arith.truncf %126 : vector<8x96xf32> to vector<8x96xbf16>
    %cst_69 = arith.constant dense<0.000000e+00> : vector<8x64xf32>
    %128 = tpu.matmul %127, %109, %cst_69 {dimension_numbers = #tpu.dot_dimension_numbers<[1], [0], [0], [1], [0, 0, 1, 1], [], []>} : vector<8x96xbf16>, vector<96x64xbf16>, vector<8x64xf32> -> vector<8x64xf32>
    %129 = vector.broadcast %111 : vector<1x64xf32> to vector<8x64xf32>
    %130 = arith.addf %128, %129 : vector<8x64xf32>
    %cst_70 = arith.constant 0.000000e+00 : f32
    %131 = vector.broadcast %cst_70 : f32 to vector<8x64xf32>
    %132 = arith.maximumf %130, %131 : vector<8x64xf32>
    %cst_71 = arith.constant 0.000000e+00 : f32
    %133 = vector.broadcast %cst_71 : f32 to vector<1x64xf32>
    %cst_72 = arith.constant 0.000000e+00 : f32
    %134 = vector.broadcast %cst_72 : f32 to vector<1x64xf32>
    %135 = tpu.concatenate %133, %132, %134 in 0 : vector<1x64xf32>, vector<8x64xf32>, vector<1x64xf32> -> vector<10x64xf32>
    %136 = vector.extract_strided_slice %135 {offsets = [0, 0], sizes = [8, 64], strides = [1, 1]} : vector<10x64xf32> to vector<8x64xf32>
    %137 = vector.extract_strided_slice %135 {offsets = [1, 0], sizes = [8, 64], strides = [1, 1]} : vector<10x64xf32> to vector<8x64xf32>
    %138 = vector.extract_strided_slice %135 {offsets = [2, 0], sizes = [8, 64], strides = [1, 1]} : vector<10x64xf32> to vector<8x64xf32>
    %139 = tpu.concatenate %136, %137, %138 in 1 : vector<8x64xf32>, vector<8x64xf32>, vector<8x64xf32> -> vector<8x192xf32>
    %140 = arith.truncf %139 : vector<8x192xf32> to vector<8x192xbf16>
    %cst_73 = arith.constant dense<0.000000e+00> : vector<8x32xf32>
    %141 = tpu.matmul %140, %113, %cst_73 {dimension_numbers = #tpu.dot_dimension_numbers<[1], [0], [0], [1], [0, 0, 1, 1], [], []>} : vector<8x192xbf16>, vector<192x32xbf16>, vector<8x32xf32> -> vector<8x32xf32>
    %142 = vector.broadcast %115 : vector<1x32xf32> to vector<8x32xf32>
    %143 = arith.addf %141, %142 : vector<8x32xf32>
    %144 = arith.addf %103, %143 : vector<8x32xf32>
    %cst_74 = arith.constant dense<0.000000e+00> : vector<8xf32>
    %145 = vector.multi_reduction <add>, %144, %cst_74 [1] : vector<8x32xf32> to vector<8xf32>
    %146 = vector.shape_cast %145 : vector<8xf32> to vector<8x1xf32>
    %cst_75 = arith.constant 3.200000e+01 : f32
    %147 = vector.broadcast %cst_75 : f32 to vector<8x1xf32>
    %148 = arith.divf %146, %147 : vector<8x1xf32>
    %149 = vector.broadcast %148 : vector<8x1xf32> to vector<8x32xf32>
    %150 = arith.subf %144, %149 : vector<8x32xf32>
    %151 = arith.mulf %150, %150 : vector<8x32xf32>
    %cst_76 = arith.constant dense<0.000000e+00> : vector<8xf32>
    %152 = vector.multi_reduction <add>, %151, %cst_76 [1] : vector<8x32xf32> to vector<8xf32>
    %153 = vector.shape_cast %152 : vector<8xf32> to vector<8x1xf32>
    %cst_77 = arith.constant 3.200000e+01 : f32
    %154 = vector.broadcast %cst_77 : f32 to vector<8x1xf32>
    %155 = arith.divf %153, %154 : vector<8x1xf32>
    %156 = vector.broadcast %148 : vector<8x1xf32> to vector<8x32xf32>
    %157 = arith.subf %144, %156 : vector<8x32xf32>
    %cst_78 = arith.constant 9.99999974E-6 : f32
    %158 = vector.broadcast %cst_78 : f32 to vector<8x1xf32>
    %159 = arith.addf %155, %158 : vector<8x1xf32>
    %160 = math.rsqrt %159 : vector<8x1xf32>
    %161 = vector.broadcast %160 : vector<8x1xf32> to vector<8x32xf32>
    %162 = arith.mulf %157, %161 : vector<8x32xf32>
    %163 = vector.broadcast %117 : vector<1x32xf32> to vector<8x32xf32>
    %164 = arith.mulf %162, %163 : vector<8x32xf32>
    %165 = vector.broadcast %119 : vector<1x32xf32> to vector<8x32xf32>
    %166 = arith.addf %164, %165 : vector<8x32xf32>
    %c1 = arith.constant 1 : index
    %c0_79 = arith.constant 0 : index
    %c0_80 = arith.constant 0 : index
    %167 = vector.load %arg6[%c1, %c0_79, %c0_80] : memref<2x32x32xbf16, #tpu.memory_space<vmem>>, vector<1x32x32xbf16>
    %168 = vector.shape_cast %167 : vector<1x32x32xbf16> to vector<32x32xbf16>
    %c1_81 = arith.constant 1 : index
    %c0_82 = arith.constant 0 : index
    %c0_83 = arith.constant 0 : index
    %169 = vector.load %arg7[%c1_81, %c0_82, %c0_83] : memref<2x1x32xf32, #tpu.memory_space<vmem>>, vector<1x1x32xf32>
    %170 = vector.shape_cast %169 : vector<1x1x32xf32> to vector<1x32xf32>
    %c1_84 = arith.constant 1 : index
    %c0_85 = arith.constant 0 : index
    %c0_86 = arith.constant 0 : index
    %171 = vector.load %arg8[%c1_84, %c0_85, %c0_86] : memref<2x32x64xbf16, #tpu.memory_space<vmem>>, vector<1x32x64xbf16>
    %172 = vector.shape_cast %171 : vector<1x32x64xbf16> to vector<32x64xbf16>
    %c1_87 = arith.constant 1 : index
    %c0_88 = arith.constant 0 : index
    %c0_89 = arith.constant 0 : index
    %173 = vector.load %arg9[%c1_87, %c0_88, %c0_89] : memref<2x1x64xf32, #tpu.memory_space<vmem>>, vector<1x1x64xf32>
    %174 = vector.shape_cast %173 : vector<1x1x64xf32> to vector<1x64xf32>
    %c1_90 = arith.constant 1 : index
    %c0_91 = arith.constant 0 : index
    %c0_92 = arith.constant 0 : index
    %175 = vector.load %arg10[%c1_90, %c0_91, %c0_92] : memref<2x32x32xbf16, #tpu.memory_space<vmem>>, vector<1x32x32xbf16>
    %176 = vector.shape_cast %175 : vector<1x32x32xbf16> to vector<32x32xbf16>
    %c1_93 = arith.constant 1 : index
    %c0_94 = arith.constant 0 : index
    %c0_95 = arith.constant 0 : index
    %177 = vector.load %arg11[%c1_93, %c0_94, %c0_95] : memref<2x1x32xf32, #tpu.memory_space<vmem>>, vector<1x1x32xf32>
    %178 = vector.shape_cast %177 : vector<1x1x32xf32> to vector<1x32xf32>
    %c1_96 = arith.constant 1 : index
    %c0_97 = arith.constant 0 : index
    %c0_98 = arith.constant 0 : index
    %179 = vector.load %arg12[%c1_96, %c0_97, %c0_98] : memref<2x1x32xf32, #tpu.memory_space<vmem>>, vector<1x1x32xf32>
    %180 = vector.shape_cast %179 : vector<1x1x32xf32> to vector<1x32xf32>
    %c1_99 = arith.constant 1 : index
    %c0_100 = arith.constant 0 : index
    %c0_101 = arith.constant 0 : index
    %181 = vector.load %arg13[%c1_99, %c0_100, %c0_101] : memref<2x1x32xf32, #tpu.memory_space<vmem>>, vector<1x1x32xf32>
    %182 = vector.shape_cast %181 : vector<1x1x32xf32> to vector<1x32xf32>
    %183 = arith.truncf %166 : vector<8x32xf32> to vector<8x32xbf16>
    %cst_102 = arith.constant dense<0.000000e+00> : vector<8x32xf32>
    %184 = tpu.matmul %183, %168, %cst_102 {dimension_numbers = #tpu.dot_dimension_numbers<[1], [0], [0], [1], [0, 0, 1, 1], [], []>} : vector<8x32xbf16>, vector<32x32xbf16>, vector<8x32xf32> -> vector<8x32xf32>
    %185 = vector.broadcast %170 : vector<1x32xf32> to vector<8x32xf32>
    %186 = arith.addf %184, %185 : vector<8x32xf32>
    %187 = arith.truncf %166 : vector<8x32xf32> to vector<8x32xbf16>
    %cst_103 = arith.constant dense<0.000000e+00> : vector<8x64xf32>
    %188 = tpu.matmul %187, %172, %cst_103 {dimension_numbers = #tpu.dot_dimension_numbers<[1], [0], [0], [1], [0, 0, 1, 1], [], []>} : vector<8x32xbf16>, vector<32x64xbf16>, vector<8x64xf32> -> vector<8x64xf32>
    %189 = vector.broadcast %174 : vector<1x64xf32> to vector<8x64xf32>
    %190 = arith.addf %188, %189 : vector<8x64xf32>
    %191 = vector.extract_strided_slice %190 {offsets = [0, 0], sizes = [8, 32], strides = [1, 1]} : vector<8x64xf32> to vector<8x32xf32>
    %192 = vector.extract_strided_slice %190 {offsets = [0, 32], sizes = [8, 32], strides = [1, 1]} : vector<8x64xf32> to vector<8x32xf32>
    %193 = vector.extract_strided_slice %186 {offsets = [0, 0], sizes = [8, 16], strides = [1, 1]} : vector<8x32xf32> to vector<8x16xf32>
    %194 = arith.truncf %193 : vector<8x16xf32> to vector<8x16xbf16>
    %195 = vector.extract_strided_slice %191 {offsets = [0, 0], sizes = [8, 16], strides = [1, 1]} : vector<8x32xf32> to vector<8x16xf32>
    %196 = arith.truncf %195 : vector<8x16xf32> to vector<8x16xbf16>
    %cst_104 = arith.constant dense<0.000000e+00> : vector<8x8xf32>
    %197 = tpu.matmul %194, %196, %cst_104 {dimension_numbers = #tpu.dot_dimension_numbers<[1], [1], [0], [0], [0, 0, 1, 0], [], []>} : vector<8x16xbf16>, vector<8x16xbf16>, vector<8x8xf32> -> vector<8x8xf32>
    %cst_105 = arith.constant 2.500000e-01 : f32
    %198 = vector.broadcast %cst_105 : f32 to vector<8x8xf32>
    %199 = arith.mulf %197, %198 : vector<8x8xf32>
    %200 = vector.broadcast %1 : vector<1x8xf32> to vector<8x8xf32>
    %201 = arith.addf %199, %200 : vector<8x8xf32>
    %cst_106 = arith.constant dense<0xFF800000> : vector<8xf32>
    %202 = vector.multi_reduction <maximumf>, %201, %cst_106 [1] : vector<8x8xf32> to vector<8xf32>
    %203 = vector.shape_cast %202 : vector<8xf32> to vector<8x1xf32>
    %204 = vector.broadcast %203 : vector<8x1xf32> to vector<8x8xf32>
    %205 = arith.subf %201, %204 : vector<8x8xf32>
    %206 = math.exp %205 : vector<8x8xf32>
    %cst_107 = arith.constant dense<0.000000e+00> : vector<8xf32>
    %207 = vector.multi_reduction <add>, %206, %cst_107 [1] : vector<8x8xf32> to vector<8xf32>
    %208 = vector.shape_cast %207 : vector<8xf32> to vector<8x1xf32>
    %209 = tpu.reciprocal %208 {approx = true} : vector<8x1xf32> -> vector<8x1xf32>
    %210 = vector.broadcast %209 : vector<8x1xf32> to vector<8x8xf32>
    %211 = arith.mulf %206, %210 : vector<8x8xf32>
    %212 = arith.truncf %211 : vector<8x8xf32> to vector<8x8xbf16>
    %213 = vector.extract_strided_slice %192 {offsets = [0, 0], sizes = [8, 16], strides = [1, 1]} : vector<8x32xf32> to vector<8x16xf32>
    %214 = arith.truncf %213 : vector<8x16xf32> to vector<8x16xbf16>
    %cst_108 = arith.constant dense<0.000000e+00> : vector<8x16xf32>
    %215 = tpu.matmul %212, %214, %cst_108 {dimension_numbers = #tpu.dot_dimension_numbers<[1], [0], [0], [1], [0, 0, 1, 1], [], []>} : vector<8x8xbf16>, vector<8x16xbf16>, vector<8x16xf32> -> vector<8x16xf32>
    %216 = vector.extract_strided_slice %186 {offsets = [0, 16], sizes = [8, 16], strides = [1, 1]} : vector<8x32xf32> to vector<8x16xf32>
    %217 = arith.truncf %216 : vector<8x16xf32> to vector<8x16xbf16>
    %218 = vector.extract_strided_slice %191 {offsets = [0, 16], sizes = [8, 16], strides = [1, 1]} : vector<8x32xf32> to vector<8x16xf32>
    %219 = arith.truncf %218 : vector<8x16xf32> to vector<8x16xbf16>
    %cst_109 = arith.constant dense<0.000000e+00> : vector<8x8xf32>
    %220 = tpu.matmul %217, %219, %cst_109 {dimension_numbers = #tpu.dot_dimension_numbers<[1], [1], [0], [0], [0, 0, 1, 0], [], []>} : vector<8x16xbf16>, vector<8x16xbf16>, vector<8x8xf32> -> vector<8x8xf32>
    %cst_110 = arith.constant 2.500000e-01 : f32
    %221 = vector.broadcast %cst_110 : f32 to vector<8x8xf32>
    %222 = arith.mulf %220, %221 : vector<8x8xf32>
    %223 = vector.broadcast %1 : vector<1x8xf32> to vector<8x8xf32>
    %224 = arith.addf %222, %223 : vector<8x8xf32>
    %cst_111 = arith.constant dense<0xFF800000> : vector<8xf32>
    %225 = vector.multi_reduction <maximumf>, %224, %cst_111 [1] : vector<8x8xf32> to vector<8xf32>
    %226 = vector.shape_cast %225 : vector<8xf32> to vector<8x1xf32>
    %227 = vector.broadcast %226 : vector<8x1xf32> to vector<8x8xf32>
    %228 = arith.subf %224, %227 : vector<8x8xf32>
    %229 = math.exp %228 : vector<8x8xf32>
    %cst_112 = arith.constant dense<0.000000e+00> : vector<8xf32>
    %230 = vector.multi_reduction <add>, %229, %cst_112 [1] : vector<8x8xf32> to vector<8xf32>
    %231 = vector.shape_cast %230 : vector<8xf32> to vector<8x1xf32>
    %232 = tpu.reciprocal %231 {approx = true} : vector<8x1xf32> -> vector<8x1xf32>
    %233 = vector.broadcast %232 : vector<8x1xf32> to vector<8x8xf32>
    %234 = arith.mulf %229, %233 : vector<8x8xf32>
    %235 = arith.truncf %234 : vector<8x8xf32> to vector<8x8xbf16>
    %236 = vector.extract_strided_slice %192 {offsets = [0, 16], sizes = [8, 16], strides = [1, 1]} : vector<8x32xf32> to vector<8x16xf32>
    %237 = arith.truncf %236 : vector<8x16xf32> to vector<8x16xbf16>
    %cst_113 = arith.constant dense<0.000000e+00> : vector<8x16xf32>
    %238 = tpu.matmul %235, %237, %cst_113 {dimension_numbers = #tpu.dot_dimension_numbers<[1], [0], [0], [1], [0, 0, 1, 1], [], []>} : vector<8x8xbf16>, vector<8x16xbf16>, vector<8x16xf32> -> vector<8x16xf32>
    %239 = tpu.concatenate %215, %238 in 1 : vector<8x16xf32>, vector<8x16xf32> -> vector<8x32xf32>
    %240 = arith.truncf %239 : vector<8x32xf32> to vector<8x32xbf16>
    %cst_114 = arith.constant dense<0.000000e+00> : vector<8x32xf32>
    %241 = tpu.matmul %240, %176, %cst_114 {dimension_numbers = #tpu.dot_dimension_numbers<[1], [0], [0], [1], [0, 0, 1, 1], [], []>} : vector<8x32xbf16>, vector<32x32xbf16>, vector<8x32xf32> -> vector<8x32xf32>
    %242 = vector.broadcast %178 : vector<1x32xf32> to vector<8x32xf32>
    %243 = arith.addf %241, %242 : vector<8x32xf32>
    %244 = arith.addf %166, %243 : vector<8x32xf32>
    %cst_115 = arith.constant dense<0.000000e+00> : vector<8xf32>
    %245 = vector.multi_reduction <add>, %244, %cst_115 [1] : vector<8x32xf32> to vector<8xf32>
    %246 = vector.shape_cast %245 : vector<8xf32> to vector<8x1xf32>
    %cst_116 = arith.constant 3.200000e+01 : f32
    %247 = vector.broadcast %cst_116 : f32 to vector<8x1xf32>
    %248 = arith.divf %246, %247 : vector<8x1xf32>
    %249 = vector.broadcast %248 : vector<8x1xf32> to vector<8x32xf32>
    %250 = arith.subf %244, %249 : vector<8x32xf32>
    %251 = arith.mulf %250, %250 : vector<8x32xf32>
    %cst_117 = arith.constant dense<0.000000e+00> : vector<8xf32>
    %252 = vector.multi_reduction <add>, %251, %cst_117 [1] : vector<8x32xf32> to vector<8xf32>
    %253 = vector.shape_cast %252 : vector<8xf32> to vector<8x1xf32>
    %cst_118 = arith.constant 3.200000e+01 : f32
    %254 = vector.broadcast %cst_118 : f32 to vector<8x1xf32>
    %255 = arith.divf %253, %254 : vector<8x1xf32>
    %256 = vector.broadcast %248 : vector<8x1xf32> to vector<8x32xf32>
    %257 = arith.subf %244, %256 : vector<8x32xf32>
    %cst_119 = arith.constant 9.99999974E-6 : f32
    %258 = vector.broadcast %cst_119 : f32 to vector<8x1xf32>
    %259 = arith.addf %255, %258 : vector<8x1xf32>
    %260 = math.rsqrt %259 : vector<8x1xf32>
    %261 = vector.broadcast %260 : vector<8x1xf32> to vector<8x32xf32>
    %262 = arith.mulf %257, %261 : vector<8x32xf32>
    %263 = vector.broadcast %180 : vector<1x32xf32> to vector<8x32xf32>
    %264 = arith.mulf %262, %263 : vector<8x32xf32>
    %265 = vector.broadcast %182 : vector<1x32xf32> to vector<8x32xf32>
    %266 = arith.addf %264, %265 : vector<8x32xf32>
    %267 = tpu.concatenate %211, %234 in 0 : vector<8x8xf32>, vector<8x8xf32> -> vector<16x8xf32>
    %c0_120 = arith.constant 0 : index
    %c16 = arith.constant 16 : index
    %c0_121 = arith.constant 0 : index
    %268 = vector.load %arg66[%c0_120, %c16, %c0_121] : memref<1x32x8xf32, #tpu.memory_space<vmem>>, vector<1x16x8xf32>
    %269 = vector.shape_cast %268 : vector<1x16x8xf32> to vector<16x8xf32>
    %270 = vector.shape_cast %267 : vector<16x8xf32> to vector<1x16x8xf32>
    tpu.vector_store %arg66[%c0_120, %c16, %c0_121], %270 {strides = array<i32>} : memref<1x32x8xf32, #tpu.memory_space<vmem>>, vector<1x16x8xf32>,
    %c1_122 = arith.constant 1 : index
    %c0_123 = arith.constant 0 : index
    %c0_124 = arith.constant 0 : index
    %271 = vector.load %arg14[%c1_122, %c0_123, %c0_124] : memref<2x96x64xbf16, #tpu.memory_space<vmem>>, vector<1x96x64xbf16>
    %272 = vector.shape_cast %271 : vector<1x96x64xbf16> to vector<96x64xbf16>
    %c1_125 = arith.constant 1 : index
    %c0_126 = arith.constant 0 : index
    %c0_127 = arith.constant 0 : index
    %273 = vector.load %arg15[%c1_125, %c0_126, %c0_127] : memref<2x1x64xf32, #tpu.memory_space<vmem>>, vector<1x1x64xf32>
    %274 = vector.shape_cast %273 : vector<1x1x64xf32> to vector<1x64xf32>
    %c1_128 = arith.constant 1 : index
    %c0_129 = arith.constant 0 : index
    %c0_130 = arith.constant 0 : index
    %275 = vector.load %arg16[%c1_128, %c0_129, %c0_130] : memref<2x192x32xbf16, #tpu.memory_space<vmem>>, vector<1x192x32xbf16>
    %276 = vector.shape_cast %275 : vector<1x192x32xbf16> to vector<192x32xbf16>
    %c1_131 = arith.constant 1 : index
    %c0_132 = arith.constant 0 : index
    %c0_133 = arith.constant 0 : index
    %277 = vector.load %arg17[%c1_131, %c0_132, %c0_133] : memref<2x1x32xf32, #tpu.memory_space<vmem>>, vector<1x1x32xf32>
    %278 = vector.shape_cast %277 : vector<1x1x32xf32> to vector<1x32xf32>
    %c1_134 = arith.constant 1 : index
    %c0_135 = arith.constant 0 : index
    %c0_136 = arith.constant 0 : index
    %279 = vector.load %arg18[%c1_134, %c0_135, %c0_136] : memref<2x1x32xf32, #tpu.memory_space<vmem>>, vector<1x1x32xf32>
    %280 = vector.shape_cast %279 : vector<1x1x32xf32> to vector<1x32xf32>
    %c1_137 = arith.constant 1 : index
    %c0_138 = arith.constant 0 : index
    %c0_139 = arith.constant 0 : index
    %281 = vector.load %arg19[%c1_137, %c0_138, %c0_139] : memref<2x1x32xf32, #tpu.memory_space<vmem>>, vector<1x1x32xf32>
    %282 = vector.shape_cast %281 : vector<1x1x32xf32> to vector<1x32xf32>
    %cst_140 = arith.constant 0.000000e+00 : f32
    %283 = vector.broadcast %cst_140 : f32 to vector<1x32xf32>
    %cst_141 = arith.constant 0.000000e+00 : f32
    %284 = vector.broadcast %cst_141 : f32 to vector<1x32xf32>
    %285 = tpu.concatenate %283, %266, %284 in 0 : vector<1x32xf32>, vector<8x32xf32>, vector<1x32xf32> -> vector<10x32xf32>
    %286 = vector.extract_strided_slice %285 {offsets = [0, 0], sizes = [8, 32], strides = [1, 1]} : vector<10x32xf32> to vector<8x32xf32>
    %287 = vector.extract_strided_slice %285 {offsets = [1, 0], sizes = [8, 32], strides = [1, 1]} : vector<10x32xf32> to vector<8x32xf32>
    %288 = vector.extract_strided_slice %285 {offsets = [2, 0], sizes = [8, 32], strides = [1, 1]} : vector<10x32xf32> to vector<8x32xf32>
    %289 = tpu.concatenate %286, %287, %288 in 1 : vector<8x32xf32>, vector<8x32xf32>, vector<8x32xf32> -> vector<8x96xf32>
    %290 = arith.truncf %289 : vector<8x96xf32> to vector<8x96xbf16>
    %cst_142 = arith.constant dense<0.000000e+00> : vector<8x64xf32>
    %291 = tpu.matmul %290, %272, %cst_142 {dimension_numbers = #tpu.dot_dimension_numbers<[1], [0], [0], [1], [0, 0, 1, 1], [], []>} : vector<8x96xbf16>, vector<96x64xbf16>, vector<8x64xf32> -> vector<8x64xf32>
    %292 = vector.broadcast %274 : vector<1x64xf32> to vector<8x64xf32>
    %293 = arith.addf %291, %292 : vector<8x64xf32>
    %cst_143 = arith.constant 0.000000e+00 : f32
    %294 = vector.broadcast %cst_143 : f32 to vector<8x64xf32>
    %295 = arith.maximumf %293, %294 : vector<8x64xf32>
    %cst_144 = arith.constant 0.000000e+00 : f32
    %296 = vector.broadcast %cst_144 : f32 to vector<1x64xf32>
    %cst_145 = arith.constant 0.000000e+00 : f32
    %297 = vector.broadcast %cst_145 : f32 to vector<1x64xf32>
    %298 = tpu.concatenate %296, %295, %297 in 0 : vector<1x64xf32>, vector<8x64xf32>, vector<1x64xf32> -> vector<10x64xf32>
    %299 = vector.extract_strided_slice %298 {offsets = [0, 0], sizes = [8, 64], strides = [1, 1]} : vector<10x64xf32> to vector<8x64xf32>
    %300 = vector.extract_strided_slice %298 {offsets = [1, 0], sizes = [8, 64], strides = [1, 1]} : vector<10x64xf32> to vector<8x64xf32>
    %301 = vector.extract_strided_slice %298 {offsets = [2, 0], sizes = [8, 64], strides = [1, 1]} : vector<10x64xf32> to vector<8x64xf32>
    %302 = tpu.concatenate %299, %300, %301 in 1 : vector<8x64xf32>, vector<8x64xf32>, vector<8x64xf32> -> vector<8x192xf32>
    %303 = arith.truncf %302 : vector<8x192xf32> to vector<8x192xbf16>
    %cst_146 = arith.constant dense<0.000000e+00> : vector<8x32xf32>
    %304 = tpu.matmul %303, %276, %cst_146 {dimension_numbers = #tpu.dot_dimension_numbers<[1], [0], [0], [1], [0, 0, 1, 1], [], []>} : vector<8x192xbf16>, vector<192x32xbf16>, vector<8x32xf32> -> vector<8x32xf32>
    %305 = vector.broadcast %278 : vector<1x32xf32> to vector<8x32xf32>
    %306 = arith.addf %304, %305 : vector<8x32xf32>
    %307 = arith.addf %266, %306 : vector<8x32xf32>
    %cst_147 = arith.constant dense<0.000000e+00> : vector<8xf32>
    %308 = vector.multi_reduction <add>, %307, %cst_147 [1] : vector<8x32xf32> to vector<8xf32>
    %309 = vector.shape_cast %308 : vector<8xf32> to vector<8x1xf32>
    %cst_148 = arith.constant 3.200000e+01 : f32
    %310 = vector.broadcast %cst_148 : f32 to vector<8x1xf32>
    %311 = arith.divf %309, %310 : vector<8x1xf32>
    %312 = vector.broadcast %311 : vector<8x1xf32> to vector<8x32xf32>
    %313 = arith.subf %307, %312 : vector<8x32xf32>
    %314 = arith.mulf %313, %313 : vector<8x32xf32>
    %cst_149 = arith.constant dense<0.000000e+00> : vector<8xf32>
    %315 = vector.multi_reduction <add>, %314, %cst_149 [1] : vector<8x32xf32> to vector<8xf32>
    %316 = vector.shape_cast %315 : vector<8xf32> to vector<8x1xf32>
    %cst_150 = arith.constant 3.200000e+01 : f32
    %317 = vector.broadcast %cst_150 : f32 to vector<8x1xf32>
    %318 = arith.divf %316, %317 : vector<8x1xf32>
    %319 = vector.broadcast %311 : vector<8x1xf32> to vector<8x32xf32>
    %320 = arith.subf %307, %319 : vector<8x32xf32>
    %cst_151 = arith.constant 9.99999974E-6 : f32
    %321 = vector.broadcast %cst_151 : f32 to vector<8x1xf32>
    %322 = arith.addf %318, %321 : vector<8x1xf32>
    %323 = math.rsqrt %322 : vector<8x1xf32>
    %324 = vector.broadcast %323 : vector<8x1xf32> to vector<8x32xf32>
    %325 = arith.mulf %320, %324 : vector<8x32xf32>
    %326 = vector.broadcast %280 : vector<1x32xf32> to vector<8x32xf32>
    %327 = arith.mulf %325, %326 : vector<8x32xf32>
    %328 = vector.broadcast %282 : vector<1x32xf32> to vector<8x32xf32>
    %329 = arith.addf %327, %328 : vector<8x32xf32>
    %c0_152 = arith.constant 0 : index
    %c0_153 = arith.constant 0 : index
    %330 = vector.load %arg20[%c0_152, %c0_153] : memref<1x32xf32, #tpu.memory_space<vmem>>, vector<1x32xf32>
    %c0_154 = arith.constant 0 : index
    %c0_155 = arith.constant 0 : index
    %331 = vector.load %arg21[%c0_154, %c0_155] : memref<1x32xf32, #tpu.memory_space<vmem>>, vector<1x32xf32>
    %cst_156 = arith.constant dense<0.000000e+00> : vector<8xf32>
    %332 = vector.multi_reduction <add>, %329, %cst_156 [1] : vector<8x32xf32> to vector<8xf32>
    %333 = vector.shape_cast %332 : vector<8xf32> to vector<8x1xf32>
    %cst_157 = arith.constant 3.200000e+01 : f32
    %334 = vector.broadcast %cst_157 : f32 to vector<8x1xf32>
    %335 = arith.divf %333, %334 : vector<8x1xf32>
    %336 = vector.broadcast %335 : vector<8x1xf32> to vector<8x32xf32>
    %337 = arith.subf %329, %336 : vector<8x32xf32>
    %338 = arith.mulf %337, %337 : vector<8x32xf32>
    %cst_158 = arith.constant dense<0.000000e+00> : vector<8xf32>
    %339 = vector.multi_reduction <add>, %338, %cst_158 [1] : vector<8x32xf32> to vector<8xf32>
    %340 = vector.shape_cast %339 : vector<8xf32> to vector<8x1xf32>
    %cst_159 = arith.constant 3.200000e+01 : f32
    %341 = vector.broadcast %cst_159 : f32 to vector<8x1xf32>
    %342 = arith.divf %340, %341 : vector<8x1xf32>
    %343 = vector.broadcast %335 : vector<8x1xf32> to vector<8x32xf32>
    %344 = arith.subf %329, %343 : vector<8x32xf32>
    %cst_160 = arith.constant 9.99999974E-6 : f32
    %345 = vector.broadcast %cst_160 : f32 to vector<8x1xf32>
    %346 = arith.addf %342, %345 : vector<8x1xf32>
    %347 = math.rsqrt %346 : vector<8x1xf32>
    %348 = vector.broadcast %347 : vector<8x1xf32> to vector<8x32xf32>
    %349 = arith.mulf %344, %348 : vector<8x32xf32>
    %350 = vector.broadcast %330 : vector<1x32xf32> to vector<8x32xf32>
    %351 = arith.mulf %349, %350 : vector<8x32xf32>
    %352 = vector.broadcast %331 : vector<1x32xf32> to vector<8x32xf32>
    %353 = arith.addf %351, %352 : vector<8x32xf32>
    %c0_161 = arith.constant 0 : index
    %c0_162 = arith.constant 0 : index
    %c0_163 = arith.constant 0 : index
    %354 = vector.load %arg3[%c0_161, %c0_162, %c0_163] : memref<1x8x16xf32, #tpu.memory_space<vmem>>, vector<1x8x16xf32>
    %355 = vector.shape_cast %354 : vector<1x8x16xf32> to vector<8x16xf32>
    %356 = arith.truncf %355 : vector<8x16xf32> to vector<8x16xbf16>
    %c0_164 = arith.constant 0 : index
    %c0_165 = arith.constant 0 : index
    %357 = vector.load %arg22[%c0_164, %c0_165] : memref<16x32xbf16, #tpu.memory_space<vmem>>, vector<16x32xbf16>
    %cst_166 = arith.constant dense<0.000000e+00> : vector<8x32xf32>
    %358 = tpu.matmul %356, %357, %cst_166 {dimension_numbers = #tpu.dot_dimension_numbers<[1], [0], [0], [1], [0, 0, 1, 1], [], []>} : vector<8x16xbf16>, vector<16x32xbf16>, vector<8x32xf32> -> vector<8x32xf32>
    %c0_167 = arith.constant 0 : index
    %c0_168 = arith.constant 0 : index
    %359 = vector.load %arg23[%c0_167, %c0_168] : memref<1x32xf32, #tpu.memory_space<vmem>>, vector<1x32xf32>
    %360 = vector.broadcast %359 : vector<1x32xf32> to vector<8x32xf32>
    %361 = arith.addf %358, %360 : vector<8x32xf32>
    %cst_169 = arith.constant 0.000000e+00 : f32
    %362 = vector.broadcast %cst_169 : f32 to vector<8x32xf32>
    %363 = arith.maximumf %361, %362 : vector<8x32xf32>
    %364 = arith.truncf %363 : vector<8x32xf32> to vector<8x32xbf16>
    %c0_170 = arith.constant 0 : index
    %c0_171 = arith.constant 0 : index
    %365 = vector.load %arg24[%c0_170, %c0_171] : memref<32x32xbf16, #tpu.memory_space<vmem>>, vector<32x32xbf16>
    %cst_172 = arith.constant dense<0.000000e+00> : vector<8x32xf32>
    %366 = tpu.matmul %364, %365, %cst_172 {dimension_numbers = #tpu.dot_dimension_numbers<[1], [0], [0], [1], [0, 0, 1, 1], [], []>} : vector<8x32xbf16>, vector<32x32xbf16>, vector<8x32xf32> -> vector<8x32xf32>
    %c0_173 = arith.constant 0 : index
    %c0_174 = arith.constant 0 : index
    %367 = vector.load %arg25[%c0_173, %c0_174] : memref<1x32xf32, #tpu.memory_space<vmem>>, vector<1x32xf32>
    %368 = vector.broadcast %367 : vector<1x32xf32> to vector<8x32xf32>
    %369 = arith.addf %366, %368 : vector<8x32xf32>
    %cst_175 = arith.constant 0.000000e+00 : f32
    %370 = vector.broadcast %cst_175 : f32 to vector<8x32xf32>
    %371 = arith.maximumf %369, %370 : vector<8x32xf32>
    %372 = arith.truncf %371 : vector<8x32xf32> to vector<8x32xbf16>
    %c0_176 = arith.constant 0 : index
    %c0_177 = arith.constant 0 : index
    %373 = vector.load %arg26[%c0_176, %c0_177] : memref<32x32xbf16, #tpu.memory_space<vmem>>, vector<32x32xbf16>
    %cst_178 = arith.constant dense<0.000000e+00> : vector<8x32xf32>
    %374 = tpu.matmul %372, %373, %cst_178 {dimension_numbers = #tpu.dot_dimension_numbers<[1], [0], [0], [1], [0, 0, 1, 1], [], []>} : vector<8x32xbf16>, vector<32x32xbf16>, vector<8x32xf32> -> vector<8x32xf32>
    %c0_179 = arith.constant 0 : index
    %c0_180 = arith.constant 0 : index
    %375 = vector.load %arg27[%c0_179, %c0_180] : memref<1x32xf32, #tpu.memory_space<vmem>>, vector<1x32xf32>
    %376 = vector.broadcast %375 : vector<1x32xf32> to vector<8x32xf32>
    %377 = arith.addf %374, %376 : vector<8x32xf32>
    %cst_181 = arith.constant 5.65685415 : f32
    %378 = vector.broadcast %cst_181 : f32 to vector<8x32xf32>
    %379 = arith.mulf %377, %378 : vector<8x32xf32>
    %c0_182 = arith.constant 0 : index
    %c0_183 = arith.constant 0 : index
    %380 = vector.load %arg5[%c0_182, %c0_183] : memref<8x32xf32, #tpu.memory_space<vmem>>, vector<8x32xf32>
    %381 = arith.addf %379, %380 : vector<8x32xf32>
    %c0_184 = arith.constant 0 : index
    %c0_185 = arith.constant 0 : index
    %c0_186 = arith.constant 0 : index
    %382 = vector.load %arg4[%c0_184, %c0_185, %c0_186] : memref<1x8x8xf32, #tpu.memory_space<vmem>>, vector<1x8x8xf32>
    %383 = vector.shape_cast %382 : vector<1x8x8xf32> to vector<8x8xf32>
    %c0_187 = arith.constant 0 : index
    %c0_188 = arith.constant 0 : index
    %c0_189 = arith.constant 0 : index
    %384 = vector.load %arg28[%c0_187, %c0_188, %c0_189] : memref<2x32x32xbf16, #tpu.memory_space<vmem>>, vector<1x32x32xbf16>
    %385 = vector.shape_cast %384 : vector<1x32x32xbf16> to vector<32x32xbf16>
    %c0_190 = arith.constant 0 : index
    %c0_191 = arith.constant 0 : index
    %c0_192 = arith.constant 0 : index
    %386 = vector.load %arg29[%c0_190, %c0_191, %c0_192] : memref<2x1x32xf32, #tpu.memory_space<vmem>>, vector<1x1x32xf32>
    %387 = vector.shape_cast %386 : vector<1x1x32xf32> to vector<1x32xf32>
    %c0_193 = arith.constant 0 : index
    %c0_194 = arith.constant 0 : index
    %c0_195 = arith.constant 0 : index
    %388 = vector.load %arg30[%c0_193, %c0_194, %c0_195] : memref<2x32x64xbf16, #tpu.memory_space<vmem>>, vector<1x32x64xbf16>
    %389 = vector.shape_cast %388 : vector<1x32x64xbf16> to vector<32x64xbf16>
    %c0_196 = arith.constant 0 : index
    %c0_197 = arith.constant 0 : index
    %c0_198 = arith.constant 0 : index
    %390 = vector.load %arg31[%c0_196, %c0_197, %c0_198] : memref<2x1x64xf32, #tpu.memory_space<vmem>>, vector<1x1x64xf32>
    %391 = vector.shape_cast %390 : vector<1x1x64xf32> to vector<1x64xf32>
    %c0_199 = arith.constant 0 : index
    %c0_200 = arith.constant 0 : index
    %c0_201 = arith.constant 0 : index
    %392 = vector.load %arg32[%c0_199, %c0_200, %c0_201] : memref<2x32x32xbf16, #tpu.memory_space<vmem>>, vector<1x32x32xbf16>
    %393 = vector.shape_cast %392 : vector<1x32x32xbf16> to vector<32x32xbf16>
    %c0_202 = arith.constant 0 : index
    %c0_203 = arith.constant 0 : index
    %c0_204 = arith.constant 0 : index
    %394 = vector.load %arg33[%c0_202, %c0_203, %c0_204] : memref<2x1x32xf32, #tpu.memory_space<vmem>>, vector<1x1x32xf32>
    %395 = vector.shape_cast %394 : vector<1x1x32xf32> to vector<1x32xf32>
    %c0_205 = arith.constant 0 : index
    %c0_206 = arith.constant 0 : index
    %c0_207 = arith.constant 0 : index
    %396 = vector.load %arg34[%c0_205, %c0_206, %c0_207] : memref<2x1x32xf32, #tpu.memory_space<vmem>>, vector<1x1x32xf32>
    %397 = vector.shape_cast %396 : vector<1x1x32xf32> to vector<1x32xf32>
    %c0_208 = arith.constant 0 : index
    %c0_209 = arith.constant 0 : index
    %c0_210 = arith.constant 0 : index
    %398 = vector.load %arg35[%c0_208, %c0_209, %c0_210] : memref<2x1x32xf32, #tpu.memory_space<vmem>>, vector<1x1x32xf32>
    %399 = vector.shape_cast %398 : vector<1x1x32xf32> to vector<1x32xf32>
    %400 = arith.truncf %381 : vector<8x32xf32> to vector<8x32xbf16>
    %cst_211 = arith.constant dense<0.000000e+00> : vector<8x32xf32>
    %401 = tpu.matmul %400, %385, %cst_211 {dimension_numbers = #tpu.dot_dimension_numbers<[1], [0], [0], [1], [0, 0, 1, 1], [], []>} : vector<8x32xbf16>, vector<32x32xbf16>, vector<8x32xf32> -> vector<8x32xf32>
    %402 = vector.broadcast %387 : vector<1x32xf32> to vector<8x32xf32>
    %403 = arith.addf %401, %402 : vector<8x32xf32>
    %404 = arith.truncf %381 : vector<8x32xf32> to vector<8x32xbf16>
    %cst_212 = arith.constant dense<0.000000e+00> : vector<8x64xf32>
    %405 = tpu.matmul %404, %389, %cst_212 {dimension_numbers = #tpu.dot_dimension_numbers<[1], [0], [0], [1], [0, 0, 1, 1], [], []>} : vector<8x32xbf16>, vector<32x64xbf16>, vector<8x64xf32> -> vector<8x64xf32>
    %406 = vector.broadcast %391 : vector<1x64xf32> to vector<8x64xf32>
    %407 = arith.addf %405, %406 : vector<8x64xf32>
    %408 = vector.extract_strided_slice %407 {offsets = [0, 0], sizes = [8, 32], strides = [1, 1]} : vector<8x64xf32> to vector<8x32xf32>
    %409 = vector.extract_strided_slice %407 {offsets = [0, 32], sizes = [8, 32], strides = [1, 1]} : vector<8x64xf32> to vector<8x32xf32>
    %410 = vector.extract_strided_slice %403 {offsets = [0, 0], sizes = [8, 16], strides = [1, 1]} : vector<8x32xf32> to vector<8x16xf32>
    %411 = arith.truncf %410 : vector<8x16xf32> to vector<8x16xbf16>
    %412 = vector.extract_strided_slice %408 {offsets = [0, 0], sizes = [8, 16], strides = [1, 1]} : vector<8x32xf32> to vector<8x16xf32>
    %413 = arith.truncf %412 : vector<8x16xf32> to vector<8x16xbf16>
    %cst_213 = arith.constant dense<0.000000e+00> : vector<8x8xf32>
    %414 = tpu.matmul %411, %413, %cst_213 {dimension_numbers = #tpu.dot_dimension_numbers<[1], [1], [0], [0], [0, 0, 1, 0], [], []>} : vector<8x16xbf16>, vector<8x16xbf16>, vector<8x8xf32> -> vector<8x8xf32>
    %cst_214 = arith.constant 2.500000e-01 : f32
    %415 = vector.broadcast %cst_214 : f32 to vector<8x8xf32>
    %416 = arith.mulf %414, %415 : vector<8x8xf32>
    %417 = arith.addf %416, %383 : vector<8x8xf32>
    %cst_215 = arith.constant dense<0xFF800000> : vector<8xf32>
    %418 = vector.multi_reduction <maximumf>, %417, %cst_215 [1] : vector<8x8xf32> to vector<8xf32>
    %419 = vector.shape_cast %418 : vector<8xf32> to vector<8x1xf32>
    %420 = vector.broadcast %419 : vector<8x1xf32> to vector<8x8xf32>
    %421 = arith.subf %417, %420 : vector<8x8xf32>
    %422 = math.exp %421 : vector<8x8xf32>
    %cst_216 = arith.constant dense<0.000000e+00> : vector<8xf32>
    %423 = vector.multi_reduction <add>, %422, %cst_216 [1] : vector<8x8xf32> to vector<8xf32>
    %424 = vector.shape_cast %423 : vector<8xf32> to vector<8x1xf32>
    %425 = tpu.reciprocal %424 {approx = true} : vector<8x1xf32> -> vector<8x1xf32>
    %426 = vector.broadcast %425 : vector<8x1xf32> to vector<8x8xf32>
    %427 = arith.mulf %422, %426 : vector<8x8xf32>
    %428 = arith.truncf %427 : vector<8x8xf32> to vector<8x8xbf16>
    %429 = vector.extract_strided_slice %409 {offsets = [0, 0], sizes = [8, 16], strides = [1, 1]} : vector<8x32xf32> to vector<8x16xf32>
    %430 = arith.truncf %429 : vector<8x16xf32> to vector<8x16xbf16>
    %cst_217 = arith.constant dense<0.000000e+00> : vector<8x16xf32>
    %431 = tpu.matmul %428, %430, %cst_217 {dimension_numbers = #tpu.dot_dimension_numbers<[1], [0], [0], [1], [0, 0, 1, 1], [], []>} : vector<8x8xbf16>, vector<8x16xbf16>, vector<8x16xf32> -> vector<8x16xf32>
    %432 = vector.extract_strided_slice %403 {offsets = [0, 16], sizes = [8, 16], strides = [1, 1]} : vector<8x32xf32> to vector<8x16xf32>
    %433 = arith.truncf %432 : vector<8x16xf32> to vector<8x16xbf16>
    %434 = vector.extract_strided_slice %408 {offsets = [0, 16], sizes = [8, 16], strides = [1, 1]} : vector<8x32xf32> to vector<8x16xf32>
    %435 = arith.truncf %434 : vector<8x16xf32> to vector<8x16xbf16>
    %cst_218 = arith.constant dense<0.000000e+00> : vector<8x8xf32>
    %436 = tpu.matmul %433, %435, %cst_218 {dimension_numbers = #tpu.dot_dimension_numbers<[1], [1], [0], [0], [0, 0, 1, 0], [], []>} : vector<8x16xbf16>, vector<8x16xbf16>, vector<8x8xf32> -> vector<8x8xf32>
    %cst_219 = arith.constant 2.500000e-01 : f32
    %437 = vector.broadcast %cst_219 : f32 to vector<8x8xf32>
    %438 = arith.mulf %436, %437 : vector<8x8xf32>
    %439 = arith.addf %438, %383 : vector<8x8xf32>
    %cst_220 = arith.constant dense<0xFF800000> : vector<8xf32>
    %440 = vector.multi_reduction <maximumf>, %439, %cst_220 [1] : vector<8x8xf32> to vector<8xf32>
    %441 = vector.shape_cast %440 : vector<8xf32> to vector<8x1xf32>
    %442 = vector.broadcast %441 : vector<8x1xf32> to vector<8x8xf32>
    %443 = arith.subf %439, %442 : vector<8x8xf32>
    %444 = math.exp %443 : vector<8x8xf32>
    %cst_221 = arith.constant dense<0.000000e+00> : vector<8xf32>
    %445 = vector.multi_reduction <add>, %444, %cst_221 [1] : vector<8x8xf32> to vector<8xf32>
    %446 = vector.shape_cast %445 : vector<8xf32> to vector<8x1xf32>
    %447 = tpu.reciprocal %446 {approx = true} : vector<8x1xf32> -> vector<8x1xf32>
    %448 = vector.broadcast %447 : vector<8x1xf32> to vector<8x8xf32>
    %449 = arith.mulf %444, %448 : vector<8x8xf32>
    %450 = arith.truncf %449 : vector<8x8xf32> to vector<8x8xbf16>
    %451 = vector.extract_strided_slice %409 {offsets = [0, 16], sizes = [8, 16], strides = [1, 1]} : vector<8x32xf32> to vector<8x16xf32>
    %452 = arith.truncf %451 : vector<8x16xf32> to vector<8x16xbf16>
    %cst_222 = arith.constant dense<0.000000e+00> : vector<8x16xf32>
    %453 = tpu.matmul %450, %452, %cst_222 {dimension_numbers = #tpu.dot_dimension_numbers<[1], [0], [0], [1], [0, 0, 1, 1], [], []>} : vector<8x8xbf16>, vector<8x16xbf16>, vector<8x16xf32> -> vector<8x16xf32>
    %454 = tpu.concatenate %431, %453 in 1 : vector<8x16xf32>, vector<8x16xf32> -> vector<8x32xf32>
    %455 = arith.truncf %454 : vector<8x32xf32> to vector<8x32xbf16>
    %cst_223 = arith.constant dense<0.000000e+00> : vector<8x32xf32>
    %456 = tpu.matmul %455, %393, %cst_223 {dimension_numbers = #tpu.dot_dimension_numbers<[1], [0], [0], [1], [0, 0, 1, 1], [], []>} : vector<8x32xbf16>, vector<32x32xbf16>, vector<8x32xf32> -> vector<8x32xf32>
    %457 = vector.broadcast %395 : vector<1x32xf32> to vector<8x32xf32>
    %458 = arith.addf %456, %457 : vector<8x32xf32>
    %459 = arith.addf %381, %458 : vector<8x32xf32>
    %cst_224 = arith.constant dense<0.000000e+00> : vector<8xf32>
    %460 = vector.multi_reduction <add>, %459, %cst_224 [1] : vector<8x32xf32> to vector<8xf32>
    %461 = vector.shape_cast %460 : vector<8xf32> to vector<8x1xf32>
    %cst_225 = arith.constant 3.200000e+01 : f32
    %462 = vector.broadcast %cst_225 : f32 to vector<8x1xf32>
    %463 = arith.divf %461, %462 : vector<8x1xf32>
    %464 = vector.broadcast %463 : vector<8x1xf32> to vector<8x32xf32>
    %465 = arith.subf %459, %464 : vector<8x32xf32>
    %466 = arith.mulf %465, %465 : vector<8x32xf32>
    %cst_226 = arith.constant dense<0.000000e+00> : vector<8xf32>
    %467 = vector.multi_reduction <add>, %466, %cst_226 [1] : vector<8x32xf32> to vector<8xf32>
    %468 = vector.shape_cast %467 : vector<8xf32> to vector<8x1xf32>
    %cst_227 = arith.constant 3.200000e+01 : f32
    %469 = vector.broadcast %cst_227 : f32 to vector<8x1xf32>
    %470 = arith.divf %468, %469 : vector<8x1xf32>
    %471 = vector.broadcast %463 : vector<8x1xf32> to vector<8x32xf32>
    %472 = arith.subf %459, %471 : vector<8x32xf32>
    %cst_228 = arith.constant 9.99999974E-6 : f32
    %473 = vector.broadcast %cst_228 : f32 to vector<8x1xf32>
    %474 = arith.addf %470, %473 : vector<8x1xf32>
    %475 = math.rsqrt %474 : vector<8x1xf32>
    %476 = vector.broadcast %475 : vector<8x1xf32> to vector<8x32xf32>
    %477 = arith.mulf %472, %476 : vector<8x32xf32>
    %478 = vector.broadcast %397 : vector<1x32xf32> to vector<8x32xf32>
    %479 = arith.mulf %477, %478 : vector<8x32xf32>
    %480 = vector.broadcast %399 : vector<1x32xf32> to vector<8x32xf32>
    %481 = arith.addf %479, %480 : vector<8x32xf32>
    %482 = tpu.concatenate %427, %449 in 0 : vector<8x8xf32>, vector<8x8xf32> -> vector<16x8xf32>
    %c0_229 = arith.constant 0 : index
    %c0_230 = arith.constant 0 : index
    %c0_231 = arith.constant 0 : index
    %483 = vector.load %arg67[%c0_229, %c0_230, %c0_231] : memref<1x32x8xf32, #tpu.memory_space<vmem>>, vector<1x16x8xf32>
    %484 = vector.shape_cast %483 : vector<1x16x8xf32> to vector<16x8xf32>
    %485 = vector.shape_cast %482 : vector<16x8xf32> to vector<1x16x8xf32>
    tpu.vector_store %arg67[%c0_229, %c0_230, %c0_231], %485 {strides = array<i32>} : memref<1x32x8xf32, #tpu.memory_space<vmem>>, vector<1x16x8xf32>,
    %c0_232 = arith.constant 0 : index
    %c0_233 = arith.constant 0 : index
    %c0_234 = arith.constant 0 : index
    %486 = vector.load %arg36[%c0_232, %c0_233, %c0_234] : memref<2x32x32xbf16, #tpu.memory_space<vmem>>, vector<1x32x32xbf16>
    %487 = vector.shape_cast %486 : vector<1x32x32xbf16> to vector<32x32xbf16>
    %c0_235 = arith.constant 0 : index
    %c0_236 = arith.constant 0 : index
    %c0_237 = arith.constant 0 : index
    %488 = vector.load %arg37[%c0_235, %c0_236, %c0_237] : memref<2x1x32xf32, #tpu.memory_space<vmem>>, vector<1x1x32xf32>
    %489 = vector.shape_cast %488 : vector<1x1x32xf32> to vector<1x32xf32>
    %c0_238 = arith.constant 0 : index
    %c0_239 = arith.constant 0 : index
    %c0_240 = arith.constant 0 : index
    %490 = vector.load %arg38[%c0_238, %c0_239, %c0_240] : memref<2x32x64xbf16, #tpu.memory_space<vmem>>, vector<1x32x64xbf16>
    %491 = vector.shape_cast %490 : vector<1x32x64xbf16> to vector<32x64xbf16>
    %c0_241 = arith.constant 0 : index
    %c0_242 = arith.constant 0 : index
    %c0_243 = arith.constant 0 : index
    %492 = vector.load %arg39[%c0_241, %c0_242, %c0_243] : memref<2x1x64xf32, #tpu.memory_space<vmem>>, vector<1x1x64xf32>
    %493 = vector.shape_cast %492 : vector<1x1x64xf32> to vector<1x64xf32>
    %c0_244 = arith.constant 0 : index
    %c0_245 = arith.constant 0 : index
    %c0_246 = arith.constant 0 : index
    %494 = vector.load %arg40[%c0_244, %c0_245, %c0_246] : memref<2x32x32xbf16, #tpu.memory_space<vmem>>, vector<1x32x32xbf16>
    %495 = vector.shape_cast %494 : vector<1x32x32xbf16> to vector<32x32xbf16>
    %c0_247 = arith.constant 0 : index
    %c0_248 = arith.constant 0 : index
    %c0_249 = arith.constant 0 : index
    %496 = vector.load %arg41[%c0_247, %c0_248, %c0_249] : memref<2x1x32xf32, #tpu.memory_space<vmem>>, vector<1x1x32xf32>
    %497 = vector.shape_cast %496 : vector<1x1x32xf32> to vector<1x32xf32>
    %c0_250 = arith.constant 0 : index
    %c0_251 = arith.constant 0 : index
    %c0_252 = arith.constant 0 : index
    %498 = vector.load %arg42[%c0_250, %c0_251, %c0_252] : memref<2x1x32xf32, #tpu.memory_space<vmem>>, vector<1x1x32xf32>
    %499 = vector.shape_cast %498 : vector<1x1x32xf32> to vector<1x32xf32>
    %c0_253 = arith.constant 0 : index
    %c0_254 = arith.constant 0 : index
    %c0_255 = arith.constant 0 : index
    %500 = vector.load %arg43[%c0_253, %c0_254, %c0_255] : memref<2x1x32xf32, #tpu.memory_space<vmem>>, vector<1x1x32xf32>
    %501 = vector.shape_cast %500 : vector<1x1x32xf32> to vector<1x32xf32>
    %502 = arith.truncf %481 : vector<8x32xf32> to vector<8x32xbf16>
    %cst_256 = arith.constant dense<0.000000e+00> : vector<8x32xf32>
    %503 = tpu.matmul %502, %487, %cst_256 {dimension_numbers = #tpu.dot_dimension_numbers<[1], [0], [0], [1], [0, 0, 1, 1], [], []>} : vector<8x32xbf16>, vector<32x32xbf16>, vector<8x32xf32> -> vector<8x32xf32>
    %504 = vector.broadcast %489 : vector<1x32xf32> to vector<8x32xf32>
    %505 = arith.addf %503, %504 : vector<8x32xf32>
    %506 = arith.truncf %353 : vector<8x32xf32> to vector<8x32xbf16>
    %cst_257 = arith.constant dense<0.000000e+00> : vector<8x64xf32>
    %507 = tpu.matmul %506, %491, %cst_257 {dimension_numbers = #tpu.dot_dimension_numbers<[1], [0], [0], [1], [0, 0, 1, 1], [], []>} : vector<8x32xbf16>, vector<32x64xbf16>, vector<8x64xf32> -> vector<8x64xf32>
    %508 = vector.broadcast %493 : vector<1x64xf32> to vector<8x64xf32>
    %509 = arith.addf %507, %508 : vector<8x64xf32>
    %510 = vector.extract_strided_slice %509 {offsets = [0, 0], sizes = [8, 32], strides = [1, 1]} : vector<8x64xf32> to vector<8x32xf32>
    %511 = vector.extract_strided_slice %509 {offsets = [0, 32], sizes = [8, 32], strides = [1, 1]} : vector<8x64xf32> to vector<8x32xf32>
    %512 = vector.extract_strided_slice %505 {offsets = [0, 0], sizes = [8, 16], strides = [1, 1]} : vector<8x32xf32> to vector<8x16xf32>
    %513 = arith.truncf %512 : vector<8x16xf32> to vector<8x16xbf16>
    %514 = vector.extract_strided_slice %510 {offsets = [0, 0], sizes = [8, 16], strides = [1, 1]} : vector<8x32xf32> to vector<8x16xf32>
    %515 = arith.truncf %514 : vector<8x16xf32> to vector<8x16xbf16>
    %cst_258 = arith.constant dense<0.000000e+00> : vector<8x8xf32>
    %516 = tpu.matmul %513, %515, %cst_258 {dimension_numbers = #tpu.dot_dimension_numbers<[1], [1], [0], [0], [0, 0, 1, 0], [], []>} : vector<8x16xbf16>, vector<8x16xbf16>, vector<8x8xf32> -> vector<8x8xf32>
    %cst_259 = arith.constant 2.500000e-01 : f32
    %517 = vector.broadcast %cst_259 : f32 to vector<8x8xf32>
    %518 = arith.mulf %516, %517 : vector<8x8xf32>
    %519 = vector.broadcast %1 : vector<1x8xf32> to vector<8x8xf32>
    %520 = arith.addf %518, %519 : vector<8x8xf32>
    %cst_260 = arith.constant dense<0xFF800000> : vector<8xf32>
    %521 = vector.multi_reduction <maximumf>, %520, %cst_260 [1] : vector<8x8xf32> to vector<8xf32>
    %522 = vector.shape_cast %521 : vector<8xf32> to vector<8x1xf32>
    %523 = vector.broadcast %522 : vector<8x1xf32> to vector<8x8xf32>
    %524 = arith.subf %520, %523 : vector<8x8xf32>
    %525 = math.exp %524 : vector<8x8xf32>
    %cst_261 = arith.constant dense<0.000000e+00> : vector<8xf32>
    %526 = vector.multi_reduction <add>, %525, %cst_261 [1] : vector<8x8xf32> to vector<8xf32>
    %527 = vector.shape_cast %526 : vector<8xf32> to vector<8x1xf32>
    %528 = tpu.reciprocal %527 {approx = true} : vector<8x1xf32> -> vector<8x1xf32>
    %529 = vector.broadcast %528 : vector<8x1xf32> to vector<8x8xf32>
    %530 = arith.mulf %525, %529 : vector<8x8xf32>
    %531 = arith.truncf %530 : vector<8x8xf32> to vector<8x8xbf16>
    %532 = vector.extract_strided_slice %511 {offsets = [0, 0], sizes = [8, 16], strides = [1, 1]} : vector<8x32xf32> to vector<8x16xf32>
    %533 = arith.truncf %532 : vector<8x16xf32> to vector<8x16xbf16>
    %cst_262 = arith.constant dense<0.000000e+00> : vector<8x16xf32>
    %534 = tpu.matmul %531, %533, %cst_262 {dimension_numbers = #tpu.dot_dimension_numbers<[1], [0], [0], [1], [0, 0, 1, 1], [], []>} : vector<8x8xbf16>, vector<8x16xbf16>, vector<8x16xf32> -> vector<8x16xf32>
    %535 = vector.extract_strided_slice %505 {offsets = [0, 16], sizes = [8, 16], strides = [1, 1]} : vector<8x32xf32> to vector<8x16xf32>
    %536 = arith.truncf %535 : vector<8x16xf32> to vector<8x16xbf16>
    %537 = vector.extract_strided_slice %510 {offsets = [0, 16], sizes = [8, 16], strides = [1, 1]} : vector<8x32xf32> to vector<8x16xf32>
    %538 = arith.truncf %537 : vector<8x16xf32> to vector<8x16xbf16>
    %cst_263 = arith.constant dense<0.000000e+00> : vector<8x8xf32>
    %539 = tpu.matmul %536, %538, %cst_263 {dimension_numbers = #tpu.dot_dimension_numbers<[1], [1], [0], [0], [0, 0, 1, 0], [], []>} : vector<8x16xbf16>, vector<8x16xbf16>, vector<8x8xf32> -> vector<8x8xf32>
    %cst_264 = arith.constant 2.500000e-01 : f32
    %540 = vector.broadcast %cst_264 : f32 to vector<8x8xf32>
    %541 = arith.mulf %539, %540 : vector<8x8xf32>
    %542 = vector.broadcast %1 : vector<1x8xf32> to vector<8x8xf32>
    %543 = arith.addf %541, %542 : vector<8x8xf32>
    %cst_265 = arith.constant dense<0xFF800000> : vector<8xf32>
    %544 = vector.multi_reduction <maximumf>, %543, %cst_265 [1] : vector<8x8xf32> to vector<8xf32>
    %545 = vector.shape_cast %544 : vector<8xf32> to vector<8x1xf32>
    %546 = vector.broadcast %545 : vector<8x1xf32> to vector<8x8xf32>
    %547 = arith.subf %543, %546 : vector<8x8xf32>
    %548 = math.exp %547 : vector<8x8xf32>
    %cst_266 = arith.constant dense<0.000000e+00> : vector<8xf32>
    %549 = vector.multi_reduction <add>, %548, %cst_266 [1] : vector<8x8xf32> to vector<8xf32>
    %550 = vector.shape_cast %549 : vector<8xf32> to vector<8x1xf32>
    %551 = tpu.reciprocal %550 {approx = true} : vector<8x1xf32> -> vector<8x1xf32>
    %552 = vector.broadcast %551 : vector<8x1xf32> to vector<8x8xf32>
    %553 = arith.mulf %548, %552 : vector<8x8xf32>
    %554 = arith.truncf %553 : vector<8x8xf32> to vector<8x8xbf16>
    %555 = vector.extract_strided_slice %511 {offsets = [0, 16], sizes = [8, 16], strides = [1, 1]} : vector<8x32xf32> to vector<8x16xf32>
    %556 = arith.truncf %555 : vector<8x16xf32> to vector<8x16xbf16>
    %cst_267 = arith.constant dense<0.000000e+00> : vector<8x16xf32>
    %557 = tpu.matmul %554, %556, %cst_267 {dimension_numbers = #tpu.dot_dimension_numbers<[1], [0], [0], [1], [0, 0, 1, 1], [], []>} : vector<8x8xbf16>, vector<8x16xbf16>, vector<8x16xf32> -> vector<8x16xf32>
    %558 = tpu.concatenate %534, %557 in 1 : vector<8x16xf32>, vector<8x16xf32> -> vector<8x32xf32>
    %559 = arith.truncf %558 : vector<8x32xf32> to vector<8x32xbf16>
    %cst_268 = arith.constant dense<0.000000e+00> : vector<8x32xf32>
    %560 = tpu.matmul %559, %495, %cst_268 {dimension_numbers = #tpu.dot_dimension_numbers<[1], [0], [0], [1], [0, 0, 1, 1], [], []>} : vector<8x32xbf16>, vector<32x32xbf16>, vector<8x32xf32> -> vector<8x32xf32>
    %561 = vector.broadcast %497 : vector<1x32xf32> to vector<8x32xf32>
    %562 = arith.addf %560, %561 : vector<8x32xf32>
    %563 = arith.addf %481, %562 : vector<8x32xf32>
    %cst_269 = arith.constant dense<0.000000e+00> : vector<8xf32>
    %564 = vector.multi_reduction <add>, %563, %cst_269 [1] : vector<8x32xf32> to vector<8xf32>
    %565 = vector.shape_cast %564 : vector<8xf32> to vector<8x1xf32>
    %cst_270 = arith.constant 3.200000e+01 : f32
    %566 = vector.broadcast %cst_270 : f32 to vector<8x1xf32>
    %567 = arith.divf %565, %566 : vector<8x1xf32>
    %568 = vector.broadcast %567 : vector<8x1xf32> to vector<8x32xf32>
    %569 = arith.subf %563, %568 : vector<8x32xf32>
    %570 = arith.mulf %569, %569 : vector<8x32xf32>
    %cst_271 = arith.constant dense<0.000000e+00> : vector<8xf32>
    %571 = vector.multi_reduction <add>, %570, %cst_271 [1] : vector<8x32xf32> to vector<8xf32>
    %572 = vector.shape_cast %571 : vector<8xf32> to vector<8x1xf32>
    %cst_272 = arith.constant 3.200000e+01 : f32
    %573 = vector.broadcast %cst_272 : f32 to vector<8x1xf32>
    %574 = arith.divf %572, %573 : vector<8x1xf32>
    %575 = vector.broadcast %567 : vector<8x1xf32> to vector<8x32xf32>
    %576 = arith.subf %563, %575 : vector<8x32xf32>
    %cst_273 = arith.constant 9.99999974E-6 : f32
    %577 = vector.broadcast %cst_273 : f32 to vector<8x1xf32>
    %578 = arith.addf %574, %577 : vector<8x1xf32>
    %579 = math.rsqrt %578 : vector<8x1xf32>
    %580 = vector.broadcast %579 : vector<8x1xf32> to vector<8x32xf32>
    %581 = arith.mulf %576, %580 : vector<8x32xf32>
    %582 = vector.broadcast %499 : vector<1x32xf32> to vector<8x32xf32>
    %583 = arith.mulf %581, %582 : vector<8x32xf32>
    %584 = vector.broadcast %501 : vector<1x32xf32> to vector<8x32xf32>
    %585 = arith.addf %583, %584 : vector<8x32xf32>
    %586 = tpu.concatenate %530, %553 in 0 : vector<8x8xf32>, vector<8x8xf32> -> vector<16x8xf32>
    %c0_274 = arith.constant 0 : index
    %c0_275 = arith.constant 0 : index
    %c0_276 = arith.constant 0 : index
    %587 = vector.load %arg68[%c0_274, %c0_275, %c0_276] : memref<1x32x8xf32, #tpu.memory_space<vmem>>, vector<1x16x8xf32>
    %588 = vector.shape_cast %587 : vector<1x16x8xf32> to vector<16x8xf32>
    %589 = vector.shape_cast %586 : vector<16x8xf32> to vector<1x16x8xf32>
    tpu.vector_store %arg68[%c0_274, %c0_275, %c0_276], %589 {strides = array<i32>} : memref<1x32x8xf32, #tpu.memory_space<vmem>>, vector<1x16x8xf32>,
    %c0_277 = arith.constant 0 : index
    %c0_278 = arith.constant 0 : index
    %c0_279 = arith.constant 0 : index
    %590 = vector.load %arg44[%c0_277, %c0_278, %c0_279] : memref<2x96x64xbf16, #tpu.memory_space<vmem>>, vector<1x96x64xbf16>
    %591 = vector.shape_cast %590 : vector<1x96x64xbf16> to vector<96x64xbf16>
    %c0_280 = arith.constant 0 : index
    %c0_281 = arith.constant 0 : index
    %c0_282 = arith.constant 0 : index
    %592 = vector.load %arg45[%c0_280, %c0_281, %c0_282] : memref<2x1x64xf32, #tpu.memory_space<vmem>>, vector<1x1x64xf32>
    %593 = vector.shape_cast %592 : vector<1x1x64xf32> to vector<1x64xf32>
    %c0_283 = arith.constant 0 : index
    %c0_284 = arith.constant 0 : index
    %c0_285 = arith.constant 0 : index
    %594 = vector.load %arg46[%c0_283, %c0_284, %c0_285] : memref<2x192x32xbf16, #tpu.memory_space<vmem>>, vector<1x192x32xbf16>
    %595 = vector.shape_cast %594 : vector<1x192x32xbf16> to vector<192x32xbf16>
    %c0_286 = arith.constant 0 : index
    %c0_287 = arith.constant 0 : index
    %c0_288 = arith.constant 0 : index
    %596 = vector.load %arg47[%c0_286, %c0_287, %c0_288] : memref<2x1x32xf32, #tpu.memory_space<vmem>>, vector<1x1x32xf32>
    %597 = vector.shape_cast %596 : vector<1x1x32xf32> to vector<1x32xf32>
    %c0_289 = arith.constant 0 : index
    %c0_290 = arith.constant 0 : index
    %c0_291 = arith.constant 0 : index
    %598 = vector.load %arg48[%c0_289, %c0_290, %c0_291] : memref<2x1x32xf32, #tpu.memory_space<vmem>>, vector<1x1x32xf32>
    %599 = vector.shape_cast %598 : vector<1x1x32xf32> to vector<1x32xf32>
    %c0_292 = arith.constant 0 : index
    %c0_293 = arith.constant 0 : index
    %c0_294 = arith.constant 0 : index
    %600 = vector.load %arg49[%c0_292, %c0_293, %c0_294] : memref<2x1x32xf32, #tpu.memory_space<vmem>>, vector<1x1x32xf32>
    %601 = vector.shape_cast %600 : vector<1x1x32xf32> to vector<1x32xf32>
    %cst_295 = arith.constant 0.000000e+00 : f32
    %602 = vector.broadcast %cst_295 : f32 to vector<1x32xf32>
    %cst_296 = arith.constant 0.000000e+00 : f32
    %603 = vector.broadcast %cst_296 : f32 to vector<1x32xf32>
    %604 = tpu.concatenate %602, %585, %603 in 0 : vector<1x32xf32>, vector<8x32xf32>, vector<1x32xf32> -> vector<10x32xf32>
    %605 = vector.extract_strided_slice %604 {offsets = [0, 0], sizes = [8, 32], strides = [1, 1]} : vector<10x32xf32> to vector<8x32xf32>
    %606 = vector.extract_strided_slice %604 {offsets = [1, 0], sizes = [8, 32], strides = [1, 1]} : vector<10x32xf32> to vector<8x32xf32>
    %607 = vector.extract_strided_slice %604 {offsets = [2, 0], sizes = [8, 32], strides = [1, 1]} : vector<10x32xf32> to vector<8x32xf32>
    %608 = tpu.concatenate %605, %606, %607 in 1 : vector<8x32xf32>, vector<8x32xf32>, vector<8x32xf32> -> vector<8x96xf32>
    %609 = arith.truncf %608 : vector<8x96xf32> to vector<8x96xbf16>
    %cst_297 = arith.constant dense<0.000000e+00> : vector<8x64xf32>
    %610 = tpu.matmul %609, %591, %cst_297 {dimension_numbers = #tpu.dot_dimension_numbers<[1], [0], [0], [1], [0, 0, 1, 1], [], []>} : vector<8x96xbf16>, vector<96x64xbf16>, vector<8x64xf32> -> vector<8x64xf32>
    %611 = vector.broadcast %593 : vector<1x64xf32> to vector<8x64xf32>
    %612 = arith.addf %610, %611 : vector<8x64xf32>
    %cst_298 = arith.constant 0.000000e+00 : f32
    %613 = vector.broadcast %cst_298 : f32 to vector<8x64xf32>
    %614 = arith.maximumf %612, %613 : vector<8x64xf32>
    %cst_299 = arith.constant 0.000000e+00 : f32
    %615 = vector.broadcast %cst_299 : f32 to vector<1x64xf32>
    %cst_300 = arith.constant 0.000000e+00 : f32
    %616 = vector.broadcast %cst_300 : f32 to vector<1x64xf32>
    %617 = tpu.concatenate %615, %614, %616 in 0 : vector<1x64xf32>, vector<8x64xf32>, vector<1x64xf32> -> vector<10x64xf32>
    %618 = vector.extract_strided_slice %617 {offsets = [0, 0], sizes = [8, 64], strides = [1, 1]} : vector<10x64xf32> to vector<8x64xf32>
    %619 = vector.extract_strided_slice %617 {offsets = [1, 0], sizes = [8, 64], strides = [1, 1]} : vector<10x64xf32> to vector<8x64xf32>
    %620 = vector.extract_strided_slice %617 {offsets = [2, 0], sizes = [8, 64], strides = [1, 1]} : vector<10x64xf32> to vector<8x64xf32>
    %621 = tpu.concatenate %618, %619, %620 in 1 : vector<8x64xf32>, vector<8x64xf32>, vector<8x64xf32> -> vector<8x192xf32>
    %622 = arith.truncf %621 : vector<8x192xf32> to vector<8x192xbf16>
    %cst_301 = arith.constant dense<0.000000e+00> : vector<8x32xf32>
    %623 = tpu.matmul %622, %595, %cst_301 {dimension_numbers = #tpu.dot_dimension_numbers<[1], [0], [0], [1], [0, 0, 1, 1], [], []>} : vector<8x192xbf16>, vector<192x32xbf16>, vector<8x32xf32> -> vector<8x32xf32>
    %624 = vector.broadcast %597 : vector<1x32xf32> to vector<8x32xf32>
    %625 = arith.addf %623, %624 : vector<8x32xf32>
    %626 = arith.addf %585, %625 : vector<8x32xf32>
    %cst_302 = arith.constant dense<0.000000e+00> : vector<8xf32>
    %627 = vector.multi_reduction <add>, %626, %cst_302 [1] : vector<8x32xf32> to vector<8xf32>
    %628 = vector.shape_cast %627 : vector<8xf32> to vector<8x1xf32>
    %cst_303 = arith.constant 3.200000e+01 : f32
    %629 = vector.broadcast %cst_303 : f32 to vector<8x1xf32>
    %630 = arith.divf %628, %629 : vector<8x1xf32>
    %631 = vector.broadcast %630 : vector<8x1xf32> to vector<8x32xf32>
    %632 = arith.subf %626, %631 : vector<8x32xf32>
    %633 = arith.mulf %632, %632 : vector<8x32xf32>
    %cst_304 = arith.constant dense<0.000000e+00> : vector<8xf32>
    %634 = vector.multi_reduction <add>, %633, %cst_304 [1] : vector<8x32xf32> to vector<8xf32>
    %635 = vector.shape_cast %634 : vector<8xf32> to vector<8x1xf32>
    %cst_305 = arith.constant 3.200000e+01 : f32
    %636 = vector.broadcast %cst_305 : f32 to vector<8x1xf32>
    %637 = arith.divf %635, %636 : vector<8x1xf32>
    %638 = vector.broadcast %630 : vector<8x1xf32> to vector<8x32xf32>
    %639 = arith.subf %626, %638 : vector<8x32xf32>
    %cst_306 = arith.constant 9.99999974E-6 : f32
    %640 = vector.broadcast %cst_306 : f32 to vector<8x1xf32>
    %641 = arith.addf %637, %640 : vector<8x1xf32>
    %642 = math.rsqrt %641 : vector<8x1xf32>
    %643 = vector.broadcast %642 : vector<8x1xf32> to vector<8x32xf32>
    %644 = arith.mulf %639, %643 : vector<8x32xf32>
    %645 = vector.broadcast %599 : vector<1x32xf32> to vector<8x32xf32>
    %646 = arith.mulf %644, %645 : vector<8x32xf32>
    %647 = vector.broadcast %601 : vector<1x32xf32> to vector<8x32xf32>
    %648 = arith.addf %646, %647 : vector<8x32xf32>
    %c1_307 = arith.constant 1 : index
    %c0_308 = arith.constant 0 : index
    %c0_309 = arith.constant 0 : index
    %649 = vector.load %arg28[%c1_307, %c0_308, %c0_309] : memref<2x32x32xbf16, #tpu.memory_space<vmem>>, vector<1x32x32xbf16>
    %650 = vector.shape_cast %649 : vector<1x32x32xbf16> to vector<32x32xbf16>
    %c1_310 = arith.constant 1 : index
    %c0_311 = arith.constant 0 : index
    %c0_312 = arith.constant 0 : index
    %651 = vector.load %arg29[%c1_310, %c0_311, %c0_312] : memref<2x1x32xf32, #tpu.memory_space<vmem>>, vector<1x1x32xf32>
    %652 = vector.shape_cast %651 : vector<1x1x32xf32> to vector<1x32xf32>
    %c1_313 = arith.constant 1 : index
    %c0_314 = arith.constant 0 : index
    %c0_315 = arith.constant 0 : index
    %653 = vector.load %arg30[%c1_313, %c0_314, %c0_315] : memref<2x32x64xbf16, #tpu.memory_space<vmem>>, vector<1x32x64xbf16>
    %654 = vector.shape_cast %653 : vector<1x32x64xbf16> to vector<32x64xbf16>
    %c1_316 = arith.constant 1 : index
    %c0_317 = arith.constant 0 : index
    %c0_318 = arith.constant 0 : index
    %655 = vector.load %arg31[%c1_316, %c0_317, %c0_318] : memref<2x1x64xf32, #tpu.memory_space<vmem>>, vector<1x1x64xf32>
    %656 = vector.shape_cast %655 : vector<1x1x64xf32> to vector<1x64xf32>
    %c1_319 = arith.constant 1 : index
    %c0_320 = arith.constant 0 : index
    %c0_321 = arith.constant 0 : index
    %657 = vector.load %arg32[%c1_319, %c0_320, %c0_321] : memref<2x32x32xbf16, #tpu.memory_space<vmem>>, vector<1x32x32xbf16>
    %658 = vector.shape_cast %657 : vector<1x32x32xbf16> to vector<32x32xbf16>
    %c1_322 = arith.constant 1 : index
    %c0_323 = arith.constant 0 : index
    %c0_324 = arith.constant 0 : index
    %659 = vector.load %arg33[%c1_322, %c0_323, %c0_324] : memref<2x1x32xf32, #tpu.memory_space<vmem>>, vector<1x1x32xf32>
    %660 = vector.shape_cast %659 : vector<1x1x32xf32> to vector<1x32xf32>
    %c1_325 = arith.constant 1 : index
    %c0_326 = arith.constant 0 : index
    %c0_327 = arith.constant 0 : index
    %661 = vector.load %arg34[%c1_325, %c0_326, %c0_327] : memref<2x1x32xf32, #tpu.memory_space<vmem>>, vector<1x1x32xf32>
    %662 = vector.shape_cast %661 : vector<1x1x32xf32> to vector<1x32xf32>
    %c1_328 = arith.constant 1 : index
    %c0_329 = arith.constant 0 : index
    %c0_330 = arith.constant 0 : index
    %663 = vector.load %arg35[%c1_328, %c0_329, %c0_330] : memref<2x1x32xf32, #tpu.memory_space<vmem>>, vector<1x1x32xf32>
    %664 = vector.shape_cast %663 : vector<1x1x32xf32> to vector<1x32xf32>
    %665 = arith.truncf %648 : vector<8x32xf32> to vector<8x32xbf16>
    %cst_331 = arith.constant dense<0.000000e+00> : vector<8x32xf32>
    %666 = tpu.matmul %665, %650, %cst_331 {dimension_numbers = #tpu.dot_dimension_numbers<[1], [0], [0], [1], [0, 0, 1, 1], [], []>} : vector<8x32xbf16>, vector<32x32xbf16>, vector<8x32xf32> -> vector<8x32xf32>
    %667 = vector.broadcast %652 : vector<1x32xf32> to vector<8x32xf32>
    %668 = arith.addf %666, %667 : vector<8x32xf32>
    %669 = arith.truncf %648 : vector<8x32xf32> to vector<8x32xbf16>
    %cst_332 = arith.constant dense<0.000000e+00> : vector<8x64xf32>
    %670 = tpu.matmul %669, %654, %cst_332 {dimension_numbers = #tpu.dot_dimension_numbers<[1], [0], [0], [1], [0, 0, 1, 1], [], []>} : vector<8x32xbf16>, vector<32x64xbf16>, vector<8x64xf32> -> vector<8x64xf32>
    %671 = vector.broadcast %656 : vector<1x64xf32> to vector<8x64xf32>
    %672 = arith.addf %670, %671 : vector<8x64xf32>
    %673 = vector.extract_strided_slice %672 {offsets = [0, 0], sizes = [8, 32], strides = [1, 1]} : vector<8x64xf32> to vector<8x32xf32>
    %674 = vector.extract_strided_slice %672 {offsets = [0, 32], sizes = [8, 32], strides = [1, 1]} : vector<8x64xf32> to vector<8x32xf32>
    %675 = vector.extract_strided_slice %668 {offsets = [0, 0], sizes = [8, 16], strides = [1, 1]} : vector<8x32xf32> to vector<8x16xf32>
    %676 = arith.truncf %675 : vector<8x16xf32> to vector<8x16xbf16>
    %677 = vector.extract_strided_slice %673 {offsets = [0, 0], sizes = [8, 16], strides = [1, 1]} : vector<8x32xf32> to vector<8x16xf32>
    %678 = arith.truncf %677 : vector<8x16xf32> to vector<8x16xbf16>
    %cst_333 = arith.constant dense<0.000000e+00> : vector<8x8xf32>
    %679 = tpu.matmul %676, %678, %cst_333 {dimension_numbers = #tpu.dot_dimension_numbers<[1], [1], [0], [0], [0, 0, 1, 0], [], []>} : vector<8x16xbf16>, vector<8x16xbf16>, vector<8x8xf32> -> vector<8x8xf32>
    %cst_334 = arith.constant 2.500000e-01 : f32
    %680 = vector.broadcast %cst_334 : f32 to vector<8x8xf32>
    %681 = arith.mulf %679, %680 : vector<8x8xf32>
    %682 = arith.addf %681, %383 : vector<8x8xf32>
    %cst_335 = arith.constant dense<0xFF800000> : vector<8xf32>
    %683 = vector.multi_reduction <maximumf>, %682, %cst_335 [1] : vector<8x8xf32> to vector<8xf32>
    %684 = vector.shape_cast %683 : vector<8xf32> to vector<8x1xf32>
    %685 = vector.broadcast %684 : vector<8x1xf32> to vector<8x8xf32>
    %686 = arith.subf %682, %685 : vector<8x8xf32>
    %687 = math.exp %686 : vector<8x8xf32>
    %cst_336 = arith.constant dense<0.000000e+00> : vector<8xf32>
    %688 = vector.multi_reduction <add>, %687, %cst_336 [1] : vector<8x8xf32> to vector<8xf32>
    %689 = vector.shape_cast %688 : vector<8xf32> to vector<8x1xf32>
    %690 = tpu.reciprocal %689 {approx = true} : vector<8x1xf32> -> vector<8x1xf32>
    %691 = vector.broadcast %690 : vector<8x1xf32> to vector<8x8xf32>
    %692 = arith.mulf %687, %691 : vector<8x8xf32>
    %693 = arith.truncf %692 : vector<8x8xf32> to vector<8x8xbf16>
    %694 = vector.extract_strided_slice %674 {offsets = [0, 0], sizes = [8, 16], strides = [1, 1]} : vector<8x32xf32> to vector<8x16xf32>
    %695 = arith.truncf %694 : vector<8x16xf32> to vector<8x16xbf16>
    %cst_337 = arith.constant dense<0.000000e+00> : vector<8x16xf32>
    %696 = tpu.matmul %693, %695, %cst_337 {dimension_numbers = #tpu.dot_dimension_numbers<[1], [0], [0], [1], [0, 0, 1, 1], [], []>} : vector<8x8xbf16>, vector<8x16xbf16>, vector<8x16xf32> -> vector<8x16xf32>
    %697 = vector.extract_strided_slice %668 {offsets = [0, 16], sizes = [8, 16], strides = [1, 1]} : vector<8x32xf32> to vector<8x16xf32>
    %698 = arith.truncf %697 : vector<8x16xf32> to vector<8x16xbf16>
    %699 = vector.extract_strided_slice %673 {offsets = [0, 16], sizes = [8, 16], strides = [1, 1]} : vector<8x32xf32> to vector<8x16xf32>
    %700 = arith.truncf %699 : vector<8x16xf32> to vector<8x16xbf16>
    %cst_338 = arith.constant dense<0.000000e+00> : vector<8x8xf32>
    %701 = tpu.matmul %698, %700, %cst_338 {dimension_numbers = #tpu.dot_dimension_numbers<[1], [1], [0], [0], [0, 0, 1, 0], [], []>} : vector<8x16xbf16>, vector<8x16xbf16>, vector<8x8xf32> -> vector<8x8xf32>
    %cst_339 = arith.constant 2.500000e-01 : f32
    %702 = vector.broadcast %cst_339 : f32 to vector<8x8xf32>
    %703 = arith.mulf %701, %702 : vector<8x8xf32>
    %704 = arith.addf %703, %383 : vector<8x8xf32>
    %cst_340 = arith.constant dense<0xFF800000> : vector<8xf32>
    %705 = vector.multi_reduction <maximumf>, %704, %cst_340 [1] : vector<8x8xf32> to vector<8xf32>
    %706 = vector.shape_cast %705 : vector<8xf32> to vector<8x1xf32>
    %707 = vector.broadcast %706 : vector<8x1xf32> to vector<8x8xf32>
    %708 = arith.subf %704, %707 : vector<8x8xf32>
    %709 = math.exp %708 : vector<8x8xf32>
    %cst_341 = arith.constant dense<0.000000e+00> : vector<8xf32>
    %710 = vector.multi_reduction <add>, %709, %cst_341 [1] : vector<8x8xf32> to vector<8xf32>
    %711 = vector.shape_cast %710 : vector<8xf32> to vector<8x1xf32>
    %712 = tpu.reciprocal %711 {approx = true} : vector<8x1xf32> -> vector<8x1xf32>
    %713 = vector.broadcast %712 : vector<8x1xf32> to vector<8x8xf32>
    %714 = arith.mulf %709, %713 : vector<8x8xf32>
    %715 = arith.truncf %714 : vector<8x8xf32> to vector<8x8xbf16>
    %716 = vector.extract_strided_slice %674 {offsets = [0, 16], sizes = [8, 16], strides = [1, 1]} : vector<8x32xf32> to vector<8x16xf32>
    %717 = arith.truncf %716 : vector<8x16xf32> to vector<8x16xbf16>
    %cst_342 = arith.constant dense<0.000000e+00> : vector<8x16xf32>
    %718 = tpu.matmul %715, %717, %cst_342 {dimension_numbers = #tpu.dot_dimension_numbers<[1], [0], [0], [1], [0, 0, 1, 1], [], []>} : vector<8x8xbf16>, vector<8x16xbf16>, vector<8x16xf32> -> vector<8x16xf32>
    %719 = tpu.concatenate %696, %718 in 1 : vector<8x16xf32>, vector<8x16xf32> -> vector<8x32xf32>
    %720 = arith.truncf %719 : vector<8x32xf32> to vector<8x32xbf16>
    %cst_343 = arith.constant dense<0.000000e+00> : vector<8x32xf32>
    %721 = tpu.matmul %720, %658, %cst_343 {dimension_numbers = #tpu.dot_dimension_numbers<[1], [0], [0], [1], [0, 0, 1, 1], [], []>} : vector<8x32xbf16>, vector<32x32xbf16>, vector<8x32xf32> -> vector<8x32xf32>
    %722 = vector.broadcast %660 : vector<1x32xf32> to vector<8x32xf32>
    %723 = arith.addf %721, %722 : vector<8x32xf32>
    %724 = arith.addf %648, %723 : vector<8x32xf32>
    %cst_344 = arith.constant dense<0.000000e+00> : vector<8xf32>
    %725 = vector.multi_reduction <add>, %724, %cst_344 [1] : vector<8x32xf32> to vector<8xf32>
    %726 = vector.shape_cast %725 : vector<8xf32> to vector<8x1xf32>
    %cst_345 = arith.constant 3.200000e+01 : f32
    %727 = vector.broadcast %cst_345 : f32 to vector<8x1xf32>
    %728 = arith.divf %726, %727 : vector<8x1xf32>
    %729 = vector.broadcast %728 : vector<8x1xf32> to vector<8x32xf32>
    %730 = arith.subf %724, %729 : vector<8x32xf32>
    %731 = arith.mulf %730, %730 : vector<8x32xf32>
    %cst_346 = arith.constant dense<0.000000e+00> : vector<8xf32>
    %732 = vector.multi_reduction <add>, %731, %cst_346 [1] : vector<8x32xf32> to vector<8xf32>
    %733 = vector.shape_cast %732 : vector<8xf32> to vector<8x1xf32>
    %cst_347 = arith.constant 3.200000e+01 : f32
    %734 = vector.broadcast %cst_347 : f32 to vector<8x1xf32>
    %735 = arith.divf %733, %734 : vector<8x1xf32>
    %736 = vector.broadcast %728 : vector<8x1xf32> to vector<8x32xf32>
    %737 = arith.subf %724, %736 : vector<8x32xf32>
    %cst_348 = arith.constant 9.99999974E-6 : f32
    %738 = vector.broadcast %cst_348 : f32 to vector<8x1xf32>
    %739 = arith.addf %735, %738 : vector<8x1xf32>
    %740 = math.rsqrt %739 : vector<8x1xf32>
    %741 = vector.broadcast %740 : vector<8x1xf32> to vector<8x32xf32>
    %742 = arith.mulf %737, %741 : vector<8x32xf32>
    %743 = vector.broadcast %662 : vector<1x32xf32> to vector<8x32xf32>
    %744 = arith.mulf %742, %743 : vector<8x32xf32>
    %745 = vector.broadcast %664 : vector<1x32xf32> to vector<8x32xf32>
    %746 = arith.addf %744, %745 : vector<8x32xf32>
    %747 = tpu.concatenate %692, %714 in 0 : vector<8x8xf32>, vector<8x8xf32> -> vector<16x8xf32>
    %c0_349 = arith.constant 0 : index
    %c16_350 = arith.constant 16 : index
    %c0_351 = arith.constant 0 : index
    %748 = vector.load %arg67[%c0_349, %c16_350, %c0_351] : memref<1x32x8xf32, #tpu.memory_space<vmem>>, vector<1x16x8xf32>
    %749 = vector.shape_cast %748 : vector<1x16x8xf32> to vector<16x8xf32>
    %750 = vector.shape_cast %747 : vector<16x8xf32> to vector<1x16x8xf32>
    tpu.vector_store %arg67[%c0_349, %c16_350, %c0_351], %750 {strides = array<i32>} : memref<1x32x8xf32, #tpu.memory_space<vmem>>, vector<1x16x8xf32>,
    %c1_352 = arith.constant 1 : index
    %c0_353 = arith.constant 0 : index
    %c0_354 = arith.constant 0 : index
    %751 = vector.load %arg36[%c1_352, %c0_353, %c0_354] : memref<2x32x32xbf16, #tpu.memory_space<vmem>>, vector<1x32x32xbf16>
    %752 = vector.shape_cast %751 : vector<1x32x32xbf16> to vector<32x32xbf16>
    %c1_355 = arith.constant 1 : index
    %c0_356 = arith.constant 0 : index
    %c0_357 = arith.constant 0 : index
    %753 = vector.load %arg37[%c1_355, %c0_356, %c0_357] : memref<2x1x32xf32, #tpu.memory_space<vmem>>, vector<1x1x32xf32>
    %754 = vector.shape_cast %753 : vector<1x1x32xf32> to vector<1x32xf32>
    %c1_358 = arith.constant 1 : index
    %c0_359 = arith.constant 0 : index
    %c0_360 = arith.constant 0 : index
    %755 = vector.load %arg38[%c1_358, %c0_359, %c0_360] : memref<2x32x64xbf16, #tpu.memory_space<vmem>>, vector<1x32x64xbf16>
    %756 = vector.shape_cast %755 : vector<1x32x64xbf16> to vector<32x64xbf16>
    %c1_361 = arith.constant 1 : index
    %c0_362 = arith.constant 0 : index
    %c0_363 = arith.constant 0 : index
    %757 = vector.load %arg39[%c1_361, %c0_362, %c0_363] : memref<2x1x64xf32, #tpu.memory_space<vmem>>, vector<1x1x64xf32>
    %758 = vector.shape_cast %757 : vector<1x1x64xf32> to vector<1x64xf32>
    %c1_364 = arith.constant 1 : index
    %c0_365 = arith.constant 0 : index
    %c0_366 = arith.constant 0 : index
    %759 = vector.load %arg40[%c1_364, %c0_365, %c0_366] : memref<2x32x32xbf16, #tpu.memory_space<vmem>>, vector<1x32x32xbf16>
    %760 = vector.shape_cast %759 : vector<1x32x32xbf16> to vector<32x32xbf16>
    %c1_367 = arith.constant 1 : index
    %c0_368 = arith.constant 0 : index
    %c0_369 = arith.constant 0 : index
    %761 = vector.load %arg41[%c1_367, %c0_368, %c0_369] : memref<2x1x32xf32, #tpu.memory_space<vmem>>, vector<1x1x32xf32>
    %762 = vector.shape_cast %761 : vector<1x1x32xf32> to vector<1x32xf32>
    %c1_370 = arith.constant 1 : index
    %c0_371 = arith.constant 0 : index
    %c0_372 = arith.constant 0 : index
    %763 = vector.load %arg42[%c1_370, %c0_371, %c0_372] : memref<2x1x32xf32, #tpu.memory_space<vmem>>, vector<1x1x32xf32>
    %764 = vector.shape_cast %763 : vector<1x1x32xf32> to vector<1x32xf32>
    %c1_373 = arith.constant 1 : index
    %c0_374 = arith.constant 0 : index
    %c0_375 = arith.constant 0 : index
    %765 = vector.load %arg43[%c1_373, %c0_374, %c0_375] : memref<2x1x32xf32, #tpu.memory_space<vmem>>, vector<1x1x32xf32>
    %766 = vector.shape_cast %765 : vector<1x1x32xf32> to vector<1x32xf32>
    %767 = arith.truncf %746 : vector<8x32xf32> to vector<8x32xbf16>
    %cst_376 = arith.constant dense<0.000000e+00> : vector<8x32xf32>
    %768 = tpu.matmul %767, %752, %cst_376 {dimension_numbers = #tpu.dot_dimension_numbers<[1], [0], [0], [1], [0, 0, 1, 1], [], []>} : vector<8x32xbf16>, vector<32x32xbf16>, vector<8x32xf32> -> vector<8x32xf32>
    %769 = vector.broadcast %754 : vector<1x32xf32> to vector<8x32xf32>
    %770 = arith.addf %768, %769 : vector<8x32xf32>
    %771 = arith.truncf %353 : vector<8x32xf32> to vector<8x32xbf16>
    %cst_377 = arith.constant dense<0.000000e+00> : vector<8x64xf32>
    %772 = tpu.matmul %771, %756, %cst_377 {dimension_numbers = #tpu.dot_dimension_numbers<[1], [0], [0], [1], [0, 0, 1, 1], [], []>} : vector<8x32xbf16>, vector<32x64xbf16>, vector<8x64xf32> -> vector<8x64xf32>
    %773 = vector.broadcast %758 : vector<1x64xf32> to vector<8x64xf32>
    %774 = arith.addf %772, %773 : vector<8x64xf32>
    %775 = vector.extract_strided_slice %774 {offsets = [0, 0], sizes = [8, 32], strides = [1, 1]} : vector<8x64xf32> to vector<8x32xf32>
    %776 = vector.extract_strided_slice %774 {offsets = [0, 32], sizes = [8, 32], strides = [1, 1]} : vector<8x64xf32> to vector<8x32xf32>
    %777 = vector.extract_strided_slice %770 {offsets = [0, 0], sizes = [8, 16], strides = [1, 1]} : vector<8x32xf32> to vector<8x16xf32>
    %778 = arith.truncf %777 : vector<8x16xf32> to vector<8x16xbf16>
    %779 = vector.extract_strided_slice %775 {offsets = [0, 0], sizes = [8, 16], strides = [1, 1]} : vector<8x32xf32> to vector<8x16xf32>
    %780 = arith.truncf %779 : vector<8x16xf32> to vector<8x16xbf16>
    %cst_378 = arith.constant dense<0.000000e+00> : vector<8x8xf32>
    %781 = tpu.matmul %778, %780, %cst_378 {dimension_numbers = #tpu.dot_dimension_numbers<[1], [1], [0], [0], [0, 0, 1, 0], [], []>} : vector<8x16xbf16>, vector<8x16xbf16>, vector<8x8xf32> -> vector<8x8xf32>
    %cst_379 = arith.constant 2.500000e-01 : f32
    %782 = vector.broadcast %cst_379 : f32 to vector<8x8xf32>
    %783 = arith.mulf %781, %782 : vector<8x8xf32>
    %784 = vector.broadcast %1 : vector<1x8xf32> to vector<8x8xf32>
    %785 = arith.addf %783, %784 : vector<8x8xf32>
    %cst_380 = arith.constant dense<0xFF800000> : vector<8xf32>
    %786 = vector.multi_reduction <maximumf>, %785, %cst_380 [1] : vector<8x8xf32> to vector<8xf32>
    %787 = vector.shape_cast %786 : vector<8xf32> to vector<8x1xf32>
    %788 = vector.broadcast %787 : vector<8x1xf32> to vector<8x8xf32>
    %789 = arith.subf %785, %788 : vector<8x8xf32>
    %790 = math.exp %789 : vector<8x8xf32>
    %cst_381 = arith.constant dense<0.000000e+00> : vector<8xf32>
    %791 = vector.multi_reduction <add>, %790, %cst_381 [1] : vector<8x8xf32> to vector<8xf32>
    %792 = vector.shape_cast %791 : vector<8xf32> to vector<8x1xf32>
    %793 = tpu.reciprocal %792 {approx = true} : vector<8x1xf32> -> vector<8x1xf32>
    %794 = vector.broadcast %793 : vector<8x1xf32> to vector<8x8xf32>
    %795 = arith.mulf %790, %794 : vector<8x8xf32>
    %796 = arith.truncf %795 : vector<8x8xf32> to vector<8x8xbf16>
    %797 = vector.extract_strided_slice %776 {offsets = [0, 0], sizes = [8, 16], strides = [1, 1]} : vector<8x32xf32> to vector<8x16xf32>
    %798 = arith.truncf %797 : vector<8x16xf32> to vector<8x16xbf16>
    %cst_382 = arith.constant dense<0.000000e+00> : vector<8x16xf32>
    %799 = tpu.matmul %796, %798, %cst_382 {dimension_numbers = #tpu.dot_dimension_numbers<[1], [0], [0], [1], [0, 0, 1, 1], [], []>} : vector<8x8xbf16>, vector<8x16xbf16>, vector<8x16xf32> -> vector<8x16xf32>
    %800 = vector.extract_strided_slice %770 {offsets = [0, 16], sizes = [8, 16], strides = [1, 1]} : vector<8x32xf32> to vector<8x16xf32>
    %801 = arith.truncf %800 : vector<8x16xf32> to vector<8x16xbf16>
    %802 = vector.extract_strided_slice %775 {offsets = [0, 16], sizes = [8, 16], strides = [1, 1]} : vector<8x32xf32> to vector<8x16xf32>
    %803 = arith.truncf %802 : vector<8x16xf32> to vector<8x16xbf16>
    %cst_383 = arith.constant dense<0.000000e+00> : vector<8x8xf32>
    %804 = tpu.matmul %801, %803, %cst_383 {dimension_numbers = #tpu.dot_dimension_numbers<[1], [1], [0], [0], [0, 0, 1, 0], [], []>} : vector<8x16xbf16>, vector<8x16xbf16>, vector<8x8xf32> -> vector<8x8xf32>
    %cst_384 = arith.constant 2.500000e-01 : f32
    %805 = vector.broadcast %cst_384 : f32 to vector<8x8xf32>
    %806 = arith.mulf %804, %805 : vector<8x8xf32>
    %807 = vector.broadcast %1 : vector<1x8xf32> to vector<8x8xf32>
    %808 = arith.addf %806, %807 : vector<8x8xf32>
    %cst_385 = arith.constant dense<0xFF800000> : vector<8xf32>
    %809 = vector.multi_reduction <maximumf>, %808, %cst_385 [1] : vector<8x8xf32> to vector<8xf32>
    %810 = vector.shape_cast %809 : vector<8xf32> to vector<8x1xf32>
    %811 = vector.broadcast %810 : vector<8x1xf32> to vector<8x8xf32>
    %812 = arith.subf %808, %811 : vector<8x8xf32>
    %813 = math.exp %812 : vector<8x8xf32>
    %cst_386 = arith.constant dense<0.000000e+00> : vector<8xf32>
    %814 = vector.multi_reduction <add>, %813, %cst_386 [1] : vector<8x8xf32> to vector<8xf32>
    %815 = vector.shape_cast %814 : vector<8xf32> to vector<8x1xf32>
    %816 = tpu.reciprocal %815 {approx = true} : vector<8x1xf32> -> vector<8x1xf32>
    %817 = vector.broadcast %816 : vector<8x1xf32> to vector<8x8xf32>
    %818 = arith.mulf %813, %817 : vector<8x8xf32>
    %819 = arith.truncf %818 : vector<8x8xf32> to vector<8x8xbf16>
    %820 = vector.extract_strided_slice %776 {offsets = [0, 16], sizes = [8, 16], strides = [1, 1]} : vector<8x32xf32> to vector<8x16xf32>
    %821 = arith.truncf %820 : vector<8x16xf32> to vector<8x16xbf16>
    %cst_387 = arith.constant dense<0.000000e+00> : vector<8x16xf32>
    %822 = tpu.matmul %819, %821, %cst_387 {dimension_numbers = #tpu.dot_dimension_numbers<[1], [0], [0], [1], [0, 0, 1, 1], [], []>} : vector<8x8xbf16>, vector<8x16xbf16>, vector<8x16xf32> -> vector<8x16xf32>
    %823 = tpu.concatenate %799, %822 in 1 : vector<8x16xf32>, vector<8x16xf32> -> vector<8x32xf32>
    %824 = arith.truncf %823 : vector<8x32xf32> to vector<8x32xbf16>
    %cst_388 = arith.constant dense<0.000000e+00> : vector<8x32xf32>
    %825 = tpu.matmul %824, %760, %cst_388 {dimension_numbers = #tpu.dot_dimension_numbers<[1], [0], [0], [1], [0, 0, 1, 1], [], []>} : vector<8x32xbf16>, vector<32x32xbf16>, vector<8x32xf32> -> vector<8x32xf32>
    %826 = vector.broadcast %762 : vector<1x32xf32> to vector<8x32xf32>
    %827 = arith.addf %825, %826 : vector<8x32xf32>
    %828 = arith.addf %746, %827 : vector<8x32xf32>
    %cst_389 = arith.constant dense<0.000000e+00> : vector<8xf32>
    %829 = vector.multi_reduction <add>, %828, %cst_389 [1] : vector<8x32xf32> to vector<8xf32>
    %830 = vector.shape_cast %829 : vector<8xf32> to vector<8x1xf32>
    %cst_390 = arith.constant 3.200000e+01 : f32
    %831 = vector.broadcast %cst_390 : f32 to vector<8x1xf32>
    %832 = arith.divf %830, %831 : vector<8x1xf32>
    %833 = vector.broadcast %832 : vector<8x1xf32> to vector<8x32xf32>
    %834 = arith.subf %828, %833 : vector<8x32xf32>
    %835 = arith.mulf %834, %834 : vector<8x32xf32>
    %cst_391 = arith.constant dense<0.000000e+00> : vector<8xf32>
    %836 = vector.multi_reduction <add>, %835, %cst_391 [1] : vector<8x32xf32> to vector<8xf32>
    %837 = vector.shape_cast %836 : vector<8xf32> to vector<8x1xf32>
    %cst_392 = arith.constant 3.200000e+01 : f32
    %838 = vector.broadcast %cst_392 : f32 to vector<8x1xf32>
    %839 = arith.divf %837, %838 : vector<8x1xf32>
    %840 = vector.broadcast %832 : vector<8x1xf32> to vector<8x32xf32>
    %841 = arith.subf %828, %840 : vector<8x32xf32>
    %cst_393 = arith.constant 9.99999974E-6 : f32
    %842 = vector.broadcast %cst_393 : f32 to vector<8x1xf32>
    %843 = arith.addf %839, %842 : vector<8x1xf32>
    %844 = math.rsqrt %843 : vector<8x1xf32>
    %845 = vector.broadcast %844 : vector<8x1xf32> to vector<8x32xf32>
    %846 = arith.mulf %841, %845 : vector<8x32xf32>
    %847 = vector.broadcast %764 : vector<1x32xf32> to vector<8x32xf32>
    %848 = arith.mulf %846, %847 : vector<8x32xf32>
    %849 = vector.broadcast %766 : vector<1x32xf32> to vector<8x32xf32>
    %850 = arith.addf %848, %849 : vector<8x32xf32>
    %851 = tpu.concatenate %795, %818 in 0 : vector<8x8xf32>, vector<8x8xf32> -> vector<16x8xf32>
    %c0_394 = arith.constant 0 : index
    %c16_395 = arith.constant 16 : index
    %c0_396 = arith.constant 0 : index
    %852 = vector.load %arg68[%c0_394, %c16_395, %c0_396] : memref<1x32x8xf32, #tpu.memory_space<vmem>>, vector<1x16x8xf32>
    %853 = vector.shape_cast %852 : vector<1x16x8xf32> to vector<16x8xf32>
    %854 = vector.shape_cast %851 : vector<16x8xf32> to vector<1x16x8xf32>
    tpu.vector_store %arg68[%c0_394, %c16_395, %c0_396], %854 {strides = array<i32>} : memref<1x32x8xf32, #tpu.memory_space<vmem>>, vector<1x16x8xf32>,
    %c1_397 = arith.constant 1 : index
    %c0_398 = arith.constant 0 : index
    %c0_399 = arith.constant 0 : index
    %855 = vector.load %arg44[%c1_397, %c0_398, %c0_399] : memref<2x96x64xbf16, #tpu.memory_space<vmem>>, vector<1x96x64xbf16>
    %856 = vector.shape_cast %855 : vector<1x96x64xbf16> to vector<96x64xbf16>
    %c1_400 = arith.constant 1 : index
    %c0_401 = arith.constant 0 : index
    %c0_402 = arith.constant 0 : index
    %857 = vector.load %arg45[%c1_400, %c0_401, %c0_402] : memref<2x1x64xf32, #tpu.memory_space<vmem>>, vector<1x1x64xf32>
    %858 = vector.shape_cast %857 : vector<1x1x64xf32> to vector<1x64xf32>
    %c1_403 = arith.constant 1 : index
    %c0_404 = arith.constant 0 : index
    %c0_405 = arith.constant 0 : index
    %859 = vector.load %arg46[%c1_403, %c0_404, %c0_405] : memref<2x192x32xbf16, #tpu.memory_space<vmem>>, vector<1x192x32xbf16>
    %860 = vector.shape_cast %859 : vector<1x192x32xbf16> to vector<192x32xbf16>
    %c1_406 = arith.constant 1 : index
    %c0_407 = arith.constant 0 : index
    %c0_408 = arith.constant 0 : index
    %861 = vector.load %arg47[%c1_406, %c0_407, %c0_408] : memref<2x1x32xf32, #tpu.memory_space<vmem>>, vector<1x1x32xf32>
    %862 = vector.shape_cast %861 : vector<1x1x32xf32> to vector<1x32xf32>
    %c1_409 = arith.constant 1 : index
    %c0_410 = arith.constant 0 : index
    %c0_411 = arith.constant 0 : index
    %863 = vector.load %arg48[%c1_409, %c0_410, %c0_411] : memref<2x1x32xf32, #tpu.memory_space<vmem>>, vector<1x1x32xf32>
    %864 = vector.shape_cast %863 : vector<1x1x32xf32> to vector<1x32xf32>
    %c1_412 = arith.constant 1 : index
    %c0_413 = arith.constant 0 : index
    %c0_414 = arith.constant 0 : index
    %865 = vector.load %arg49[%c1_412, %c0_413, %c0_414] : memref<2x1x32xf32, #tpu.memory_space<vmem>>, vector<1x1x32xf32>
    %866 = vector.shape_cast %865 : vector<1x1x32xf32> to vector<1x32xf32>
    %cst_415 = arith.constant 0.000000e+00 : f32
    %867 = vector.broadcast %cst_415 : f32 to vector<1x32xf32>
    %cst_416 = arith.constant 0.000000e+00 : f32
    %868 = vector.broadcast %cst_416 : f32 to vector<1x32xf32>
    %869 = tpu.concatenate %867, %850, %868 in 0 : vector<1x32xf32>, vector<8x32xf32>, vector<1x32xf32> -> vector<10x32xf32>
    %870 = vector.extract_strided_slice %869 {offsets = [0, 0], sizes = [8, 32], strides = [1, 1]} : vector<10x32xf32> to vector<8x32xf32>
    %871 = vector.extract_strided_slice %869 {offsets = [1, 0], sizes = [8, 32], strides = [1, 1]} : vector<10x32xf32> to vector<8x32xf32>
    %872 = vector.extract_strided_slice %869 {offsets = [2, 0], sizes = [8, 32], strides = [1, 1]} : vector<10x32xf32> to vector<8x32xf32>
    %873 = tpu.concatenate %870, %871, %872 in 1 : vector<8x32xf32>, vector<8x32xf32>, vector<8x32xf32> -> vector<8x96xf32>
    %874 = arith.truncf %873 : vector<8x96xf32> to vector<8x96xbf16>
    %cst_417 = arith.constant dense<0.000000e+00> : vector<8x64xf32>
    %875 = tpu.matmul %874, %856, %cst_417 {dimension_numbers = #tpu.dot_dimension_numbers<[1], [0], [0], [1], [0, 0, 1, 1], [], []>} : vector<8x96xbf16>, vector<96x64xbf16>, vector<8x64xf32> -> vector<8x64xf32>
    %876 = vector.broadcast %858 : vector<1x64xf32> to vector<8x64xf32>
    %877 = arith.addf %875, %876 : vector<8x64xf32>
    %cst_418 = arith.constant 0.000000e+00 : f32
    %878 = vector.broadcast %cst_418 : f32 to vector<8x64xf32>
    %879 = arith.maximumf %877, %878 : vector<8x64xf32>
    %cst_419 = arith.constant 0.000000e+00 : f32
    %880 = vector.broadcast %cst_419 : f32 to vector<1x64xf32>
    %cst_420 = arith.constant 0.000000e+00 : f32
    %881 = vector.broadcast %cst_420 : f32 to vector<1x64xf32>
    %882 = tpu.concatenate %880, %879, %881 in 0 : vector<1x64xf32>, vector<8x64xf32>, vector<1x64xf32> -> vector<10x64xf32>
    %883 = vector.extract_strided_slice %882 {offsets = [0, 0], sizes = [8, 64], strides = [1, 1]} : vector<10x64xf32> to vector<8x64xf32>
    %884 = vector.extract_strided_slice %882 {offsets = [1, 0], sizes = [8, 64], strides = [1, 1]} : vector<10x64xf32> to vector<8x64xf32>
    %885 = vector.extract_strided_slice %882 {offsets = [2, 0], sizes = [8, 64], strides = [1, 1]} : vector<10x64xf32> to vector<8x64xf32>
    %886 = tpu.concatenate %883, %884, %885 in 1 : vector<8x64xf32>, vector<8x64xf32>, vector<8x64xf32> -> vector<8x192xf32>
    %887 = arith.truncf %886 : vector<8x192xf32> to vector<8x192xbf16>
    %cst_421 = arith.constant dense<0.000000e+00> : vector<8x32xf32>
    %888 = tpu.matmul %887, %860, %cst_421 {dimension_numbers = #tpu.dot_dimension_numbers<[1], [0], [0], [1], [0, 0, 1, 1], [], []>} : vector<8x192xbf16>, vector<192x32xbf16>, vector<8x32xf32> -> vector<8x32xf32>
    %889 = vector.broadcast %862 : vector<1x32xf32> to vector<8x32xf32>
    %890 = arith.addf %888, %889 : vector<8x32xf32>
    %891 = arith.addf %850, %890 : vector<8x32xf32>
    %cst_422 = arith.constant dense<0.000000e+00> : vector<8xf32>
    %892 = vector.multi_reduction <add>, %891, %cst_422 [1] : vector<8x32xf32> to vector<8xf32>
    %893 = vector.shape_cast %892 : vector<8xf32> to vector<8x1xf32>
    %cst_423 = arith.constant 3.200000e+01 : f32
    %894 = vector.broadcast %cst_423 : f32 to vector<8x1xf32>
    %895 = arith.divf %893, %894 : vector<8x1xf32>
    %896 = vector.broadcast %895 : vector<8x1xf32> to vector<8x32xf32>
    %897 = arith.subf %891, %896 : vector<8x32xf32>
    %898 = arith.mulf %897, %897 : vector<8x32xf32>
    %cst_424 = arith.constant dense<0.000000e+00> : vector<8xf32>
    %899 = vector.multi_reduction <add>, %898, %cst_424 [1] : vector<8x32xf32> to vector<8xf32>
    %900 = vector.shape_cast %899 : vector<8xf32> to vector<8x1xf32>
    %cst_425 = arith.constant 3.200000e+01 : f32
    %901 = vector.broadcast %cst_425 : f32 to vector<8x1xf32>
    %902 = arith.divf %900, %901 : vector<8x1xf32>
    %903 = vector.broadcast %895 : vector<8x1xf32> to vector<8x32xf32>
    %904 = arith.subf %891, %903 : vector<8x32xf32>
    %cst_426 = arith.constant 9.99999974E-6 : f32
    %905 = vector.broadcast %cst_426 : f32 to vector<8x1xf32>
    %906 = arith.addf %902, %905 : vector<8x1xf32>
    %907 = math.rsqrt %906 : vector<8x1xf32>
    %908 = vector.broadcast %907 : vector<8x1xf32> to vector<8x32xf32>
    %909 = arith.mulf %904, %908 : vector<8x32xf32>
    %910 = vector.broadcast %864 : vector<1x32xf32> to vector<8x32xf32>
    %911 = arith.mulf %909, %910 : vector<8x32xf32>
    %912 = vector.broadcast %866 : vector<1x32xf32> to vector<8x32xf32>
    %913 = arith.addf %911, %912 : vector<8x32xf32>
    %c0_427 = arith.constant 0 : index
    %c0_428 = arith.constant 0 : index
    %914 = vector.load %arg50[%c0_427, %c0_428] : memref<1x32xf32, #tpu.memory_space<vmem>>, vector<1x32xf32>
    %c0_429 = arith.constant 0 : index
    %c0_430 = arith.constant 0 : index
    %915 = vector.load %arg51[%c0_429, %c0_430] : memref<1x32xf32, #tpu.memory_space<vmem>>, vector<1x32xf32>
    %cst_431 = arith.constant dense<0.000000e+00> : vector<8xf32>
    %916 = vector.multi_reduction <add>, %913, %cst_431 [1] : vector<8x32xf32> to vector<8xf32>
    %917 = vector.shape_cast %916 : vector<8xf32> to vector<8x1xf32>
    %cst_432 = arith.constant 3.200000e+01 : f32
    %918 = vector.broadcast %cst_432 : f32 to vector<8x1xf32>
    %919 = arith.divf %917, %918 : vector<8x1xf32>
    %920 = vector.broadcast %919 : vector<8x1xf32> to vector<8x32xf32>
    %921 = arith.subf %913, %920 : vector<8x32xf32>
    %922 = arith.mulf %921, %921 : vector<8x32xf32>
    %cst_433 = arith.constant dense<0.000000e+00> : vector<8xf32>
    %923 = vector.multi_reduction <add>, %922, %cst_433 [1] : vector<8x32xf32> to vector<8xf32>
    %924 = vector.shape_cast %923 : vector<8xf32> to vector<8x1xf32>
    %cst_434 = arith.constant 3.200000e+01 : f32
    %925 = vector.broadcast %cst_434 : f32 to vector<8x1xf32>
    %926 = arith.divf %924, %925 : vector<8x1xf32>
    %927 = vector.broadcast %919 : vector<8x1xf32> to vector<8x32xf32>
    %928 = arith.subf %913, %927 : vector<8x32xf32>
    %cst_435 = arith.constant 9.99999974E-6 : f32
    %929 = vector.broadcast %cst_435 : f32 to vector<8x1xf32>
    %930 = arith.addf %926, %929 : vector<8x1xf32>
    %931 = math.rsqrt %930 : vector<8x1xf32>
    %932 = vector.broadcast %931 : vector<8x1xf32> to vector<8x32xf32>
    %933 = arith.mulf %928, %932 : vector<8x32xf32>
    %934 = vector.broadcast %914 : vector<1x32xf32> to vector<8x32xf32>
    %935 = arith.mulf %933, %934 : vector<8x32xf32>
    %936 = vector.broadcast %915 : vector<1x32xf32> to vector<8x32xf32>
    %937 = arith.addf %935, %936 : vector<8x32xf32>
    %938 = arith.truncf %937 : vector<8x32xf32> to vector<8x32xbf16>
    %c0_436 = arith.constant 0 : index
    %c0_437 = arith.constant 0 : index
    %939 = vector.load %arg52[%c0_436, %c0_437] : memref<32x17xbf16, #tpu.memory_space<vmem>>, vector<32x17xbf16>
    %cst_438 = arith.constant dense<0.000000e+00> : vector<8x17xf32>
    %940 = tpu.matmul %938, %939, %cst_438 {dimension_numbers = #tpu.dot_dimension_numbers<[1], [0], [0], [1], [0, 0, 1, 1], [], []>} : vector<8x32xbf16>, vector<32x17xbf16>, vector<8x17xf32> -> vector<8x17xf32>
    %c0_439 = arith.constant 0 : index
    %c0_440 = arith.constant 0 : index
    %941 = vector.load %arg53[%c0_439, %c0_440] : memref<1x17xf32, #tpu.memory_space<vmem>>, vector<1x17xf32>
    %942 = vector.broadcast %941 : vector<1x17xf32> to vector<8x17xf32>
    %943 = arith.addf %940, %942 : vector<8x17xf32>
    %c0_441 = arith.constant 0 : index
    %c0_442 = arith.constant 0 : index
    %c0_443 = arith.constant 0 : index
    %944 = vector.load %arg64[%c0_441, %c0_442, %c0_443] : memref<1x8x17xf32, #tpu.memory_space<vmem>>, vector<1x8x17xf32>
    %945 = vector.shape_cast %944 : vector<1x8x17xf32> to vector<8x17xf32>
    %946 = vector.shape_cast %943 : vector<8x17xf32> to vector<1x8x17xf32>
    tpu.vector_store %arg64[%c0_441, %c0_442, %c0_443], %946 {strides = array<i32>} : memref<1x8x17xf32, #tpu.memory_space<vmem>>, vector<1x8x17xf32>,
    %947 = vector.extract_strided_slice %943 {offsets = [0, 0], sizes = [8, 16], strides = [1, 1]} : vector<8x17xf32> to vector<8x16xf32>
    %c0_444 = arith.constant 0 : index
    %c0_445 = arith.constant 0 : index
    %948 = vector.load %arg54[%c0_444, %c0_445] : memref<80x32xbf16, #tpu.memory_space<vmem>>, vector<80x32xbf16>
    %c0_446 = arith.constant 0 : index
    %c0_447 = arith.constant 0 : index
    %949 = vector.load %arg55[%c0_446, %c0_447] : memref<1x32xf32, #tpu.memory_space<vmem>>, vector<1x32xf32>
    %cst_448 = arith.constant 0.000000e+00 : f32
    %950 = vector.broadcast %cst_448 : f32 to vector<2x16xf32>
    %cst_449 = arith.constant 0.000000e+00 : f32
    %951 = vector.broadcast %cst_449 : f32 to vector<2x16xf32>
    %952 = tpu.concatenate %950, %947, %951 in 0 : vector<2x16xf32>, vector<8x16xf32>, vector<2x16xf32> -> vector<12x16xf32>
    %953 = vector.extract_strided_slice %952 {offsets = [0, 0], sizes = [8, 16], strides = [1, 1]} : vector<12x16xf32> to vector<8x16xf32>
    %954 = vector.extract_strided_slice %952 {offsets = [1, 0], sizes = [8, 16], strides = [1, 1]} : vector<12x16xf32> to vector<8x16xf32>
    %955 = vector.extract_strided_slice %952 {offsets = [2, 0], sizes = [8, 16], strides = [1, 1]} : vector<12x16xf32> to vector<8x16xf32>
    %956 = vector.extract_strided_slice %952 {offsets = [3, 0], sizes = [8, 16], strides = [1, 1]} : vector<12x16xf32> to vector<8x16xf32>
    %957 = vector.extract_strided_slice %952 {offsets = [4, 0], sizes = [8, 16], strides = [1, 1]} : vector<12x16xf32> to vector<8x16xf32>
    %958 = tpu.concatenate %953, %954, %955, %956, %957 in 1 : vector<8x16xf32>, vector<8x16xf32>, vector<8x16xf32>, vector<8x16xf32>, vector<8x16xf32> -> vector<8x80xf32>
    %959 = arith.truncf %958 : vector<8x80xf32> to vector<8x80xbf16>
    %cst_450 = arith.constant dense<0.000000e+00> : vector<8x32xf32>
    %960 = tpu.matmul %959, %948, %cst_450 {dimension_numbers = #tpu.dot_dimension_numbers<[1], [0], [0], [1], [0, 0, 1, 1], [], []>} : vector<8x80xbf16>, vector<80x32xbf16>, vector<8x32xf32> -> vector<8x32xf32>
    %961 = vector.broadcast %949 : vector<1x32xf32> to vector<8x32xf32>
    %962 = arith.addf %960, %961 : vector<8x32xf32>
    %963 = math.tanh %962 : vector<8x32xf32>
    %c0_451 = arith.constant 0 : index
    %c0_452 = arith.constant 0 : index
    %964 = vector.load %arg56[%c0_451, %c0_452] : memref<160x32xbf16, #tpu.memory_space<vmem>>, vector<160x32xbf16>
    %c0_453 = arith.constant 0 : index
    %c0_454 = arith.constant 0 : index
    %965 = vector.load %arg57[%c0_453, %c0_454] : memref<1x32xf32, #tpu.memory_space<vmem>>, vector<1x32xf32>
    %cst_455 = arith.constant 0.000000e+00 : f32
    %966 = vector.broadcast %cst_455 : f32 to vector<2x32xf32>
    %cst_456 = arith.constant 0.000000e+00 : f32
    %967 = vector.broadcast %cst_456 : f32 to vector<2x32xf32>
    %968 = tpu.concatenate %966, %963, %967 in 0 : vector<2x32xf32>, vector<8x32xf32>, vector<2x32xf32> -> vector<12x32xf32>
    %969 = vector.extract_strided_slice %968 {offsets = [0, 0], sizes = [8, 32], strides = [1, 1]} : vector<12x32xf32> to vector<8x32xf32>
    %970 = vector.extract_strided_slice %968 {offsets = [1, 0], sizes = [8, 32], strides = [1, 1]} : vector<12x32xf32> to vector<8x32xf32>
    %971 = vector.extract_strided_slice %968 {offsets = [2, 0], sizes = [8, 32], strides = [1, 1]} : vector<12x32xf32> to vector<8x32xf32>
    %972 = vector.extract_strided_slice %968 {offsets = [3, 0], sizes = [8, 32], strides = [1, 1]} : vector<12x32xf32> to vector<8x32xf32>
    %973 = vector.extract_strided_slice %968 {offsets = [4, 0], sizes = [8, 32], strides = [1, 1]} : vector<12x32xf32> to vector<8x32xf32>
    %974 = tpu.concatenate %969, %970, %971, %972, %973 in 1 : vector<8x32xf32>, vector<8x32xf32>, vector<8x32xf32>, vector<8x32xf32>, vector<8x32xf32> -> vector<8x160xf32>
    %975 = arith.truncf %974 : vector<8x160xf32> to vector<8x160xbf16>
    %cst_457 = arith.constant dense<0.000000e+00> : vector<8x32xf32>
    %976 = tpu.matmul %975, %964, %cst_457 {dimension_numbers = #tpu.dot_dimension_numbers<[1], [0], [0], [1], [0, 0, 1, 1], [], []>} : vector<8x160xbf16>, vector<160x32xbf16>, vector<8x32xf32> -> vector<8x32xf32>
    %977 = vector.broadcast %965 : vector<1x32xf32> to vector<8x32xf32>
    %978 = arith.addf %976, %977 : vector<8x32xf32>
    %979 = math.tanh %978 : vector<8x32xf32>
    %c0_458 = arith.constant 0 : index
    %c0_459 = arith.constant 0 : index
    %980 = vector.load %arg58[%c0_458, %c0_459] : memref<160x32xbf16, #tpu.memory_space<vmem>>, vector<160x32xbf16>
    %c0_460 = arith.constant 0 : index
    %c0_461 = arith.constant 0 : index
    %981 = vector.load %arg59[%c0_460, %c0_461] : memref<1x32xf32, #tpu.memory_space<vmem>>, vector<1x32xf32>
    %cst_462 = arith.constant 0.000000e+00 : f32
    %982 = vector.broadcast %cst_462 : f32 to vector<2x32xf32>
    %cst_463 = arith.constant 0.000000e+00 : f32
    %983 = vector.broadcast %cst_463 : f32 to vector<2x32xf32>
    %984 = tpu.concatenate %982, %979, %983 in 0 : vector<2x32xf32>, vector<8x32xf32>, vector<2x32xf32> -> vector<12x32xf32>
    %985 = vector.extract_strided_slice %984 {offsets = [0, 0], sizes = [8, 32], strides = [1, 1]} : vector<12x32xf32> to vector<8x32xf32>
    %986 = vector.extract_strided_slice %984 {offsets = [1, 0], sizes = [8, 32], strides = [1, 1]} : vector<12x32xf32> to vector<8x32xf32>
    %987 = vector.extract_strided_slice %984 {offsets = [2, 0], sizes = [8, 32], strides = [1, 1]} : vector<12x32xf32> to vector<8x32xf32>
    %988 = vector.extract_strided_slice %984 {offsets = [3, 0], sizes = [8, 32], strides = [1, 1]} : vector<12x32xf32> to vector<8x32xf32>
    %989 = vector.extract_strided_slice %984 {offsets = [4, 0], sizes = [8, 32], strides = [1, 1]} : vector<12x32xf32> to vector<8x32xf32>
    %990 = tpu.concatenate %985, %986, %987, %988, %989 in 1 : vector<8x32xf32>, vector<8x32xf32>, vector<8x32xf32>, vector<8x32xf32>, vector<8x32xf32> -> vector<8x160xf32>
    %991 = arith.truncf %990 : vector<8x160xf32> to vector<8x160xbf16>
    %cst_464 = arith.constant dense<0.000000e+00> : vector<8x32xf32>
    %992 = tpu.matmul %991, %980, %cst_464 {dimension_numbers = #tpu.dot_dimension_numbers<[1], [0], [0], [1], [0, 0, 1, 1], [], []>} : vector<8x160xbf16>, vector<160x32xbf16>, vector<8x32xf32> -> vector<8x32xf32>
    %993 = vector.broadcast %981 : vector<1x32xf32> to vector<8x32xf32>
    %994 = arith.addf %992, %993 : vector<8x32xf32>
    %995 = math.tanh %994 : vector<8x32xf32>
    %c0_465 = arith.constant 0 : index
    %c0_466 = arith.constant 0 : index
    %996 = vector.load %arg60[%c0_465, %c0_466] : memref<160x32xbf16, #tpu.memory_space<vmem>>, vector<160x32xbf16>
    %c0_467 = arith.constant 0 : index
    %c0_468 = arith.constant 0 : index
    %997 = vector.load %arg61[%c0_467, %c0_468] : memref<1x32xf32, #tpu.memory_space<vmem>>, vector<1x32xf32>
    %cst_469 = arith.constant 0.000000e+00 : f32
    %998 = vector.broadcast %cst_469 : f32 to vector<2x32xf32>
    %cst_470 = arith.constant 0.000000e+00 : f32
    %999 = vector.broadcast %cst_470 : f32 to vector<2x32xf32>
    %1000 = tpu.concatenate %998, %995, %999 in 0 : vector<2x32xf32>, vector<8x32xf32>, vector<2x32xf32> -> vector<12x32xf32>
    %1001 = vector.extract_strided_slice %1000 {offsets = [0, 0], sizes = [8, 32], strides = [1, 1]} : vector<12x32xf32> to vector<8x32xf32>
    %1002 = vector.extract_strided_slice %1000 {offsets = [1, 0], sizes = [8, 32], strides = [1, 1]} : vector<12x32xf32> to vector<8x32xf32>
    %1003 = vector.extract_strided_slice %1000 {offsets = [2, 0], sizes = [8, 32], strides = [1, 1]} : vector<12x32xf32> to vector<8x32xf32>
    %1004 = vector.extract_strided_slice %1000 {offsets = [3, 0], sizes = [8, 32], strides = [1, 1]} : vector<12x32xf32> to vector<8x32xf32>
    %1005 = vector.extract_strided_slice %1000 {offsets = [4, 0], sizes = [8, 32], strides = [1, 1]} : vector<12x32xf32> to vector<8x32xf32>
    %1006 = tpu.concatenate %1001, %1002, %1003, %1004, %1005 in 1 : vector<8x32xf32>, vector<8x32xf32>, vector<8x32xf32>, vector<8x32xf32>, vector<8x32xf32> -> vector<8x160xf32>
    %1007 = arith.truncf %1006 : vector<8x160xf32> to vector<8x160xbf16>
    %cst_471 = arith.constant dense<0.000000e+00> : vector<8x32xf32>
    %1008 = tpu.matmul %1007, %996, %cst_471 {dimension_numbers = #tpu.dot_dimension_numbers<[1], [0], [0], [1], [0, 0, 1, 1], [], []>} : vector<8x160xbf16>, vector<160x32xbf16>, vector<8x32xf32> -> vector<8x32xf32>
    %1009 = vector.broadcast %997 : vector<1x32xf32> to vector<8x32xf32>
    %1010 = arith.addf %1008, %1009 : vector<8x32xf32>
    %1011 = math.tanh %1010 : vector<8x32xf32>
    %c0_472 = arith.constant 0 : index
    %c0_473 = arith.constant 0 : index
    %1012 = vector.load %arg62[%c0_472, %c0_473] : memref<160x16xbf16, #tpu.memory_space<vmem>>, vector<160x16xbf16>
    %c0_474 = arith.constant 0 : index
    %c0_475 = arith.constant 0 : index
    %1013 = vector.load %arg63[%c0_474, %c0_475] : memref<1x16xf32, #tpu.memory_space<vmem>>, vector<1x16xf32>
    %cst_476 = arith.constant 0.000000e+00 : f32
    %1014 = vector.broadcast %cst_476 : f32 to vector<2x32xf32>
    %cst_477 = arith.constant 0.000000e+00 : f32
    %1015 = vector.broadcast %cst_477 : f32 to vector<2x32xf32>
    %1016 = tpu.concatenate %1014, %1011, %1015 in 0 : vector<2x32xf32>, vector<8x32xf32>, vector<2x32xf32> -> vector<12x32xf32>
    %1017 = vector.extract_strided_slice %1016 {offsets = [0, 0], sizes = [8, 32], strides = [1, 1]} : vector<12x32xf32> to vector<8x32xf32>
    %1018 = vector.extract_strided_slice %1016 {offsets = [1, 0], sizes = [8, 32], strides = [1, 1]} : vector<12x32xf32> to vector<8x32xf32>
    %1019 = vector.extract_strided_slice %1016 {offsets = [2, 0], sizes = [8, 32], strides = [1, 1]} : vector<12x32xf32> to vector<8x32xf32>
    %1020 = vector.extract_strided_slice %1016 {offsets = [3, 0], sizes = [8, 32], strides = [1, 1]} : vector<12x32xf32> to vector<8x32xf32>
    %1021 = vector.extract_strided_slice %1016 {offsets = [4, 0], sizes = [8, 32], strides = [1, 1]} : vector<12x32xf32> to vector<8x32xf32>
    %1022 = tpu.concatenate %1017, %1018, %1019, %1020, %1021 in 1 : vector<8x32xf32>, vector<8x32xf32>, vector<8x32xf32>, vector<8x32xf32>, vector<8x32xf32> -> vector<8x160xf32>
    %1023 = arith.truncf %1022 : vector<8x160xf32> to vector<8x160xbf16>
    %cst_478 = arith.constant dense<0.000000e+00> : vector<8x16xf32>
    %1024 = tpu.matmul %1023, %1012, %cst_478 {dimension_numbers = #tpu.dot_dimension_numbers<[1], [0], [0], [1], [0, 0, 1, 1], [], []>} : vector<8x160xbf16>, vector<160x16xbf16>, vector<8x16xf32> -> vector<8x16xf32>
    %1025 = vector.broadcast %1013 : vector<1x16xf32> to vector<8x16xf32>
    %1026 = arith.addf %1024, %1025 : vector<8x16xf32>
    %1027 = arith.addf %947, %1026 : vector<8x16xf32>
    %c0_479 = arith.constant 0 : index
    %c0_480 = arith.constant 0 : index
    %c0_481 = arith.constant 0 : index
    %1028 = vector.load %arg65[%c0_479, %c0_480, %c0_481] : memref<1x8x16xf32, #tpu.memory_space<vmem>>, vector<1x8x16xf32>
    %1029 = vector.shape_cast %1028 : vector<1x8x16xf32> to vector<8x16xf32>
    %1030 = vector.shape_cast %1027 : vector<8x16xf32> to vector<1x8x16xf32>
    tpu.vector_store %arg65[%c0_479, %c0_480, %c0_481], %1030 {strides = array<i32>} : memref<1x8x16xf32, #tpu.memory_space<vmem>>, vector<1x8x16xf32>,
    return
  }
  func.func @transform_0(%arg0: i32) -> (i32, i32, i32) {
    %c0_i32 = arith.constant 0 : i32
    %c0_i32_0 = arith.constant 0 : i32
    %c0_i32_1 = arith.constant 0 : i32
    return %arg0, %c0_i32, %c0_i32_0 : i32, i32, i32
  }
  func.func @transform_1(%arg0: i32) -> (i32, i32, i32) {
    %c0_i32 = arith.constant 0 : i32
    %c0_i32_0 = arith.constant 0 : i32
    %c0_i32_1 = arith.constant 0 : i32
    return %arg0, %c0_i32, %c0_i32_0 : i32, i32, i32
  }
  func.func @transform_2(%arg0: i32) -> (i32, i32, i32) {
    %c0_i32 = arith.constant 0 : i32
    %c0_i32_0 = arith.constant 0 : i32
    %c0_i32_1 = arith.constant 0 : i32
    return %arg0, %c0_i32, %c0_i32_0 : i32, i32, i32
  }
  func.func @transform_3(%arg0: i32) -> (i32, i32, i32) {
    %c0_i32 = arith.constant 0 : i32
    %c0_i32_0 = arith.constant 0 : i32
    %c0_i32_1 = arith.constant 0 : i32
    return %arg0, %c0_i32, %c0_i32_0 : i32, i32, i32
  }
  func.func @transform_4(%arg0: i32) -> (i32, i32) {
    %c0_i32 = arith.constant 0 : i32
    %c0_i32_0 = arith.constant 0 : i32
    %c0_i32_1 = arith.constant 0 : i32
    return %c0_i32, %c0_i32_0 : i32, i32
  }
  func.func @transform_5(%arg0: i32) -> (i32, i32, i32) {
    %c0_i32 = arith.constant 0 : i32
    %c0_i32_0 = arith.constant 0 : i32
    %c0_i32_1 = arith.constant 0 : i32
    %c0_i32_2 = arith.constant 0 : i32
    return %c0_i32, %c0_i32_0, %c0_i32_1 : i32, i32, i32
  }
  func.func @transform_6(%arg0: i32) -> (i32, i32, i32) {
    %c0_i32 = arith.constant 0 : i32
    %c0_i32_0 = arith.constant 0 : i32
    %c0_i32_1 = arith.constant 0 : i32
    %c0_i32_2 = arith.constant 0 : i32
    return %c0_i32, %c0_i32_0, %c0_i32_1 : i32, i32, i32
  }
  func.func @transform_7(%arg0: i32) -> (i32, i32, i32) {
    %c0_i32 = arith.constant 0 : i32
    %c0_i32_0 = arith.constant 0 : i32
    %c0_i32_1 = arith.constant 0 : i32
    %c0_i32_2 = arith.constant 0 : i32
    return %c0_i32, %c0_i32_0, %c0_i32_1 : i32, i32, i32
  }
  func.func @transform_8(%arg0: i32) -> (i32, i32, i32) {
    %c0_i32 = arith.constant 0 : i32
    %c0_i32_0 = arith.constant 0 : i32
    %c0_i32_1 = arith.constant 0 : i32
    %c0_i32_2 = arith.constant 0 : i32
    return %c0_i32, %c0_i32_0, %c0_i32_1 : i32, i32, i32
  }
  func.func @transform_9(%arg0: i32) -> (i32, i32, i32) {
    %c0_i32 = arith.constant 0 : i32
    %c0_i32_0 = arith.constant 0 : i32
    %c0_i32_1 = arith.constant 0 : i32
    %c0_i32_2 = arith.constant 0 : i32
    return %c0_i32, %c0_i32_0, %c0_i32_1 : i32, i32, i32
  }
  func.func @transform_10(%arg0: i32) -> (i32, i32, i32) {
    %c0_i32 = arith.constant 0 : i32
    %c0_i32_0 = arith.constant 0 : i32
    %c0_i32_1 = arith.constant 0 : i32
    %c0_i32_2 = arith.constant 0 : i32
    return %c0_i32, %c0_i32_0, %c0_i32_1 : i32, i32, i32
  }
  func.func @transform_11(%arg0: i32) -> (i32, i32, i32) {
    %c0_i32 = arith.constant 0 : i32
    %c0_i32_0 = arith.constant 0 : i32
    %c0_i32_1 = arith.constant 0 : i32
    %c0_i32_2 = arith.constant 0 : i32
    return %c0_i32, %c0_i32_0, %c0_i32_1 : i32, i32, i32
  }
  func.func @transform_12(%arg0: i32) -> (i32, i32, i32) {
    %c0_i32 = arith.constant 0 : i32
    %c0_i32_0 = arith.constant 0 : i32
    %c0_i32_1 = arith.constant 0 : i32
    %c0_i32_2 = arith.constant 0 : i32
    return %c0_i32, %c0_i32_0, %c0_i32_1 : i32, i32, i32
  }
  func.func @transform_13(%arg0: i32) -> (i32, i32, i32) {
    %c0_i32 = arith.constant 0 : i32
    %c0_i32_0 = arith.constant 0 : i32
    %c0_i32_1 = arith.constant 0 : i32
    %c0_i32_2 = arith.constant 0 : i32
    return %c0_i32, %c0_i32_0, %c0_i32_1 : i32, i32, i32
  }
  func.func @transform_14(%arg0: i32) -> (i32, i32, i32) {
    %c0_i32 = arith.constant 0 : i32
    %c0_i32_0 = arith.constant 0 : i32
    %c0_i32_1 = arith.constant 0 : i32
    %c0_i32_2 = arith.constant 0 : i32
    return %c0_i32, %c0_i32_0, %c0_i32_1 : i32, i32, i32
  }
  func.func @transform_15(%arg0: i32) -> (i32, i32, i32) {
    %c0_i32 = arith.constant 0 : i32
    %c0_i32_0 = arith.constant 0 : i32
    %c0_i32_1 = arith.constant 0 : i32
    %c0_i32_2 = arith.constant 0 : i32
    return %c0_i32, %c0_i32_0, %c0_i32_1 : i32, i32, i32
  }
  func.func @transform_16(%arg0: i32) -> (i32, i32, i32) {
    %c0_i32 = arith.constant 0 : i32
    %c0_i32_0 = arith.constant 0 : i32
    %c0_i32_1 = arith.constant 0 : i32
    %c0_i32_2 = arith.constant 0 : i32
    return %c0_i32, %c0_i32_0, %c0_i32_1 : i32, i32, i32
  }
  func.func @transform_17(%arg0: i32) -> (i32, i32, i32) {
    %c0_i32 = arith.constant 0 : i32
    %c0_i32_0 = arith.constant 0 : i32
    %c0_i32_1 = arith.constant 0 : i32
    %c0_i32_2 = arith.constant 0 : i32
    return %c0_i32, %c0_i32_0, %c0_i32_1 : i32, i32, i32
  }
  func.func @transform_18(%arg0: i32) -> (i32, i32, i32) {
    %c0_i32 = arith.constant 0 : i32
    %c0_i32_0 = arith.constant 0 : i32
    %c0_i32_1 = arith.constant 0 : i32
    %c0_i32_2 = arith.constant 0 : i32
    return %c0_i32, %c0_i32_0, %c0_i32_1 : i32, i32, i32
  }
  func.func @transform_19(%arg0: i32) -> (i32, i32) {
    %c0_i32 = arith.constant 0 : i32
    %c0_i32_0 = arith.constant 0 : i32
    %c0_i32_1 = arith.constant 0 : i32
    return %c0_i32, %c0_i32_0 : i32, i32
  }
  func.func @transform_20(%arg0: i32) -> (i32, i32) {
    %c0_i32 = arith.constant 0 : i32
    %c0_i32_0 = arith.constant 0 : i32
    %c0_i32_1 = arith.constant 0 : i32
    return %c0_i32, %c0_i32_0 : i32, i32
  }
  func.func @transform_21(%arg0: i32) -> (i32, i32) {
    %c0_i32 = arith.constant 0 : i32
    %c0_i32_0 = arith.constant 0 : i32
    %c0_i32_1 = arith.constant 0 : i32
    return %c0_i32, %c0_i32_0 : i32, i32
  }
  func.func @transform_22(%arg0: i32) -> (i32, i32) {
    %c0_i32 = arith.constant 0 : i32
    %c0_i32_0 = arith.constant 0 : i32
    %c0_i32_1 = arith.constant 0 : i32
    return %c0_i32, %c0_i32_0 : i32, i32
  }
  func.func @transform_23(%arg0: i32) -> (i32, i32) {
    %c0_i32 = arith.constant 0 : i32
    %c0_i32_0 = arith.constant 0 : i32
    %c0_i32_1 = arith.constant 0 : i32
    return %c0_i32, %c0_i32_0 : i32, i32
  }
  func.func @transform_24(%arg0: i32) -> (i32, i32) {
    %c0_i32 = arith.constant 0 : i32
    %c0_i32_0 = arith.constant 0 : i32
    %c0_i32_1 = arith.constant 0 : i32
    return %c0_i32, %c0_i32_0 : i32, i32
  }
  func.func @transform_25(%arg0: i32) -> (i32, i32) {
    %c0_i32 = arith.constant 0 : i32
    %c0_i32_0 = arith.constant 0 : i32
    %c0_i32_1 = arith.constant 0 : i32
    return %c0_i32, %c0_i32_0 : i32, i32
  }
  func.func @transform_26(%arg0: i32) -> (i32, i32) {
    %c0_i32 = arith.constant 0 : i32
    %c0_i32_0 = arith.constant 0 : i32
    %c0_i32_1 = arith.constant 0 : i32
    return %c0_i32, %c0_i32_0 : i32, i32
  }
  func.func @transform_27(%arg0: i32) -> (i32, i32, i32) {
    %c0_i32 = arith.constant 0 : i32
    %c0_i32_0 = arith.constant 0 : i32
    %c0_i32_1 = arith.constant 0 : i32
    %c0_i32_2 = arith.constant 0 : i32
    return %c0_i32, %c0_i32_0, %c0_i32_1 : i32, i32, i32
  }
  func.func @transform_28(%arg0: i32) -> (i32, i32, i32) {
    %c0_i32 = arith.constant 0 : i32
    %c0_i32_0 = arith.constant 0 : i32
    %c0_i32_1 = arith.constant 0 : i32
    %c0_i32_2 = arith.constant 0 : i32
    return %c0_i32, %c0_i32_0, %c0_i32_1 : i32, i32, i32
  }
  func.func @transform_29(%arg0: i32) -> (i32, i32, i32) {
    %c0_i32 = arith.constant 0 : i32
    %c0_i32_0 = arith.constant 0 : i32
    %c0_i32_1 = arith.constant 0 : i32
    %c0_i32_2 = arith.constant 0 : i32
    return %c0_i32, %c0_i32_0, %c0_i32_1 : i32, i32, i32
  }
  func.func @transform_30(%arg0: i32) -> (i32, i32, i32) {
    %c0_i32 = arith.constant 0 : i32
    %c0_i32_0 = arith.constant 0 : i32
    %c0_i32_1 = arith.constant 0 : i32
    %c0_i32_2 = arith.constant 0 : i32
    return %c0_i32, %c0_i32_0, %c0_i32_1 : i32, i32, i32
  }
  func.func @transform_31(%arg0: i32) -> (i32, i32, i32) {
    %c0_i32 = arith.constant 0 : i32
    %c0_i32_0 = arith.constant 0 : i32
    %c0_i32_1 = arith.constant 0 : i32
    %c0_i32_2 = arith.constant 0 : i32
    return %c0_i32, %c0_i32_0, %c0_i32_1 : i32, i32, i32
  }
  func.func @transform_32(%arg0: i32) -> (i32, i32, i32) {
    %c0_i32 = arith.constant 0 : i32
    %c0_i32_0 = arith.constant 0 : i32
    %c0_i32_1 = arith.constant 0 : i32
    %c0_i32_2 = arith.constant 0 : i32
    return %c0_i32, %c0_i32_0, %c0_i32_1 : i32, i32, i32
  }
  func.func @transform_33(%arg0: i32) -> (i32, i32, i32) {
    %c0_i32 = arith.constant 0 : i32
    %c0_i32_0 = arith.constant 0 : i32
    %c0_i32_1 = arith.constant 0 : i32
    %c0_i32_2 = arith.constant 0 : i32
    return %c0_i32, %c0_i32_0, %c0_i32_1 : i32, i32, i32
  }
  func.func @transform_34(%arg0: i32) -> (i32, i32, i32) {
    %c0_i32 = arith.constant 0 : i32
    %c0_i32_0 = arith.constant 0 : i32
    %c0_i32_1 = arith.constant 0 : i32
    %c0_i32_2 = arith.constant 0 : i32
    return %c0_i32, %c0_i32_0, %c0_i32_1 : i32, i32, i32
  }
  func.func @transform_35(%arg0: i32) -> (i32, i32, i32) {
    %c0_i32 = arith.constant 0 : i32
    %c0_i32_0 = arith.constant 0 : i32
    %c0_i32_1 = arith.constant 0 : i32
    %c0_i32_2 = arith.constant 0 : i32
    return %c0_i32, %c0_i32_0, %c0_i32_1 : i32, i32, i32
  }
  func.func @transform_36(%arg0: i32) -> (i32, i32, i32) {
    %c0_i32 = arith.constant 0 : i32
    %c0_i32_0 = arith.constant 0 : i32
    %c0_i32_1 = arith.constant 0 : i32
    %c0_i32_2 = arith.constant 0 : i32
    return %c0_i32, %c0_i32_0, %c0_i32_1 : i32, i32, i32
  }
  func.func @transform_37(%arg0: i32) -> (i32, i32, i32) {
    %c0_i32 = arith.constant 0 : i32
    %c0_i32_0 = arith.constant 0 : i32
    %c0_i32_1 = arith.constant 0 : i32
    %c0_i32_2 = arith.constant 0 : i32
    return %c0_i32, %c0_i32_0, %c0_i32_1 : i32, i32, i32
  }
  func.func @transform_38(%arg0: i32) -> (i32, i32, i32) {
    %c0_i32 = arith.constant 0 : i32
    %c0_i32_0 = arith.constant 0 : i32
    %c0_i32_1 = arith.constant 0 : i32
    %c0_i32_2 = arith.constant 0 : i32
    return %c0_i32, %c0_i32_0, %c0_i32_1 : i32, i32, i32
  }
  func.func @transform_39(%arg0: i32) -> (i32, i32, i32) {
    %c0_i32 = arith.constant 0 : i32
    %c0_i32_0 = arith.constant 0 : i32
    %c0_i32_1 = arith.constant 0 : i32
    %c0_i32_2 = arith.constant 0 : i32
    return %c0_i32, %c0_i32_0, %c0_i32_1 : i32, i32, i32
  }
  func.func @transform_40(%arg0: i32) -> (i32, i32, i32) {
    %c0_i32 = arith.constant 0 : i32
    %c0_i32_0 = arith.constant 0 : i32
    %c0_i32_1 = arith.constant 0 : i32
    %c0_i32_2 = arith.constant 0 : i32
    return %c0_i32, %c0_i32_0, %c0_i32_1 : i32, i32, i32
  }
  func.func @transform_41(%arg0: i32) -> (i32, i32, i32) {
    %c0_i32 = arith.constant 0 : i32
    %c0_i32_0 = arith.constant 0 : i32
    %c0_i32_1 = arith.constant 0 : i32
    %c0_i32_2 = arith.constant 0 : i32
    return %c0_i32, %c0_i32_0, %c0_i32_1 : i32, i32, i32
  }
  func.func @transform_42(%arg0: i32) -> (i32, i32, i32) {
    %c0_i32 = arith.constant 0 : i32
    %c0_i32_0 = arith.constant 0 : i32
    %c0_i32_1 = arith.constant 0 : i32
    %c0_i32_2 = arith.constant 0 : i32
    return %c0_i32, %c0_i32_0, %c0_i32_1 : i32, i32, i32
  }
  func.func @transform_43(%arg0: i32) -> (i32, i32, i32) {
    %c0_i32 = arith.constant 0 : i32
    %c0_i32_0 = arith.constant 0 : i32
    %c0_i32_1 = arith.constant 0 : i32
    %c0_i32_2 = arith.constant 0 : i32
    return %c0_i32, %c0_i32_0, %c0_i32_1 : i32, i32, i32
  }
  func.func @transform_44(%arg0: i32) -> (i32, i32, i32) {
    %c0_i32 = arith.constant 0 : i32
    %c0_i32_0 = arith.constant 0 : i32
    %c0_i32_1 = arith.constant 0 : i32
    %c0_i32_2 = arith.constant 0 : i32
    return %c0_i32, %c0_i32_0, %c0_i32_1 : i32, i32, i32
  }
  func.func @transform_45(%arg0: i32) -> (i32, i32, i32) {
    %c0_i32 = arith.constant 0 : i32
    %c0_i32_0 = arith.constant 0 : i32
    %c0_i32_1 = arith.constant 0 : i32
    %c0_i32_2 = arith.constant 0 : i32
    return %c0_i32, %c0_i32_0, %c0_i32_1 : i32, i32, i32
  }
  func.func @transform_46(%arg0: i32) -> (i32, i32, i32) {
    %c0_i32 = arith.constant 0 : i32
    %c0_i32_0 = arith.constant 0 : i32
    %c0_i32_1 = arith.constant 0 : i32
    %c0_i32_2 = arith.constant 0 : i32
    return %c0_i32, %c0_i32_0, %c0_i32_1 : i32, i32, i32
  }
  func.func @transform_47(%arg0: i32) -> (i32, i32, i32) {
    %c0_i32 = arith.constant 0 : i32
    %c0_i32_0 = arith.constant 0 : i32
    %c0_i32_1 = arith.constant 0 : i32
    %c0_i32_2 = arith.constant 0 : i32
    return %c0_i32, %c0_i32_0, %c0_i32_1 : i32, i32, i32
  }
  func.func @transform_48(%arg0: i32) -> (i32, i32, i32) {
    %c0_i32 = arith.constant 0 : i32
    %c0_i32_0 = arith.constant 0 : i32
    %c0_i32_1 = arith.constant 0 : i32
    %c0_i32_2 = arith.constant 0 : i32
    return %c0_i32, %c0_i32_0, %c0_i32_1 : i32, i32, i32
  }
  func.func @transform_49(%arg0: i32) -> (i32, i32) {
    %c0_i32 = arith.constant 0 : i32
    %c0_i32_0 = arith.constant 0 : i32
    %c0_i32_1 = arith.constant 0 : i32
    return %c0_i32, %c0_i32_0 : i32, i32
  }
  func.func @transform_50(%arg0: i32) -> (i32, i32) {
    %c0_i32 = arith.constant 0 : i32
    %c0_i32_0 = arith.constant 0 : i32
    %c0_i32_1 = arith.constant 0 : i32
    return %c0_i32, %c0_i32_0 : i32, i32
  }
  func.func @transform_51(%arg0: i32) -> (i32, i32) {
    %c0_i32 = arith.constant 0 : i32
    %c0_i32_0 = arith.constant 0 : i32
    %c0_i32_1 = arith.constant 0 : i32
    return %c0_i32, %c0_i32_0 : i32, i32
  }
  func.func @transform_52(%arg0: i32) -> (i32, i32) {
    %c0_i32 = arith.constant 0 : i32
    %c0_i32_0 = arith.constant 0 : i32
    %c0_i32_1 = arith.constant 0 : i32
    return %c0_i32, %c0_i32_0 : i32, i32
  }
  func.func @transform_53(%arg0: i32) -> (i32, i32) {
    %c0_i32 = arith.constant 0 : i32
    %c0_i32_0 = arith.constant 0 : i32
    %c0_i32_1 = arith.constant 0 : i32
    return %c0_i32, %c0_i32_0 : i32, i32
  }
  func.func @transform_54(%arg0: i32) -> (i32, i32) {
    %c0_i32 = arith.constant 0 : i32
    %c0_i32_0 = arith.constant 0 : i32
    %c0_i32_1 = arith.constant 0 : i32
    return %c0_i32, %c0_i32_0 : i32, i32
  }
  func.func @transform_55(%arg0: i32) -> (i32, i32) {
    %c0_i32 = arith.constant 0 : i32
    %c0_i32_0 = arith.constant 0 : i32
    %c0_i32_1 = arith.constant 0 : i32
    return %c0_i32, %c0_i32_0 : i32, i32
  }
  func.func @transform_56(%arg0: i32) -> (i32, i32) {
    %c0_i32 = arith.constant 0 : i32
    %c0_i32_0 = arith.constant 0 : i32
    %c0_i32_1 = arith.constant 0 : i32
    return %c0_i32, %c0_i32_0 : i32, i32
  }
  func.func @transform_57(%arg0: i32) -> (i32, i32) {
    %c0_i32 = arith.constant 0 : i32
    %c0_i32_0 = arith.constant 0 : i32
    %c0_i32_1 = arith.constant 0 : i32
    return %c0_i32, %c0_i32_0 : i32, i32
  }
  func.func @transform_58(%arg0: i32) -> (i32, i32) {
    %c0_i32 = arith.constant 0 : i32
    %c0_i32_0 = arith.constant 0 : i32
    %c0_i32_1 = arith.constant 0 : i32
    return %c0_i32, %c0_i32_0 : i32, i32
  }
  func.func @transform_59(%arg0: i32) -> (i32, i32) {
    %c0_i32 = arith.constant 0 : i32
    %c0_i32_0 = arith.constant 0 : i32
    %c0_i32_1 = arith.constant 0 : i32
    return %c0_i32, %c0_i32_0 : i32, i32
  }
  func.func @transform_60(%arg0: i32) -> (i32, i32) {
    %c0_i32 = arith.constant 0 : i32
    %c0_i32_0 = arith.constant 0 : i32
    %c0_i32_1 = arith.constant 0 : i32
    return %c0_i32, %c0_i32_0 : i32, i32
  }
  func.func @transform_61(%arg0: i32) -> (i32, i32) {
    %c0_i32 = arith.constant 0 : i32
    %c0_i32_0 = arith.constant 0 : i32
    %c0_i32_1 = arith.constant 0 : i32
    return %c0_i32, %c0_i32_0 : i32, i32
  }
  func.func @transform_62(%arg0: i32) -> (i32, i32) {
    %c0_i32 = arith.constant 0 : i32
    %c0_i32_0 = arith.constant 0 : i32
    %c0_i32_1 = arith.constant 0 : i32
    return %c0_i32, %c0_i32_0 : i32, i32
  }
  func.func @transform_63(%arg0: i32) -> (i32, i32, i32) {
    %c0_i32 = arith.constant 0 : i32
    %c0_i32_0 = arith.constant 0 : i32
    %c0_i32_1 = arith.constant 0 : i32
    return %arg0, %c0_i32, %c0_i32_0 : i32, i32, i32
  }
  func.func @transform_64(%arg0: i32) -> (i32, i32, i32) {
    %c0_i32 = arith.constant 0 : i32
    %c0_i32_0 = arith.constant 0 : i32
    %c0_i32_1 = arith.constant 0 : i32
    return %arg0, %c0_i32, %c0_i32_0 : i32, i32, i32
  }
  func.func @transform_65(%arg0: i32) -> (i32, i32, i32) {
    %c0_i32 = arith.constant 0 : i32
    %c0_i32_0 = arith.constant 0 : i32
    %c0_i32_1 = arith.constant 0 : i32
    return %arg0, %c0_i32, %c0_i32_0 : i32, i32, i32
  }
  func.func @transform_66(%arg0: i32) -> (i32, i32, i32) {
    %c0_i32 = arith.constant 0 : i32
    %c0_i32_0 = arith.constant 0 : i32
    %c0_i32_1 = arith.constant 0 : i32
    return %arg0, %c0_i32, %c0_i32_0 : i32, i32, i32
  }
  func.func @transform_67(%arg0: i32) -> (i32, i32, i32) {
    %c0_i32 = arith.constant 0 : i32
    %c0_i32_0 = arith.constant 0 : i32
    %c0_i32_1 = arith.constant 0 : i32
    return %arg0, %c0_i32, %c0_i32_0 : i32, i32, i32
  }
}

</mosaic_0001>

<llo_original>
// kernel: transformer_forward.1
$region0: #{transformer_forward.1}
  #allocation0 [shape = 'u32[]', space=smem, size = 0x4, offset = 0x4, fixed_abs, tag = 'smem constant byte address 0x4 - core index']
  #allocation1 [shape = 'u32[72,128]{1,0:T(1,128)}', space=vmem, size = 0x9000, scoped, tag = 'internal scratch']
  %s0 = inlined_call_operand.smem [shape: u32[68], index: -1, kind: input, shape index: {}]
  %s1 = sld [smem:[%s0]]
  %s2 = scalar_lea.smem %s0, 1
  %s3 = sld [smem:[%s2]]
  %s4 = scalar_lea.smem %s0, 2
  %s5 = sld [smem:[%s4]]
  %s6 = scalar_lea.smem %s0, 3
  %s7 = sld [smem:[%s6]]
  %s8 = scalar_lea.smem %s0, 4
  %s9 = sld [smem:[%s8]]
  %s10 = scalar_lea.smem %s0, 5
  %s11 = sld [smem:[%s10]]
  %s12 = scalar_lea.smem %s0, 6
  %s13 = sld [smem:[%s12]]
  %s14 = scalar_lea.smem %s0, 7
  %s15 = sld [smem:[%s14]]
  %s16 = scalar_lea.smem %s0, 8
  %s17 = sld [smem:[%s16]]
  %s18 = scalar_lea.smem %s0, 9
  %s19 = sld [smem:[%s18]]
  %s20 = scalar_lea.smem %s0, 10
  %s21 = sld [smem:[%s20]]
  %s22 = scalar_lea.smem %s0, 11
  %s23 = sld [smem:[%s22]]
  %s24 = scalar_lea.smem %s0, 12
  %s25 = sld [smem:[%s24]]
  %s26 = scalar_lea.smem %s0, 13
  %s27 = sld [smem:[%s26]]
  %s28 = scalar_lea.smem %s0, 14
  %s29 = sld [smem:[%s28]]
  %s30 = scalar_lea.smem %s0, 15
  %s31 = sld [smem:[%s30]]
  %s32 = scalar_lea.smem %s0, 16
  %s33 = sld [smem:[%s32]]
  %s34 = scalar_lea.smem %s0, 17
  %s35 = sld [smem:[%s34]]
  %s36 = scalar_lea.smem %s0, 18
  %s37 = sld [smem:[%s36]]
  %s38 = scalar_lea.smem %s0, 19
  %s39 = sld [smem:[%s38]]
  %s40 = scalar_lea.smem %s0, 20
  %s41 = sld [smem:[%s40]]
  %s42 = scalar_lea.smem %s0, 21
  %s43 = sld [smem:[%s42]]
  %s44 = scalar_lea.smem %s0, 22
  %s45 = sld [smem:[%s44]]
  %s46 = scalar_lea.smem %s0, 23
  %s47 = sld [smem:[%s46]]
  %s48 = scalar_lea.smem %s0, 24
  %s49 = sld [smem:[%s48]]
  %s50 = scalar_lea.smem %s0, 25
  %s51 = sld [smem:[%s50]]
  %s52 = scalar_lea.smem %s0, 26
  %s53 = sld [smem:[%s52]]
  %s54 = scalar_lea.smem %s0, 27
  %s55 = sld [smem:[%s54]]
  %s56 = scalar_lea.smem %s0, 28
  %s57 = sld [smem:[%s56]]
  %s58 = scalar_lea.smem %s0, 29
  %s59 = sld [smem:[%s58]]
  %s60 = scalar_lea.smem %s0, 30
  %s61 = sld [smem:[%s60]]
  %s62 = scalar_lea.smem %s0, 31
  %s63 = sld [smem:[%s62]]
  %s64 = scalar_lea.smem %s0, 32
  %s65 = sld [smem:[%s64]]
  %s66 = scalar_lea.smem %s0, 33
  %s67 = sld [smem:[%s66]]
  %s68 = scalar_lea.smem %s0, 34
  %s69 = sld [smem:[%s68]]
  %s70 = scalar_lea.smem %s0, 35
  %s71 = sld [smem:[%s70]]
  %s72 = scalar_lea.smem %s0, 36
  %s73 = sld [smem:[%s72]]
  %s74 = scalar_lea.smem %s0, 37
  %s75 = sld [smem:[%s74]]
  %s76 = scalar_lea.smem %s0, 38
  %s77 = sld [smem:[%s76]]
  %s78 = scalar_lea.smem %s0, 39
  %s79 = sld [smem:[%s78]]
  %s80 = scalar_lea.smem %s0, 40
  %s81 = sld [smem:[%s80]]
  %s82 = scalar_lea.smem %s0, 41
  %s83 = sld [smem:[%s82]]
  %s84 = scalar_lea.smem %s0, 42
  %s85 = sld [smem:[%s84]]
  %s86 = scalar_lea.smem %s0, 43
  %s87 = sld [smem:[%s86]]
  %s88 = scalar_lea.smem %s0, 44
  %s89 = sld [smem:[%s88]]
  %s90 = scalar_lea.smem %s0, 45
  %s91 = sld [smem:[%s90]]
  %s92 = scalar_lea.smem %s0, 46
  %s93 = sld [smem:[%s92]]
  %s94 = scalar_lea.smem %s0, 47
  %s95 = sld [smem:[%s94]]
  %s96 = scalar_lea.smem %s0, 48
  %s97 = sld [smem:[%s96]]
  %s98 = scalar_lea.smem %s0, 49
  %s99 = sld [smem:[%s98]]
  %s100 = scalar_lea.smem %s0, 50
  %s101 = sld [smem:[%s100]]
  %s102 = scalar_lea.smem %s0, 51
  %s103 = sld [smem:[%s102]]
  %s104 = scalar_lea.smem %s0, 52
  %s105 = sld [smem:[%s104]]
  %s106 = scalar_lea.smem %s0, 53
  %s107 = sld [smem:[%s106]]
  %s108 = scalar_lea.smem %s0, 54
  %s109 = sld [smem:[%s108]]
  %s110 = scalar_lea.smem %s0, 55
  %s111 = sld [smem:[%s110]]
  %s112 = scalar_lea.smem %s0, 56
  %s113 = sld [smem:[%s112]]
  %s114 = scalar_lea.smem %s0, 57
  %s115 = sld [smem:[%s114]]
  %s116 = scalar_lea.smem %s0, 58
  %s117 = sld [smem:[%s116]]
  %s118 = scalar_lea.smem %s0, 59
  %s119 = sld [smem:[%s118]]
  %s120 = scalar_lea.smem %s0, 60
  %s121 = sld [smem:[%s120]]
  %s122 = scalar_lea.smem %s0, 61
  %s123 = sld [smem:[%s122]]
  %s124 = scalar_lea.smem %s0, 62
  %s125 = sld [smem:[%s124]]
  %s126 = scalar_lea.smem %s0, 63
  %s127 = sld [smem:[%s126]]
  %s128 = scalar_lea.smem %s0, 64
  %s129 = sld [smem:[%s128]]
  %s130 = scalar_lea.smem %s0, 65
  %s131 = sld [smem:[%s130]]
  %s132 = scalar_lea.smem %s0, 66
  %s133 = sld [smem:[%s132]]
  %s134 = scalar_lea.smem %s0, 67
  %s135 = sld [smem:[%s134]]
  %136 = xla_tuple %s127, %s129, %s131, %s133, %s135
  %s137 = sld [smem:[#allocation0]]
  $region369: #{transformer_forward.1} parent=0
    _
  %s139 = ssub.s32 1, %s137
  %s140 = scalar_select 0, %s139, %s137
  $region1: #{transformer_forward.1} parent=0
    #allocation2 [shape = 'u8[512]{0}', space=vmem, size = 0x400, scoped, tag = 'input window, operand 19, single buffered']
    #allocation3 [shape = 's32[2]{0}', space=sflag, size = 0x8, scoped, tag = 'scoped memory for transformer_forward.1']
    #allocation4 [shape = 's32[2]{0}', space=sflag, size = 0x8, scoped, tag = 'scoped memory for transformer_forward.1']
    #allocation5 [shape = 'u8[512]{0}', space=vmem, size = 0x400, scoped, tag = 'input window, operand 20, single buffered']
    #allocation6 [shape = 's32[1]{0}', space=sflag, size = 0x4, scoped, tag = 'scoped memory for transformer_forward.1']
    #allocation7 [shape = 'u8[512]{0}', space=vmem, size = 0x400, scoped, tag = 'input window, operand 22, single buffered']
    #allocation8 [shape = 'u8[512]{0}', space=vmem, size = 0x400, scoped, tag = 'input window, operand 24, single buffered']
    #allocation9 [shape = 's32[1]{0}', space=sflag, size = 0x4, scoped, tag = 'scoped memory for transformer_forward.1']
    #allocation10 [shape = 'u8[512]{0}', space=vmem, size = 0x400, scoped, tag = 'input window, operand 26, single buffered']
    #allocation11 [shape = 'u8[512]{0}', space=vmem, size = 0x400, scoped, tag = 'input window, operand 49, single buffered']
    #allocation12 [shape = 's32[1]{0}', space=sflag, size = 0x4, scoped, tag = 'scoped memory for transformer_forward.1']
    #allocation13 [shape = 'u8[512]{0}', space=vmem, size = 0x400, scoped, tag = 'input window, operand 50, single buffered']
    #allocation14 [shape = 'u8[512]{0}', space=vmem, size = 0x400, scoped, tag = 'input window, operand 52, single buffered']
    #allocation15 [shape = 's32[1]{0}', space=sflag, size = 0x4, scoped, tag = 'scoped memory for transformer_forward.1']
    #allocation16 [shape = 'u8[512]{0}', space=vmem, size = 0x400, scoped, tag = 'input window, operand 54, single buffered']
    #allocation17 [shape = 'u8[512]{0}', space=vmem, size = 0x400, scoped, tag = 'input window, operand 56, single buffered']
    #allocation18 [shape = 's32[1]{0}', space=sflag, size = 0x4, scoped, tag = 'scoped memory for transformer_forward.1']
    #allocation19 [shape = 'u8[512]{0}', space=vmem, size = 0x400, scoped, tag = 'input window, operand 58, single buffered']
    #allocation20 [shape = 'u8[512]{0}', space=vmem, size = 0x400, scoped, tag = 'input window, operand 60, single buffered']
    #allocation21 [shape = 's32[1]{0}', space=sflag, size = 0x4, scoped, tag = 'scoped memory for transformer_forward.1']
    #allocation22 [shape = 'u8[512]{0}', space=vmem, size = 0x400, scoped, tag = 'input window, operand 62, single buffered']
    #allocation23 [shape = 'u8[8192]{0}', space=vmem, size = 0x2000, scoped, tag = 'output window, operand 1']
    %141 = vsyncpa [#allocation3], 0
    %142 = vsyncpa [#allocation6], 0
    %143 = vsyncpa [#allocation9], 0
    %144 = vsyncpa [#allocation12], 0
    %145 = vsyncpa [#allocation15], 0
    %146 = vsyncpa [#allocation18], 0
    %147 = vsyncpa [#allocation21], 0
    %148 = vsyncpa [#allocation4], 0
    %s149 = scalar_lea.sflag [#allocation4], 1
    %150 = vsyncpa %s149, 0
    loop: start=0, step=1, limit=4
    $region2: #{transformer_forward.1} parent=1 // loop_pre_header
      _
    $region3: #{transformer_forward.1} parent=1 // loop_header
      %s152 = sphi 0, %s156
      %p153 = scmp.ge.s32.totalorder %s152, 4
      %s162 = sphi 0, %s164
      %s165 = sphi 0, %s162
      %s166 = sphi 0, %s165
      %s182 = sphi 0, %s166
      %s188 = sphi 0, %s190
      %s191 = sphi 0, %s188
      %s192 = sphi 0, %s191
      %s208 = sphi 0, %s192
      %s214 = sphi 0, %s216
      %s217 = sphi 0, %s214
      %s218 = sphi 0, %s217
      %s234 = sphi 0, %s218
      %s240 = sphi 0, %s242
      %s243 = sphi 0, %s240
      %s244 = sphi 0, %s243
      %s260 = sphi 0, %s244
      %s264 = sphi 0, %s264
      %s266 = sphi 0, %s264
      %s267 = sphi 0, %s266
      %s281 = sphi 0, %s267
      %s285 = sphi 0, %s285
      %s287 = sphi 0, %s285
      %s288 = sphi 0, %s287
      %s302 = sphi 0, %s288
      %s306 = sphi 0, %s306
      %s308 = sphi 0, %s306
      %s309 = sphi 0, %s308
      %s323 = sphi 0, %s309
      %s327 = sphi 0, %s327
      %s329 = sphi 0, %s327
      %s330 = sphi 0, %s329
      %s344 = sphi 0, %s330
      %s348 = sphi 0, %s348
      %s350 = sphi 0, %s348
      %s351 = sphi 0, %s350
      %s365 = sphi 0, %s351
      %s369 = sphi 0, %s369
      %s371 = sphi 0, %s369
      %s372 = sphi 0, %s371
      %s386 = sphi 0, %s372
      %s390 = sphi 0, %s390
      %s392 = sphi 0, %s390
      %s393 = sphi 0, %s392
      %s407 = sphi 0, %s393
      %s411 = sphi 0, %s411
      %s413 = sphi 0, %s411
      %s414 = sphi 0, %s413
      %s428 = sphi 0, %s414
      %s432 = sphi 0, %s432
      %s434 = sphi 0, %s432
      %s435 = sphi 0, %s434
      %s449 = sphi 0, %s435
      %s453 = sphi 0, %s453
      %s455 = sphi 0, %s453
      %s456 = sphi 0, %s455
      %s470 = sphi 0, %s456
      %s474 = sphi 0, %s474
      %s476 = sphi 0, %s474
      %s477 = sphi 0, %s476
      %s491 = sphi 0, %s477
      %s495 = sphi 0, %s495
      %s497 = sphi 0, %s495
      %s498 = sphi 0, %s497
      %s512 = sphi 0, %s498
      %s516 = sphi 0, %s516
      %s518 = sphi 0, %s516
      %s519 = sphi 0, %s518
      %s533 = sphi 0, %s519
      %s537 = sphi 0, %s537
      %s539 = sphi 0, %s537
      %s540 = sphi 0, %s539
      %s554 = sphi 0, %s540
      %s558 = sphi 0, %s558
      %s560 = sphi 0, %s558
      %s561 = sphi 0, %s560
      %s575 = sphi 0, %s561
      %s579 = sphi 0, %s579
      %s581 = sphi 0, %s579
      %s582 = sphi 0, %s581
      %s596 = sphi 0, %s582
      %s600 = sphi 0, %s600
      %s602 = sphi 0, %s600
      %s603 = sphi 0, %s602
      %s617 = sphi 0, %s603
      %s621 = sphi 0, %s621
      %s623 = sphi 0, %s621
      %s624 = sphi 0, %s623
      %s638 = sphi 0, %s624
      %s642 = sphi 0, %s642
      %s644 = sphi 0, %s642
      %s645 = sphi 0, %s644
      %s659 = sphi 0, %s645
      %s663 = sphi 0, %s663
      %s665 = sphi 0, %s663
      %s666 = sphi 0, %s665
      %s680 = sphi 0, %s666
      %s684 = sphi 0, %s684
      %s686 = sphi 0, %s684
      %s687 = sphi 0, %s686
      %s701 = sphi 0, %s687
      %s705 = sphi 0, %s705
      %s707 = sphi 0, %s705
      %s708 = sphi 0, %s707
      %s722 = sphi 0, %s708
      %s726 = sphi 0, %s726
      %s728 = sphi 0, %s726
      %s729 = sphi 0, %s728
      %s743 = sphi 0, %s729
      %s747 = sphi 0, %s747
      %s749 = sphi 0, %s747
      %s750 = sphi 0, %s749
      %s764 = sphi 0, %s750
      %s768 = sphi 0, %s768
      %s770 = sphi 0, %s768
      %s771 = sphi 0, %s770
      %s785 = sphi 0, %s771
      %s789 = sphi 0, %s789
      %s791 = sphi 0, %s789
      %s792 = sphi 0, %s791
      %s806 = sphi 0, %s792
      %s810 = sphi 0, %s810
      %s812 = sphi 0, %s810
      %s813 = sphi 0, %s812
      %s827 = sphi 0, %s813
      %s831 = sphi 0, %s831
      %s833 = sphi 0, %s831
      %s834 = sphi 0, %s833
      %s848 = sphi 0, %s834
      %s852 = sphi 0, %s852
      %s854 = sphi 0, %s852
      %s855 = sphi 0, %s854
      %s869 = sphi 0, %s855
      %s873 = sphi 0, %s873
      %s875 = sphi 0, %s873
      %s876 = sphi 0, %s875
      %s890 = sphi 0, %s876
      %s894 = sphi 0, %s894
      %s896 = sphi 0, %s894
      %s897 = sphi 0, %s896
      %s911 = sphi 0, %s897
      %s915 = sphi 0, %s915
      %s917 = sphi 0, %s915
      %s918 = sphi 0, %s917
      %s932 = sphi 0, %s918
      %s936 = sphi 0, %s936
      %s938 = sphi 0, %s936
      %s939 = sphi 0, %s938
      %s953 = sphi 0, %s939
      %s957 = sphi 0, %s957
      %s959 = sphi 0, %s957
      %s960 = sphi 0, %s959
      %s974 = sphi 0, %s960
      %s978 = sphi 0, %s978
      %s980 = sphi 0, %s978
      %s981 = sphi 0, %s980
      %s995 = sphi 0, %s981
      %s999 = sphi 0, %s999
      %s1001 = sphi 0, %s999
      %s1002 = sphi 0, %s1001
      %s1016 = sphi 0, %s1002
      %s1020 = sphi 0, %s1020
      %s1022 = sphi 0, %s1020
      %s1023 = sphi 0, %s1022
      %s1037 = sphi 0, %s1023
      %s1041 = sphi 0, %s1041
      %s1043 = sphi 0, %s1041
      %s1044 = sphi 0, %s1043
      %s1058 = sphi 0, %s1044
      %s1062 = sphi 0, %s1062
      %s1064 = sphi 0, %s1062
      %s1065 = sphi 0, %s1064
      %s1079 = sphi 0, %s1065
      %s1083 = sphi 0, %s1083
      %s1085 = sphi 0, %s1083
      %s1086 = sphi 0, %s1085
      %s1100 = sphi 0, %s1086
      %s1104 = sphi 0, %s1104
      %s1106 = sphi 0, %s1104
      %s1107 = sphi 0, %s1106
      %s1121 = sphi 0, %s1107
      %s1125 = sphi 0, %s1125
      %s1127 = sphi 0, %s1125
      %s1128 = sphi 0, %s1127
      %s1142 = sphi 0, %s1128
      %s1146 = sphi 0, %s1146
      %s1148 = sphi 0, %s1146
      %s1149 = sphi 0, %s1148
      %s1163 = sphi 0, %s1149
      %s1167 = sphi 0, %s1167
      %s1169 = sphi 0, %s1167
      %s1170 = sphi 0, %s1169
      %s1184 = sphi 0, %s1170
      %s1188 = sphi 0, %s1188
      %s1190 = sphi 0, %s1188
      %s1191 = sphi 0, %s1190
      %s1205 = sphi 0, %s1191
      %s1209 = sphi 0, %s1209
      %s1211 = sphi 0, %s1209
      %s1212 = sphi 0, %s1211
      %s1226 = sphi 0, %s1212
      %s1230 = sphi 0, %s1230
      %s1232 = sphi 0, %s1230
      %s1233 = sphi 0, %s1232
      %s1247 = sphi 0, %s1233
      %s1251 = sphi 0, %s1251
      %s1253 = sphi 0, %s1251
      %s1254 = sphi 0, %s1253
      %s1268 = sphi 0, %s1254
      %s1272 = sphi 0, %s1272
      %s1274 = sphi 0, %s1272
      %s1275 = sphi 0, %s1274
      %s1289 = sphi 0, %s1275
      %s1293 = sphi 0, %s1293
      %s1295 = sphi 0, %s1293
      %s1296 = sphi 0, %s1295
      %s1310 = sphi 0, %s1296
      %s1314 = sphi 0, %s1314
      %s1316 = sphi 0, %s1314
      %s1317 = sphi 0, %s1316
      %s1331 = sphi 0, %s1317
      %s1335 = sphi 0, %s1335
      %s1337 = sphi 0, %s1335
      %s1338 = sphi 0, %s1337
      %s1352 = sphi 0, %s1338
      %s1356 = sphi 0, %s1356
      %s1358 = sphi 0, %s1356
      %s1359 = sphi 0, %s1358
      %s1373 = sphi 0, %s1359
      %s1377 = sphi 0, %s1377
      %s1379 = sphi 0, %s1377
      %s1380 = sphi 0, %s1379
      %s1394 = sphi 0, %s1380
      %s1398 = sphi 0, %s1398
      %s1400 = sphi 0, %s1398
      %s1401 = sphi 0, %s1400
      %s1415 = sphi 0, %s1401
      %s1419 = sphi 0, %s1419
      %s1421 = sphi 0, %s1419
      %s1422 = sphi 0, %s1421
      %s1436 = sphi 0, %s1422
      %s1440 = sphi 0, %s1440
      %s1442 = sphi 0, %s1440
      %s1443 = sphi 0, %s1442
      %s1457 = sphi 0, %s1443
      %s1461 = sphi 0, %s1461
      %s1463 = sphi 0, %s1461
      %s1464 = sphi 0, %s1463
      %s1478 = sphi 0, %s1464
      %s1482 = sphi 0, %s1482
      %s1484 = sphi 0, %s1482
      %s1485 = sphi 0, %s1484
      %s1499 = sphi 0, %s1485
      %s1505 = sphi 0, %s1507
      %s1508 = sphi 0, %s1505
      %s1509 = sphi 0, %s1508
      %s1525 = sphi 0, %s1509
      %s1531 = sphi 0, %s1533
      %s1534 = sphi 0, %s1531
      %s1535 = sphi 0, %s1534
      %s1551 = sphi 0, %s1535
      %s1557 = sphi 0, %s1559
      %s1560 = sphi 0, %s1557
      %s1561 = sphi 0, %s1560
      %s1577 = sphi 0, %s1561
      %s1583 = sphi 0, %s1585
      %s1586 = sphi 0, %s1583
      %s1587 = sphi 0, %s1586
      %s1603 = sphi 0, %s1587
      %s1609 = sphi 0, %s1611
      %s1612 = sphi 0, %s1609
      %s1613 = sphi 0, %s1612
      %s1629 = sphi 0, %s1613
    $region4: #{transformer_forward.1} parent=1 // loop_header_branch
      %155 = sbr.rel (%p153) target = $region8
    $region5: #{transformer_forward.1} parent=1 // loop_body
      %s157 = ssub.s32 %s152, 1
      %s158 = ssub.s32 %s152, 2
      %s159 = sadd.s32 %s152, 1
      %s160 = ssub.s32 %s152, %s159
      %p161 = scmp.eq.s32.totalorder %s160, 0
      %s163 = sadd.s32 %s162, 1
      %s164 = scalar_select %p161, %s162, %s163
      %p167 = pneg %p161
      %p168 = scmp.eq.s32.totalorder %s152, 1
      %p169 = por %p167, %p168
      %p170 = scmp.ne.s32.totalorder %s162, %s165
      %p171 = scmp.eq.s32.totalorder %s152, 0
      %p172 = por %p170, %p171
      %p173 = scmp.ne.s32.totalorder %s162, %s165
      %p174 = scmp.eq.s32.totalorder %s157, 1
      %p175 = por %p173, %p174
      %p176 = scmp.ne.s32.totalorder %s165, %s166
      %p177 = scmp.eq.s32.totalorder %s157, 0
      %p178 = por %p176, %p177
      %p179 = scmp.ne.s32.totalorder %s165, %s166
      %p180 = scmp.eq.s32.totalorder %s158, 1
      %p181 = por %p179, %p180
      %p183 = scmp.ne.s32.totalorder %s166, %s182
      %p184 = scmp.eq.s32.totalorder %s158, 0
      %p185 = por %p183, %p184
      %s186 = ssub.s32 %s152, %s159
      %p187 = scmp.eq.s32.totalorder %s186, 0
      %s189 = sadd.s32 %s188, 1
      %s190 = scalar_select %p187, %s188, %s189
      %p193 = pneg %p187
      %p194 = scmp.eq.s32.totalorder %s152, 1
      %p195 = por %p193, %p194
      %p196 = scmp.ne.s32.totalorder %s188, %s191
      %p197 = scmp.eq.s32.totalorder %s152, 0
      %p198 = por %p196, %p197
      %p199 = scmp.ne.s32.totalorder %s188, %s191
      %p200 = scmp.eq.s32.totalorder %s157, 1
      %p201 = por %p199, %p200
      %p202 = scmp.ne.s32.totalorder %s191, %s192
      %p203 = scmp.eq.s32.totalorder %s157, 0
      %p204 = por %p202, %p203
      %p205 = scmp.ne.s32.totalorder %s191, %s192
      %p206 = scmp.eq.s32.totalorder %s158, 1
      %p207 = por %p205, %p206
      %p209 = scmp.ne.s32.totalorder %s192, %s208
      %p210 = scmp.eq.s32.totalorder %s158, 0
      %p211 = por %p209, %p210
      %s212 = ssub.s32 %s152, %s159
      %p213 = scmp.eq.s32.totalorder %s212, 0
      %s215 = sadd.s32 %s214, 1
      %s216 = scalar_select %p213, %s214, %s215
      %p219 = pneg %p213
      %p220 = scmp.eq.s32.totalorder %s152, 1
      %p221 = por %p219, %p220
      %p222 = scmp.ne.s32.totalorder %s214, %s217
      %p223 = scmp.eq.s32.totalorder %s152, 0
      %p224 = por %p222, %p223
      %p225 = scmp.ne.s32.totalorder %s214, %s217
      %p226 = scmp.eq.s32.totalorder %s157, 1
      %p227 = por %p225, %p226
      %p228 = scmp.ne.s32.totalorder %s217, %s218
      %p229 = scmp.eq.s32.totalorder %s157, 0
      %p230 = por %p228, %p229
      %p231 = scmp.ne.s32.totalorder %s217, %s218
      %p232 = scmp.eq.s32.totalorder %s158, 1
      %p233 = por %p231, %p232
      %p235 = scmp.ne.s32.totalorder %s218, %s234
      %p236 = scmp.eq.s32.totalorder %s158, 0
      %p237 = por %p235, %p236
      %s238 = ssub.s32 %s152, %s159
      %p239 = scmp.eq.s32.totalorder %s238, 0
      %s241 = sadd.s32 %s240, 1
      %s242 = scalar_select %p239, %s240, %s241
      %p245 = pneg %p239
      %p246 = scmp.eq.s32.totalorder %s152, 1
      %p247 = por %p245, %p246
      %p248 = scmp.ne.s32.totalorder %s240, %s243
      %p249 = scmp.eq.s32.totalorder %s152, 0
      %p250 = por %p248, %p249
      %p251 = scmp.ne.s32.totalorder %s240, %s243
      %p252 = scmp.eq.s32.totalorder %s157, 1
      %p253 = por %p251, %p252
      %p254 = scmp.ne.s32.totalorder %s243, %s244
      %p255 = scmp.eq.s32.totalorder %s157, 0
      %p256 = por %p254, %p255
      %p257 = scmp.ne.s32.totalorder %s243, %s244
      %p258 = scmp.eq.s32.totalorder %s158, 1
      %p259 = por %p257, %p258
      %p261 = scmp.ne.s32.totalorder %s244, %s260
      %p262 = scmp.eq.s32.totalorder %s158, 0
      %p263 = por %p261, %p262
      %s265 = sadd.s32 %s264, 1
      %p268 = scmp.eq.s32.totalorder %s152, 1
      %p269 = scmp.ne.s32.totalorder %s264, %s266
      %p270 = scmp.eq.s32.totalorder %s152, 0
      %p271 = por %p269, %p270
      %p272 = scmp.ne.s32.totalorder %s264, %s266
      %p273 = scmp.eq.s32.totalorder %s157, 1
      %p274 = por %p272, %p273
      %p275 = scmp.ne.s32.totalorder %s266, %s267
      %p276 = scmp.eq.s32.totalorder %s157, 0
      %p277 = por %p275, %p276
      %p278 = scmp.ne.s32.totalorder %s266, %s267
      %p279 = scmp.eq.s32.totalorder %s158, 1
      %p280 = por %p278, %p279
      %p282 = scmp.ne.s32.totalorder %s267, %s281
      %p283 = scmp.eq.s32.totalorder %s158, 0
      %p284 = por %p282, %p283
      %s286 = sadd.s32 %s285, 1
      %p289 = scmp.eq.s32.totalorder %s152, 1
      %p290 = scmp.ne.s32.totalorder %s285, %s287
      %p291 = scmp.eq.s32.totalorder %s152, 0
      %p292 = por %p290, %p291
      %p293 = scmp.ne.s32.totalorder %s285, %s287
      %p294 = scmp.eq.s32.totalorder %s157, 1
      %p295 = por %p293, %p294
      %p296 = scmp.ne.s32.totalorder %s287, %s288
      %p297 = scmp.eq.s32.totalorder %s157, 0
      %p298 = por %p296, %p297
      %p299 = scmp.ne.s32.totalorder %s287, %s288
      %p300 = scmp.eq.s32.totalorder %s158, 1
      %p301 = por %p299, %p300
      %p303 = scmp.ne.s32.totalorder %s288, %s302
      %p304 = scmp.eq.s32.totalorder %s158, 0
      %p305 = por %p303, %p304
      %s307 = sadd.s32 %s306, 1
      %p310 = scmp.eq.s32.totalorder %s152, 1
      %p311 = scmp.ne.s32.totalorder %s306, %s308
      %p312 = scmp.eq.s32.totalorder %s152, 0
      %p313 = por %p311, %p312
      %p314 = scmp.ne.s32.totalorder %s306, %s308
      %p315 = scmp.eq.s32.totalorder %s157, 1
      %p316 = por %p314, %p315
      %p317 = scmp.ne.s32.totalorder %s308, %s309
      %p318 = scmp.eq.s32.totalorder %s157, 0
      %p319 = por %p317, %p318
      %p320 = scmp.ne.s32.totalorder %s308, %s309
      %p321 = scmp.eq.s32.totalorder %s158, 1
      %p322 = por %p320, %p321
      %p324 = scmp.ne.s32.totalorder %s309, %s323
      %p325 = scmp.eq.s32.totalorder %s158, 0
      %p326 = por %p324, %p325
      %s328 = sadd.s32 %s327, 1
      %p331 = scmp.eq.s32.totalorder %s152, 1
      %p332 = scmp.ne.s32.totalorder %s327, %s329
      %p333 = scmp.eq.s32.totalorder %s152, 0
      %p334 = por %p332, %p333
      %p335 = scmp.ne.s32.totalorder %s327, %s329
      %p336 = scmp.eq.s32.totalorder %s157, 1
      %p337 = por %p335, %p336
      %p338 = scmp.ne.s32.totalorder %s329, %s330
      %p339 = scmp.eq.s32.totalorder %s157, 0
      %p340 = por %p338, %p339
      %p341 = scmp.ne.s32.totalorder %s329, %s330
      %p342 = scmp.eq.s32.totalorder %s158, 1
      %p343 = por %p341, %p342
      %p345 = scmp.ne.s32.totalorder %s330, %s344
      %p346 = scmp.eq.s32.totalorder %s158, 0
      %p347 = por %p345, %p346
      %s349 = sadd.s32 %s348, 1
      %p352 = scmp.eq.s32.totalorder %s152, 1
      %p353 = scmp.ne.s32.totalorder %s348, %s350
      %p354 = scmp.eq.s32.totalorder %s152, 0
      %p355 = por %p353, %p354
      %p356 = scmp.ne.s32.totalorder %s348, %s350
      %p357 = scmp.eq.s32.totalorder %s157, 1
      %p358 = por %p356, %p357
      %p359 = scmp.ne.s32.totalorder %s350, %s351
      %p360 = scmp.eq.s32.totalorder %s157, 0
      %p361 = por %p359, %p360
      %p362 = scmp.ne.s32.totalorder %s350, %s351
      %p363 = scmp.eq.s32.totalorder %s158, 1
      %p364 = por %p362, %p363
      %p366 = scmp.ne.s32.totalorder %s351, %s365
      %p367 = scmp.eq.s32.totalorder %s158, 0
      %p368 = por %p366, %p367
      %s370 = sadd.s32 %s369, 1
      %p373 = scmp.eq.s32.totalorder %s152, 1
      %p374 = scmp.ne.s32.totalorder %s369, %s371
      %p375 = scmp.eq.s32.totalorder %s152, 0
      %p376 = por %p374, %p375
      %p377 = scmp.ne.s32.totalorder %s369, %s371
      %p378 = scmp.eq.s32.totalorder %s157, 1
      %p379 = por %p377, %p378
      %p380 = scmp.ne.s32.totalorder %s371, %s372
      %p381 = scmp.eq.s32.totalorder %s157, 0
      %p382 = por %p380, %p381
      %p383 = scmp.ne.s32.totalorder %s371, %s372
      %p384 = scmp.eq.s32.totalorder %s158, 1
      %p385 = por %p383, %p384
      %p387 = scmp.ne.s32.totalorder %s372, %s386
      %p388 = scmp.eq.s32.totalorder %s158, 0
      %p389 = por %p387, %p388
      %s391 = sadd.s32 %s390, 1
      %p394 = scmp.eq.s32.totalorder %s152, 1
      %p395 = scmp.ne.s32.totalorder %s390, %s392
      %p396 = scmp.eq.s32.totalorder %s152, 0
      %p397 = por %p395, %p396
      %p398 = scmp.ne.s32.totalorder %s390, %s392
      %p399 = scmp.eq.s32.totalorder %s157, 1
      %p400 = por %p398, %p399
      %p401 = scmp.ne.s32.totalorder %s392, %s393
      %p402 = scmp.eq.s32.totalorder %s157, 0
      %p403 = por %p401, %p402
      %p404 = scmp.ne.s32.totalorder %s392, %s393
      %p405 = scmp.eq.s32.totalorder %s158, 1
      %p406 = por %p404, %p405
      %p408 = scmp.ne.s32.totalorder %s393, %s407
      %p409 = scmp.eq.s32.totalorder %s158, 0
      %p410 = por %p408, %p409
      %s412 = sadd.s32 %s411, 1
      %p415 = scmp.eq.s32.totalorder %s152, 1
      %p416 = scmp.ne.s32.totalorder %s411, %s413
      %p417 = scmp.eq.s32.totalorder %s152, 0
      %p418 = por %p416, %p417
      %p419 = scmp.ne.s32.totalorder %s411, %s413
      %p420 = scmp.eq.s32.totalorder %s157, 1
      %p421 = por %p419, %p420
      %p422 = scmp.ne.s32.totalorder %s413, %s414
      %p423 = scmp.eq.s32.totalorder %s157, 0
      %p424 = por %p422, %p423
      %p425 = scmp.ne.s32.totalorder %s413, %s414
      %p426 = scmp.eq.s32.totalorder %s158, 1
      %p427 = por %p425, %p426
      %p429 = scmp.ne.s32.totalorder %s414, %s428
      %p430 = scmp.eq.s32.totalorder %s158, 0
      %p431 = por %p429, %p430
      %s433 = sadd.s32 %s432, 1
      %p436 = scmp.eq.s32.totalorder %s152, 1
      %p437 = scmp.ne.s32.totalorder %s432, %s434
      %p438 = scmp.eq.s32.totalorder %s152, 0
      %p439 = por %p437, %p438
      %p440 = scmp.ne.s32.totalorder %s432, %s434
      %p441 = scmp.eq.s32.totalorder %s157, 1
      %p442 = por %p440, %p441
      %p443 = scmp.ne.s32.totalorder %s434, %s435
      %p444 = scmp.eq.s32.totalorder %s157, 0
      %p445 = por %p443, %p444
      %p446 = scmp.ne.s32.totalorder %s434, %s435
      %p447 = scmp.eq.s32.totalorder %s158, 1
      %p448 = por %p446, %p447
      %p450 = scmp.ne.s32.totalorder %s435, %s449
      %p451 = scmp.eq.s32.totalorder %s158, 0
      %p452 = por %p450, %p451
      %s454 = sadd.s32 %s453, 1
      %p457 = scmp.eq.s32.totalorder %s152, 1
      %p458 = scmp.ne.s32.totalorder %s453, %s455
      %p459 = scmp.eq.s32.totalorder %s152, 0
      %p460 = por %p458, %p459
      %p461 = scmp.ne.s32.totalorder %s453, %s455
      %p462 = scmp.eq.s32.totalorder %s157, 1
      %p463 = por %p461, %p462
      %p464 = scmp.ne.s32.totalorder %s455, %s456
      %p465 = scmp.eq.s32.totalorder %s157, 0
      %p466 = por %p464, %p465
      %p467 = scmp.ne.s32.totalorder %s455, %s456
      %p468 = scmp.eq.s32.totalorder %s158, 1
      %p469 = por %p467, %p468
      %p471 = scmp.ne.s32.totalorder %s456, %s470
      %p472 = scmp.eq.s32.totalorder %s158, 0
      %p473 = por %p471, %p472
      %s475 = sadd.s32 %s474, 1
      %p478 = scmp.eq.s32.totalorder %s152, 1
      %p479 = scmp.ne.s32.totalorder %s474, %s476
      %p480 = scmp.eq.s32.totalorder %s152, 0
      %p481 = por %p479, %p480
      %p482 = scmp.ne.s32.totalorder %s474, %s476
      %p483 = scmp.eq.s32.totalorder %s157, 1
      %p484 = por %p482, %p483
      %p485 = scmp.ne.s32.totalorder %s476, %s477
      %p486 = scmp.eq.s32.totalorder %s157, 0
      %p487 = por %p485, %p486
      %p488 = scmp.ne.s32.totalorder %s476, %s477
      %p489 = scmp.eq.s32.totalorder %s158, 1
      %p490 = por %p488, %p489
      %p492 = scmp.ne.s32.totalorder %s477, %s491
      %p493 = scmp.eq.s32.totalorder %s158, 0
      %p494 = por %p492, %p493
      %s496 = sadd.s32 %s495, 1
      %p499 = scmp.eq.s32.totalorder %s152, 1
      %p500 = scmp.ne.s32.totalorder %s495, %s497
      %p501 = scmp.eq.s32.totalorder %s152, 0
      %p502 = por %p500, %p501
      %p503 = scmp.ne.s32.totalorder %s495, %s497
      %p504 = scmp.eq.s32.totalorder %s157, 1
      %p505 = por %p503, %p504
      %p506 = scmp.ne.s32.totalorder %s497, %s498
      %p507 = scmp.eq.s32.totalorder %s157, 0
      %p508 = por %p506, %p507
      %p509 = scmp.ne.s32.totalorder %s497, %s498
      %p510 = scmp.eq.s32.totalorder %s158, 1
      %p511 = por %p509, %p510
      %p513 = scmp.ne.s32.totalorder %s498, %s512
      %p514 = scmp.eq.s32.totalorder %s158, 0
      %p515 = por %p513, %p514
      %s517 = sadd.s32 %s516, 1
      %p520 = scmp.eq.s32.totalorder %s152, 1
      %p521 = scmp.ne.s32.totalorder %s516, %s518
      %p522 = scmp.eq.s32.totalorder %s152, 0
      %p523 = por %p521, %p522
      %p524 = scmp.ne.s32.totalorder %s516, %s518
      %p525 = scmp.eq.s32.totalorder %s157, 1
      %p526 = por %p524, %p525
      %p527 = scmp.ne.s32.totalorder %s518, %s519
      %p528 = scmp.eq.s32.totalorder %s157, 0
      %p529 = por %p527, %p528
      %p530 = scmp.ne.s32.totalorder %s518, %s519
      %p531 = scmp.eq.s32.totalorder %s158, 1
      %p532 = por %p530, %p531
      %p534 = scmp.ne.s32.totalorder %s519, %s533
      %p535 = scmp.eq.s32.totalorder %s158, 0
      %p536 = por %p534, %p535
      %s538 = sadd.s32 %s537, 1
      %p541 = scmp.eq.s32.totalorder %s152, 1
      %p542 = scmp.ne.s32.totalorder %s537, %s539
      %p543 = scmp.eq.s32.totalorder %s152, 0
      %p544 = por %p542, %p543
      %p545 = scmp.ne.s32.totalorder %s537, %s539
      %p546 = scmp.eq.s32.totalorder %s157, 1
      %p547 = por %p545, %p546
      %p548 = scmp.ne.s32.totalorder %s539, %s540
      %p549 = scmp.eq.s32.totalorder %s157, 0
      %p550 = por %p548, %p549
      %p551 = scmp.ne.s32.totalorder %s539, %s540
      %p552 = scmp.eq.s32.totalorder %s158, 1
      %p553 = por %p551, %p552
      %p555 = scmp.ne.s32.totalorder %s540, %s554
      %p556 = scmp.eq.s32.totalorder %s158, 0
      %p557 = por %p555, %p556
      %s559 = sadd.s32 %s558, 1
      %p562 = scmp.eq.s32.totalorder %s152, 1
      %p563 = scmp.ne.s32.totalorder %s558, %s560
      %p564 = scmp.eq.s32.totalorder %s152, 0
      %p565 = por %p563, %p564
      %p566 = scmp.ne.s32.totalorder %s558, %s560
      %p567 = scmp.eq.s32.totalorder %s157, 1
      %p568 = por %p566, %p567
      %p569 = scmp.ne.s32.totalorder %s560, %s561
      %p570 = scmp.eq.s32.totalorder %s157, 0
      %p571 = por %p569, %p570
      %p572 = scmp.ne.s32.totalorder %s560, %s561
      %p573 = scmp.eq.s32.totalorder %s158, 1
      %p574 = por %p572, %p573
      %p576 = scmp.ne.s32.totalorder %s561, %s575
      %p577 = scmp.eq.s32.totalorder %s158, 0
      %p578 = por %p576, %p577
      %s580 = sadd.s32 %s579, 1
      %p583 = scmp.eq.s32.totalorder %s152, 1
      %p584 = scmp.ne.s32.totalorder %s579, %s581
      %p585 = scmp.eq.s32.totalorder %s152, 0
      %p586 = por %p584, %p585
      %p587 = scmp.ne.s32.totalorder %s579, %s581
      %p588 = scmp.eq.s32.totalorder %s157, 1
      %p589 = por %p587, %p588
      %p590 = scmp.ne.s32.totalorder %s581, %s582
      %p591 = scmp.eq.s32.totalorder %s157, 0
      %p592 = por %p590, %p591
      %p593 = scmp.ne.s32.totalorder %s581, %s582
      %p594 = scmp.eq.s32.totalorder %s158, 1
      %p595 = por %p593, %p594
      %p597 = scmp.ne.s32.totalorder %s582, %s596
      %p598 = scmp.eq.s32.totalorder %s158, 0
      %p599 = por %p597, %p598
      %s601 = sadd.s32 %s600, 1
      %p604 = scmp.eq.s32.totalorder %s152, 1
      %p605 = scmp.ne.s32.totalorder %s600, %s602
      %p606 = scmp.eq.s32.totalorder %s152, 0
      %p607 = por %p605, %p606
      %p608 = scmp.ne.s32.totalorder %s600, %s602
      %p609 = scmp.eq.s32.totalorder %s157, 1
      %p610 = por %p608, %p609
      %p611 = scmp.ne.s32.totalorder %s602, %s603
      %p612 = scmp.eq.s32.totalorder %s157, 0
      %p613 = por %p611, %p612
      %p614 = scmp.ne.s32.totalorder %s602, %s603
      %p615 = scmp.eq.s32.totalorder %s158, 1
      %p616 = por %p614, %p615
      %p618 = scmp.ne.s32.totalorder %s603, %s617
      %p619 = scmp.eq.s32.totalorder %s158, 0
      %p620 = por %p618, %p619
      %s622 = sadd.s32 %s621, 1
      %p625 = scmp.eq.s32.totalorder %s152, 1
      %p626 = scmp.ne.s32.totalorder %s621, %s623
      %p627 = scmp.eq.s32.totalorder %s152, 0
      %p628 = por %p626, %p627
      %p629 = scmp.ne.s32.totalorder %s621, %s623
      %p630 = scmp.eq.s32.totalorder %s157, 1
      %p631 = por %p629, %p630
      %p632 = scmp.ne.s32.totalorder %s623, %s624
      %p633 = scmp.eq.s32.totalorder %s157, 0
      %p634 = por %p632, %p633
      %p635 = scmp.ne.s32.totalorder %s623, %s624
      %p636 = scmp.eq.s32.totalorder %s158, 1
      %p637 = por %p635, %p636
      %p639 = scmp.ne.s32.totalorder %s624, %s638
      %p640 = scmp.eq.s32.totalorder %s158, 0
      %p641 = por %p639, %p640
      %s643 = sadd.s32 %s642, 1
      %p646 = scmp.eq.s32.totalorder %s152, 1
      %p647 = scmp.ne.s32.totalorder %s642, %s644
      %p648 = scmp.eq.s32.totalorder %s152, 0
      %p649 = por %p647, %p648
      %p650 = scmp.ne.s32.totalorder %s642, %s644
      %p651 = scmp.eq.s32.totalorder %s157, 1
      %p652 = por %p650, %p651
      %p653 = scmp.ne.s32.totalorder %s644, %s645
      %p654 = scmp.eq.s32.totalorder %s157, 0
      %p655 = por %p653, %p654
      %p656 = scmp.ne.s32.totalorder %s644, %s645
      %p657 = scmp.eq.s32.totalorder %s158, 1
      %p658 = por %p656, %p657
      %p660 = scmp.ne.s32.totalorder %s645, %s659
      %p661 = scmp.eq.s32.totalorder %s158, 0
      %p662 = por %p660, %p661
      %s664 = sadd.s32 %s663, 1
      %p667 = scmp.eq.s32.totalorder %s152, 1
      %p668 = scmp.ne.s32.totalorder %s663, %s665
      %p669 = scmp.eq.s32.totalorder %s152, 0
      %p670 = por %p668, %p669
      %p671 = scmp.ne.s32.totalorder %s663, %s665
      %p672 = scmp.eq.s32.totalorder %s157, 1
      %p673 = por %p671, %p672
      %p674 = scmp.ne.s32.totalorder %s665, %s666
      %p675 = scmp.eq.s32.totalorder %s157, 0
      %p676 = por %p674, %p675
      %p677 = scmp.ne.s32.totalorder %s665, %s666
      %p678 = scmp.eq.s32.totalorder %s158, 1
      %p679 = por %p677, %p678
      %p681 = scmp.ne.s32.totalorder %s666, %s680
      %p682 = scmp.eq.s32.totalorder %s158, 0
      %p683 = por %p681, %p682
      %s685 = sadd.s32 %s684, 1
      %p688 = scmp.eq.s32.totalorder %s152, 1
      %p689 = scmp.ne.s32.totalorder %s684, %s686
      %p690 = scmp.eq.s32.totalorder %s152, 0
      %p691 = por %p689, %p690
      %p692 = scmp.ne.s32.totalorder %s684, %s686
      %p693 = scmp.eq.s32.totalorder %s157, 1
      %p694 = por %p692, %p693
      %p695 = scmp.ne.s32.totalorder %s686, %s687
      %p696 = scmp.eq.s32.totalorder %s157, 0
      %p697 = por %p695, %p696
      %p698 = scmp.ne.s32.totalorder %s686, %s687
      %p699 = scmp.eq.s32.totalorder %s158, 1
      %p700 = por %p698, %p699
      %p702 = scmp.ne.s32.totalorder %s687, %s701
      %p703 = scmp.eq.s32.totalorder %s158, 0
      %p704 = por %p702, %p703
      %s706 = sadd.s32 %s705, 1
      %p709 = scmp.eq.s32.totalorder %s152, 1
      %p710 = scmp.ne.s32.totalorder %s705, %s707
      %p711 = scmp.eq.s32.totalorder %s152, 0
      %p712 = por %p710, %p711
      %p713 = scmp.ne.s32.totalorder %s705, %s707
      %p714 = scmp.eq.s32.totalorder %s157, 1
      %p715 = por %p713, %p714
      %p716 = scmp.ne.s32.totalorder %s707, %s708
      %p717 = scmp.eq.s32.totalorder %s157, 0
      %p718 = por %p716, %p717
      %p719 = scmp.ne.s32.totalorder %s707, %s708
      %p720 = scmp.eq.s32.totalorder %s158, 1
      %p721 = por %p719, %p720
      %p723 = scmp.ne.s32.totalorder %s708, %s722
      %p724 = scmp.eq.s32.totalorder %s158, 0
      %p725 = por %p723, %p724
      %s727 = sadd.s32 %s726, 1
      %p730 = scmp.eq.s32.totalorder %s152, 1
      %p731 = scmp.ne.s32.totalorder %s726, %s728
      %p732 = scmp.eq.s32.totalorder %s152, 0
      %p733 = por %p731, %p732
      %p734 = scmp.ne.s32.totalorder %s726, %s728
      %p735 = scmp.eq.s32.totalorder %s157, 1
      %p736 = por %p734, %p735
      %p737 = scmp.ne.s32.totalorder %s728, %s729
      %p738 = scmp.eq.s32.totalorder %s157, 0
      %p739 = por %p737, %p738
      %p740 = scmp.ne.s32.totalorder %s728, %s729
      %p741 = scmp.eq.s32.totalorder %s158, 1
      %p742 = por %p740, %p741
      %p744 = scmp.ne.s32.totalorder %s729, %s743
      %p745 = scmp.eq.s32.totalorder %s158, 0
      %p746 = por %p744, %p745
      %s748 = sadd.s32 %s747, 1
      %p751 = scmp.eq.s32.totalorder %s152, 1
      %p752 = scmp.ne.s32.totalorder %s747, %s749
      %p753 = scmp.eq.s32.totalorder %s152, 0
      %p754 = por %p752, %p753
      %p755 = scmp.ne.s32.totalorder %s747, %s749
      %p756 = scmp.eq.s32.totalorder %s157, 1
      %p757 = por %p755, %p756
      %p758 = scmp.ne.s32.totalorder %s749, %s750
      %p759 = scmp.eq.s32.totalorder %s157, 0
      %p760 = por %p758, %p759
      %p761 = scmp.ne.s32.totalorder %s749, %s750
      %p762 = scmp.eq.s32.totalorder %s158, 1
      %p763 = por %p761, %p762
      %p765 = scmp.ne.s32.totalorder %s750, %s764
      %p766 = scmp.eq.s32.totalorder %s158, 0
      %p767 = por %p765, %p766
      %s769 = sadd.s32 %s768, 1
      %p772 = scmp.eq.s32.totalorder %s152, 1
      %p773 = scmp.ne.s32.totalorder %s768, %s770
      %p774 = scmp.eq.s32.totalorder %s152, 0
      %p775 = por %p773, %p774
      %p776 = scmp.ne.s32.totalorder %s768, %s770
      %p777 = scmp.eq.s32.totalorder %s157, 1
      %p778 = por %p776, %p777
      %p779 = scmp.ne.s32.totalorder %s770, %s771
      %p780 = scmp.eq.s32.totalorder %s157, 0
      %p781 = por %p779, %p780
      %p782 = scmp.ne.s32.totalorder %s770, %s771
      %p783 = scmp.eq.s32.totalorder %s158, 1
      %p784 = por %p782, %p783
      %p786 = scmp.ne.s32.totalorder %s771, %s785
      %p787 = scmp.eq.s32.totalorder %s158, 0
      %p788 = por %p786, %p787
      %s790 = sadd.s32 %s789, 1
      %p793 = scmp.eq.s32.totalorder %s152, 1
      %p794 = scmp.ne.s32.totalorder %s789, %s791
      %p795 = scmp.eq.s32.totalorder %s152, 0
      %p796 = por %p794, %p795
      %p797 = scmp.ne.s32.totalorder %s789, %s791
      %p798 = scmp.eq.s32.totalorder %s157, 1
      %p799 = por %p797, %p798
      %p800 = scmp.ne.s32.totalorder %s791, %s792
      %p801 = scmp.eq.s32.totalorder %s157, 0
      %p802 = por %p800, %p801
      %p803 = scmp.ne.s32.totalorder %s791, %s792
      %p804 = scmp.eq.s32.totalorder %s158, 1
      %p805 = por %p803, %p804
      %p807 = scmp.ne.s32.totalorder %s792, %s806
      %p808 = scmp.eq.s32.totalorder %s158, 0
      %p809 = por %p807, %p808
      %s811 = sadd.s32 %s810, 1
      %p814 = scmp.eq.s32.totalorder %s152, 1
      %p815 = scmp.ne.s32.totalorder %s810, %s812
      %p816 = scmp.eq.s32.totalorder %s152, 0
      %p817 = por %p815, %p816
      %p818 = scmp.ne.s32.totalorder %s810, %s812
      %p819 = scmp.eq.s32.totalorder %s157, 1
      %p820 = por %p818, %p819
      %p821 = scmp.ne.s32.totalorder %s812, %s813
      %p822 = scmp.eq.s32.totalorder %s157, 0
      %p823 = por %p821, %p822
      %p824 = scmp.ne.s32.totalorder %s812, %s813
      %p825 = scmp.eq.s32.totalorder %s158, 1
      %p826 = por %p824, %p825
      %p828 = scmp.ne.s32.totalorder %s813, %s827
      %p829 = scmp.eq.s32.totalorder %s158, 0
      %p830 = por %p828, %p829
      %s832 = sadd.s32 %s831, 1
      %p835 = scmp.eq.s32.totalorder %s152, 1
      %p836 = scmp.ne.s32.totalorder %s831, %s833
      %p837 = scmp.eq.s32.totalorder %s152, 0
      %p838 = por %p836, %p837
      %p839 = scmp.ne.s32.totalorder %s831, %s833
      %p840 = scmp.eq.s32.totalorder %s157, 1
      %p841 = por %p839, %p840
      %p842 = scmp.ne.s32.totalorder %s833, %s834
      %p843 = scmp.eq.s32.totalorder %s157, 0
      %p844 = por %p842, %p843
      %p845 = scmp.ne.s32.totalorder %s833, %s834
      %p846 = scmp.eq.s32.totalorder %s158, 1
      %p847 = por %p845, %p846
      %p849 = scmp.ne.s32.totalorder %s834, %s848
      %p850 = scmp.eq.s32.totalorder %s158, 0
      %p851 = por %p849, %p850
      %s853 = sadd.s32 %s852, 1
      %p856 = scmp.eq.s32.totalorder %s152, 1
      %p857 = scmp.ne.s32.totalorder %s852, %s854
      %p858 = scmp.eq.s32.totalorder %s152, 0
      %p859 = por %p857, %p858
      %p860 = scmp.ne.s32.totalorder %s852, %s854
      %p861 = scmp.eq.s32.totalorder %s157, 1
      %p862 = por %p860, %p861
      %p863 = scmp.ne.s32.totalorder %s854, %s855
      %p864 = scmp.eq.s32.totalorder %s157, 0
      %p865 = por %p863, %p864
      %p866 = scmp.ne.s32.totalorder %s854, %s855
      %p867 = scmp.eq.s32.totalorder %s158, 1
      %p868 = por %p866, %p867
      %p870 = scmp.ne.s32.totalorder %s855, %s869
      %p871 = scmp.eq.s32.totalorder %s158, 0
      %p872 = por %p870, %p871
      %s874 = sadd.s32 %s873, 1
      %p877 = scmp.eq.s32.totalorder %s152, 1
      %p878 = scmp.ne.s32.totalorder %s873, %s875
      %p879 = scmp.eq.s32.totalorder %s152, 0
      %p880 = por %p878, %p879
      %p881 = scmp.ne.s32.totalorder %s873, %s875
      %p882 = scmp.eq.s32.totalorder %s157, 1
      %p883 = por %p881, %p882
      %p884 = scmp.ne.s32.totalorder %s875, %s876
      %p885 = scmp.eq.s32.totalorder %s157, 0
      %p886 = por %p884, %p885
      %p887 = scmp.ne.s32.totalorder %s875, %s876
      %p888 = scmp.eq.s32.totalorder %s158, 1
      %p889 = por %p887, %p888
      %p891 = scmp.ne.s32.totalorder %s876, %s890
      %p892 = scmp.eq.s32.totalorder %s158, 0
      %p893 = por %p891, %p892
      %s895 = sadd.s32 %s894, 1
      %p898 = scmp.eq.s32.totalorder %s152, 1
      %p899 = scmp.ne.s32.totalorder %s894, %s896
      %p900 = scmp.eq.s32.totalorder %s152, 0
      %p901 = por %p899, %p900
      %p902 = scmp.ne.s32.totalorder %s894, %s896
      %p903 = scmp.eq.s32.totalorder %s157, 1
      %p904 = por %p902, %p903
      %p905 = scmp.ne.s32.totalorder %s896, %s897
      %p906 = scmp.eq.s32.totalorder %s157, 0
      %p907 = por %p905, %p906
      %p908 = scmp.ne.s32.totalorder %s896, %s897
      %p909 = scmp.eq.s32.totalorder %s158, 1
      %p910 = por %p908, %p909
      %p912 = scmp.ne.s32.totalorder %s897, %s911
      %p913 = scmp.eq.s32.totalorder %s158, 0
      %p914 = por %p912, %p913
      %s916 = sadd.s32 %s915, 1
      %p919 = scmp.eq.s32.totalorder %s152, 1
      %p920 = scmp.ne.s32.totalorder %s915, %s917
      %p921 = scmp.eq.s32.totalorder %s152, 0
      %p922 = por %p920, %p921
      %p923 = scmp.ne.s32.totalorder %s915, %s917
      %p924 = scmp.eq.s32.totalorder %s157, 1
      %p925 = por %p923, %p924
      %p926 = scmp.ne.s32.totalorder %s917, %s918
      %p927 = scmp.eq.s32.totalorder %s157, 0
      %p928 = por %p926, %p927
      %p929 = scmp.ne.s32.totalorder %s917, %s918
      %p930 = scmp.eq.s32.totalorder %s158, 1
      %p931 = por %p929, %p930
      %p933 = scmp.ne.s32.totalorder %s918, %s932
      %p934 = scmp.eq.s32.totalorder %s158, 0
      %p935 = por %p933, %p934
      %s937 = sadd.s32 %s936, 1
      %p940 = scmp.eq.s32.totalorder %s152, 1
      %p941 = scmp.ne.s32.totalorder %s936, %s938
      %p942 = scmp.eq.s32.totalorder %s152, 0
      %p943 = por %p941, %p942
      %p944 = scmp.ne.s32.totalorder %s936, %s938
      %p945 = scmp.eq.s32.totalorder %s157, 1
      %p946 = por %p944, %p945
      %p947 = scmp.ne.s32.totalorder %s938, %s939
      %p948 = scmp.eq.s32.totalorder %s157, 0
      %p949 = por %p947, %p948
      %p950 = scmp.ne.s32.totalorder %s938, %s939
      %p951 = scmp.eq.s32.totalorder %s158, 1
      %p952 = por %p950, %p951
      %p954 = scmp.ne.s32.totalorder %s939, %s953
      %p955 = scmp.eq.s32.totalorder %s158, 0
      %p956 = por %p954, %p955
      %s958 = sadd.s32 %s957, 1
      %p961 = scmp.eq.s32.totalorder %s152, 1
      %p962 = scmp.ne.s32.totalorder %s957, %s959
      %p963 = scmp.eq.s32.totalorder %s152, 0
      %p964 = por %p962, %p963
      %p965 = scmp.ne.s32.totalorder %s957, %s959
      %p966 = scmp.eq.s32.totalorder %s157, 1
      %p967 = por %p965, %p966
      %p968 = scmp.ne.s32.totalorder %s959, %s960
      %p969 = scmp.eq.s32.totalorder %s157, 0
      %p970 = por %p968, %p969
      %p971 = scmp.ne.s32.totalorder %s959, %s960
      %p972 = scmp.eq.s32.totalorder %s158, 1
      %p973 = por %p971, %p972
      %p975 = scmp.ne.s32.totalorder %s960, %s974
      %p976 = scmp.eq.s32.totalorder %s158, 0
      %p977 = por %p975, %p976
      %s979 = sadd.s32 %s978, 1
      %p982 = scmp.eq.s32.totalorder %s152, 1
      %p983 = scmp.ne.s32.totalorder %s978, %s980
      %p984 = scmp.eq.s32.totalorder %s152, 0
      %p985 = por %p983, %p984
      %p986 = scmp.ne.s32.totalorder %s978, %s980
      %p987 = scmp.eq.s32.totalorder %s157, 1
      %p988 = por %p986, %p987
      %p989 = scmp.ne.s32.totalorder %s980, %s981
      %p990 = scmp.eq.s32.totalorder %s157, 0
      %p991 = por %p989, %p990
      %p992 = scmp.ne.s32.totalorder %s980, %s981
      %p993 = scmp.eq.s32.totalorder %s158, 1
      %p994 = por %p992, %p993
      %p996 = scmp.ne.s32.totalorder %s981, %s995
      %p997 = scmp.eq.s32.totalorder %s158, 0
      %p998 = por %p996, %p997
      %s1000 = sadd.s32 %s999, 1
      %p1003 = scmp.eq.s32.totalorder %s152, 1
      %p1004 = scmp.ne.s32.totalorder %s999, %s1001
      %p1005 = scmp.eq.s32.totalorder %s152, 0
      %p1006 = por %p1004, %p1005
      %p1007 = scmp.ne.s32.totalorder %s999, %s1001
      %p1008 = scmp.eq.s32.totalorder %s157, 1
      %p1009 = por %p1007, %p1008
      %p1010 = scmp.ne.s32.totalorder %s1001, %s1002
      %p1011 = scmp.eq.s32.totalorder %s157, 0
      %p1012 = por %p1010, %p1011
      %p1013 = scmp.ne.s32.totalorder %s1001, %s1002
      %p1014 = scmp.eq.s32.totalorder %s158, 1
      %p1015 = por %p1013, %p1014
      %p1017 = scmp.ne.s32.totalorder %s1002, %s1016
      %p1018 = scmp.eq.s32.totalorder %s158, 0
      %p1019 = por %p1017, %p1018
      %s1021 = sadd.s32 %s1020, 1
      %p1024 = scmp.eq.s32.totalorder %s152, 1
      %p1025 = scmp.ne.s32.totalorder %s1020, %s1022
      %p1026 = scmp.eq.s32.totalorder %s152, 0
      %p1027 = por %p1025, %p1026
      %p1028 = scmp.ne.s32.totalorder %s1020, %s1022
      %p1029 = scmp.eq.s32.totalorder %s157, 1
      %p1030 = por %p1028, %p1029
      %p1031 = scmp.ne.s32.totalorder %s1022, %s1023
      %p1032 = scmp.eq.s32.totalorder %s157, 0
      %p1033 = por %p1031, %p1032
      %p1034 = scmp.ne.s32.totalorder %s1022, %s1023
      %p1035 = scmp.eq.s32.totalorder %s158, 1
      %p1036 = por %p1034, %p1035
      %p1038 = scmp.ne.s32.totalorder %s1023, %s1037
      %p1039 = scmp.eq.s32.totalorder %s158, 0
      %p1040 = por %p1038, %p1039
      %s1042 = sadd.s32 %s1041, 1
      %p1045 = scmp.eq.s32.totalorder %s152, 1
      %p1046 = scmp.ne.s32.totalorder %s1041, %s1043
      %p1047 = scmp.eq.s32.totalorder %s152, 0
      %p1048 = por %p1046, %p1047
      %p1049 = scmp.ne.s32.totalorder %s1041, %s1043
      %p1050 = scmp.eq.s32.totalorder %s157, 1
      %p1051 = por %p1049, %p1050
      %p1052 = scmp.ne.s32.totalorder %s1043, %s1044
      %p1053 = scmp.eq.s32.totalorder %s157, 0
      %p1054 = por %p1052, %p1053
      %p1055 = scmp.ne.s32.totalorder %s1043, %s1044
      %p1056 = scmp.eq.s32.totalorder %s158, 1
      %p1057 = por %p1055, %p1056
      %p1059 = scmp.ne.s32.totalorder %s1044, %s1058
      %p1060 = scmp.eq.s32.totalorder %s158, 0
      %p1061 = por %p1059, %p1060
      %s1063 = sadd.s32 %s1062, 1
      %p1066 = scmp.eq.s32.totalorder %s152, 1
      %p1067 = scmp.ne.s32.totalorder %s1062, %s1064
      %p1068 = scmp.eq.s32.totalorder %s152, 0
      %p1069 = por %p1067, %p1068
      %p1070 = scmp.ne.s32.totalorder %s1062, %s1064
      %p1071 = scmp.eq.s32.totalorder %s157, 1
      %p1072 = por %p1070, %p1071
      %p1073 = scmp.ne.s32.totalorder %s1064, %s1065
      %p1074 = scmp.eq.s32.totalorder %s157, 0
      %p1075 = por %p1073, %p1074
      %p1076 = scmp.ne.s32.totalorder %s1064, %s1065
      %p1077 = scmp.eq.s32.totalorder %s158, 1
      %p1078 = por %p1076, %p1077
      %p1080 = scmp.ne.s32.totalorder %s1065, %s1079
      %p1081 = scmp.eq.s32.totalorder %s158, 0
      %p1082 = por %p1080, %p1081
      %s1084 = sadd.s32 %s1083, 1
      %p1087 = scmp.eq.s32.totalorder %s152, 1
      %p1088 = scmp.ne.s32.totalorder %s1083, %s1085
      %p1089 = scmp.eq.s32.totalorder %s152, 0
      %p1090 = por %p1088, %p1089
      %p1091 = scmp.ne.s32.totalorder %s1083, %s1085
      %p1092 = scmp.eq.s32.totalorder %s157, 1
      %p1093 = por %p1091, %p1092
      %p1094 = scmp.ne.s32.totalorder %s1085, %s1086
      %p1095 = scmp.eq.s32.totalorder %s157, 0
      %p1096 = por %p1094, %p1095
      %p1097 = scmp.ne.s32.totalorder %s1085, %s1086
      %p1098 = scmp.eq.s32.totalorder %s158, 1
      %p1099 = por %p1097, %p1098
      %p1101 = scmp.ne.s32.totalorder %s1086, %s1100
      %p1102 = scmp.eq.s32.totalorder %s158, 0
      %p1103 = por %p1101, %p1102
      %s1105 = sadd.s32 %s1104, 1
      %p1108 = scmp.eq.s32.totalorder %s152, 1
      %p1109 = scmp.ne.s32.totalorder %s1104, %s1106
      %p1110 = scmp.eq.s32.totalorder %s152, 0
      %p1111 = por %p1109, %p1110
      %p1112 = scmp.ne.s32.totalorder %s1104, %s1106
      %p1113 = scmp.eq.s32.totalorder %s157, 1
      %p1114 = por %p1112, %p1113
      %p1115 = scmp.ne.s32.totalorder %s1106, %s1107
      %p1116 = scmp.eq.s32.totalorder %s157, 0
      %p1117 = por %p1115, %p1116
      %p1118 = scmp.ne.s32.totalorder %s1106, %s1107
      %p1119 = scmp.eq.s32.totalorder %s158, 1
      %p1120 = por %p1118, %p1119
      %p1122 = scmp.ne.s32.totalorder %s1107, %s1121
      %p1123 = scmp.eq.s32.totalorder %s158, 0
      %p1124 = por %p1122, %p1123
      %s1126 = sadd.s32 %s1125, 1
      %p1129 = scmp.eq.s32.totalorder %s152, 1
      %p1130 = scmp.ne.s32.totalorder %s1125, %s1127
      %p1131 = scmp.eq.s32.totalorder %s152, 0
      %p1132 = por %p1130, %p1131
      %p1133 = scmp.ne.s32.totalorder %s1125, %s1127
      %p1134 = scmp.eq.s32.totalorder %s157, 1
      %p1135 = por %p1133, %p1134
      %p1136 = scmp.ne.s32.totalorder %s1127, %s1128
      %p1137 = scmp.eq.s32.totalorder %s157, 0
      %p1138 = por %p1136, %p1137
      %p1139 = scmp.ne.s32.totalorder %s1127, %s1128
      %p1140 = scmp.eq.s32.totalorder %s158, 1
      %p1141 = por %p1139, %p1140
      %p1143 = scmp.ne.s32.totalorder %s1128, %s1142
      %p1144 = scmp.eq.s32.totalorder %s158, 0
      %p1145 = por %p1143, %p1144
      %s1147 = sadd.s32 %s1146, 1
      %p1150 = scmp.eq.s32.totalorder %s152, 1
      %p1151 = scmp.ne.s32.totalorder %s1146, %s1148
      %p1152 = scmp.eq.s32.totalorder %s152, 0
      %p1153 = por %p1151, %p1152
      %p1154 = scmp.ne.s32.totalorder %s1146, %s1148
      %p1155 = scmp.eq.s32.totalorder %s157, 1
      %p1156 = por %p1154, %p1155
      %p1157 = scmp.ne.s32.totalorder %s1148, %s1149
      %p1158 = scmp.eq.s32.totalorder %s157, 0
      %p1159 = por %p1157, %p1158
      %p1160 = scmp.ne.s32.totalorder %s1148, %s1149
      %p1161 = scmp.eq.s32.totalorder %s158, 1
      %p1162 = por %p1160, %p1161
      %p1164 = scmp.ne.s32.totalorder %s1149, %s1163
      %p1165 = scmp.eq.s32.totalorder %s158, 0
      %p1166 = por %p1164, %p1165
      %s1168 = sadd.s32 %s1167, 1
      %p1171 = scmp.eq.s32.totalorder %s152, 1
      %p1172 = scmp.ne.s32.totalorder %s1167, %s1169
      %p1173 = scmp.eq.s32.totalorder %s152, 0
      %p1174 = por %p1172, %p1173
      %p1175 = scmp.ne.s32.totalorder %s1167, %s1169
      %p1176 = scmp.eq.s32.totalorder %s157, 1
      %p1177 = por %p1175, %p1176
      %p1178 = scmp.ne.s32.totalorder %s1169, %s1170
      %p1179 = scmp.eq.s32.totalorder %s157, 0
      %p1180 = por %p1178, %p1179
      %p1181 = scmp.ne.s32.totalorder %s1169, %s1170
      %p1182 = scmp.eq.s32.totalorder %s158, 1
      %p1183 = por %p1181, %p1182
      %p1185 = scmp.ne.s32.totalorder %s1170, %s1184
      %p1186 = scmp.eq.s32.totalorder %s158, 0
      %p1187 = por %p1185, %p1186
      %s1189 = sadd.s32 %s1188, 1
      %p1192 = scmp.eq.s32.totalorder %s152, 1
      %p1193 = scmp.ne.s32.totalorder %s1188, %s1190
      %p1194 = scmp.eq.s32.totalorder %s152, 0
      %p1195 = por %p1193, %p1194
      %p1196 = scmp.ne.s32.totalorder %s1188, %s1190
      %p1197 = scmp.eq.s32.totalorder %s157, 1
      %p1198 = por %p1196, %p1197
      %p1199 = scmp.ne.s32.totalorder %s1190, %s1191
      %p1200 = scmp.eq.s32.totalorder %s157, 0
      %p1201 = por %p1199, %p1200
      %p1202 = scmp.ne.s32.totalorder %s1190, %s1191
      %p1203 = scmp.eq.s32.totalorder %s158, 1
      %p1204 = por %p1202, %p1203
      %p1206 = scmp.ne.s32.totalorder %s1191, %s1205
      %p1207 = scmp.eq.s32.totalorder %s158, 0
      %p1208 = por %p1206, %p1207
      %s1210 = sadd.s32 %s1209, 1
      %p1213 = scmp.eq.s32.totalorder %s152, 1
      %p1214 = scmp.ne.s32.totalorder %s1209, %s1211
      %p1215 = scmp.eq.s32.totalorder %s152, 0
      %p1216 = por %p1214, %p1215
      %p1217 = scmp.ne.s32.totalorder %s1209, %s1211
      %p1218 = scmp.eq.s32.totalorder %s157, 1
      %p1219 = por %p1217, %p1218
      %p1220 = scmp.ne.s32.totalorder %s1211, %s1212
      %p1221 = scmp.eq.s32.totalorder %s157, 0
      %p1222 = por %p1220, %p1221
      %p1223 = scmp.ne.s32.totalorder %s1211, %s1212
      %p1224 = scmp.eq.s32.totalorder %s158, 1
      %p1225 = por %p1223, %p1224
      %p1227 = scmp.ne.s32.totalorder %s1212, %s1226
      %p1228 = scmp.eq.s32.totalorder %s158, 0
      %p1229 = por %p1227, %p1228
      %s1231 = sadd.s32 %s1230, 1
      %p1234 = scmp.eq.s32.totalorder %s152, 1
      %p1235 = scmp.ne.s32.totalorder %s1230, %s1232
      %p1236 = scmp.eq.s32.totalorder %s152, 0
      %p1237 = por %p1235, %p1236
      %p1238 = scmp.ne.s32.totalorder %s1230, %s1232
      %p1239 = scmp.eq.s32.totalorder %s157, 1
      %p1240 = por %p1238, %p1239
      %p1241 = scmp.ne.s32.totalorder %s1232, %s1233
      %p1242 = scmp.eq.s32.totalorder %s157, 0
      %p1243 = por %p1241, %p1242
      %p1244 = scmp.ne.s32.totalorder %s1232, %s1233
      %p1245 = scmp.eq.s32.totalorder %s158, 1
      %p1246 = por %p1244, %p1245
      %p1248 = scmp.ne.s32.totalorder %s1233, %s1247
      %p1249 = scmp.eq.s32.totalorder %s158, 0
      %p1250 = por %p1248, %p1249
      %s1252 = sadd.s32 %s1251, 1
      %p1255 = scmp.eq.s32.totalorder %s152, 1
      %p1256 = scmp.ne.s32.totalorder %s1251, %s1253
      %p1257 = scmp.eq.s32.totalorder %s152, 0
      %p1258 = por %p1256, %p1257
      %p1259 = scmp.ne.s32.totalorder %s1251, %s1253
      %p1260 = scmp.eq.s32.totalorder %s157, 1
      %p1261 = por %p1259, %p1260
      %p1262 = scmp.ne.s32.totalorder %s1253, %s1254
      %p1263 = scmp.eq.s32.totalorder %s157, 0
      %p1264 = por %p1262, %p1263
      %p1265 = scmp.ne.s32.totalorder %s1253, %s1254
      %p1266 = scmp.eq.s32.totalorder %s158, 1
      %p1267 = por %p1265, %p1266
      %p1269 = scmp.ne.s32.totalorder %s1254, %s1268
      %p1270 = scmp.eq.s32.totalorder %s158, 0
      %p1271 = por %p1269, %p1270
      %s1273 = sadd.s32 %s1272, 1
      %p1276 = scmp.eq.s32.totalorder %s152, 1
      %p1277 = scmp.ne.s32.totalorder %s1272, %s1274
      %p1278 = scmp.eq.s32.totalorder %s152, 0
      %p1279 = por %p1277, %p1278
      %p1280 = scmp.ne.s32.totalorder %s1272, %s1274
      %p1281 = scmp.eq.s32.totalorder %s157, 1
      %p1282 = por %p1280, %p1281
      %p1283 = scmp.ne.s32.totalorder %s1274, %s1275
      %p1284 = scmp.eq.s32.totalorder %s157, 0
      %p1285 = por %p1283, %p1284
      %p1286 = scmp.ne.s32.totalorder %s1274, %s1275
      %p1287 = scmp.eq.s32.totalorder %s158, 1
      %p1288 = por %p1286, %p1287
      %p1290 = scmp.ne.s32.totalorder %s1275, %s1289
      %p1291 = scmp.eq.s32.totalorder %s158, 0
      %p1292 = por %p1290, %p1291
      %s1294 = sadd.s32 %s1293, 1
      %p1297 = scmp.eq.s32.totalorder %s152, 1
      %p1298 = scmp.ne.s32.totalorder %s1293, %s1295
      %p1299 = scmp.eq.s32.totalorder %s152, 0
      %p1300 = por %p1298, %p1299
      %p1301 = scmp.ne.s32.totalorder %s1293, %s1295
      %p1302 = scmp.eq.s32.totalorder %s157, 1
      %p1303 = por %p1301, %p1302
      %p1304 = scmp.ne.s32.totalorder %s1295, %s1296
      %p1305 = scmp.eq.s32.totalorder %s157, 0
      %p1306 = por %p1304, %p1305
      %p1307 = scmp.ne.s32.totalorder %s1295, %s1296
      %p1308 = scmp.eq.s32.totalorder %s158, 1
      %p1309 = por %p1307, %p1308
      %p1311 = scmp.ne.s32.totalorder %s1296, %s1310
      %p1312 = scmp.eq.s32.totalorder %s158, 0
      %p1313 = por %p1311, %p1312
      %s1315 = sadd.s32 %s1314, 1
      %p1318 = scmp.eq.s32.totalorder %s152, 1
      %p1319 = scmp.ne.s32.totalorder %s1314, %s1316
      %p1320 = scmp.eq.s32.totalorder %s152, 0
      %p1321 = por %p1319, %p1320
      %p1322 = scmp.ne.s32.totalorder %s1314, %s1316
      %p1323 = scmp.eq.s32.totalorder %s157, 1
      %p1324 = por %p1322, %p1323
      %p1325 = scmp.ne.s32.totalorder %s1316, %s1317
      %p1326 = scmp.eq.s32.totalorder %s157, 0
      %p1327 = por %p1325, %p1326
      %p1328 = scmp.ne.s32.totalorder %s1316, %s1317
      %p1329 = scmp.eq.s32.totalorder %s158, 1
      %p1330 = por %p1328, %p1329
      %p1332 = scmp.ne.s32.totalorder %s1317, %s1331
      %p1333 = scmp.eq.s32.totalorder %s158, 0
      %p1334 = por %p1332, %p1333
      %s1336 = sadd.s32 %s1335, 1
      %p1339 = scmp.eq.s32.totalorder %s152, 1
      %p1340 = scmp.ne.s32.totalorder %s1335, %s1337
      %p1341 = scmp.eq.s32.totalorder %s152, 0
      %p1342 = por %p1340, %p1341
      %p1343 = scmp.ne.s32.totalorder %s1335, %s1337
      %p1344 = scmp.eq.s32.totalorder %s157, 1
      %p1345 = por %p1343, %p1344
      %p1346 = scmp.ne.s32.totalorder %s1337, %s1338
      %p1347 = scmp.eq.s32.totalorder %s157, 0
      %p1348 = por %p1346, %p1347
      %p1349 = scmp.ne.s32.totalorder %s1337, %s1338
      %p1350 = scmp.eq.s32.totalorder %s158, 1
      %p1351 = por %p1349, %p1350
      %p1353 = scmp.ne.s32.totalorder %s1338, %s1352
      %p1354 = scmp.eq.s32.totalorder %s158, 0
      %p1355 = por %p1353, %p1354
      %s1357 = sadd.s32 %s1356, 1
      %p1360 = scmp.eq.s32.totalorder %s152, 1
      %p1361 = scmp.ne.s32.totalorder %s1356, %s1358
      %p1362 = scmp.eq.s32.totalorder %s152, 0
      %p1363 = por %p1361, %p1362
      %p1364 = scmp.ne.s32.totalorder %s1356, %s1358
      %p1365 = scmp.eq.s32.totalorder %s157, 1
      %p1366 = por %p1364, %p1365
      %p1367 = scmp.ne.s32.totalorder %s1358, %s1359
      %p1368 = scmp.eq.s32.totalorder %s157, 0
      %p1369 = por %p1367, %p1368
      %p1370 = scmp.ne.s32.totalorder %s1358, %s1359
      %p1371 = scmp.eq.s32.totalorder %s158, 1
      %p1372 = por %p1370, %p1371
      %p1374 = scmp.ne.s32.totalorder %s1359, %s1373
      %p1375 = scmp.eq.s32.totalorder %s158, 0
      %p1376 = por %p1374, %p1375
      %s1378 = sadd.s32 %s1377, 1
      %p1381 = scmp.eq.s32.totalorder %s152, 1
      %p1382 = scmp.ne.s32.totalorder %s1377, %s1379
      %p1383 = scmp.eq.s32.totalorder %s152, 0
      %p1384 = por %p1382, %p1383
      %p1385 = scmp.ne.s32.totalorder %s1377, %s1379
      %p1386 = scmp.eq.s32.totalorder %s157, 1
      %p1387 = por %p1385, %p1386
      %p1388 = scmp.ne.s32.totalorder %s1379, %s1380
      %p1389 = scmp.eq.s32.totalorder %s157, 0
      %p1390 = por %p1388, %p1389
      %p1391 = scmp.ne.s32.totalorder %s1379, %s1380
      %p1392 = scmp.eq.s32.totalorder %s158, 1
      %p1393 = por %p1391, %p1392
      %p1395 = scmp.ne.s32.totalorder %s1380, %s1394
      %p1396 = scmp.eq.s32.totalorder %s158, 0
      %p1397 = por %p1395, %p1396
      %s1399 = sadd.s32 %s1398, 1
      %p1402 = scmp.eq.s32.totalorder %s152, 1
      %p1403 = scmp.ne.s32.totalorder %s1398, %s1400
      %p1404 = scmp.eq.s32.totalorder %s152, 0
      %p1405 = por %p1403, %p1404
      %p1406 = scmp.ne.s32.totalorder %s1398, %s1400
      %p1407 = scmp.eq.s32.totalorder %s157, 1
      %p1408 = por %p1406, %p1407
      %p1409 = scmp.ne.s32.totalorder %s1400, %s1401
      %p1410 = scmp.eq.s32.totalorder %s157, 0
      %p1411 = por %p1409, %p1410
      %p1412 = scmp.ne.s32.totalorder %s1400, %s1401
      %p1413 = scmp.eq.s32.totalorder %s158, 1
      %p1414 = por %p1412, %p1413
      %p1416 = scmp.ne.s32.totalorder %s1401, %s1415
      %p1417 = scmp.eq.s32.totalorder %s158, 0
      %p1418 = por %p1416, %p1417
      %s1420 = sadd.s32 %s1419, 1
      %p1423 = scmp.eq.s32.totalorder %s152, 1
      %p1424 = scmp.ne.s32.totalorder %s1419, %s1421
      %p1425 = scmp.eq.s32.totalorder %s152, 0
      %p1426 = por %p1424, %p1425
      %p1427 = scmp.ne.s32.totalorder %s1419, %s1421
      %p1428 = scmp.eq.s32.totalorder %s157, 1
      %p1429 = por %p1427, %p1428
      %p1430 = scmp.ne.s32.totalorder %s1421, %s1422
      %p1431 = scmp.eq.s32.totalorder %s157, 0
      %p1432 = por %p1430, %p1431
      %p1433 = scmp.ne.s32.totalorder %s1421, %s1422
      %p1434 = scmp.eq.s32.totalorder %s158, 1
      %p1435 = por %p1433, %p1434
      %p1437 = scmp.ne.s32.totalorder %s1422, %s1436
      %p1438 = scmp.eq.s32.totalorder %s158, 0
      %p1439 = por %p1437, %p1438
      %s1441 = sadd.s32 %s1440, 1
      %p1444 = scmp.eq.s32.totalorder %s152, 1
      %p1445 = scmp.ne.s32.totalorder %s1440, %s1442
      %p1446 = scmp.eq.s32.totalorder %s152, 0
      %p1447 = por %p1445, %p1446
      %p1448 = scmp.ne.s32.totalorder %s1440, %s1442
      %p1449 = scmp.eq.s32.totalorder %s157, 1
      %p1450 = por %p1448, %p1449
      %p1451 = scmp.ne.s32.totalorder %s1442, %s1443
      %p1452 = scmp.eq.s32.totalorder %s157, 0
      %p1453 = por %p1451, %p1452
      %p1454 = scmp.ne.s32.totalorder %s1442, %s1443
      %p1455 = scmp.eq.s32.totalorder %s158, 1
      %p1456 = por %p1454, %p1455
      %p1458 = scmp.ne.s32.totalorder %s1443, %s1457
      %p1459 = scmp.eq.s32.totalorder %s158, 0
      %p1460 = por %p1458, %p1459
      %s1462 = sadd.s32 %s1461, 1
      %p1465 = scmp.eq.s32.totalorder %s152, 1
      %p1466 = scmp.ne.s32.totalorder %s1461, %s1463
      %p1467 = scmp.eq.s32.totalorder %s152, 0
      %p1468 = por %p1466, %p1467
      %p1469 = scmp.ne.s32.totalorder %s1461, %s1463
      %p1470 = scmp.eq.s32.totalorder %s157, 1
      %p1471 = por %p1469, %p1470
      %p1472 = scmp.ne.s32.totalorder %s1463, %s1464
      %p1473 = scmp.eq.s32.totalorder %s157, 0
      %p1474 = por %p1472, %p1473
      %p1475 = scmp.ne.s32.totalorder %s1463, %s1464
      %p1476 = scmp.eq.s32.totalorder %s158, 1
      %p1477 = por %p1475, %p1476
      %p1479 = scmp.ne.s32.totalorder %s1464, %s1478
      %p1480 = scmp.eq.s32.totalorder %s158, 0
      %p1481 = por %p1479, %p1480
      %s1483 = sadd.s32 %s1482, 1
      %p1486 = scmp.eq.s32.totalorder %s152, 1
      %p1487 = scmp.ne.s32.totalorder %s1482, %s1484
      %p1488 = scmp.eq.s32.totalorder %s152, 0
      %p1489 = por %p1487, %p1488
      %p1490 = scmp.ne.s32.totalorder %s1482, %s1484
      %p1491 = scmp.eq.s32.totalorder %s157, 1
      %p1492 = por %p1490, %p1491
      %p1493 = scmp.ne.s32.totalorder %s1484, %s1485
      %p1494 = scmp.eq.s32.totalorder %s157, 0
      %p1495 = por %p1493, %p1494
      %p1496 = scmp.ne.s32.totalorder %s1484, %s1485
      %p1497 = scmp.eq.s32.totalorder %s158, 1
      %p1498 = por %p1496, %p1497
      %p1500 = scmp.ne.s32.totalorder %s1485, %s1499
      %p1501 = scmp.eq.s32.totalorder %s158, 0
      %p1502 = por %p1500, %p1501
      %s1503 = ssub.s32 %s152, %s159
      %p1504 = scmp.eq.s32.totalorder %s1503, 0
      %s1506 = sadd.s32 %s1505, 1
      %s1507 = scalar_select %p1504, %s1505, %s1506
      %p1510 = pneg %p1504
      %p1511 = scmp.eq.s32.totalorder %s152, 1
      %p1512 = por %p1510, %p1511
      %p1513 = scmp.ne.s32.totalorder %s1505, %s1508
      %p1514 = scmp.eq.s32.totalorder %s152, 0
      %p1515 = por %p1513, %p1514
      %p1516 = scmp.ne.s32.totalorder %s1505, %s1508
      %p1517 = scmp.eq.s32.totalorder %s157, 1
      %p1518 = por %p1516, %p1517
      %p1519 = scmp.ne.s32.totalorder %s1508, %s1509
      %p1520 = scmp.eq.s32.totalorder %s157, 0
      %p1521 = por %p1519, %p1520
      %p1522 = scmp.ne.s32.totalorder %s1508, %s1509
      %p1523 = scmp.eq.s32.totalorder %s158, 1
      %p1524 = por %p1522, %p1523
      %p1526 = scmp.ne.s32.totalorder %s1509, %s1525
      %p1527 = scmp.eq.s32.totalorder %s158, 0
      %p1528 = por %p1526, %p1527
      %s1529 = ssub.s32 %s152, %s159
      %p1530 = scmp.eq.s32.totalorder %s1529, 0
      %s1532 = sadd.s32 %s1531, 1
      %s1533 = scalar_select %p1530, %s1531, %s1532
      %p1536 = pneg %p1530
      %p1537 = scmp.eq.s32.totalorder %s152, 1
      %p1538 = por %p1536, %p1537
      %p1539 = scmp.ne.s32.totalorder %s1531, %s1534
      %p1540 = scmp.eq.s32.totalorder %s152, 0
      %p1541 = por %p1539, %p1540
      %p1542 = scmp.ne.s32.totalorder %s1531, %s1534
      %p1543 = scmp.eq.s32.totalorder %s157, 1
      %p1544 = por %p1542, %p1543
      %p1545 = scmp.ne.s32.totalorder %s1534, %s1535
      %p1546 = scmp.eq.s32.totalorder %s157, 0
      %p1547 = por %p1545, %p1546
      %p1548 = scmp.ne.s32.totalorder %s1534, %s1535
      %p1549 = scmp.eq.s32.totalorder %s158, 1
      %p1550 = por %p1548, %p1549
      %p1552 = scmp.ne.s32.totalorder %s1535, %s1551
      %p1553 = scmp.eq.s32.totalorder %s158, 0
      %p1554 = por %p1552, %p1553
      %s1555 = ssub.s32 %s152, %s159
      %p1556 = scmp.eq.s32.totalorder %s1555, 0
      %s1558 = sadd.s32 %s1557, 1
      %s1559 = scalar_select %p1556, %s1557, %s1558
      %p1562 = pneg %p1556
      %p1563 = scmp.eq.s32.totalorder %s152, 1
      %p1564 = por %p1562, %p1563
      %p1565 = scmp.ne.s32.totalorder %s1557, %s1560
      %p1566 = scmp.eq.s32.totalorder %s152, 0
      %p1567 = por %p1565, %p1566
      %p1568 = scmp.ne.s32.totalorder %s1557, %s1560
      %p1569 = scmp.eq.s32.totalorder %s157, 1
      %p1570 = por %p1568, %p1569
      %p1571 = scmp.ne.s32.totalorder %s1560, %s1561
      %p1572 = scmp.eq.s32.totalorder %s157, 0
      %p1573 = por %p1571, %p1572
      %p1574 = scmp.ne.s32.totalorder %s1560, %s1561
      %p1575 = scmp.eq.s32.totalorder %s158, 1
      %p1576 = por %p1574, %p1575
      %p1578 = scmp.ne.s32.totalorder %s1561, %s1577
      %p1579 = scmp.eq.s32.totalorder %s158, 0
      %p1580 = por %p1578, %p1579
      %s1581 = ssub.s32 %s152, %s159
      %p1582 = scmp.eq.s32.totalorder %s1581, 0
      %s1584 = sadd.s32 %s1583, 1
      %s1585 = scalar_select %p1582, %s1583, %s1584
      %p1588 = pneg %p1582
      %p1589 = scmp.eq.s32.totalorder %s152, 1
      %p1590 = por %p1588, %p1589
      %p1591 = scmp.ne.s32.totalorder %s1583, %s1586
      %p1592 = scmp.eq.s32.totalorder %s152, 0
      %p1593 = por %p1591, %p1592
      %p1594 = scmp.ne.s32.totalorder %s1583, %s1586
      %p1595 = scmp.eq.s32.totalorder %s157, 1
      %p1596 = por %p1594, %p1595
      %p1597 = scmp.ne.s32.totalorder %s1586, %s1587
      %p1598 = scmp.eq.s32.totalorder %s157, 0
      %p1599 = por %p1597, %p1598
      %p1600 = scmp.ne.s32.totalorder %s1586, %s1587
      %p1601 = scmp.eq.s32.totalorder %s158, 1
      %p1602 = por %p1600, %p1601
      %p1604 = scmp.ne.s32.totalorder %s1587, %s1603
      %p1605 = scmp.eq.s32.totalorder %s158, 0
      %p1606 = por %p1604, %p1605
      %s1607 = ssub.s32 %s152, %s159
      %p1608 = scmp.eq.s32.totalorder %s1607, 0
      %s1610 = sadd.s32 %s1609, 1
      %s1611 = scalar_select %p1608, %s1609, %s1610
      %p1614 = pneg %p1608
      %p1615 = scmp.eq.s32.totalorder %s152, 1
      %p1616 = por %p1614, %p1615
      %p1617 = scmp.ne.s32.totalorder %s1609, %s1612
      %p1618 = scmp.eq.s32.totalorder %s152, 0
      %p1619 = por %p1617, %p1618
      %p1620 = scmp.ne.s32.totalorder %s1609, %s1612
      %p1621 = scmp.eq.s32.totalorder %s157, 1
      %p1622 = por %p1620, %p1621
      %p1623 = scmp.ne.s32.totalorder %s1612, %s1613
      %p1624 = scmp.eq.s32.totalorder %s157, 0
      %p1625 = por %p1623, %p1624
      %p1626 = scmp.ne.s32.totalorder %s1612, %s1613
      %p1627 = scmp.eq.s32.totalorder %s158, 1
      %p1628 = por %p1626, %p1627
      %p1630 = scmp.ne.s32.totalorder %s1613, %s1629
      %p1631 = scmp.eq.s32.totalorder %s158, 0
      %p1632 = por %p1630, %p1631
      %p1633 = scmp.le.s32.totalorder 1, %s152
      %p1634 = scmp.lt.s32.totalorder %s152, 3
      %p1635 = pnand %p1633, %p1634
      %p1636 = pneg %p1635
      // Predicated region
      $region9: #{transformer_forward.1} parent=5 // pred_check
        _
      $region10: #{transformer_forward.1} parent=5 // pred_check_branch
        %1638 = sbr.rel (%p1635) target = $region12
      $region11: #{transformer_forward.1} parent=5 // pred_region
        %s1639 = ssub.s32 %s152, 1
        // Predicated region
        $region13: #{transformer_forward.1} parent=11 // pred_check
          %p1640 = pneg %p277
        $region14: #{transformer_forward.1} parent=11 // pred_check_branch
          %1642 = sbr.rel (%p1640) target = $region16
        $region15: #{transformer_forward.1} parent=11 // pred_region
          _
        $region16: #{transformer_forward.1} parent=11 // pred_fallthru
          _
        // Predicated region
        $region17: #{transformer_forward.1} parent=11 // pred_check
          %p1643 = pneg %p298
        $region18: #{transformer_forward.1} parent=11 // pred_check_branch
          %1645 = sbr.rel (%p1643) target = $region20
        $region19: #{transformer_forward.1} parent=11 // pred_region
          _
        $region20: #{transformer_forward.1} parent=11 // pred_fallthru
          _
        // Predicated region
        $region21: #{transformer_forward.1} parent=11 // pred_check
          %p1646 = pneg %p319
        $region22: #{transformer_forward.1} parent=11 // pred_check_branch
          %1648 = sbr.rel (%p1646) target = $region24
        $region23: #{transformer_forward.1} parent=11 // pred_region
          _
        $region24: #{transformer_forward.1} parent=11 // pred_fallthru
          _
        // Predicated region
        $region25: #{transformer_forward.1} parent=11 // pred_check
          %p1649 = pneg %p340
        $region26: #{transformer_forward.1} parent=11 // pred_check_branch
          %1651 = sbr.rel (%p1649) target = $region28
        $region27: #{transformer_forward.1} parent=11 // pred_region
          _
        $region28: #{transformer_forward.1} parent=11 // pred_fallthru
          _
        // Predicated region
        $region29: #{transformer_forward.1} parent=11 // pred_check
          %p1652 = pneg %p361
        $region30: #{transformer_forward.1} parent=11 // pred_check_branch
          %1654 = sbr.rel (%p1652) target = $region32
        $region31: #{transformer_forward.1} parent=11 // pred_region
          _
        $region32: #{transformer_forward.1} parent=11 // pred_fallthru
          _
        // Predicated region
        $region33: #{transformer_forward.1} parent=11 // pred_check
          %p1655 = pneg %p382
        $region34: #{transformer_forward.1} parent=11 // pred_check_branch
          %1657 = sbr.rel (%p1655) target = $region36
        $region35: #{transformer_forward.1} parent=11 // pred_region
          _
        $region36: #{transformer_forward.1} parent=11 // pred_fallthru
          _
        // Predicated region
        $region37: #{transformer_forward.1} parent=11 // pred_check
          %p1658 = pneg %p403
        $region38: #{transformer_forward.1} parent=11 // pred_check_branch
          %1660 = sbr.rel (%p1658) target = $region40
        $region39: #{transformer_forward.1} parent=11 // pred_region
          _
        $region40: #{transformer_forward.1} parent=11 // pred_fallthru
          _
        // Predicated region
        $region41: #{transformer_forward.1} parent=11 // pred_check
          %p1661 = pneg %p424
        $region42: #{transformer_forward.1} parent=11 // pred_check_branch
          %1663 = sbr.rel (%p1661) target = $region44
        $region43: #{transformer_forward.1} parent=11 // pred_region
          _
        $region44: #{transformer_forward.1} parent=11 // pred_fallthru
          _
        // Predicated region
        $region45: #{transformer_forward.1} parent=11 // pred_check
          %p1664 = pneg %p445
        $region46: #{transformer_forward.1} parent=11 // pred_check_branch
          %1666 = sbr.rel (%p1664) target = $region48
        $region47: #{transformer_forward.1} parent=11 // pred_region
          _
        $region48: #{transformer_forward.1} parent=11 // pred_fallthru
          _
        // Predicated region
        $region49: #{transformer_forward.1} parent=11 // pred_check
          %p1667 = pneg %p466
        $region50: #{transformer_forward.1} parent=11 // pred_check_branch
          %1669 = sbr.rel (%p1667) target = $region52
        $region51: #{transformer_forward.1} parent=11 // pred_region
          _
        $region52: #{transformer_forward.1} parent=11 // pred_fallthru
          _
        // Predicated region
        $region53: #{transformer_forward.1} parent=11 // pred_check
          %p1670 = pneg %p487
        $region54: #{transformer_forward.1} parent=11 // pred_check_branch
          %1672 = sbr.rel (%p1670) target = $region56
        $region55: #{transformer_forward.1} parent=11 // pred_region
          _
        $region56: #{transformer_forward.1} parent=11 // pred_fallthru
          _
        // Predicated region
        $region57: #{transformer_forward.1} parent=11 // pred_check
          %p1673 = pneg %p508
        $region58: #{transformer_forward.1} parent=11 // pred_check_branch
          %1675 = sbr.rel (%p1673) target = $region60
        $region59: #{transformer_forward.1} parent=11 // pred_region
          _
        $region60: #{transformer_forward.1} parent=11 // pred_fallthru
          _
        // Predicated region
        $region61: #{transformer_forward.1} parent=11 // pred_check
          %p1676 = pneg %p529
        $region62: #{transformer_forward.1} parent=11 // pred_check_branch
          %1678 = sbr.rel (%p1676) target = $region64
        $region63: #{transformer_forward.1} parent=11 // pred_region
          _
        $region64: #{transformer_forward.1} parent=11 // pred_fallthru
          _
        // Predicated region
        $region65: #{transformer_forward.1} parent=11 // pred_check
          %p1679 = pneg %p550
        $region66: #{transformer_forward.1} parent=11 // pred_check_branch
          %1681 = sbr.rel (%p1679) target = $region68
        $region67: #{transformer_forward.1} parent=11 // pred_region
          _
        $region68: #{transformer_forward.1} parent=11 // pred_fallthru
          _
        // Predicated region
        $region69: #{transformer_forward.1} parent=11 // pred_check
          %p1682 = pneg %p571
        $region70: #{transformer_forward.1} parent=11 // pred_check_branch
          %1684 = sbr.rel (%p1682) target = $region72
        $region71: #{transformer_forward.1} parent=11 // pred_region
          _
        $region72: #{transformer_forward.1} parent=11 // pred_fallthru
          _
        // Predicated region
        $region73: #{transformer_forward.1} parent=11 // pred_check
          %p1685 = pneg %p592
        $region74: #{transformer_forward.1} parent=11 // pred_check_branch
          %1687 = sbr.rel (%p1685) target = $region76
        $region75: #{transformer_forward.1} parent=11 // pred_region
          %1689 = vsyncadd [#allocation3], 0
          %s1691 = sshll.u32 %s39, 4
          %s1692 = int_to_ptr.hbm [resolvable:$true] %s1691
          %s1693 = sshll.u32 [#allocation2], 4
          %s1694 = int_to_ptr.vmem [resolvable:$true] %s1693
          %1696 = dma.hbm_to_vmem [thread:$0]  %s1692, 16, %s1694, [#allocation3]
        $region76: #{transformer_forward.1} parent=11 // pred_fallthru
          _
        // Predicated region
        $region77: #{transformer_forward.1} parent=11 // pred_check
          %p1697 = pneg %p613
        $region78: #{transformer_forward.1} parent=11 // pred_check_branch
          %1699 = sbr.rel (%p1697) target = $region80
        $region79: #{transformer_forward.1} parent=11 // pred_region
          %1701 = vsyncadd [#allocation6], 0
          %s1703 = sshll.u32 %s41, 4
          %s1704 = int_to_ptr.hbm [resolvable:$true] %s1703
          %s1705 = sshll.u32 [#allocation5], 4
          %s1706 = int_to_ptr.vmem [resolvable:$true] %s1705
          %1708 = dma.hbm_to_vmem [thread:$0]  %s1704, 16, %s1706, [#allocation6]
        $region80: #{transformer_forward.1} parent=11 // pred_fallthru
          _
        // Predicated region
        $region81: #{transformer_forward.1} parent=11 // pred_check
          %p1709 = pneg %p634
        $region82: #{transformer_forward.1} parent=11 // pred_check_branch
          %1711 = sbr.rel (%p1709) target = $region84
        $region83: #{transformer_forward.1} parent=11 // pred_region
          _
        $region84: #{transformer_forward.1} parent=11 // pred_fallthru
          _
        // Predicated region
        $region85: #{transformer_forward.1} parent=11 // pred_check
          %p1712 = pneg %p655
        $region86: #{transformer_forward.1} parent=11 // pred_check_branch
          %1714 = sbr.rel (%p1712) target = $region88
        $region87: #{transformer_forward.1} parent=11 // pred_region
          %1716 = vsyncadd [#allocation6], 0
          %s1718 = sshll.u32 %s45, 4
          %s1719 = int_to_ptr.hbm [resolvable:$true] %s1718
          %s1720 = sshll.u32 [#allocation7], 4
          %s1721 = int_to_ptr.vmem [resolvable:$true] %s1720
          %1723 = dma.hbm_to_vmem [thread:$0]  %s1719, 16, %s1721, [#allocation6]
        $region88: #{transformer_forward.1} parent=11 // pred_fallthru
          _
        // Predicated region
        $region89: #{transformer_forward.1} parent=11 // pred_check
          %p1724 = pneg %p676
        $region90: #{transformer_forward.1} parent=11 // pred_check_branch
          %1726 = sbr.rel (%p1724) target = $region92
        $region91: #{transformer_forward.1} parent=11 // pred_region
          _
        $region92: #{transformer_forward.1} parent=11 // pred_fallthru
          _
        // Predicated region
        $region93: #{transformer_forward.1} parent=11 // pred_check
          %p1727 = pneg %p697
        $region94: #{transformer_forward.1} parent=11 // pred_check_branch
          %1729 = sbr.rel (%p1727) target = $region96
        $region95: #{transformer_forward.1} parent=11 // pred_region
          %1731 = vsyncadd [#allocation9], 0
          %s1733 = sshll.u32 %s49, 4
          %s1734 = int_to_ptr.hbm [resolvable:$true] %s1733
          %s1735 = sshll.u32 [#allocation8], 4
          %s1736 = int_to_ptr.vmem [resolvable:$true] %s1735
          %1738 = dma.hbm_to_vmem [thread:$0]  %s1734, 16, %s1736, [#allocation9]
        $region96: #{transformer_forward.1} parent=11 // pred_fallthru
          _
        // Predicated region
        $region97: #{transformer_forward.1} parent=11 // pred_check
          %p1739 = pneg %p718
        $region98: #{transformer_forward.1} parent=11 // pred_check_branch
          %1741 = sbr.rel (%p1739) target = $region100
        $region99: #{transformer_forward.1} parent=11 // pred_region
          _
        $region100: #{transformer_forward.1} parent=11 // pred_fallthru
          _
        // Predicated region
        $region101: #{transformer_forward.1} parent=11 // pred_check
          %p1742 = pneg %p739
        $region102: #{transformer_forward.1} parent=11 // pred_check_branch
          %1744 = sbr.rel (%p1742) target = $region104
        $region103: #{transformer_forward.1} parent=11 // pred_region
          %1746 = vsyncadd [#allocation9], 0
          %s1748 = sshll.u32 %s53, 4
          %s1749 = int_to_ptr.hbm [resolvable:$true] %s1748
          %s1750 = sshll.u32 [#allocation10], 4
          %s1751 = int_to_ptr.vmem [resolvable:$true] %s1750
          %1753 = dma.hbm_to_vmem [thread:$0]  %s1749, 16, %s1751, [#allocation9]
        $region104: #{transformer_forward.1} parent=11 // pred_fallthru
          _
        // Predicated region
        $region105: #{transformer_forward.1} parent=11 // pred_check
          %p1754 = pneg %p760
        $region106: #{transformer_forward.1} parent=11 // pred_check_branch
          %1756 = sbr.rel (%p1754) target = $region108
        $region107: #{transformer_forward.1} parent=11 // pred_region
          _
        $region108: #{transformer_forward.1} parent=11 // pred_fallthru
          _
        // Predicated region
        $region109: #{transformer_forward.1} parent=11 // pred_check
          %p1757 = pneg %p781
        $region110: #{transformer_forward.1} parent=11 // pred_check_branch
          %1759 = sbr.rel (%p1757) target = $region112
        $region111: #{transformer_forward.1} parent=11 // pred_region
          _
        $region112: #{transformer_forward.1} parent=11 // pred_fallthru
          _
        // Predicated region
        $region113: #{transformer_forward.1} parent=11 // pred_check
          %p1760 = pneg %p802
        $region114: #{transformer_forward.1} parent=11 // pred_check_branch
          %1762 = sbr.rel (%p1760) target = $region116
        $region115: #{transformer_forward.1} parent=11 // pred_region
          _
        $region116: #{transformer_forward.1} parent=11 // pred_fallthru
          _
        // Predicated region
        $region117: #{transformer_forward.1} parent=11 // pred_check
          %p1763 = pneg %p823
        $region118: #{transformer_forward.1} parent=11 // pred_check_branch
          %1765 = sbr.rel (%p1763) target = $region120
        $region119: #{transformer_forward.1} parent=11 // pred_region
          _
        $region120: #{transformer_forward.1} parent=11 // pred_fallthru
          _
        // Predicated region
        $region121: #{transformer_forward.1} parent=11 // pred_check
          %p1766 = pneg %p844
        $region122: #{transformer_forward.1} parent=11 // pred_check_branch
          %1768 = sbr.rel (%p1766) target = $region124
        $region123: #{transformer_forward.1} parent=11 // pred_region
          _
        $region124: #{transformer_forward.1} parent=11 // pred_fallthru
          _
        // Predicated region
        $region125: #{transformer_forward.1} parent=11 // pred_check
          %p1769 = pneg %p865
        $region126: #{transformer_forward.1} parent=11 // pred_check_branch
          %1771 = sbr.rel (%p1769) target = $region128
        $region127: #{transformer_forward.1} parent=11 // pred_region
          _
        $region128: #{transformer_forward.1} parent=11 // pred_fallthru
          _
        // Predicated region
        $region129: #{transformer_forward.1} parent=11 // pred_check
          %p1772 = pneg %p886
        $region130: #{transformer_forward.1} parent=11 // pred_check_branch
          %1774 = sbr.rel (%p1772) target = $region132
        $region131: #{transformer_forward.1} parent=11 // pred_region
          _
        $region132: #{transformer_forward.1} parent=11 // pred_fallthru
          _
        // Predicated region
        $region133: #{transformer_forward.1} parent=11 // pred_check
          %p1775 = pneg %p907
        $region134: #{transformer_forward.1} parent=11 // pred_check_branch
          %1777 = sbr.rel (%p1775) target = $region136
        $region135: #{transformer_forward.1} parent=11 // pred_region
          _
        $region136: #{transformer_forward.1} parent=11 // pred_fallthru
          _
        // Predicated region
        $region137: #{transformer_forward.1} parent=11 // pred_check
          %p1778 = pneg %p928
        $region138: #{transformer_forward.1} parent=11 // pred_check_branch
          %1780 = sbr.rel (%p1778) target = $region140
        $region139: #{transformer_forward.1} parent=11 // pred_region
          _
        $region140: #{transformer_forward.1} parent=11 // pred_fallthru
          _
        // Predicated region
        $region141: #{transformer_forward.1} parent=11 // pred_check
          %p1781 = pneg %p949
        $region142: #{transformer_forward.1} parent=11 // pred_check_branch
          %1783 = sbr.rel (%p1781) target = $region144
        $region143: #{transformer_forward.1} parent=11 // pred_region
          _
        $region144: #{transformer_forward.1} parent=11 // pred_fallthru
          _
        // Predicated region
        $region145: #{transformer_forward.1} parent=11 // pred_check
          %p1784 = pneg %p970
        $region146: #{transformer_forward.1} parent=11 // pred_check_branch
          %1786 = sbr.rel (%p1784) target = $region148
        $region147: #{transformer_forward.1} parent=11 // pred_region
          _
        $region148: #{transformer_forward.1} parent=11 // pred_fallthru
          _
        // Predicated region
        $region149: #{transformer_forward.1} parent=11 // pred_check
          %p1787 = pneg %p991
        $region150: #{transformer_forward.1} parent=11 // pred_check_branch
          %1789 = sbr.rel (%p1787) target = $region152
        $region151: #{transformer_forward.1} parent=11 // pred_region
          _
        $region152: #{transformer_forward.1} parent=11 // pred_fallthru
          _
        // Predicated region
        $region153: #{transformer_forward.1} parent=11 // pred_check
          %p1790 = pneg %p1012
        $region154: #{transformer_forward.1} parent=11 // pred_check_branch
          %1792 = sbr.rel (%p1790) target = $region156
        $region155: #{transformer_forward.1} parent=11 // pred_region
          _
        $region156: #{transformer_forward.1} parent=11 // pred_fallthru
          _
        // Predicated region
        $region157: #{transformer_forward.1} parent=11 // pred_check
          %p1793 = pneg %p1033
        $region158: #{transformer_forward.1} parent=11 // pred_check_branch
          %1795 = sbr.rel (%p1793) target = $region160
        $region159: #{transformer_forward.1} parent=11 // pred_region
          _
        $region160: #{transformer_forward.1} parent=11 // pred_fallthru
          _
        // Predicated region
        $region161: #{transformer_forward.1} parent=11 // pred_check
          %p1796 = pneg %p1054
        $region162: #{transformer_forward.1} parent=11 // pred_check_branch
          %1798 = sbr.rel (%p1796) target = $region164
        $region163: #{transformer_forward.1} parent=11 // pred_region
          _
        $region164: #{transformer_forward.1} parent=11 // pred_fallthru
          _
        // Predicated region
        $region165: #{transformer_forward.1} parent=11 // pred_check
          %p1799 = pneg %p1075
        $region166: #{transformer_forward.1} parent=11 // pred_check_branch
          %1801 = sbr.rel (%p1799) target = $region168
        $region167: #{transformer_forward.1} parent=11 // pred_region
          _
        $region168: #{transformer_forward.1} parent=11 // pred_fallthru
          _
        // Predicated region
        $region169: #{transformer_forward.1} parent=11 // pred_check
          %p1802 = pneg %p1096
        $region170: #{transformer_forward.1} parent=11 // pred_check_branch
          %1804 = sbr.rel (%p1802) target = $region172
        $region171: #{transformer_forward.1} parent=11 // pred_region
          _
        $region172: #{transformer_forward.1} parent=11 // pred_fallthru
          _
        // Predicated region
        $region173: #{transformer_forward.1} parent=11 // pred_check
          %p1805 = pneg %p1117
        $region174: #{transformer_forward.1} parent=11 // pred_check_branch
          %1807 = sbr.rel (%p1805) target = $region176
        $region175: #{transformer_forward.1} parent=11 // pred_region
          _
        $region176: #{transformer_forward.1} parent=11 // pred_fallthru
          _
        // Predicated region
        $region177: #{transformer_forward.1} parent=11 // pred_check
          %p1808 = pneg %p1138
        $region178: #{transformer_forward.1} parent=11 // pred_check_branch
          %1810 = sbr.rel (%p1808) target = $region180
        $region179: #{transformer_forward.1} parent=11 // pred_region
          _
        $region180: #{transformer_forward.1} parent=11 // pred_fallthru
          _
        // Predicated region
        $region181: #{transformer_forward.1} parent=11 // pred_check
          %p1811 = pneg %p1159
        $region182: #{transformer_forward.1} parent=11 // pred_check_branch
          %1813 = sbr.rel (%p1811) target = $region184
        $region183: #{transformer_forward.1} parent=11 // pred_region
          _
        $region184: #{transformer_forward.1} parent=11 // pred_fallthru
          _
        // Predicated region
        $region185: #{transformer_forward.1} parent=11 // pred_check
          %p1814 = pneg %p1180
        $region186: #{transformer_forward.1} parent=11 // pred_check_branch
          %1816 = sbr.rel (%p1814) target = $region188
        $region187: #{transformer_forward.1} parent=11 // pred_region
          _
        $region188: #{transformer_forward.1} parent=11 // pred_fallthru
          _
        // Predicated region
        $region189: #{transformer_forward.1} parent=11 // pred_check
          %p1817 = pneg %p1201
        $region190: #{transformer_forward.1} parent=11 // pred_check_branch
          %1819 = sbr.rel (%p1817) target = $region192
        $region191: #{transformer_forward.1} parent=11 // pred_region
          _
        $region192: #{transformer_forward.1} parent=11 // pred_fallthru
          _
        // Predicated region
        $region193: #{transformer_forward.1} parent=11 // pred_check
          %p1820 = pneg %p1222
        $region194: #{transformer_forward.1} parent=11 // pred_check_branch
          %1822 = sbr.rel (%p1820) target = $region196
        $region195: #{transformer_forward.1} parent=11 // pred_region
          %1824 = vsyncadd [#allocation12], 0
          %s1826 = sshll.u32 %s99, 4
          %s1827 = int_to_ptr.hbm [resolvable:$true] %s1826
          %s1828 = sshll.u32 [#allocation11], 4
          %s1829 = int_to_ptr.vmem [resolvable:$true] %s1828
          %1831 = dma.hbm_to_vmem [thread:$0]  %s1827, 16, %s1829, [#allocation12]
        $region196: #{transformer_forward.1} parent=11 // pred_fallthru
          _
        // Predicated region
        $region197: #{transformer_forward.1} parent=11 // pred_check
          %p1832 = pneg %p1243
        $region198: #{transformer_forward.1} parent=11 // pred_check_branch
          %1834 = sbr.rel (%p1832) target = $region200
        $region199: #{transformer_forward.1} parent=11 // pred_region
          %1836 = vsyncadd [#allocation12], 0
          %s1838 = sshll.u32 %s101, 4
          %s1839 = int_to_ptr.hbm [resolvable:$true] %s1838
          %s1840 = sshll.u32 [#allocation13], 4
          %s1841 = int_to_ptr.vmem [resolvable:$true] %s1840
          %1843 = dma.hbm_to_vmem [thread:$0]  %s1839, 16, %s1841, [#allocation12]
        $region200: #{transformer_forward.1} parent=11 // pred_fallthru
          _
        // Predicated region
        $region201: #{transformer_forward.1} parent=11 // pred_check
          %p1844 = pneg %p1264
        $region202: #{transformer_forward.1} parent=11 // pred_check_branch
          %1846 = sbr.rel (%p1844) target = $region204
        $region203: #{transformer_forward.1} parent=11 // pred_region
          _
        $region204: #{transformer_forward.1} parent=11 // pred_fallthru
          _
        // Predicated region
        $region205: #{transformer_forward.1} parent=11 // pred_check
          %p1847 = pneg %p1285
        $region206: #{transformer_forward.1} parent=11 // pred_check_branch
          %1849 = sbr.rel (%p1847) target = $region208
        $region207: #{transformer_forward.1} parent=11 // pred_region
          %1851 = vsyncadd [#allocation15], 0
          %s1853 = sshll.u32 %s105, 4
          %s1854 = int_to_ptr.hbm [resolvable:$true] %s1853
          %s1855 = sshll.u32 [#allocation14], 4
          %s1856 = int_to_ptr.vmem [resolvable:$true] %s1855
          %1858 = dma.hbm_to_vmem [thread:$0]  %s1854, 16, %s1856, [#allocation15]
        $region208: #{transformer_forward.1} parent=11 // pred_fallthru
          _
        // Predicated region
        $region209: #{transformer_forward.1} parent=11 // pred_check
          %p1859 = pneg %p1306
        $region210: #{transformer_forward.1} parent=11 // pred_check_branch
          %1861 = sbr.rel (%p1859) target = $region212
        $region211: #{transformer_forward.1} parent=11 // pred_region
          _
        $region212: #{transformer_forward.1} parent=11 // pred_fallthru
          _
        // Predicated region
        $region213: #{transformer_forward.1} parent=11 // pred_check
          %p1862 = pneg %p1327
        $region214: #{transformer_forward.1} parent=11 // pred_check_branch
          %1864 = sbr.rel (%p1862) target = $region216
        $region215: #{transformer_forward.1} parent=11 // pred_region
          %1866 = vsyncadd [#allocation15], 0
          %s1868 = sshll.u32 %s109, 4
          %s1869 = int_to_ptr.hbm [resolvable:$true] %s1868
          %s1870 = sshll.u32 [#allocation16], 4
          %s1871 = int_to_ptr.vmem [resolvable:$true] %s1870
          %1873 = dma.hbm_to_vmem [thread:$0]  %s1869, 16, %s1871, [#allocation15]
        $region216: #{transformer_forward.1} parent=11 // pred_fallthru
          _
        // Predicated region
        $region217: #{transformer_forward.1} parent=11 // pred_check
          %p1874 = pneg %p1348
        $region218: #{transformer_forward.1} parent=11 // pred_check_branch
          %1876 = sbr.rel (%p1874) target = $region220
        $region219: #{transformer_forward.1} parent=11 // pred_region
          _
        $region220: #{transformer_forward.1} parent=11 // pred_fallthru
          _
        // Predicated region
        $region221: #{transformer_forward.1} parent=11 // pred_check
          %p1877 = pneg %p1369
        $region222: #{transformer_forward.1} parent=11 // pred_check_branch
          %1879 = sbr.rel (%p1877) target = $region224
        $region223: #{transformer_forward.1} parent=11 // pred_region
          %1881 = vsyncadd [#allocation18], 0
          %s1883 = sshll.u32 %s113, 4
          %s1884 = int_to_ptr.hbm [resolvable:$true] %s1883
          %s1885 = sshll.u32 [#allocation17], 4
          %s1886 = int_to_ptr.vmem [resolvable:$true] %s1885
          %1888 = dma.hbm_to_vmem [thread:$0]  %s1884, 16, %s1886, [#allocation18]
        $region224: #{transformer_forward.1} parent=11 // pred_fallthru
          _
        // Predicated region
        $region225: #{transformer_forward.1} parent=11 // pred_check
          %p1889 = pneg %p1390
        $region226: #{transformer_forward.1} parent=11 // pred_check_branch
          %1891 = sbr.rel (%p1889) target = $region228
        $region227: #{transformer_forward.1} parent=11 // pred_region
          _
        $region228: #{transformer_forward.1} parent=11 // pred_fallthru
          _
        // Predicated region
        $region229: #{transformer_forward.1} parent=11 // pred_check
          %p1892 = pneg %p1411
        $region230: #{transformer_forward.1} parent=11 // pred_check_branch
          %1894 = sbr.rel (%p1892) target = $region232
        $region231: #{transformer_forward.1} parent=11 // pred_region
          %1896 = vsyncadd [#allocation18], 0
          %s1898 = sshll.u32 %s117, 4
          %s1899 = int_to_ptr.hbm [resolvable:$true] %s1898
          %s1900 = sshll.u32 [#allocation19], 4
          %s1901 = int_to_ptr.vmem [resolvable:$true] %s1900
          %1903 = dma.hbm_to_vmem [thread:$0]  %s1899, 16, %s1901, [#allocation18]
        $region232: #{transformer_forward.1} parent=11 // pred_fallthru
          _
        // Predicated region
        $region233: #{transformer_forward.1} parent=11 // pred_check
          %p1904 = pneg %p1432
        $region234: #{transformer_forward.1} parent=11 // pred_check_branch
          %1906 = sbr.rel (%p1904) target = $region236
        $region235: #{transformer_forward.1} parent=11 // pred_region
          _
        $region236: #{transformer_forward.1} parent=11 // pred_fallthru
          _
        // Predicated region
        $region237: #{transformer_forward.1} parent=11 // pred_check
          %p1907 = pneg %p1453
        $region238: #{transformer_forward.1} parent=11 // pred_check_branch
          %1909 = sbr.rel (%p1907) target = $region240
        $region239: #{transformer_forward.1} parent=11 // pred_region
          %1911 = vsyncadd [#allocation21], 0
          %s1913 = sshll.u32 %s121, 4
          %s1914 = int_to_ptr.hbm [resolvable:$true] %s1913
          %s1915 = sshll.u32 [#allocation20], 4
          %s1916 = int_to_ptr.vmem [resolvable:$true] %s1915
          %1918 = dma.hbm_to_vmem [thread:$0]  %s1914, 16, %s1916, [#allocation21]
        $region240: #{transformer_forward.1} parent=11 // pred_fallthru
          _
        // Predicated region
        $region241: #{transformer_forward.1} parent=11 // pred_check
          %p1919 = pneg %p1474
        $region242: #{transformer_forward.1} parent=11 // pred_check_branch
          %1921 = sbr.rel (%p1919) target = $region244
        $region243: #{transformer_forward.1} parent=11 // pred_region
          _
        $region244: #{transformer_forward.1} parent=11 // pred_fallthru
          _
        // Predicated region
        $region245: #{transformer_forward.1} parent=11 // pred_check
          %p1922 = pneg %p1495
        $region246: #{transformer_forward.1} parent=11 // pred_check_branch
          %1924 = sbr.rel (%p1922) target = $region248
        $region247: #{transformer_forward.1} parent=11 // pred_region
          %1926 = vsyncadd [#allocation21], 0
          %s1928 = sshll.u32 %s125, 4
          %s1929 = int_to_ptr.hbm [resolvable:$true] %s1928
          %s1930 = sshll.u32 [#allocation22], 4
          %s1931 = int_to_ptr.vmem [resolvable:$true] %s1930
          %1933 = dma.hbm_to_vmem [thread:$0]  %s1929, 16, %s1931, [#allocation21]
        $region248: #{transformer_forward.1} parent=11 // pred_fallthru
          _
      $region12: #{transformer_forward.1} parent=5 // pred_fallthru
        _
      %p1934 = scmp.lt.s32.totalorder %s152, 2
      // Predicated region
      $region249: #{transformer_forward.1} parent=5 // pred_check
        %p1935 = pneg %p1934
      $region250: #{transformer_forward.1} parent=5 // pred_check_branch
        %1937 = sbr.rel (%p1935) target = $region252
      $region251: #{transformer_forward.1} parent=5 // pred_region
        // Predicated region
        $region253: #{transformer_forward.1} parent=251 // pred_check
          %p1938 = pneg %p172
        $region254: #{transformer_forward.1} parent=251 // pred_check_branch
          %1940 = sbr.rel (%p1938) target = $region256
        $region255: #{transformer_forward.1} parent=251 // pred_region
          %p1941 = scmp.lt.s32.totalorder %s152, 1
          %s1942 = scalar_select %p1941, %s152, 1
          %s1943 = smul.addr %s1942, 8
          %s1944 = scalar_lea.vmem %s1, %s1943
        $region256: #{transformer_forward.1} parent=251 // pred_fallthru
          _
        // Predicated region
        $region257: #{transformer_forward.1} parent=251 // pred_check
          %p1945 = pneg %p198
        $region258: #{transformer_forward.1} parent=251 // pred_check_branch
          %1947 = sbr.rel (%p1945) target = $region260
        $region259: #{transformer_forward.1} parent=251 // pred_region
          %p1948 = scmp.lt.s32.totalorder %s152, 1
          %s1949 = scalar_select %p1948, %s152, 1
          %s1950 = scalar_lea.vmem %s3, %s1949
        $region260: #{transformer_forward.1} parent=251 // pred_fallthru
          _
        // Predicated region
        $region261: #{transformer_forward.1} parent=251 // pred_check
          %p1951 = pneg %p224
        $region262: #{transformer_forward.1} parent=251 // pred_check_branch
          %1953 = sbr.rel (%p1951) target = $region264
        $region263: #{transformer_forward.1} parent=251 // pred_region
          %p1954 = scmp.lt.s32.totalorder %s152, 1
          %s1955 = scalar_select %p1954, %s152, 1
          %s1956 = smul.addr %s1955, 8
          %s1957 = scalar_lea.vmem %s5, %s1956
        $region264: #{transformer_forward.1} parent=251 // pred_fallthru
          _
        // Predicated region
        $region265: #{transformer_forward.1} parent=251 // pred_check
          %p1958 = pneg %p250
        $region266: #{transformer_forward.1} parent=251 // pred_check_branch
          %1960 = sbr.rel (%p1958) target = $region268
        $region267: #{transformer_forward.1} parent=251 // pred_region
          %p1961 = scmp.lt.s32.totalorder %s152, 1
          %s1962 = scalar_select %p1961, %s152, 1
          %s1963 = smul.addr %s1962, 8
          %s1964 = scalar_lea.vmem %s7, %s1963
        $region268: #{transformer_forward.1} parent=251 // pred_fallthru
          _
      $region252: #{transformer_forward.1} parent=5 // pred_fallthru
        _
      %p1965 = scmp.le.s32.totalorder 1, %s152
      %p1966 = scmp.lt.s32.totalorder %s152, 3
      %p1967 = pnand %p1965, %p1966
      %p1968 = pneg %p1967
      // Predicated region
      $region269: #{transformer_forward.1} parent=5 // pred_check
        _
      $region270: #{transformer_forward.1} parent=5 // pred_check_branch
        %1970 = sbr.rel (%p1967) target = $region272
      $region271: #{transformer_forward.1} parent=5 // pred_region
        %s1971 = ssub.s32 %s152, 1
        // Predicated region
        $region273: #{transformer_forward.1} parent=271 // pred_check
          %p1972 = pneg %p592
        $region274: #{transformer_forward.1} parent=271 // pred_check_branch
          %1974 = sbr.rel (%p1972) target = $region276
        $region275: #{transformer_forward.1} parent=271 // pred_region
          %1976 = dma.done [#allocation3], 16
        $region276: #{transformer_forward.1} parent=271 // pred_fallthru
          _
        // Predicated region
        $region277: #{transformer_forward.1} parent=271 // pred_check
          %p1977 = pneg %p613
        $region278: #{transformer_forward.1} parent=271 // pred_check_branch
          %1979 = sbr.rel (%p1977) target = $region280
        $region279: #{transformer_forward.1} parent=271 // pred_region
          %1981 = dma.done [#allocation6], 16
        $region280: #{transformer_forward.1} parent=271 // pred_fallthru
          _
        // Predicated region
        $region281: #{transformer_forward.1} parent=271 // pred_check
          %p1982 = pneg %p655
        $region282: #{transformer_forward.1} parent=271 // pred_check_branch
          %1984 = sbr.rel (%p1982) target = $region284
        $region283: #{transformer_forward.1} parent=271 // pred_region
          %1986 = dma.done [#allocation6], 16
        $region284: #{transformer_forward.1} parent=271 // pred_fallthru
          _
        // Predicated region
        $region285: #{transformer_forward.1} parent=271 // pred_check
          %p1987 = pneg %p697
        $region286: #{transformer_forward.1} parent=271 // pred_check_branch
          %1989 = sbr.rel (%p1987) target = $region288
        $region287: #{transformer_forward.1} parent=271 // pred_region
          %1991 = dma.done [#allocation9], 16
        $region288: #{transformer_forward.1} parent=271 // pred_fallthru
          _
        // Predicated region
        $region289: #{transformer_forward.1} parent=271 // pred_check
          %p1992 = pneg %p739
        $region290: #{transformer_forward.1} parent=271 // pred_check_branch
          %1994 = sbr.rel (%p1992) target = $region292
        $region291: #{transformer_forward.1} parent=271 // pred_region
          %1996 = dma.done [#allocation9], 16
        $region292: #{transformer_forward.1} parent=271 // pred_fallthru
          _
        // Predicated region
        $region293: #{transformer_forward.1} parent=271 // pred_check
          %p1997 = pneg %p1222
        $region294: #{transformer_forward.1} parent=271 // pred_check_branch
          %1999 = sbr.rel (%p1997) target = $region296
        $region295: #{transformer_forward.1} parent=271 // pred_region
          %2001 = dma.done [#allocation12], 16
        $region296: #{transformer_forward.1} parent=271 // pred_fallthru
          _
        // Predicated region
        $region297: #{transformer_forward.1} parent=271 // pred_check
          %p2002 = pneg %p1243
        $region298: #{transformer_forward.1} parent=271 // pred_check_branch
          %2004 = sbr.rel (%p2002) target = $region300
        $region299: #{transformer_forward.1} parent=271 // pred_region
          %2006 = dma.done [#allocation12], 16
        $region300: #{transformer_forward.1} parent=271 // pred_fallthru
          _
        // Predicated region
        $region301: #{transformer_forward.1} parent=271 // pred_check
          %p2007 = pneg %p1285
        $region302: #{transformer_forward.1} parent=271 // pred_check_branch
          %2009 = sbr.rel (%p2007) target = $region304
        $region303: #{transformer_forward.1} parent=271 // pred_region
          %2011 = dma.done [#allocation15], 16
        $region304: #{transformer_forward.1} parent=271 // pred_fallthru
          _
        // Predicated region
        $region305: #{transformer_forward.1} parent=271 // pred_check
          %p2012 = pneg %p1327
        $region306: #{transformer_forward.1} parent=271 // pred_check_branch
          %2014 = sbr.rel (%p2012) target = $region308
        $region307: #{transformer_forward.1} parent=271 // pred_region
          %2016 = dma.done [#allocation15], 16
        $region308: #{transformer_forward.1} parent=271 // pred_fallthru
          _
        // Predicated region
        $region309: #{transformer_forward.1} parent=271 // pred_check
          %p2017 = pneg %p1369
        $region310: #{transformer_forward.1} parent=271 // pred_check_branch
          %2019 = sbr.rel (%p2017) target = $region312
        $region311: #{transformer_forward.1} parent=271 // pred_region
          %2021 = dma.done [#allocation18], 16
        $region312: #{transformer_forward.1} parent=271 // pred_fallthru
          _
        // Predicated region
        $region313: #{transformer_forward.1} parent=271 // pred_check
          %p2022 = pneg %p1411
        $region314: #{transformer_forward.1} parent=271 // pred_check_branch
          %2024 = sbr.rel (%p2022) target = $region316
        $region315: #{transformer_forward.1} parent=271 // pred_region
          %2026 = dma.done [#allocation18], 16
        $region316: #{transformer_forward.1} parent=271 // pred_fallthru
          _
        // Predicated region
        $region317: #{transformer_forward.1} parent=271 // pred_check
          %p2027 = pneg %p1453
        $region318: #{transformer_forward.1} parent=271 // pred_check_branch
          %2029 = sbr.rel (%p2027) target = $region320
        $region319: #{transformer_forward.1} parent=271 // pred_region
          %2031 = dma.done [#allocation21], 16
        $region320: #{transformer_forward.1} parent=271 // pred_fallthru
          _
        // Predicated region
        $region321: #{transformer_forward.1} parent=271 // pred_check
          %p2032 = pneg %p1495
        $region322: #{transformer_forward.1} parent=271 // pred_check_branch
          %2034 = sbr.rel (%p2032) target = $region324
        $region323: #{transformer_forward.1} parent=271 // pred_region
          %2036 = dma.done [#allocation21], 16
        $region324: #{transformer_forward.1} parent=271 // pred_fallthru
          _
        %p2037 = scmp.lt.s32.totalorder %s157, 1
        %s2038 = scalar_select %p2037, %s157, 1
        %s2039 = smul.addr %s2038, 8
        %s2040 = scalar_lea.vmem %s1, %s2039
        %p2041 = pneg %p178
        %p2042 = pneg %p175
        %p2043 = scmp.lt.s32.totalorder %s157, 1
        %s2044 = scalar_select %p2043, %s157, 1
        %s2045 = scalar_lea.vmem %s3, %s2044
        %p2046 = pneg %p204
        %p2047 = pneg %p201
        %p2048 = scmp.lt.s32.totalorder %s157, 1
        %s2049 = scalar_select %p2048, %s157, 1
        %s2050 = smul.addr %s2049, 8
        %s2051 = scalar_lea.vmem %s5, %s2050
        %p2052 = pneg %p230
        %p2053 = pneg %p227
        %p2054 = scmp.lt.s32.totalorder %s157, 1
        %s2055 = scalar_select %p2054, %s157, 1
        %s2056 = smul.addr %s2055, 8
        %s2057 = scalar_lea.vmem %s7, %s2056
        %p2058 = pneg %p256
        %p2059 = pneg %p253
        %p2060 = pneg %p277
        %p2061 = pneg %p274
        %p2062 = pneg %p298
        %p2063 = pneg %p295
        %p2064 = pneg %p319
        %p2065 = pneg %p316
        %p2066 = pneg %p340
        %p2067 = pneg %p337
        %p2068 = pneg %p361
        %p2069 = pneg %p358
        %p2070 = pneg %p382
        %p2071 = pneg %p379
        %p2072 = pneg %p403
        %p2073 = pneg %p400
        %p2074 = pneg %p424
        %p2075 = pneg %p421
        %p2076 = pneg %p445
        %p2077 = pneg %p442
        %p2078 = pneg %p466
        %p2079 = pneg %p463
        %p2080 = pneg %p487
        %p2081 = pneg %p484
        %p2082 = pneg %p508
        %p2083 = pneg %p505
        %p2084 = pneg %p529
        %p2085 = pneg %p526
        %p2086 = pneg %p550
        %p2087 = pneg %p547
        %p2088 = pneg %p571
        %p2089 = pneg %p568
        %p2090 = pneg %p592
        %p2091 = pneg %p589
        %p2092 = pneg %p613
        %p2093 = pneg %p610
        %p2094 = pneg %p634
        %p2095 = pneg %p631
        %p2096 = pneg %p655
        %p2097 = pneg %p652
        %p2098 = pneg %p676
        %p2099 = pneg %p673
        %p2100 = pneg %p697
        %p2101 = pneg %p694
        %p2102 = pneg %p718
        %p2103 = pneg %p715
        %p2104 = pneg %p739
        %p2105 = pneg %p736
        %p2106 = pneg %p760
        %p2107 = pneg %p757
        %p2108 = pneg %p781
        %p2109 = pneg %p778
        %p2110 = pneg %p802
        %p2111 = pneg %p799
        %p2112 = pneg %p823
        %p2113 = pneg %p820
        %p2114 = pneg %p844
        %p2115 = pneg %p841
        %p2116 = pneg %p865
        %p2117 = pneg %p862
        %p2118 = pneg %p886
        %p2119 = pneg %p883
        %p2120 = pneg %p907
        %p2121 = pneg %p904
        %p2122 = pneg %p928
        %p2123 = pneg %p925
        %p2124 = pneg %p949
        %p2125 = pneg %p946
        %p2126 = pneg %p970
        %p2127 = pneg %p967
        %p2128 = pneg %p991
        %p2129 = pneg %p988
        %p2130 = pneg %p1012
        %p2131 = pneg %p1009
        %p2132 = pneg %p1033
        %p2133 = pneg %p1030
        %p2134 = pneg %p1054
        %p2135 = pneg %p1051
        %p2136 = pneg %p1075
        %p2137 = pneg %p1072
        %p2138 = pneg %p1096
        %p2139 = pneg %p1093
        %p2140 = pneg %p1117
        %p2141 = pneg %p1114
        %p2142 = pneg %p1138
        %p2143 = pneg %p1135
        %p2144 = pneg %p1159
        %p2145 = pneg %p1156
        %p2146 = pneg %p1180
        %p2147 = pneg %p1177
        %p2148 = pneg %p1201
        %p2149 = pneg %p1198
        %p2150 = pneg %p1222
        %p2151 = pneg %p1219
        %p2152 = pneg %p1243
        %p2153 = pneg %p1240
        %p2154 = pneg %p1264
        %p2155 = pneg %p1261
        %p2156 = pneg %p1285
        %p2157 = pneg %p1282
        %p2158 = pneg %p1306
        %p2159 = pneg %p1303
        %p2160 = pneg %p1327
        %p2161 = pneg %p1324
        %p2162 = pneg %p1348
        %p2163 = pneg %p1345
        %p2164 = pneg %p1369
        %p2165 = pneg %p1366
        %p2166 = pneg %p1390
        %p2167 = pneg %p1387
        %p2168 = pneg %p1411
        %p2169 = pneg %p1408
        %p2170 = pneg %p1432
        %p2171 = pneg %p1429
        %p2172 = pneg %p1453
        %p2173 = pneg %p1450
        %p2174 = pneg %p1474
        %p2175 = pneg %p1471
        %p2176 = pneg %p1495
        %p2177 = pneg %p1492
        %p2178 = pneg %p1521
        %p2179 = pneg %p1518
        %p2180 = scmp.lt.s32.totalorder %s157, 1
        %s2181 = scalar_select %p2180, %s157, 1
        %s2182 = smul.addr %s2181, 8
        %s2183 = scalar_lea.vmem %s127, %s2182
        %p2184 = pneg %p1547
        %p2185 = pneg %p1544
        %s2186 = sand.u32 %s1534, 1
        %s2187 = scalar_lea.sflag [#allocation4], %s2186
        %s2188 = sand.u32 %s1534, 1
        %s2189 = smul.addr %s2188, 8
        %s2190 = scalar_lea.vmem [#allocation23], %s2189
        %p2191 = pneg %p1573
        %p2192 = pneg %p1570
        %p2193 = scmp.lt.s32.totalorder %s157, 1
        %s2194 = scalar_select %p2193, %s157, 1
        %s2195 = smul.addr %s2194, 4
        %s2196 = smul.addr %s2195, 8
        %s2197 = scalar_lea.vmem %s131, %s2196
        %p2198 = pneg %p1599
        %p2199 = pneg %p1596
        %p2200 = scmp.lt.s32.totalorder %s157, 1
        %s2201 = scalar_select %p2200, %s157, 1
        %s2202 = smul.addr %s2201, 4
        %s2203 = smul.addr %s2202, 8
        %s2204 = scalar_lea.vmem %s133, %s2203
        %p2205 = pneg %p1625
        %p2206 = pneg %p1622
        %p2207 = scmp.lt.s32.totalorder %s157, 1
        %s2208 = scalar_select %p2207, %s157, 1
        %s2209 = smul.addr %s2208, 4
        %s2210 = smul.addr %s2209, 8
        %s2211 = scalar_lea.vmem %s135, %s2210
        %p2212 = scmp.lt.s32.totalorder %s157, 1
        %s2213 = scalar_select %p2212, %s157, 1
        %s2214 = smul.addr %s2213, 8
        %s2215 = scalar_lea.vmem %s1, %s2214
        %p2216 = scmp.lt.s32.totalorder %s157, 1
        %s2217 = scalar_select %p2216, %s157, 1
        %s2218 = scalar_lea.vmem %s3, %s2217
        %p2219 = scmp.lt.s32.totalorder %s157, 1
        %s2220 = scalar_select %p2219, %s157, 1
        %s2221 = smul.addr %s2220, 8
        %s2222 = scalar_lea.vmem %s5, %s2221
        %p2223 = scmp.lt.s32.totalorder %s157, 1
        %s2224 = scalar_select %p2223, %s157, 1
        %s2225 = smul.addr %s2224, 8
        %s2226 = scalar_lea.vmem %s7, %s2225
        %p2227 = scmp.lt.s32.totalorder %s157, 1
        %s2228 = scalar_select %p2227, %s157, 1
        %s2229 = smul.addr %s2228, 8
        %s2230 = scalar_lea.vmem %s127, %s2229
        %p2231 = scmp.lt.s32.totalorder %s157, 1
        %s2232 = scalar_select %p2231, %s157, 1
        %s2233 = smul.addr %s2232, 4
        %s2234 = smul.addr %s2233, 8
        %s2235 = scalar_lea.vmem %s131, %s2234
        %p2236 = scmp.lt.s32.totalorder %s157, 1
        %s2237 = scalar_select %p2236, %s157, 1
        %s2238 = smul.addr %s2237, 4
        %s2239 = smul.addr %s2238, 8
        %s2240 = scalar_lea.vmem %s133, %s2239
        %p2241 = scmp.lt.s32.totalorder %s157, 1
        %s2242 = scalar_select %p2241, %s157, 1
        %s2243 = smul.addr %s2242, 4
        %s2244 = smul.addr %s2243, 8
        %s2245 = scalar_lea.vmem %s135, %s2244
        %v2247 = vld [vmem:[%s2218] sm:$0x1]
        %v2248 = vld [vmem:[%s2215] sm:$0xff]
        %v2249 = vld [vmem:[%s11] sm:$0xf]
        %v2250 = vld [vmem:[%s11 + $0x4] sm:$0xf]
        %v2251 = vld [vmem:[%s11 + $0x8] sm:$0xf]
        %v2252 = vld [vmem:[%s11 + $0xc] sm:$0xf]
        %v2253 = vld [vmem:[%s13] sm:$0x1]
        %v2254 = vld [vmem:[%s15] sm:$0xf]
        %v2255 = vld [vmem:[%s15 + $0x4] sm:$0xf]
        %v2256 = vld [vmem:[%s15 + $0x8] sm:$0xf]
        %v2257 = vld [vmem:[%s15 + $0xc] sm:$0xf]
        %v2258 = vld [vmem:[%s17] sm:$0x1]
        %v2259 = vld [vmem:[%s19] sm:$0xf]
        %v2260 = vld [vmem:[%s19 + $0x4] sm:$0xf]
        %v2261 = vld [vmem:[%s19 + $0x8] sm:$0xf]
        %v2262 = vld [vmem:[%s19 + $0xc] sm:$0xf]
        %v2263 = vld [vmem:[%s21] sm:$0x1]
        %v2264 = vld [vmem:[%s23] sm:$0x1]
        %v2265 = vld [vmem:[%s25] sm:$0x1]
        %v2266 = vpack.c.bf16 %v2248, %v2248
        %v2268 = vperm.slane %v2253, 0
        %v2274 = vunpack.c.l.b16 %v2249
        %v2275 = vunpack.c.l.b16 %v2250
        %v2276 = vunpack.c.l.b16 %v2251
        %v2277 = vunpack.c.l.b16 %v2252
        %v2278 = vpack.c.b16 %v2275, %v2274
        %v2279 = vpack.c.b16 %v2277, %v2276
        %vm2282 = vcmask 261120
        %v2284 = vsel %vm2282, %v2266, 0
        %2286 = vmatpush.bf16.msra.mxu0 0
        %2287 = vmatpush.bf16.msra.mxu0 0
        %2288 = vmatpush.bf16.msra.mxu0 0
        %2289 = vmatpush.bf16.msra.mxu0 0
        %2290 = vmatpush.bf16.msra.mxu0 0
        %2291 = vmatpush.bf16.msra.mxu0 0
        %2292 = vmatpush.bf16.msra.mxu0 %v2279
        %2293 = vmatpush.bf16.msra.mxu0 %v2278
        %2294 = vmatmul.bf16.gmra.mxu0 %v2284
        %v2295 = vpop.f32.mrf.mxu0
        %v2296 = vadd.f32 %v2268, %v2295
        %v2297 = vpop.f32.mrf.mxu0
        %2298 = vdwg.mxu0
        %v2300 = vperm.slane %v2258, 0
        %v2306 = vunpack.c.l.b16 %v2254
        %v2307 = vunpack.c.l.b16 %v2255
        %v2308 = vunpack.c.l.b16 %v2256
        %v2309 = vunpack.c.l.b16 %v2257
        %v2310 = vpack.c.b16 %v2307, %v2306
        %v2311 = vpack.c.b16 %v2309, %v2308
        %2314 = vmatpush.bf16.msra.mxu0 0
        %2315 = vmatpush.bf16.msra.mxu0 0
        %2316 = vmatpush.bf16.msra.mxu0 0
        %2317 = vmatpush.bf16.msra.mxu0 0
        %2318 = vmatpush.bf16.msra.mxu0 0
        %2319 = vmatpush.bf16.msra.mxu0 0
        %2320 = vmatpush.bf16.msra.mxu0 %v2311
        %2321 = vmatpush.bf16.msra.mxu0 %v2310
        %2322 = vmatmul.bf16.gmra.mxu0 %v2284
        %v2323 = vpop.f32.mrf.mxu0
        %v2324 = vadd.f32 %v2300, %v2323
        %v2325 = vpop.f32.mrf.mxu0
        %2326 = vdwg.mxu0
        %v2327 = vpack.c.bf16 %v2296, %v2296
        %v2328 = vpack.c.bf16 %v2324, %v2324
        %vm2329 = vcmask 130048
        %v2331 = vsel %vm2329, %v2327, 0
        %v2334 = vsel %vm2329, %v2328, 0
        %2336 = vmatpush.bf16.xpose.msra.mxu0 0
        %2337 = vmatpush.bf16.xpose.msra.mxu0 0
        %2338 = vmatpush.bf16.xpose.msra.mxu0 0
        %2339 = vmatpush.bf16.xpose.msra.mxu0 0
        %2340 = vmatpush.bf16.xpose.msra.mxu0 0
        %2341 = vmatpush.bf16.xpose.msra.mxu0 0
        %2342 = vmatpush.bf16.xpose.msra.mxu0 0
        %2343 = vmatpush.bf16.xpose.msra.mxu0 %v2334
        %2344 = vmatmul.bf16.gmra.mxu0 %v2331
        %v2345 = vpop.f32.mrf.mxu0
        %v2346 = vadd.f32 0.0, %v2345
        %v2347 = vpop.f32.mrf.mxu0
        %2348 = vdwg.mxu0
        %v2349 = vmul.f32 %v2346, 0.25
        %v2351 = vperm.slane %v2247, 0
        %v2353 = vadd.f32 %v2349, %v2351
        %vm2354 = vcmask 64512
        %v2355 = vsel %vm2354, %v2353, -inf
        %2356 = vmax.xlane.f32.xlu0 %v2355
        %v2357 = vpop.xlane.xlu0 %2356
        %v2358 = vsub.f32 %v2353, %v2357
        %v2359 = vmul.f32 %v2358, 1.442695
        %v2360 = vpow.pop %v2359
        %v2361 = vsel %vm2354, %v2360, 0.0
        %2362 = vadd.xlane.f32.xlu0 %v2361
        %v2363 = vpop.xlane.xlu0 %2362
        %v2364 = vrcp.pop %v2363
        %v2365 = vmul.f32 %v2360, %v2364
        %v2366 = vpack.c.bf16 %v2365, %v2365
        %2368 = vrot.lane.b32.xlu0 %v2328, 96
        %v2369 = vpop.permute.xlu0 %2368
        %v2371 = vsel %vm2354, %v2366, 0
        %vm2373 = vcmask 1043456
        %v2375 = vsel %vm2373, %v2369, 0
        %2377 = vmatpush.bf16.msra.mxu0 0
        %2378 = vmatpush.bf16.msra.mxu0 0
        %2379 = vmatpush.bf16.msra.mxu0 0
        %2380 = vmatpush.bf16.msra.mxu0 0
        %2381 = vmatpush.bf16.msra.mxu0 0
        %2382 = vmatpush.bf16.msra.mxu0 0
        %2383 = vmatpush.bf16.msra.mxu0 0
        %2384 = vmatpush.bf16.msra.mxu0 %v2375
        %2385 = vmatmul.bf16.gmra.mxu0 %v2371
        %v2386 = vpop.f32.mrf.mxu0
        %v2387 = vadd.f32 0.0, %v2386
        %v2388 = vpop.f32.mrf.mxu0
        %2389 = vdwg.mxu0
        %2391 = vrot.lane.b32.xlu0 %v2327, 112
        %v2392 = vpop.permute.xlu0 %2391
        %2393 = vrot.lane.b32.xlu0 %v2328, 112
        %v2394 = vpop.permute.xlu0 %2393
        %v2396 = vsel %vm2329, %v2392, 0
        %v2399 = vsel %vm2329, %v2394, 0
        %2401 = vmatpush.bf16.xpose.msra.mxu0 0
        %2402 = vmatpush.bf16.xpose.msra.mxu0 0
        %2403 = vmatpush.bf16.xpose.msra.mxu0 0
        %2404 = vmatpush.bf16.xpose.msra.mxu0 0
        %2405 = vmatpush.bf16.xpose.msra.mxu0 0
        %2406 = vmatpush.bf16.xpose.msra.mxu0 0
        %2407 = vmatpush.bf16.xpose.msra.mxu0 0
        %2408 = vmatpush.bf16.xpose.msra.mxu0 %v2399
        %2409 = vmatmul.bf16.gmra.mxu0 %v2396
        %v2410 = vpop.f32.mrf.mxu0
        %v2411 = vadd.f32 0.0, %v2410
        %v2412 = vpop.f32.mrf.mxu0
        %2413 = vdwg.mxu0
        %v2414 = vmul.f32 %v2411, 0.25
        %v2415 = vadd.f32 %v2414, %v2351
        %v2416 = vsel %vm2354, %v2415, -inf
        %2417 = vmax.xlane.f32.xlu0 %v2416
        %v2418 = vpop.xlane.xlu0 %2417
        %v2419 = vsub.f32 %v2415, %v2418
        %v2420 = vmul.f32 %v2419, 1.442695
        %v2421 = vpow.pop %v2420
        %v2422 = vsel %vm2354, %v2421, 0.0
        %2423 = vadd.xlane.f32.xlu0 %v2422
        %v2424 = vpop.xlane.xlu0 %2423
        %v2425 = vrcp.pop %v2424
        %v2426 = vmul.f32 %v2421, %v2425
        %v2427 = vpack.c.bf16 %v2426, %v2426
        %2428 = vrot.lane.b32.xlu0 %v2328, 80
        %v2429 = vpop.permute.xlu0 %2428
        %v2431 = vsel %vm2354, %v2427, 0
        %v2434 = vsel %vm2373, %v2429, 0
        %2436 = vmatpush.bf16.msra.mxu0 0
        %2437 = vmatpush.bf16.msra.mxu0 0
        %2438 = vmatpush.bf16.msra.mxu0 0
        %2439 = vmatpush.bf16.msra.mxu0 0
        %2440 = vmatpush.bf16.msra.mxu0 0
        %2441 = vmatpush.bf16.msra.mxu0 0
        %2442 = vmatpush.bf16.msra.mxu0 0
        %2443 = vmatpush.bf16.msra.mxu0 %v2434
        %2444 = vmatmul.bf16.gmra.mxu0 %v2431
        %v2445 = vpop.f32.mrf.mxu0
        %v2446 = vadd.f32 0.0, %v2445
        %v2447 = vpop.f32.mrf.mxu0
        %2448 = vdwg.mxu0
        %2450 = vrot.lane.b32.xlu0 %v2446, 16
        %v2451 = vpop.permute.xlu0 %2450
        %v2453 = vsel %vm2329, %v2387, %v2451
        %v2454 = vpack.c.bf16 %v2453, %v2453
        %v2456 = vperm.slane %v2263, 0
        %v2462 = vunpack.c.l.b16 %v2259
        %v2463 = vunpack.c.l.b16 %v2260
        %v2464 = vunpack.c.l.b16 %v2261
        %v2465 = vunpack.c.l.b16 %v2262
        %v2466 = vpack.c.b16 %v2463, %v2462
        %v2467 = vpack.c.b16 %v2465, %v2464
        %v2471 = vsel %vm2282, %v2454, 0
        %2473 = vmatpush.bf16.msra.mxu0 0
        %2474 = vmatpush.bf16.msra.mxu0 0
        %2475 = vmatpush.bf16.msra.mxu0 0
        %2476 = vmatpush.bf16.msra.mxu0 0
        %2477 = vmatpush.bf16.msra.mxu0 0
        %2478 = vmatpush.bf16.msra.mxu0 0
        %2479 = vmatpush.bf16.msra.mxu0 %v2467
        %2480 = vmatpush.bf16.msra.mxu0 %v2466
        %2481 = vmatmul.bf16.gmra.mxu0 %v2471
        %v2482 = vpop.f32.mrf.mxu0
        %v2483 = vadd.f32 %v2456, %v2482
        %v2484 = vpop.f32.mrf.mxu0
        %2485 = vdwg.mxu0
        %v2486 = vadd.f32 %v2248, %v2483
        %v2487 = vsel %vm2282, %v2486, 0.0
        %2488 = vadd.xlane.f32.xlu0 %v2487
        %v2489 = vpop.xlane.xlu0 %2488
        %v2490 = vrcp.pop 32.0
        %v2491 = vmul.f32 32.0, %v2490
        %v2492 = vsub.f32 1.0, %v2491
        %v2493 = vmul.f32 %v2490, %v2492
        %v2494 = vadd.f32 %v2490, %v2493
        %vm2495 = vweird.f32 %v2490
        %v2496 = vsel %vm2495, %v2490, %v2494
        %v2497 = vmul.f32 %v2489, %v2496
        %v2498 = vsub.f32 %v2486, %v2497
        %v2499 = vmul.f32 %v2498, %v2498
        %v2500 = vsel %vm2282, %v2499, 0.0
        %2501 = vadd.xlane.f32.xlu0 %v2500
        %v2502 = vpop.xlane.xlu0 %2501
        %v2503 = vmul.f32 %v2502, %v2496
        %v2504 = vadd.f32 %v2503, 1e-05
        %v2505 = vrsqrt.pop %v2504
        %v2506 = vmul.f32 %v2505, %v2504
        %v2507 = vmul.f32 %v2506, %v2505
        %v2508 = vmul.f32 0.5, %v2507
        %v2509 = vsub.f32 1.5, %v2508
        %v2510 = vmul.f32 %v2505, %v2509
        %vm2511 = vweird.f32 %v2504
        %vm2512 = vweird.f32 %v2505
        %vm2513 = vmor %vm2511, %vm2512
        %v2514 = vsel %vm2513, %v2505, %v2510
        %v2515 = vmul.f32 %v2498, %v2514
        %v2517 = vperm.slane %v2264, 0
        %v2519 = vmul.f32 %v2515, %v2517
        %v2521 = vperm.slane %v2265, 0
        %v2523 = vadd.f32 %v2519, %v2521
        %2524 = vst.msk [vmem:[%s2235] sm:$0xff] %vm2354, %v2365
        %2525 = vst.msk [vmem:[%s2235 + $0x8] sm:$0xff] %vm2354, %v2426
        %v2526 = vld [vmem:[%s27] sm:$0xf]
        %v2527 = vld [vmem:[%s27 + $0x4] sm:$0xf]
        %v2528 = vld [vmem:[%s27 + $0x8] sm:$0xf]
        %v2529 = vld [vmem:[%s27 + $0xc] sm:$0xf]
        %v2530 = vld [vmem:[%s27 + $0x10] sm:$0xf]
        %v2531 = vld [vmem:[%s27 + $0x14] sm:$0xf]
        %v2532 = vld [vmem:[%s27 + $0x18] sm:$0xf]
        %v2533 = vld [vmem:[%s27 + $0x1c] sm:$0xf]
        %v2534 = vld [vmem:[%s27 + $0x20] sm:$0xf]
        %v2535 = vld [vmem:[%s27 + $0x24] sm:$0xf]
        %v2536 = vld [vmem:[%s27 + $0x28] sm:$0xf]
        %v2537 = vld [vmem:[%s27 + $0x2c] sm:$0xf]
        %v2538 = vld [vmem:[%s29] sm:$0x1]
        %v2539 = vld [vmem:[%s31] sm:$0xf]
        %v2540 = vld [vmem:[%s31 + $0x4] sm:$0xf]
        %v2541 = vld [vmem:[%s31 + $0x8] sm:$0xf]
        %v2542 = vld [vmem:[%s31 + $0xc] sm:$0xf]
        %v2543 = vld [vmem:[%s31 + $0x10] sm:$0xf]
        %v2544 = vld [vmem:[%s31 + $0x14] sm:$0xf]
        %v2545 = vld [vmem:[%s31 + $0x18] sm:$0xf]
        %v2546 = vld [vmem:[%s31 + $0x1c] sm:$0xf]
        %v2547 = vld [vmem:[%s31 + $0x20] sm:$0xf]
        %v2548 = vld [vmem:[%s31 + $0x24] sm:$0xf]
        %v2549 = vld [vmem:[%s31 + $0x28] sm:$0xf]
        %v2550 = vld [vmem:[%s31 + $0x2c] sm:$0xf]
        %v2551 = vld [vmem:[%s31 + $0x30] sm:$0xf]
        %v2552 = vld [vmem:[%s31 + $0x34] sm:$0xf]
        %v2553 = vld [vmem:[%s31 + $0x38] sm:$0xf]
        %v2554 = vld [vmem:[%s31 + $0x3c] sm:$0xf]
        %v2555 = vld [vmem:[%s31 + $0x40] sm:$0xf]
        %v2556 = vld [vmem:[%s31 + $0x44] sm:$0xf]
        %v2557 = vld [vmem:[%s31 + $0x48] sm:$0xf]
        %v2558 = vld [vmem:[%s31 + $0x4c] sm:$0xf]
        %v2559 = vld [vmem:[%s31 + $0x50] sm:$0xf]
        %v2560 = vld [vmem:[%s31 + $0x54] sm:$0xf]
        %v2561 = vld [vmem:[%s31 + $0x58] sm:$0xf]
        %v2562 = vld [vmem:[%s31 + $0x5c] sm:$0xf]
        %v2563 = vld [vmem:[%s33] sm:$0x1]
        %v2564 = vld [vmem:[%s35] sm:$0x1]
        %v2565 = vld [vmem:[%s37] sm:$0x1]
        %v2567 = vrot.slane %v2523, 7
        %vm2569 = vcmask 1040384
        %v2570 = vsel %vm2569, 0.0, %v2567
        %v2571 = vsel %vm2569, %v2567, 0.0
        %vm2574 = vcmask 1046528
        %v2575 = vrot.slane %v2570, 1
        %v2576 = vrot.slane %v2571, 1
        %v2577 = vsel %vm2574, %v2575, %v2576
        %2578 = vrot.lane.b32.xlu0 %v2577, 32
        %v2579 = vpop.permute.xlu0 %2578
        %vm2581 = vcmask 1045504
        %v2582 = vrot.slane %v2570, 2
        %v2583 = vrot.slane %v2571, 2
        %v2584 = vsel %vm2581, %v2582, %v2583
        %2585 = vrot.lane.b32.xlu0 %v2584, 64
        %v2586 = vpop.permute.xlu0 %2585
        %v2588 = vsel %vm2282, %v2570, %v2579
        %vm2589 = vcmask 523264
        %v2590 = vsel %vm2589, %v2588, %v2586
        %v2591 = vpack.c.bf16 %v2590, %v2590
        %v2593 = vperm.slane %v2538, 0
        %v2607 = vunpack.c.l.b16 %v2526
        %v2608 = vunpack.c.l.b16 %v2527
        %v2609 = vunpack.c.l.b16 %v2528
        %v2610 = vunpack.c.l.b16 %v2529
        %v2611 = vunpack.c.l.b16 %v2530
        %v2612 = vunpack.c.l.b16 %v2531
        %v2613 = vunpack.c.l.b16 %v2532
        %v2614 = vunpack.c.l.b16 %v2533
        %v2615 = vunpack.c.l.b16 %v2534
        %v2616 = vunpack.c.l.b16 %v2535
        %v2617 = vunpack.c.l.b16 %v2536
        %v2618 = vunpack.c.l.b16 %v2537
        %v2619 = vpack.c.b16 %v2608, %v2607
        %v2620 = vpack.c.b16 %v2610, %v2609
        %v2621 = vpack.c.b16 %v2612, %v2611
        %v2622 = vpack.c.b16 %v2614, %v2613
        %v2623 = vpack.c.b16 %v2616, %v2615
        %v2624 = vpack.c.b16 %v2618, %v2617
        %vm2631 = vcmask 785408
        %v2633 = vsel %vm2631, %v2591, 0
        %2635 = vmatpush.bf16.msra.mxu0 0
        %2636 = vmatpush.bf16.msra.mxu0 0
        %2637 = vmatpush.bf16.msra.mxu0 %v2624
        %2638 = vmatpush.bf16.msra.mxu0 %v2623
        %2639 = vmatpush.bf16.msra.mxu0 %v2622
        %2640 = vmatpush.bf16.msra.mxu0 %v2621
        %2641 = vmatpush.bf16.msra.mxu0 %v2620
        %2642 = vmatpush.bf16.msra.mxu0 %v2619
        %2643 = vmatmul.bf16.gmra.mxu0 %v2633
        %v2644 = vpop.f32.mrf.mxu0
        %v2645 = vadd.f32 %v2593, %v2644
        %v2646 = vpop.f32.mrf.mxu0
        %2647 = vdwg.mxu0
        %v2648 = vmax.f32 %v2645, 0.0
        %v2650 = vrot.slane %v2648, 7
        %v2652 = vsel %vm2569, 0.0, %v2650
        %v2653 = vsel %vm2569, %v2650, 0.0
        %v2656 = vrot.slane %v2652, 1
        %v2657 = vrot.slane %v2653, 1
        %v2658 = vsel %vm2574, %v2656, %v2657
        %2659 = vrot.lane.b32.xlu0 %v2658, 64
        %v2660 = vpop.permute.xlu0 %2659
        %v2662 = vrot.slane %v2652, 2
        %v2663 = vrot.slane %v2653, 2
        %v2664 = vsel %vm2581, %v2662, %v2663
        %v2666 = vsel %vm2589, %v2652, %v2660
        %v2667 = vpack.c.bf16 %v2666, %v2666
        %v2668 = vpack.c.bf16 %v2664, %v2664
        %v2670 = vperm.slane %v2563, 0
        %v2696 = vunpack.c.l.b16 %v2539
        %v2697 = vunpack.c.l.b16 %v2540
        %v2698 = vunpack.c.l.b16 %v2541
        %v2699 = vunpack.c.l.b16 %v2542
        %v2700 = vunpack.c.l.b16 %v2543
        %v2701 = vunpack.c.l.b16 %v2544
        %v2702 = vunpack.c.l.b16 %v2545
        %v2703 = vunpack.c.l.b16 %v2546
        %v2704 = vunpack.c.l.b16 %v2547
        %v2705 = vunpack.c.l.b16 %v2548
        %v2706 = vunpack.c.l.b16 %v2549
        %v2707 = vunpack.c.l.b16 %v2550
        %v2708 = vunpack.c.l.b16 %v2551
        %v2709 = vunpack.c.l.b16 %v2552
        %v2710 = vunpack.c.l.b16 %v2553
        %v2711 = vunpack.c.l.b16 %v2554
        %v2712 = vunpack.c.l.b16 %v2555
        %v2713 = vunpack.c.l.b16 %v2556
        %v2714 = vunpack.c.l.b16 %v2557
        %v2715 = vunpack.c.l.b16 %v2558
        %v2716 = vunpack.c.l.b16 %v2559
        %v2717 = vunpack.c.l.b16 %v2560
        %v2718 = vunpack.c.l.b16 %v2561
        %v2719 = vunpack.c.l.b16 %v2562
        %v2720 = vpack.c.b16 %v2697, %v2696
        %v2721 = vpack.c.b16 %v2699, %v2698
        %v2722 = vpack.c.b16 %v2701, %v2700
        %v2723 = vpack.c.b16 %v2703, %v2702
        %v2724 = vpack.c.b16 %v2705, %v2704
        %v2725 = vpack.c.b16 %v2707, %v2706
        %v2726 = vpack.c.b16 %v2709, %v2708
        %v2727 = vpack.c.b16 %v2711, %v2710
        %v2728 = vpack.c.b16 %v2713, %v2712
        %v2729 = vpack.c.b16 %v2715, %v2714
        %v2730 = vpack.c.b16 %v2717, %v2716
        %v2731 = vpack.c.b16 %v2719, %v2718
        %v2745 = vsel %vm2589, %v2668, 0
        %2747 = vmatpush.bf16.msra.mxu0 %v2727
        %2748 = vmatpush.bf16.msra.mxu0 %v2726
        %2749 = vmatpush.bf16.msra.mxu0 %v2725
        %2750 = vmatpush.bf16.msra.mxu0 %v2724
        %2751 = vmatpush.bf16.msra.mxu0 %v2723
        %2752 = vmatpush.bf16.msra.mxu0 %v2722
        %2753 = vmatpush.bf16.msra.mxu0 %v2721
        %2754 = vmatpush.bf16.msra.mxu0 %v2720
        %2755 = vmatmul.bf16.gmra.mxu0 %v2667
        %v2756 = vpop.f32.mrf.mxu0
        %v2757 = vadd.f32 %v2670, %v2756
        %v2758 = vpop.f32.mrf.mxu0
        %2759 = vdwg.mxu0
        %2760 = vmatpush.bf16.msra.mxu0 0
        %2761 = vmatpush.bf16.msra.mxu0 0
        %2762 = vmatpush.bf16.msra.mxu0 0
        %2763 = vmatpush.bf16.msra.mxu0 0
        %2764 = vmatpush.bf16.msra.mxu0 %v2731
        %2765 = vmatpush.bf16.msra.mxu0 %v2730
        %2766 = vmatpush.bf16.msra.mxu0 %v2729
        %2767 = vmatpush.bf16.msra.mxu0 %v2728
        %2768 = vmatmul.bf16.gmra.mxu0 %v2745
        %v2769 = vpop.f32.mrf.mxu0
        %v2770 = vadd.f32 %v2757, %v2769
        %v2771 = vpop.f32.mrf.mxu0
        %2772 = vdwg.mxu0
        %v2773 = vadd.f32 %v2523, %v2770
        %v2774 = vsel %vm2282, %v2773, 0.0
        %2775 = vadd.xlane.f32.xlu0 %v2774
        %v2776 = vpop.xlane.xlu0 %2775
        %v2777 = vmul.f32 %v2776, %v2496
        %v2778 = vsub.f32 %v2773, %v2777
        %v2779 = vmul.f32 %v2778, %v2778
        %v2780 = vsel %vm2282, %v2779, 0.0
        %2781 = vadd.xlane.f32.xlu0 %v2780
        %v2782 = vpop.xlane.xlu0 %2781
        %v2783 = vmul.f32 %v2782, %v2496
        %v2784 = vadd.f32 %v2783, 1e-05
        %v2785 = vrsqrt.pop %v2784
        %v2786 = vmul.f32 %v2785, %v2784
        %v2787 = vmul.f32 %v2786, %v2785
        %v2788 = vmul.f32 0.5, %v2787
        %v2789 = vsub.f32 1.5, %v2788
        %v2790 = vmul.f32 %v2785, %v2789
        %vm2791 = vweird.f32 %v2784
        %vm2792 = vweird.f32 %v2785
        %vm2793 = vmor %vm2791, %vm2792
        %v2794 = vsel %vm2793, %v2785, %v2790
        %v2795 = vmul.f32 %v2778, %v2794
        %v2797 = vperm.slane %v2564, 0
        %v2799 = vmul.f32 %v2795, %v2797
        %v2801 = vperm.slane %v2565, 0
        %v2803 = vadd.f32 %v2799, %v2801
        %s2804 = scalar_lea.vmem %s11, 16
        %v2805 = vld [vmem:[%s2804] sm:$0xf]
        %v2806 = vld [vmem:[%s2804 + $0x4] sm:$0xf]
        %v2807 = vld [vmem:[%s2804 + $0x8] sm:$0xf]
        %v2808 = vld [vmem:[%s2804 + $0xc] sm:$0xf]
        %s2809 = scalar_lea.vmem %s13, 1
        %v2810 = vld [vmem:[%s2809] sm:$0x1]
        %s2811 = scalar_lea.vmem %s15, 16
        %v2812 = vld [vmem:[%s2811] sm:$0xf]
        %v2813 = vld [vmem:[%s2811 + $0x4] sm:$0xf]
        %v2814 = vld [vmem:[%s2811 + $0x8] sm:$0xf]
        %v2815 = vld [vmem:[%s2811 + $0xc] sm:$0xf]
        %s2816 = scalar_lea.vmem %s17, 1
        %v2817 = vld [vmem:[%s2816] sm:$0x1]
        %s2818 = scalar_lea.vmem %s19, 16
        %v2819 = vld [vmem:[%s2818] sm:$0xf]
        %v2820 = vld [vmem:[%s2818 + $0x4] sm:$0xf]
        %v2821 = vld [vmem:[%s2818 + $0x8] sm:$0xf]
        %v2822 = vld [vmem:[%s2818 + $0xc] sm:$0xf]
        %s2823 = scalar_lea.vmem %s21, 1
        %v2824 = vld [vmem:[%s2823] sm:$0x1]
        %s2825 = scalar_lea.vmem %s23, 1
        %v2826 = vld [vmem:[%s2825] sm:$0x1]
        %s2827 = scalar_lea.vmem %s25, 1
        %v2828 = vld [vmem:[%s2827] sm:$0x1]
        %v2829 = vpack.c.bf16 %v2803, %v2803
        %v2831 = vperm.slane %v2810, 0
        %v2837 = vunpack.c.l.b16 %v2805
        %v2838 = vunpack.c.l.b16 %v2806
        %v2839 = vunpack.c.l.b16 %v2807
        %v2840 = vunpack.c.l.b16 %v2808
        %v2841 = vpack.c.b16 %v2838, %v2837
        %v2842 = vpack.c.b16 %v2840, %v2839
        %v2846 = vsel %vm2282, %v2829, 0
        %2848 = vmatpush.bf16.msra.mxu0 0
        %2849 = vmatpush.bf16.msra.mxu0 0
        %2850 = vmatpush.bf16.msra.mxu0 0
        %2851 = vmatpush.bf16.msra.mxu0 0
        %2852 = vmatpush.bf16.msra.mxu0 0
        %2853 = vmatpush.bf16.msra.mxu0 0
        %2854 = vmatpush.bf16.msra.mxu0 %v2842
        %2855 = vmatpush.bf16.msra.mxu0 %v2841
        %2856 = vmatmul.bf16.gmra.mxu0 %v2846
        %v2857 = vpop.f32.mrf.mxu0
        %v2858 = vadd.f32 %v2831, %v2857
        %v2859 = vpop.f32.mrf.mxu0
        %2860 = vdwg.mxu0
        %v2862 = vperm.slane %v2817, 0
        %v2868 = vunpack.c.l.b16 %v2812
        %v2869 = vunpack.c.l.b16 %v2813
        %v2870 = vunpack.c.l.b16 %v2814
        %v2871 = vunpack.c.l.b16 %v2815
        %v2872 = vpack.c.b16 %v2869, %v2868
        %v2873 = vpack.c.b16 %v2871, %v2870
        %2876 = vmatpush.bf16.msra.mxu0 0
        %2877 = vmatpush.bf16.msra.mxu0 0
        %2878 = vmatpush.bf16.msra.mxu0 0
        %2879 = vmatpush.bf16.msra.mxu0 0
        %2880 = vmatpush.bf16.msra.mxu0 0
        %2881 = vmatpush.bf16.msra.mxu0 0
        %2882 = vmatpush.bf16.msra.mxu0 %v2873
        %2883 = vmatpush.bf16.msra.mxu0 %v2872
        %2884 = vmatmul.bf16.gmra.mxu0 %v2846
        %v2885 = vpop.f32.mrf.mxu0
        %v2886 = vadd.f32 %v2862, %v2885
        %v2887 = vpop.f32.mrf.mxu0
        %2888 = vdwg.mxu0
        %v2889 = vpack.c.bf16 %v2858, %v2858
        %v2890 = vpack.c.bf16 %v2886, %v2886
        %v2892 = vsel %vm2329, %v2889, 0
        %v2895 = vsel %vm2329, %v2890, 0
        %2897 = vmatpush.bf16.xpose.msra.mxu0 0
        %2898 = vmatpush.bf16.xpose.msra.mxu0 0
        %2899 = vmatpush.bf16.xpose.msra.mxu0 0
        %2900 = vmatpush.bf16.xpose.msra.mxu0 0
        %2901 = vmatpush.bf16.xpose.msra.mxu0 0
        %2902 = vmatpush.bf16.xpose.msra.mxu0 0
        %2903 = vmatpush.bf16.xpose.msra.mxu0 0
        %2904 = vmatpush.bf16.xpose.msra.mxu0 %v2895
        %2905 = vmatmul.bf16.gmra.mxu0 %v2892
        %v2906 = vpop.f32.mrf.mxu0
        %v2907 = vadd.f32 0.0, %v2906
        %v2908 = vpop.f32.mrf.mxu0
        %2909 = vdwg.mxu0
        %v2910 = vmul.f32 %v2907, 0.25
        %v2911 = vadd.f32 %v2910, %v2351
        %v2912 = vsel %vm2354, %v2911, -inf
        %2913 = vmax.xlane.f32.xlu0 %v2912
        %v2914 = vpop.xlane.xlu0 %2913
        %v2915 = vsub.f32 %v2911, %v2914
        %v2916 = vmul.f32 %v2915, 1.442695
        %v2917 = vpow.pop %v2916
        %v2918 = vsel %vm2354, %v2917, 0.0
        %2919 = vadd.xlane.f32.xlu0 %v2918
        %v2920 = vpop.xlane.xlu0 %2919
        %v2921 = vrcp.pop %v2920
        %v2922 = vmul.f32 %v2917, %v2921
        %v2923 = vpack.c.bf16 %v2922, %v2922
        %2925 = vrot.lane.b32.xlu0 %v2890, 96
        %v2926 = vpop.permute.xlu0 %2925
        %v2928 = vsel %vm2354, %v2923, 0
        %v2931 = vsel %vm2373, %v2926, 0
        %2933 = vmatpush.bf16.msra.mxu0 0
        %2934 = vmatpush.bf16.msra.mxu0 0
        %2935 = vmatpush.bf16.msra.mxu0 0
        %2936 = vmatpush.bf16.msra.mxu0 0
        %2937 = vmatpush.bf16.msra.mxu0 0
        %2938 = vmatpush.bf16.msra.mxu0 0
        %2939 = vmatpush.bf16.msra.mxu0 0
        %2940 = vmatpush.bf16.msra.mxu0 %v2931
        %2941 = vmatmul.bf16.gmra.mxu0 %v2928
        %v2942 = vpop.f32.mrf.mxu0
        %v2943 = vadd.f32 0.0, %v2942
        %v2944 = vpop.f32.mrf.mxu0
        %2945 = vdwg.mxu0
        %2947 = vrot.lane.b32.xlu0 %v2889, 112
        %v2948 = vpop.permute.xlu0 %2947
        %2949 = vrot.lane.b32.xlu0 %v2890, 112
        %v2950 = vpop.permute.xlu0 %2949
        %v2952 = vsel %vm2329, %v2948, 0
        %v2955 = vsel %vm2329, %v2950, 0
        %2957 = vmatpush.bf16.xpose.msra.mxu0 0
        %2958 = vmatpush.bf16.xpose.msra.mxu0 0
        %2959 = vmatpush.bf16.xpose.msra.mxu0 0
        %2960 = vmatpush.bf16.xpose.msra.mxu0 0
        %2961 = vmatpush.bf16.xpose.msra.mxu0 0
        %2962 = vmatpush.bf16.xpose.msra.mxu0 0
        %2963 = vmatpush.bf16.xpose.msra.mxu0 0
        %2964 = vmatpush.bf16.xpose.msra.mxu0 %v2955
        %2965 = vmatmul.bf16.gmra.mxu0 %v2952
        %v2966 = vpop.f32.mrf.mxu0
        %v2967 = vadd.f32 0.0, %v2966
        %v2968 = vpop.f32.mrf.mxu0
        %2969 = vdwg.mxu0
        %v2970 = vmul.f32 %v2967, 0.25
        %v2971 = vadd.f32 %v2970, %v2351
        %v2972 = vsel %vm2354, %v2971, -inf
        %2973 = vmax.xlane.f32.xlu0 %v2972
        %v2974 = vpop.xlane.xlu0 %2973
        %v2975 = vsub.f32 %v2971, %v2974
        %v2976 = vmul.f32 %v2975, 1.442695
        %v2977 = vpow.pop %v2976
        %v2978 = vsel %vm2354, %v2977, 0.0
        %2979 = vadd.xlane.f32.xlu0 %v2978
        %v2980 = vpop.xlane.xlu0 %2979
        %v2981 = vrcp.pop %v2980
        %v2982 = vmul.f32 %v2977, %v2981
        %v2983 = vpack.c.bf16 %v2982, %v2982
        %2984 = vrot.lane.b32.xlu0 %v2890, 80
        %v2985 = vpop.permute.xlu0 %2984
        %v2987 = vsel %vm2354, %v2983, 0
        %v2990 = vsel %vm2373, %v2985, 0
        %2992 = vmatpush.bf16.msra.mxu0 0
        %2993 = vmatpush.bf16.msra.mxu0 0
        %2994 = vmatpush.bf16.msra.mxu0 0
        %2995 = vmatpush.bf16.msra.mxu0 0
        %2996 = vmatpush.bf16.msra.mxu0 0
        %2997 = vmatpush.bf16.msra.mxu0 0
        %2998 = vmatpush.bf16.msra.mxu0 0
        %2999 = vmatpush.bf16.msra.mxu0 %v2990
        %3000 = vmatmul.bf16.gmra.mxu0 %v2987
        %v3001 = vpop.f32.mrf.mxu0
        %v3002 = vadd.f32 0.0, %v3001
        %v3003 = vpop.f32.mrf.mxu0
        %3004 = vdwg.mxu0
        %3006 = vrot.lane.b32.xlu0 %v3002, 16
        %v3007 = vpop.permute.xlu0 %3006
        %v3009 = vsel %vm2329, %v2943, %v3007
        %v3010 = vpack.c.bf16 %v3009, %v3009
        %v3012 = vperm.slane %v2824, 0
        %v3018 = vunpack.c.l.b16 %v2819
        %v3019 = vunpack.c.l.b16 %v2820
        %v3020 = vunpack.c.l.b16 %v2821
        %v3021 = vunpack.c.l.b16 %v2822
        %v3022 = vpack.c.b16 %v3019, %v3018
        %v3023 = vpack.c.b16 %v3021, %v3020
        %v3027 = vsel %vm2282, %v3010, 0
        %3029 = vmatpush.bf16.msra.mxu0 0
        %3030 = vmatpush.bf16.msra.mxu0 0
        %3031 = vmatpush.bf16.msra.mxu0 0
        %3032 = vmatpush.bf16.msra.mxu0 0
        %3033 = vmatpush.bf16.msra.mxu0 0
        %3034 = vmatpush.bf16.msra.mxu0 0
        %3035 = vmatpush.bf16.msra.mxu0 %v3023
        %3036 = vmatpush.bf16.msra.mxu0 %v3022
        %3037 = vmatmul.bf16.gmra.mxu0 %v3027
        %v3038 = vpop.f32.mrf.mxu0
        %v3039 = vadd.f32 %v3012, %v3038
        %v3040 = vpop.f32.mrf.mxu0
        %3041 = vdwg.mxu0
        %v3042 = vadd.f32 %v2803, %v3039
        %v3043 = vsel %vm2282, %v3042, 0.0
        %3044 = vadd.xlane.f32.xlu0 %v3043
        %v3045 = vpop.xlane.xlu0 %3044
        %v3046 = vmul.f32 %v3045, %v2496
        %v3047 = vsub.f32 %v3042, %v3046
        %v3048 = vmul.f32 %v3047, %v3047
        %v3049 = vsel %vm2282, %v3048, 0.0
        %3050 = vadd.xlane.f32.xlu0 %v3049
        %v3051 = vpop.xlane.xlu0 %3050
        %v3052 = vmul.f32 %v3051, %v2496
        %v3053 = vadd.f32 %v3052, 1e-05
        %v3054 = vrsqrt.pop %v3053
        %v3055 = vmul.f32 %v3054, %v3053
        %v3056 = vmul.f32 %v3055, %v3054
        %v3057 = vmul.f32 0.5, %v3056
        %v3058 = vsub.f32 1.5, %v3057
        %v3059 = vmul.f32 %v3054, %v3058
        %vm3060 = vweird.f32 %v3053
        %vm3061 = vweird.f32 %v3054
        %vm3062 = vmor %vm3060, %vm3061
        %v3063 = vsel %vm3062, %v3054, %v3059
        %v3064 = vmul.f32 %v3047, %v3063
        %v3066 = vperm.slane %v2826, 0
        %v3068 = vmul.f32 %v3064, %v3066
        %v3070 = vperm.slane %v2828, 0
        %v3072 = vadd.f32 %v3068, %v3070
        %3073 = vst.msk [vmem:[%s2235 + $0x10] sm:$0xff] %vm2354, %v2922
        %3074 = vst.msk [vmem:[%s2235 + $0x18] sm:$0xff] %vm2354, %v2982
        %s3075 = scalar_lea.vmem %s27, 48
        %v3076 = vld [vmem:[%s3075] sm:$0xf]
        %v3077 = vld [vmem:[%s3075 + $0x4] sm:$0xf]
        %v3078 = vld [vmem:[%s3075 + $0x8] sm:$0xf]
        %v3079 = vld [vmem:[%s3075 + $0xc] sm:$0xf]
        %v3080 = vld [vmem:[%s3075 + $0x10] sm:$0xf]
        %v3081 = vld [vmem:[%s3075 + $0x14] sm:$0xf]
        %v3082 = vld [vmem:[%s3075 + $0x18] sm:$0xf]
        %v3083 = vld [vmem:[%s3075 + $0x1c] sm:$0xf]
        %v3084 = vld [vmem:[%s3075 + $0x20] sm:$0xf]
        %v3085 = vld [vmem:[%s3075 + $0x24] sm:$0xf]
        %v3086 = vld [vmem:[%s3075 + $0x28] sm:$0xf]
        %v3087 = vld [vmem:[%s3075 + $0x2c] sm:$0xf]
        %s3088 = scalar_lea.vmem %s29, 1
        %v3089 = vld [vmem:[%s3088] sm:$0x1]
        %s3090 = scalar_lea.vmem %s31, 96
        %v3091 = vld [vmem:[%s3090] sm:$0xf]
        %v3092 = vld [vmem:[%s3090 + $0x4] sm:$0xf]
        %v3093 = vld [vmem:[%s3090 + $0x8] sm:$0xf]
        %v3094 = vld [vmem:[%s3090 + $0xc] sm:$0xf]
        %v3095 = vld [vmem:[%s3090 + $0x10] sm:$0xf]
        %v3096 = vld [vmem:[%s3090 + $0x14] sm:$0xf]
        %v3097 = vld [vmem:[%s3090 + $0x18] sm:$0xf]
        %v3098 = vld [vmem:[%s3090 + $0x1c] sm:$0xf]
        %v3099 = vld [vmem:[%s3090 + $0x20] sm:$0xf]
        %v3100 = vld [vmem:[%s3090 + $0x24] sm:$0xf]
        %v3101 = vld [vmem:[%s3090 + $0x28] sm:$0xf]
        %v3102 = vld [vmem:[%s3090 + $0x2c] sm:$0xf]
        %v3103 = vld [vmem:[%s3090 + $0x30] sm:$0xf]
        %v3104 = vld [vmem:[%s3090 + $0x34] sm:$0xf]
        %v3105 = vld [vmem:[%s3090 + $0x38] sm:$0xf]
        %v3106 = vld [vmem:[%s3090 + $0x3c] sm:$0xf]
        %v3107 = vld [vmem:[%s3090 + $0x40] sm:$0xf]
        %v3108 = vld [vmem:[%s3090 + $0x44] sm:$0xf]
        %v3109 = vld [vmem:[%s3090 + $0x48] sm:$0xf]
        %v3110 = vld [vmem:[%s3090 + $0x4c] sm:$0xf]
        %v3111 = vld [vmem:[%s3090 + $0x50] sm:$0xf]
        %v3112 = vld [vmem:[%s3090 + $0x54] sm:$0xf]
        %v3113 = vld [vmem:[%s3090 + $0x58] sm:$0xf]
        %v3114 = vld [vmem:[%s3090 + $0x5c] sm:$0xf]
        %s3115 = scalar_lea.vmem %s33, 1
        %v3116 = vld [vmem:[%s3115] sm:$0x1]
        %s3117 = scalar_lea.vmem %s35, 1
        %v3118 = vld [vmem:[%s3117] sm:$0x1]
        %s3119 = scalar_lea.vmem %s37, 1
        %v3120 = vld [vmem:[%s3119] sm:$0x1]
        %v3122 = vrot.slane %v3072, 7
        %v3124 = vsel %vm2569, 0.0, %v3122
        %v3125 = vsel %vm2569, %v3122, 0.0
        %v3128 = vrot.slane %v3124, 1
        %v3129 = vrot.slane %v3125, 1
        %v3130 = vsel %vm2574, %v3128, %v3129
        %3131 = vrot.lane.b32.xlu0 %v3130, 32
        %v3132 = vpop.permute.xlu0 %3131
        %v3134 = vrot.slane %v3124, 2
        %v3135 = vrot.slane %v3125, 2
        %v3136 = vsel %vm2581, %v3134, %v3135
        %3137 = vrot.lane.b32.xlu0 %v3136, 64
        %v3138 = vpop.permute.xlu0 %3137
        %v3140 = vsel %vm2282, %v3124, %v3132
        %v3141 = vsel %vm2589, %v3140, %v3138
        %v3142 = vpack.c.bf16 %v3141, %v3141
        %v3144 = vperm.slane %v3089, 0
        %v3158 = vunpack.c.l.b16 %v3076
        %v3159 = vunpack.c.l.b16 %v3077
        %v3160 = vunpack.c.l.b16 %v3078
        %v3161 = vunpack.c.l.b16 %v3079
        %v3162 = vunpack.c.l.b16 %v3080
        %v3163 = vunpack.c.l.b16 %v3081
        %v3164 = vunpack.c.l.b16 %v3082
        %v3165 = vunpack.c.l.b16 %v3083
        %v3166 = vunpack.c.l.b16 %v3084
        %v3167 = vunpack.c.l.b16 %v3085
        %v3168 = vunpack.c.l.b16 %v3086
        %v3169 = vunpack.c.l.b16 %v3087
        %v3170 = vpack.c.b16 %v3159, %v3158
        %v3171 = vpack.c.b16 %v3161, %v3160
        %v3172 = vpack.c.b16 %v3163, %v3162
        %v3173 = vpack.c.b16 %v3165, %v3164
        %v3174 = vpack.c.b16 %v3167, %v3166
        %v3175 = vpack.c.b16 %v3169, %v3168
        %v3183 = vsel %vm2631, %v3142, 0
        %3185 = vmatpush.bf16.msra.mxu0 0
        %3186 = vmatpush.bf16.msra.mxu0 0
        %3187 = vmatpush.bf16.msra.mxu0 %v3175
        %3188 = vmatpush.bf16.msra.mxu0 %v3174
        %3189 = vmatpush.bf16.msra.mxu0 %v3173
        %3190 = vmatpush.bf16.msra.mxu0 %v3172
        %3191 = vmatpush.bf16.msra.mxu0 %v3171
        %3192 = vmatpush.bf16.msra.mxu0 %v3170
        %3193 = vmatmul.bf16.gmra.mxu0 %v3183
        %v3194 = vpop.f32.mrf.mxu0
        %v3195 = vadd.f32 %v3144, %v3194
        %v3196 = vpop.f32.mrf.mxu0
        %3197 = vdwg.mxu0
        %v3198 = vmax.f32 %v3195, 0.0
        %v3200 = vrot.slane %v3198, 7
        %v3202 = vsel %vm2569, 0.0, %v3200
        %v3203 = vsel %vm2569, %v3200, 0.0
        %v3206 = vrot.slane %v3202, 1
        %v3207 = vrot.slane %v3203, 1
        %v3208 = vsel %vm2574, %v3206, %v3207
        %3209 = vrot.lane.b32.xlu0 %v3208, 64
        %v3210 = vpop.permute.xlu0 %3209
        %v3212 = vrot.slane %v3202, 2
        %v3213 = vrot.slane %v3203, 2
        %v3214 = vsel %vm2581, %v3212, %v3213
        %v3216 = vsel %vm2589, %v3202, %v3210
        %v3217 = vpack.c.bf16 %v3216, %v3216
        %v3218 = vpack.c.bf16 %v3214, %v3214
        %v3220 = vperm.slane %v3116, 0
        %v3246 = vunpack.c.l.b16 %v3091
        %v3247 = vunpack.c.l.b16 %v3092
        %v3248 = vunpack.c.l.b16 %v3093
        %v3249 = vunpack.c.l.b16 %v3094
        %v3250 = vunpack.c.l.b16 %v3095
        %v3251 = vunpack.c.l.b16 %v3096
        %v3252 = vunpack.c.l.b16 %v3097
        %v3253 = vunpack.c.l.b16 %v3098
        %v3254 = vunpack.c.l.b16 %v3099
        %v3255 = vunpack.c.l.b16 %v3100
        %v3256 = vunpack.c.l.b16 %v3101
        %v3257 = vunpack.c.l.b16 %v3102
        %v3258 = vunpack.c.l.b16 %v3103
        %v3259 = vunpack.c.l.b16 %v3104
        %v3260 = vunpack.c.l.b16 %v3105
        %v3261 = vunpack.c.l.b16 %v3106
        %v3262 = vunpack.c.l.b16 %v3107
        %v3263 = vunpack.c.l.b16 %v3108
        %v3264 = vunpack.c.l.b16 %v3109
        %v3265 = vunpack.c.l.b16 %v3110
        %v3266 = vunpack.c.l.b16 %v3111
        %v3267 = vunpack.c.l.b16 %v3112
        %v3268 = vunpack.c.l.b16 %v3113
        %v3269 = vunpack.c.l.b16 %v3114
        %v3270 = vpack.c.b16 %v3247, %v3246
        %v3271 = vpack.c.b16 %v3249, %v3248
        %v3272 = vpack.c.b16 %v3251, %v3250
        %v3273 = vpack.c.b16 %v3253, %v3252
        %v3274 = vpack.c.b16 %v3255, %v3254
        %v3275 = vpack.c.b16 %v3257, %v3256
        %v3276 = vpack.c.b16 %v3259, %v3258
        %v3277 = vpack.c.b16 %v3261, %v3260
        %v3278 = vpack.c.b16 %v3263, %v3262
        %v3279 = vpack.c.b16 %v3265, %v3264
        %v3280 = vpack.c.b16 %v3267, %v3266
        %v3281 = vpack.c.b16 %v3269, %v3268
        %v3295 = vsel %vm2589, %v3218, 0
        %3297 = vmatpush.bf16.msra.mxu0 %v3277
        %3298 = vmatpush.bf16.msra.mxu0 %v3276
        %3299 = vmatpush.bf16.msra.mxu0 %v3275
        %3300 = vmatpush.bf16.msra.mxu0 %v3274
        %3301 = vmatpush.bf16.msra.mxu0 %v3273
        %3302 = vmatpush.bf16.msra.mxu0 %v3272
        %3303 = vmatpush.bf16.msra.mxu0 %v3271
        %3304 = vmatpush.bf16.msra.mxu0 %v3270
        %3305 = vmatmul.bf16.gmra.mxu0 %v3217
        %v3306 = vpop.f32.mrf.mxu0
        %v3307 = vadd.f32 %v3220, %v3306
        %v3308 = vpop.f32.mrf.mxu0
        %3309 = vdwg.mxu0
        %3310 = vmatpush.bf16.msra.mxu0 0
        %3311 = vmatpush.bf16.msra.mxu0 0
        %3312 = vmatpush.bf16.msra.mxu0 0
        %3313 = vmatpush.bf16.msra.mxu0 0
        %3314 = vmatpush.bf16.msra.mxu0 %v3281
        %3315 = vmatpush.bf16.msra.mxu0 %v3280
        %3316 = vmatpush.bf16.msra.mxu0 %v3279
        %3317 = vmatpush.bf16.msra.mxu0 %v3278
        %3318 = vmatmul.bf16.gmra.mxu0 %v3295
        %v3319 = vpop.f32.mrf.mxu0
        %v3320 = vadd.f32 %v3307, %v3319
        %v3321 = vpop.f32.mrf.mxu0
        %3322 = vdwg.mxu0
        %v3323 = vadd.f32 %v3072, %v3320
        %v3324 = vsel %vm2282, %v3323, 0.0
        %3325 = vadd.xlane.f32.xlu0 %v3324
        %v3326 = vpop.xlane.xlu0 %3325
        %v3327 = vmul.f32 %v3326, %v2496
        %v3328 = vsub.f32 %v3323, %v3327
        %v3329 = vmul.f32 %v3328, %v3328
        %v3330 = vsel %vm2282, %v3329, 0.0
        %3331 = vadd.xlane.f32.xlu0 %v3330
        %v3332 = vpop.xlane.xlu0 %3331
        %v3333 = vmul.f32 %v3332, %v2496
        %v3334 = vadd.f32 %v3333, 1e-05
        %v3335 = vrsqrt.pop %v3334
        %v3336 = vmul.f32 %v3335, %v3334
        %v3337 = vmul.f32 %v3336, %v3335
        %v3338 = vmul.f32 0.5, %v3337
        %v3339 = vsub.f32 1.5, %v3338
        %v3340 = vmul.f32 %v3335, %v3339
        %vm3341 = vweird.f32 %v3334
        %vm3342 = vweird.f32 %v3335
        %vm3343 = vmor %vm3341, %vm3342
        %v3344 = vsel %vm3343, %v3335, %v3340
        %v3345 = vmul.f32 %v3328, %v3344
        %v3347 = vperm.slane %v3118, 0
        %v3349 = vmul.f32 %v3345, %v3347
        %v3351 = vperm.slane %v3120, 0
        %v3353 = vadd.f32 %v3349, %v3351
        %v3354 = vld [vmem:[#allocation2] sm:$0x1]
        %v3355 = vld [vmem:[#allocation5] sm:$0x1]
        %v3356 = vsel %vm2282, %v3353, 0.0
        %3357 = vadd.xlane.f32.xlu0 %v3356
        %v3358 = vpop.xlane.xlu0 %3357
        %v3359 = vmul.f32 %v3358, %v2496
        %v3360 = vsub.f32 %v3353, %v3359
        %v3361 = vmul.f32 %v3360, %v3360
        %v3362 = vsel %vm2282, %v3361, 0.0
        %3363 = vadd.xlane.f32.xlu0 %v3362
        %v3364 = vpop.xlane.xlu0 %3363
        %v3365 = vmul.f32 %v3364, %v2496
        %v3366 = vadd.f32 %v3365, 1e-05
        %v3367 = vrsqrt.pop %v3366
        %v3368 = vmul.f32 %v3367, %v3366
        %v3369 = vmul.f32 %v3368, %v3367
        %v3370 = vmul.f32 0.5, %v3369
        %v3371 = vsub.f32 1.5, %v3370
        %v3372 = vmul.f32 %v3367, %v3371
        %vm3373 = vweird.f32 %v3366
        %vm3374 = vweird.f32 %v3367
        %vm3375 = vmor %vm3373, %vm3374
        %v3376 = vsel %vm3375, %v3367, %v3372
        %v3377 = vmul.f32 %v3360, %v3376
        %v3379 = vperm.slane %v3354, 0
        %v3381 = vmul.f32 %v3377, %v3379
        %v3383 = vperm.slane %v3355, 0
        %v3385 = vadd.f32 %v3381, %v3383
        %v3386 = vld [vmem:[%s2222] sm:$0xff]
        %v3387 = vpack.c.bf16 %v3386, %v3386
        %v3388 = vld [vmem:[%s43] sm:$0xf]
        %v3389 = vld [vmem:[%s43 + $0x4] sm:$0xf]
        %v3390 = vld [vmem:[#allocation7] sm:$0x1]
        %v3392 = vperm.slane %v3390, 0
        %v3396 = vunpack.c.l.b16 %v3388
        %v3397 = vunpack.c.l.b16 %v3389
        %v3398 = vpack.c.b16 %v3397, %v3396
        %v3401 = vsel %vm2329, %v3387, 0
        %3403 = vmatpush.bf16.msra.mxu0 0
        %3404 = vmatpush.bf16.msra.mxu0 0
        %3405 = vmatpush.bf16.msra.mxu0 0
        %3406 = vmatpush.bf16.msra.mxu0 0
        %3407 = vmatpush.bf16.msra.mxu0 0
        %3408 = vmatpush.bf16.msra.mxu0 0
        %3409 = vmatpush.bf16.msra.mxu0 0
        %3410 = vmatpush.bf16.msra.mxu0 %v3398
        %3411 = vmatmul.bf16.gmra.mxu0 %v3401
        %v3412 = vpop.f32.mrf.mxu0
        %v3413 = vadd.f32 %v3392, %v3412
        %v3414 = vpop.f32.mrf.mxu0
        %3415 = vdwg.mxu0
        %v3416 = vmax.f32 %v3413, 0.0
        %v3417 = vpack.c.bf16 %v3416, %v3416
        %v3418 = vld [vmem:[%s47] sm:$0xf]
        %v3419 = vld [vmem:[%s47 + $0x4] sm:$0xf]
        %v3420 = vld [vmem:[%s47 + $0x8] sm:$0xf]
        %v3421 = vld [vmem:[%s47 + $0xc] sm:$0xf]
        %v3422 = vld [vmem:[#allocation8] sm:$0x1]
        %v3424 = vperm.slane %v3422, 0
        %v3430 = vunpack.c.l.b16 %v3418
        %v3431 = vunpack.c.l.b16 %v3419
        %v3432 = vunpack.c.l.b16 %v3420
        %v3433 = vunpack.c.l.b16 %v3421
        %v3434 = vpack.c.b16 %v3431, %v3430
        %v3435 = vpack.c.b16 %v3433, %v3432
        %v3439 = vsel %vm2282, %v3417, 0
        %3441 = vmatpush.bf16.msra.mxu0 0
        %3442 = vmatpush.bf16.msra.mxu0 0
        %3443 = vmatpush.bf16.msra.mxu0 0
        %3444 = vmatpush.bf16.msra.mxu0 0
        %3445 = vmatpush.bf16.msra.mxu0 0
        %3446 = vmatpush.bf16.msra.mxu0 0
        %3447 = vmatpush.bf16.msra.mxu0 %v3435
        %3448 = vmatpush.bf16.msra.mxu0 %v3434
        %3449 = vmatmul.bf16.gmra.mxu0 %v3439
        %v3450 = vpop.f32.mrf.mxu0
        %v3451 = vadd.f32 %v3424, %v3450
        %v3452 = vpop.f32.mrf.mxu0
        %3453 = vdwg.mxu0
        %v3454 = vmax.f32 %v3451, 0.0
        %v3455 = vpack.c.bf16 %v3454, %v3454
        %v3456 = vld [vmem:[%s51] sm:$0xf]
        %v3457 = vld [vmem:[%s51 + $0x4] sm:$0xf]
        %v3458 = vld [vmem:[%s51 + $0x8] sm:$0xf]
        %v3459 = vld [vmem:[%s51 + $0xc] sm:$0xf]
        %v3460 = vld [vmem:[#allocation10] sm:$0x1]
        %v3462 = vperm.slane %v3460, 0
        %v3468 = vunpack.c.l.b16 %v3456
        %v3469 = vunpack.c.l.b16 %v3457
        %v3470 = vunpack.c.l.b16 %v3458
        %v3471 = vunpack.c.l.b16 %v3459
        %v3472 = vpack.c.b16 %v3469, %v3468
        %v3473 = vpack.c.b16 %v3471, %v3470
        %v3477 = vsel %vm2282, %v3455, 0
        %3479 = vmatpush.bf16.msra.mxu0 0
        %3480 = vmatpush.bf16.msra.mxu0 0
        %3481 = vmatpush.bf16.msra.mxu0 0
        %3482 = vmatpush.bf16.msra.mxu0 0
        %3483 = vmatpush.bf16.msra.mxu0 0
        %3484 = vmatpush.bf16.msra.mxu0 0
        %3485 = vmatpush.bf16.msra.mxu0 %v3473
        %3486 = vmatpush.bf16.msra.mxu0 %v3472
        %3487 = vmatmul.bf16.gmra.mxu0 %v3477
        %v3488 = vpop.f32.mrf.mxu0
        %v3489 = vadd.f32 %v3462, %v3488
        %v3490 = vpop.f32.mrf.mxu0
        %3491 = vdwg.mxu0
        %v3492 = vmul.f32 %v3489, 5.656854
        %v3493 = vld [vmem:[%s9] sm:$0xff]
        %v3494 = vadd.f32 %v3492, %v3493
        %v3495 = vld [vmem:[%s2226] sm:$0xff]
        %v3496 = vld [vmem:[%s55] sm:$0xf]
        %v3497 = vld [vmem:[%s55 + $0x4] sm:$0xf]
        %v3498 = vld [vmem:[%s55 + $0x8] sm:$0xf]
        %v3499 = vld [vmem:[%s55 + $0xc] sm:$0xf]
        %v3500 = vld [vmem:[%s57] sm:$0x1]
        %v3501 = vld [vmem:[%s59] sm:$0xf]
        %v3502 = vld [vmem:[%s59 + $0x4] sm:$0xf]
        %v3503 = vld [vmem:[%s59 + $0x8] sm:$0xf]
        %v3504 = vld [vmem:[%s59 + $0xc] sm:$0xf]
        %v3505 = vld [vmem:[%s61] sm:$0x1]
        %v3506 = vld [vmem:[%s63] sm:$0xf]
        %v3507 = vld [vmem:[%s63 + $0x4] sm:$0xf]
        %v3508 = vld [vmem:[%s63 + $0x8] sm:$0xf]
        %v3509 = vld [vmem:[%s63 + $0xc] sm:$0xf]
        %v3510 = vld [vmem:[%s65] sm:$0x1]
        %v3511 = vld [vmem:[%s67] sm:$0x1]
        %v3512 = vld [vmem:[%s69] sm:$0x1]
        %v3513 = vpack.c.bf16 %v3494, %v3494
        %v3515 = vperm.slane %v3500, 0
        %v3521 = vunpack.c.l.b16 %v3496
        %v3522 = vunpack.c.l.b16 %v3497
        %v3523 = vunpack.c.l.b16 %v3498
        %v3524 = vunpack.c.l.b16 %v3499
        %v3525 = vpack.c.b16 %v3522, %v3521
        %v3526 = vpack.c.b16 %v3524, %v3523
        %v3530 = vsel %vm2282, %v3513, 0
        %3532 = vmatpush.bf16.msra.mxu0 0
        %3533 = vmatpush.bf16.msra.mxu0 0
        %3534 = vmatpush.bf16.msra.mxu0 0
        %3535 = vmatpush.bf16.msra.mxu0 0
        %3536 = vmatpush.bf16.msra.mxu0 0
        %3537 = vmatpush.bf16.msra.mxu0 0
        %3538 = vmatpush.bf16.msra.mxu0 %v3526
        %3539 = vmatpush.bf16.msra.mxu0 %v3525
        %3540 = vmatmul.bf16.gmra.mxu0 %v3530
        %v3541 = vpop.f32.mrf.mxu0
        %v3542 = vadd.f32 %v3515, %v3541
        %v3543 = vpop.f32.mrf.mxu0
        %3544 = vdwg.mxu0
        %v3546 = vperm.slane %v3505, 0
        %v3552 = vunpack.c.l.b16 %v3501
        %v3553 = vunpack.c.l.b16 %v3502
        %v3554 = vunpack.c.l.b16 %v3503
        %v3555 = vunpack.c.l.b16 %v3504
        %v3556 = vpack.c.b16 %v3553, %v3552
        %v3557 = vpack.c.b16 %v3555, %v3554
        %3560 = vmatpush.bf16.msra.mxu0 0
        %3561 = vmatpush.bf16.msra.mxu0 0
        %3562 = vmatpush.bf16.msra.mxu0 0
        %3563 = vmatpush.bf16.msra.mxu0 0
        %3564 = vmatpush.bf16.msra.mxu0 0
        %3565 = vmatpush.bf16.msra.mxu0 0
        %3566 = vmatpush.bf16.msra.mxu0 %v3557
        %3567 = vmatpush.bf16.msra.mxu0 %v3556
        %3568 = vmatmul.bf16.gmra.mxu0 %v3530
        %v3569 = vpop.f32.mrf.mxu0
        %v3570 = vadd.f32 %v3546, %v3569
        %v3571 = vpop.f32.mrf.mxu0
        %3572 = vdwg.mxu0
        %v3573 = vpack.c.bf16 %v3542, %v3542
        %v3574 = vpack.c.bf16 %v3570, %v3570
        %v3576 = vsel %vm2329, %v3573, 0
        %v3579 = vsel %vm2329, %v3574, 0
        %3581 = vmatpush.bf16.xpose.msra.mxu0 0
        %3582 = vmatpush.bf16.xpose.msra.mxu0 0
        %3583 = vmatpush.bf16.xpose.msra.mxu0 0
        %3584 = vmatpush.bf16.xpose.msra.mxu0 0
        %3585 = vmatpush.bf16.xpose.msra.mxu0 0
        %3586 = vmatpush.bf16.xpose.msra.mxu0 0
        %3587 = vmatpush.bf16.xpose.msra.mxu0 0
        %3588 = vmatpush.bf16.xpose.msra.mxu0 %v3579
        %3589 = vmatmul.bf16.gmra.mxu0 %v3576
        %v3590 = vpop.f32.mrf.mxu0
        %v3591 = vadd.f32 0.0, %v3590
        %v3592 = vpop.f32.mrf.mxu0
        %3593 = vdwg.mxu0
        %v3594 = vmul.f32 %v3591, 0.25
        %v3595 = vadd.f32 %v3594, %v3495
        %v3596 = vsel %vm2354, %v3595, -inf
        %3597 = vmax.xlane.f32.xlu0 %v3596
        %v3598 = vpop.xlane.xlu0 %3597
        %v3599 = vsub.f32 %v3595, %v3598
        %v3600 = vmul.f32 %v3599, 1.442695
        %v3601 = vpow.pop %v3600
        %v3602 = vsel %vm2354, %v3601, 0.0
        %3603 = vadd.xlane.f32.xlu0 %v3602
        %v3604 = vpop.xlane.xlu0 %3603
        %v3605 = vrcp.pop %v3604
        %v3606 = vmul.f32 %v3601, %v3605
        %v3607 = vpack.c.bf16 %v3606, %v3606
        %3609 = vrot.lane.b32.xlu0 %v3574, 96
        %v3610 = vpop.permute.xlu0 %3609
        %v3612 = vsel %vm2354, %v3607, 0
        %v3615 = vsel %vm2373, %v3610, 0
        %3617 = vmatpush.bf16.msra.mxu0 0
        %3618 = vmatpush.bf16.msra.mxu0 0
        %3619 = vmatpush.bf16.msra.mxu0 0
        %3620 = vmatpush.bf16.msra.mxu0 0
        %3621 = vmatpush.bf16.msra.mxu0 0
        %3622 = vmatpush.bf16.msra.mxu0 0
        %3623 = vmatpush.bf16.msra.mxu0 0
        %3624 = vmatpush.bf16.msra.mxu0 %v3615
        %3625 = vmatmul.bf16.gmra.mxu0 %v3612
        %v3626 = vpop.f32.mrf.mxu0
        %v3627 = vadd.f32 0.0, %v3626
        %v3628 = vpop.f32.mrf.mxu0
        %3629 = vdwg.mxu0
        %3631 = vrot.lane.b32.xlu0 %v3573, 112
        %v3632 = vpop.permute.xlu0 %3631
        %3633 = vrot.lane.b32.xlu0 %v3574, 112
        %v3634 = vpop.permute.xlu0 %3633
        %v3636 = vsel %vm2329, %v3632, 0
        %v3639 = vsel %vm2329, %v3634, 0
        %3641 = vmatpush.bf16.xpose.msra.mxu0 0
        %3642 = vmatpush.bf16.xpose.msra.mxu0 0
        %3643 = vmatpush.bf16.xpose.msra.mxu0 0
        %3644 = vmatpush.bf16.xpose.msra.mxu0 0
        %3645 = vmatpush.bf16.xpose.msra.mxu0 0
        %3646 = vmatpush.bf16.xpose.msra.mxu0 0
        %3647 = vmatpush.bf16.xpose.msra.mxu0 0
        %3648 = vmatpush.bf16.xpose.msra.mxu0 %v3639
        %3649 = vmatmul.bf16.gmra.mxu0 %v3636
        %v3650 = vpop.f32.mrf.mxu0
        %v3651 = vadd.f32 0.0, %v3650
        %v3652 = vpop.f32.mrf.mxu0
        %3653 = vdwg.mxu0
        %v3654 = vmul.f32 %v3651, 0.25
        %v3655 = vadd.f32 %v3654, %v3495
        %v3656 = vsel %vm2354, %v3655, -inf
        %3657 = vmax.xlane.f32.xlu0 %v3656
        %v3658 = vpop.xlane.xlu0 %3657
        %v3659 = vsub.f32 %v3655, %v3658
        %v3660 = vmul.f32 %v3659, 1.442695
        %v3661 = vpow.pop %v3660
        %v3662 = vsel %vm2354, %v3661, 0.0
        %3663 = vadd.xlane.f32.xlu0 %v3662
        %v3664 = vpop.xlane.xlu0 %3663
        %v3665 = vrcp.pop %v3664
        %v3666 = vmul.f32 %v3661, %v3665
        %v3667 = vpack.c.bf16 %v3666, %v3666
        %3668 = vrot.lane.b32.xlu0 %v3574, 80
        %v3669 = vpop.permute.xlu0 %3668
        %v3671 = vsel %vm2354, %v3667, 0
        %v3674 = vsel %vm2373, %v3669, 0
        %3676 = vmatpush.bf16.msra.mxu0 0
        %3677 = vmatpush.bf16.msra.mxu0 0
        %3678 = vmatpush.bf16.msra.mxu0 0
        %3679 = vmatpush.bf16.msra.mxu0 0
        %3680 = vmatpush.bf16.msra.mxu0 0
        %3681 = vmatpush.bf16.msra.mxu0 0
        %3682 = vmatpush.bf16.msra.mxu0 0
        %3683 = vmatpush.bf16.msra.mxu0 %v3674
        %3684 = vmatmul.bf16.gmra.mxu0 %v3671
        %v3685 = vpop.f32.mrf.mxu0
        %v3686 = vadd.f32 0.0, %v3685
        %v3687 = vpop.f32.mrf.mxu0
        %3688 = vdwg.mxu0
        %3690 = vrot.lane.b32.xlu0 %v3686, 16
        %v3691 = vpop.permute.xlu0 %3690
        %v3693 = vsel %vm2329, %v3627, %v3691
        %v3694 = vpack.c.bf16 %v3693, %v3693
        %v3696 = vperm.slane %v3510, 0
        %v3702 = vunpack.c.l.b16 %v3506
        %v3703 = vunpack.c.l.b16 %v3507
        %v3704 = vunpack.c.l.b16 %v3508
        %v3705 = vunpack.c.l.b16 %v3509
        %v3706 = vpack.c.b16 %v3703, %v3702
        %v3707 = vpack.c.b16 %v3705, %v3704
        %v3711 = vsel %vm2282, %v3694, 0
        %3713 = vmatpush.bf16.msra.mxu0 0
        %3714 = vmatpush.bf16.msra.mxu0 0
        %3715 = vmatpush.bf16.msra.mxu0 0
        %3716 = vmatpush.bf16.msra.mxu0 0
        %3717 = vmatpush.bf16.msra.mxu0 0
        %3718 = vmatpush.bf16.msra.mxu0 0
        %3719 = vmatpush.bf16.msra.mxu0 %v3707
        %3720 = vmatpush.bf16.msra.mxu0 %v3706
        %3721 = vmatmul.bf16.gmra.mxu0 %v3711
        %v3722 = vpop.f32.mrf.mxu0
        %v3723 = vadd.f32 %v3696, %v3722
        %v3724 = vpop.f32.mrf.mxu0
        %3725 = vdwg.mxu0
        %v3726 = vadd.f32 %v3494, %v3723
        %v3727 = vsel %vm2282, %v3726, 0.0
        %3728 = vadd.xlane.f32.xlu0 %v3727
        %v3729 = vpop.xlane.xlu0 %3728
        %v3730 = vmul.f32 %v3729, %v2496
        %v3731 = vsub.f32 %v3726, %v3730
        %v3732 = vmul.f32 %v3731, %v3731
        %v3733 = vsel %vm2282, %v3732, 0.0
        %3734 = vadd.xlane.f32.xlu0 %v3733
        %v3735 = vpop.xlane.xlu0 %3734
        %v3736 = vmul.f32 %v3735, %v2496
        %v3737 = vadd.f32 %v3736, 1e-05
        %v3738 = vrsqrt.pop %v3737
        %v3739 = vmul.f32 %v3738, %v3737
        %v3740 = vmul.f32 %v3739, %v3738
        %v3741 = vmul.f32 0.5, %v3740
        %v3742 = vsub.f32 1.5, %v3741
        %v3743 = vmul.f32 %v3738, %v3742
        %vm3744 = vweird.f32 %v3737
        %vm3745 = vweird.f32 %v3738
        %vm3746 = vmor %vm3744, %vm3745
        %v3747 = vsel %vm3746, %v3738, %v3743
        %v3748 = vmul.f32 %v3731, %v3747
        %v3750 = vperm.slane %v3511, 0
        %v3752 = vmul.f32 %v3748, %v3750
        %v3754 = vperm.slane %v3512, 0
        %v3756 = vadd.f32 %v3752, %v3754
        %3757 = vst.msk [vmem:[%s2240] sm:$0xff] %vm2354, %v3606
        %3758 = vst.msk [vmem:[%s2240 + $0x8] sm:$0xff] %vm2354, %v3666
        %v3759 = vld [vmem:[%s71] sm:$0xf]
        %v3760 = vld [vmem:[%s71 + $0x4] sm:$0xf]
        %v3761 = vld [vmem:[%s71 + $0x8] sm:$0xf]
        %v3762 = vld [vmem:[%s71 + $0xc] sm:$0xf]
        %v3763 = vld [vmem:[%s73] sm:$0x1]
        %v3764 = vld [vmem:[%s75] sm:$0xf]
        %v3765 = vld [vmem:[%s75 + $0x4] sm:$0xf]
        %v3766 = vld [vmem:[%s75 + $0x8] sm:$0xf]
        %v3767 = vld [vmem:[%s75 + $0xc] sm:$0xf]
        %v3768 = vld [vmem:[%s77] sm:$0x1]
        %v3769 = vld [vmem:[%s79] sm:$0xf]
        %v3770 = vld [vmem:[%s79 + $0x4] sm:$0xf]
        %v3771 = vld [vmem:[%s79 + $0x8] sm:$0xf]
        %v3772 = vld [vmem:[%s79 + $0xc] sm:$0xf]
        %v3773 = vld [vmem:[%s81] sm:$0x1]
        %v3774 = vld [vmem:[%s83] sm:$0x1]
        %v3775 = vld [vmem:[%s85] sm:$0x1]
        %v3776 = vpack.c.bf16 %v3756, %v3756
        %v3778 = vperm.slane %v3763, 0
        %v3784 = vunpack.c.l.b16 %v3759
        %v3785 = vunpack.c.l.b16 %v3760
        %v3786 = vunpack.c.l.b16 %v3761
        %v3787 = vunpack.c.l.b16 %v3762
        %v3788 = vpack.c.b16 %v3785, %v3784
        %v3789 = vpack.c.b16 %v3787, %v3786
        %v3793 = vsel %vm2282, %v3776, 0
        %3795 = vmatpush.bf16.msra.mxu0 0
        %3796 = vmatpush.bf16.msra.mxu0 0
        %3797 = vmatpush.bf16.msra.mxu0 0
        %3798 = vmatpush.bf16.msra.mxu0 0
        %3799 = vmatpush.bf16.msra.mxu0 0
        %3800 = vmatpush.bf16.msra.mxu0 0
        %3801 = vmatpush.bf16.msra.mxu0 %v3789
        %3802 = vmatpush.bf16.msra.mxu0 %v3788
        %3803 = vmatmul.bf16.gmra.mxu0 %v3793
        %v3804 = vpop.f32.mrf.mxu0
        %v3805 = vadd.f32 %v3778, %v3804
        %v3806 = vpop.f32.mrf.mxu0
        %3807 = vdwg.mxu0
        %v3808 = vpack.c.bf16 %v3385, %v3385
        %v3810 = vperm.slane %v3768, 0
        %v3816 = vunpack.c.l.b16 %v3764
        %v3817 = vunpack.c.l.b16 %v3765
        %v3818 = vunpack.c.l.b16 %v3766
        %v3819 = vunpack.c.l.b16 %v3767
        %v3820 = vpack.c.b16 %v3817, %v3816
        %v3821 = vpack.c.b16 %v3819, %v3818
        %v3825 = vsel %vm2282, %v3808, 0
        %3827 = vmatpush.bf16.msra.mxu0 0
        %3828 = vmatpush.bf16.msra.mxu0 0
        %3829 = vmatpush.bf16.msra.mxu0 0
        %3830 = vmatpush.bf16.msra.mxu0 0
        %3831 = vmatpush.bf16.msra.mxu0 0
        %3832 = vmatpush.bf16.msra.mxu0 0
        %3833 = vmatpush.bf16.msra.mxu0 %v3821
        %3834 = vmatpush.bf16.msra.mxu0 %v3820
        %3835 = vmatmul.bf16.gmra.mxu0 %v3825
        %v3836 = vpop.f32.mrf.mxu0
        %v3837 = vadd.f32 %v3810, %v3836
        %v3838 = vpop.f32.mrf.mxu0
        %3839 = vdwg.mxu0
        %v3840 = vpack.c.bf16 %v3805, %v3805
        %v3841 = vpack.c.bf16 %v3837, %v3837
        %v3843 = vsel %vm2329, %v3840, 0
        %v3846 = vsel %vm2329, %v3841, 0
        %3848 = vmatpush.bf16.xpose.msra.mxu0 0
        %3849 = vmatpush.bf16.xpose.msra.mxu0 0
        %3850 = vmatpush.bf16.xpose.msra.mxu0 0
        %3851 = vmatpush.bf16.xpose.msra.mxu0 0
        %3852 = vmatpush.bf16.xpose.msra.mxu0 0
        %3853 = vmatpush.bf16.xpose.msra.mxu0 0
        %3854 = vmatpush.bf16.xpose.msra.mxu0 0
        %3855 = vmatpush.bf16.xpose.msra.mxu0 %v3846
        %3856 = vmatmul.bf16.gmra.mxu0 %v3843
        %v3857 = vpop.f32.mrf.mxu0
        %v3858 = vadd.f32 0.0, %v3857
        %v3859 = vpop.f32.mrf.mxu0
        %3860 = vdwg.mxu0
        %v3861 = vmul.f32 %v3858, 0.25
        %v3862 = vadd.f32 %v3861, %v2351
        %v3863 = vsel %vm2354, %v3862, -inf
        %3864 = vmax.xlane.f32.xlu0 %v3863
        %v3865 = vpop.xlane.xlu0 %3864
        %v3866 = vsub.f32 %v3862, %v3865
        %v3867 = vmul.f32 %v3866, 1.442695
        %v3868 = vpow.pop %v3867
        %v3869 = vsel %vm2354, %v3868, 0.0
        %3870 = vadd.xlane.f32.xlu0 %v3869
        %v3871 = vpop.xlane.xlu0 %3870
        %v3872 = vrcp.pop %v3871
        %v3873 = vmul.f32 %v3868, %v3872
        %v3874 = vpack.c.bf16 %v3873, %v3873
        %3876 = vrot.lane.b32.xlu0 %v3841, 96
        %v3877 = vpop.permute.xlu0 %3876
        %v3879 = vsel %vm2354, %v3874, 0
        %v3882 = vsel %vm2373, %v3877, 0
        %3884 = vmatpush.bf16.msra.mxu0 0
        %3885 = vmatpush.bf16.msra.mxu0 0
        %3886 = vmatpush.bf16.msra.mxu0 0
        %3887 = vmatpush.bf16.msra.mxu0 0
        %3888 = vmatpush.bf16.msra.mxu0 0
        %3889 = vmatpush.bf16.msra.mxu0 0
        %3890 = vmatpush.bf16.msra.mxu0 0
        %3891 = vmatpush.bf16.msra.mxu0 %v3882
        %3892 = vmatmul.bf16.gmra.mxu0 %v3879
        %v3893 = vpop.f32.mrf.mxu0
        %v3894 = vadd.f32 0.0, %v3893
        %v3895 = vpop.f32.mrf.mxu0
        %3896 = vdwg.mxu0
        %3898 = vrot.lane.b32.xlu0 %v3840, 112
        %v3899 = vpop.permute.xlu0 %3898
        %3900 = vrot.lane.b32.xlu0 %v3841, 112
        %v3901 = vpop.permute.xlu0 %3900
        %v3903 = vsel %vm2329, %v3899, 0
        %v3906 = vsel %vm2329, %v3901, 0
        %3908 = vmatpush.bf16.xpose.msra.mxu0 0
        %3909 = vmatpush.bf16.xpose.msra.mxu0 0
        %3910 = vmatpush.bf16.xpose.msra.mxu0 0
        %3911 = vmatpush.bf16.xpose.msra.mxu0 0
        %3912 = vmatpush.bf16.xpose.msra.mxu0 0
        %3913 = vmatpush.bf16.xpose.msra.mxu0 0
        %3914 = vmatpush.bf16.xpose.msra.mxu0 0
        %3915 = vmatpush.bf16.xpose.msra.mxu0 %v3906
        %3916 = vmatmul.bf16.gmra.mxu0 %v3903
        %v3917 = vpop.f32.mrf.mxu0
        %v3918 = vadd.f32 0.0, %v3917
        %v3919 = vpop.f32.mrf.mxu0
        %3920 = vdwg.mxu0
        %v3921 = vmul.f32 %v3918, 0.25
        %v3922 = vadd.f32 %v3921, %v2351
        %v3923 = vsel %vm2354, %v3922, -inf
        %3924 = vmax.xlane.f32.xlu0 %v3923
        %v3925 = vpop.xlane.xlu0 %3924
        %v3926 = vsub.f32 %v3922, %v3925
        %v3927 = vmul.f32 %v3926, 1.442695
        %v3928 = vpow.pop %v3927
        %v3929 = vsel %vm2354, %v3928, 0.0
        %3930 = vadd.xlane.f32.xlu0 %v3929
        %v3931 = vpop.xlane.xlu0 %3930
        %v3932 = vrcp.pop %v3931
        %v3933 = vmul.f32 %v3928, %v3932
        %v3934 = vpack.c.bf16 %v3933, %v3933
        %3935 = vrot.lane.b32.xlu0 %v3841, 80
        %v3936 = vpop.permute.xlu0 %3935
        %v3938 = vsel %vm2354, %v3934, 0
        %v3941 = vsel %vm2373, %v3936, 0
        %3943 = vmatpush.bf16.msra.mxu0 0
        %3944 = vmatpush.bf16.msra.mxu0 0
        %3945 = vmatpush.bf16.msra.mxu0 0
        %3946 = vmatpush.bf16.msra.mxu0 0
        %3947 = vmatpush.bf16.msra.mxu0 0
        %3948 = vmatpush.bf16.msra.mxu0 0
        %3949 = vmatpush.bf16.msra.mxu0 0
        %3950 = vmatpush.bf16.msra.mxu0 %v3941
        %3951 = vmatmul.bf16.gmra.mxu0 %v3938
        %v3952 = vpop.f32.mrf.mxu0
        %v3953 = vadd.f32 0.0, %v3952
        %v3954 = vpop.f32.mrf.mxu0
        %3955 = vdwg.mxu0
        %3957 = vrot.lane.b32.xlu0 %v3953, 16
        %v3958 = vpop.permute.xlu0 %3957
        %v3960 = vsel %vm2329, %v3894, %v3958
        %v3961 = vpack.c.bf16 %v3960, %v3960
        %v3963 = vperm.slane %v3773, 0
        %v3969 = vunpack.c.l.b16 %v3769
        %v3970 = vunpack.c.l.b16 %v3770
        %v3971 = vunpack.c.l.b16 %v3771
        %v3972 = vunpack.c.l.b16 %v3772
        %v3973 = vpack.c.b16 %v3970, %v3969
        %v3974 = vpack.c.b16 %v3972, %v3971
        %v3978 = vsel %vm2282, %v3961, 0
        %3980 = vmatpush.bf16.msra.mxu0 0
        %3981 = vmatpush.bf16.msra.mxu0 0
        %3982 = vmatpush.bf16.msra.mxu0 0
        %3983 = vmatpush.bf16.msra.mxu0 0
        %3984 = vmatpush.bf16.msra.mxu0 0
        %3985 = vmatpush.bf16.msra.mxu0 0
        %3986 = vmatpush.bf16.msra.mxu0 %v3974
        %3987 = vmatpush.bf16.msra.mxu0 %v3973
        %3988 = vmatmul.bf16.gmra.mxu0 %v3978
        %v3989 = vpop.f32.mrf.mxu0
        %v3990 = vadd.f32 %v3963, %v3989
        %v3991 = vpop.f32.mrf.mxu0
        %3992 = vdwg.mxu0
        %v3993 = vadd.f32 %v3756, %v3990
        %v3994 = vsel %vm2282, %v3993, 0.0
        %3995 = vadd.xlane.f32.xlu0 %v3994
        %v3996 = vpop.xlane.xlu0 %3995
        %v3997 = vmul.f32 %v3996, %v2496
        %v3998 = vsub.f32 %v3993, %v3997
        %v3999 = vmul.f32 %v3998, %v3998
        %v4000 = vsel %vm2282, %v3999, 0.0
        %4001 = vadd.xlane.f32.xlu0 %v4000
        %v4002 = vpop.xlane.xlu0 %4001
        %v4003 = vmul.f32 %v4002, %v2496
        %v4004 = vadd.f32 %v4003, 1e-05
        %v4005 = vrsqrt.pop %v4004
        %v4006 = vmul.f32 %v4005, %v4004
        %v4007 = vmul.f32 %v4006, %v4005
        %v4008 = vmul.f32 0.5, %v4007
        %v4009 = vsub.f32 1.5, %v4008
        %v4010 = vmul.f32 %v4005, %v4009
        %vm4011 = vweird.f32 %v4004
        %vm4012 = vweird.f32 %v4005
        %vm4013 = vmor %vm4011, %vm4012
        %v4014 = vsel %vm4013, %v4005, %v4010
        %v4015 = vmul.f32 %v3998, %v4014
        %v4017 = vperm.slane %v3774, 0
        %v4019 = vmul.f32 %v4015, %v4017
        %v4021 = vperm.slane %v3775, 0
        %v4023 = vadd.f32 %v4019, %v4021
        %4024 = vst.msk [vmem:[%s2245] sm:$0xff] %vm2354, %v3873
        %4025 = vst.msk [vmem:[%s2245 + $0x8] sm:$0xff] %vm2354, %v3933
        %v4026 = vld [vmem:[%s87] sm:$0xf]
        %v4027 = vld [vmem:[%s87 + $0x4] sm:$0xf]
        %v4028 = vld [vmem:[%s87 + $0x8] sm:$0xf]
        %v4029 = vld [vmem:[%s87 + $0xc] sm:$0xf]
        %v4030 = vld [vmem:[%s87 + $0x10] sm:$0xf]
        %v4031 = vld [vmem:[%s87 + $0x14] sm:$0xf]
        %v4032 = vld [vmem:[%s87 + $0x18] sm:$0xf]
        %v4033 = vld [vmem:[%s87 + $0x1c] sm:$0xf]
        %v4034 = vld [vmem:[%s87 + $0x20] sm:$0xf]
        %v4035 = vld [vmem:[%s87 + $0x24] sm:$0xf]
        %v4036 = vld [vmem:[%s87 + $0x28] sm:$0xf]
        %v4037 = vld [vmem:[%s87 + $0x2c] sm:$0xf]
        %v4038 = vld [vmem:[%s89] sm:$0x1]
        %v4039 = vld [vmem:[%s91] sm:$0xf]
        %v4040 = vld [vmem:[%s91 + $0x4] sm:$0xf]
        %v4041 = vld [vmem:[%s91 + $0x8] sm:$0xf]
        %v4042 = vld [vmem:[%s91 + $0xc] sm:$0xf]
        %v4043 = vld [vmem:[%s91 + $0x10] sm:$0xf]
        %v4044 = vld [vmem:[%s91 + $0x14] sm:$0xf]
        %v4045 = vld [vmem:[%s91 + $0x18] sm:$0xf]
        %v4046 = vld [vmem:[%s91 + $0x1c] sm:$0xf]
        %v4047 = vld [vmem:[%s91 + $0x20] sm:$0xf]
        %v4048 = vld [vmem:[%s91 + $0x24] sm:$0xf]
        %v4049 = vld [vmem:[%s91 + $0x28] sm:$0xf]
        %v4050 = vld [vmem:[%s91 + $0x2c] sm:$0xf]
        %v4051 = vld [vmem:[%s91 + $0x30] sm:$0xf]
        %v4052 = vld [vmem:[%s91 + $0x34] sm:$0xf]
        %v4053 = vld [vmem:[%s91 + $0x38] sm:$0xf]
        %v4054 = vld [vmem:[%s91 + $0x3c] sm:$0xf]
        %v4055 = vld [vmem:[%s91 + $0x40] sm:$0xf]
        %v4056 = vld [vmem:[%s91 + $0x44] sm:$0xf]
        %v4057 = vld [vmem:[%s91 + $0x48] sm:$0xf]
        %v4058 = vld [vmem:[%s91 + $0x4c] sm:$0xf]
        %v4059 = vld [vmem:[%s91 + $0x50] sm:$0xf]
        %v4060 = vld [vmem:[%s91 + $0x54] sm:$0xf]
        %v4061 = vld [vmem:[%s91 + $0x58] sm:$0xf]
        %v4062 = vld [vmem:[%s91 + $0x5c] sm:$0xf]
        %v4063 = vld [vmem:[%s93] sm:$0x1]
        %v4064 = vld [vmem:[%s95] sm:$0x1]
        %v4065 = vld [vmem:[%s97] sm:$0x1]
        %v4067 = vrot.slane %v4023, 7
        %v4069 = vsel %vm2569, 0.0, %v4067
        %v4070 = vsel %vm2569, %v4067, 0.0
        %v4073 = vrot.slane %v4069, 1
        %v4074 = vrot.slane %v4070, 1
        %v4075 = vsel %vm2574, %v4073, %v4074
        %4076 = vrot.lane.b32.xlu0 %v4075, 32
        %v4077 = vpop.permute.xlu0 %4076
        %v4079 = vrot.slane %v4069, 2
        %v4080 = vrot.slane %v4070, 2
        %v4081 = vsel %vm2581, %v4079, %v4080
        %4082 = vrot.lane.b32.xlu0 %v4081, 64
        %v4083 = vpop.permute.xlu0 %4082
        %v4085 = vsel %vm2282, %v4069, %v4077
        %v4086 = vsel %vm2589, %v4085, %v4083
        %v4087 = vpack.c.bf16 %v4086, %v4086
        %v4089 = vperm.slane %v4038, 0
        %v4103 = vunpack.c.l.b16 %v4026
        %v4104 = vunpack.c.l.b16 %v4027
        %v4105 = vunpack.c.l.b16 %v4028
        %v4106 = vunpack.c.l.b16 %v4029
        %v4107 = vunpack.c.l.b16 %v4030
        %v4108 = vunpack.c.l.b16 %v4031
        %v4109 = vunpack.c.l.b16 %v4032
        %v4110 = vunpack.c.l.b16 %v4033
        %v4111 = vunpack.c.l.b16 %v4034
        %v4112 = vunpack.c.l.b16 %v4035
        %v4113 = vunpack.c.l.b16 %v4036
        %v4114 = vunpack.c.l.b16 %v4037
        %v4115 = vpack.c.b16 %v4104, %v4103
        %v4116 = vpack.c.b16 %v4106, %v4105
        %v4117 = vpack.c.b16 %v4108, %v4107
        %v4118 = vpack.c.b16 %v4110, %v4109
        %v4119 = vpack.c.b16 %v4112, %v4111
        %v4120 = vpack.c.b16 %v4114, %v4113
        %v4128 = vsel %vm2631, %v4087, 0
        %4130 = vmatpush.bf16.msra.mxu0 0
        %4131 = vmatpush.bf16.msra.mxu0 0
        %4132 = vmatpush.bf16.msra.mxu0 %v4120
        %4133 = vmatpush.bf16.msra.mxu0 %v4119
        %4134 = vmatpush.bf16.msra.mxu0 %v4118
        %4135 = vmatpush.bf16.msra.mxu0 %v4117
        %4136 = vmatpush.bf16.msra.mxu0 %v4116
        %4137 = vmatpush.bf16.msra.mxu0 %v4115
        %4138 = vmatmul.bf16.gmra.mxu0 %v4128
        %v4139 = vpop.f32.mrf.mxu0
        %v4140 = vadd.f32 %v4089, %v4139
        %v4141 = vpop.f32.mrf.mxu0
        %4142 = vdwg.mxu0
        %v4143 = vmax.f32 %v4140, 0.0
        %v4145 = vrot.slane %v4143, 7
        %v4147 = vsel %vm2569, 0.0, %v4145
        %v4148 = vsel %vm2569, %v4145, 0.0
        %v4151 = vrot.slane %v4147, 1
        %v4152 = vrot.slane %v4148, 1
        %v4153 = vsel %vm2574, %v4151, %v4152
        %4154 = vrot.lane.b32.xlu0 %v4153, 64
        %v4155 = vpop.permute.xlu0 %4154
        %v4157 = vrot.slane %v4147, 2
        %v4158 = vrot.slane %v4148, 2
        %v4159 = vsel %vm2581, %v4157, %v4158
        %v4161 = vsel %vm2589, %v4147, %v4155
        %v4162 = vpack.c.bf16 %v4161, %v4161
        %v4163 = vpack.c.bf16 %v4159, %v4159
        %v4165 = vperm.slane %v4063, 0
        %v4191 = vunpack.c.l.b16 %v4039
        %v4192 = vunpack.c.l.b16 %v4040
        %v4193 = vunpack.c.l.b16 %v4041
        %v4194 = vunpack.c.l.b16 %v4042
        %v4195 = vunpack.c.l.b16 %v4043
        %v4196 = vunpack.c.l.b16 %v4044
        %v4197 = vunpack.c.l.b16 %v4045
        %v4198 = vunpack.c.l.b16 %v4046
        %v4199 = vunpack.c.l.b16 %v4047
        %v4200 = vunpack.c.l.b16 %v4048
        %v4201 = vunpack.c.l.b16 %v4049
        %v4202 = vunpack.c.l.b16 %v4050
        %v4203 = vunpack.c.l.b16 %v4051
        %v4204 = vunpack.c.l.b16 %v4052
        %v4205 = vunpack.c.l.b16 %v4053
        %v4206 = vunpack.c.l.b16 %v4054
        %v4207 = vunpack.c.l.b16 %v4055
        %v4208 = vunpack.c.l.b16 %v4056
        %v4209 = vunpack.c.l.b16 %v4057
        %v4210 = vunpack.c.l.b16 %v4058
        %v4211 = vunpack.c.l.b16 %v4059
        %v4212 = vunpack.c.l.b16 %v4060
        %v4213 = vunpack.c.l.b16 %v4061
        %v4214 = vunpack.c.l.b16 %v4062
        %v4215 = vpack.c.b16 %v4192, %v4191
        %v4216 = vpack.c.b16 %v4194, %v4193
        %v4217 = vpack.c.b16 %v4196, %v4195
        %v4218 = vpack.c.b16 %v4198, %v4197
        %v4219 = vpack.c.b16 %v4200, %v4199
        %v4220 = vpack.c.b16 %v4202, %v4201
        %v4221 = vpack.c.b16 %v4204, %v4203
        %v4222 = vpack.c.b16 %v4206, %v4205
        %v4223 = vpack.c.b16 %v4208, %v4207
        %v4224 = vpack.c.b16 %v4210, %v4209
        %v4225 = vpack.c.b16 %v4212, %v4211
        %v4226 = vpack.c.b16 %v4214, %v4213
        %v4240 = vsel %vm2589, %v4163, 0
        %4242 = vmatpush.bf16.msra.mxu0 %v4222
        %4243 = vmatpush.bf16.msra.mxu0 %v4221
        %4244 = vmatpush.bf16.msra.mxu0 %v4220
        %4245 = vmatpush.bf16.msra.mxu0 %v4219
        %4246 = vmatpush.bf16.msra.mxu0 %v4218
        %4247 = vmatpush.bf16.msra.mxu0 %v4217
        %4248 = vmatpush.bf16.msra.mxu0 %v4216
        %4249 = vmatpush.bf16.msra.mxu0 %v4215
        %4250 = vmatmul.bf16.gmra.mxu0 %v4162
        %v4251 = vpop.f32.mrf.mxu0
        %v4252 = vadd.f32 %v4165, %v4251
        %v4253 = vpop.f32.mrf.mxu0
        %4254 = vdwg.mxu0
        %4255 = vmatpush.bf16.msra.mxu0 0
        %4256 = vmatpush.bf16.msra.mxu0 0
        %4257 = vmatpush.bf16.msra.mxu0 0
        %4258 = vmatpush.bf16.msra.mxu0 0
        %4259 = vmatpush.bf16.msra.mxu0 %v4226
        %4260 = vmatpush.bf16.msra.mxu0 %v4225
        %4261 = vmatpush.bf16.msra.mxu0 %v4224
        %4262 = vmatpush.bf16.msra.mxu0 %v4223
        %4263 = vmatmul.bf16.gmra.mxu0 %v4240
        %v4264 = vpop.f32.mrf.mxu0
        %v4265 = vadd.f32 %v4252, %v4264
        %v4266 = vpop.f32.mrf.mxu0
        %4267 = vdwg.mxu0
        %v4268 = vadd.f32 %v4023, %v4265
        %v4269 = vsel %vm2282, %v4268, 0.0
        %4270 = vadd.xlane.f32.xlu0 %v4269
        %v4271 = vpop.xlane.xlu0 %4270
        %v4272 = vmul.f32 %v4271, %v2496
        %v4273 = vsub.f32 %v4268, %v4272
        %v4274 = vmul.f32 %v4273, %v4273
        %v4275 = vsel %vm2282, %v4274, 0.0
        %4276 = vadd.xlane.f32.xlu0 %v4275
        %v4277 = vpop.xlane.xlu0 %4276
        %v4278 = vmul.f32 %v4277, %v2496
        %v4279 = vadd.f32 %v4278, 1e-05
        %v4280 = vrsqrt.pop %v4279
        %v4281 = vmul.f32 %v4280, %v4279
        %v4282 = vmul.f32 %v4281, %v4280
        %v4283 = vmul.f32 0.5, %v4282
        %v4284 = vsub.f32 1.5, %v4283
        %v4285 = vmul.f32 %v4280, %v4284
        %vm4286 = vweird.f32 %v4279
        %vm4287 = vweird.f32 %v4280
        %vm4288 = vmor %vm4286, %vm4287
        %v4289 = vsel %vm4288, %v4280, %v4285
        %v4290 = vmul.f32 %v4273, %v4289
        %v4292 = vperm.slane %v4064, 0
        %v4294 = vmul.f32 %v4290, %v4292
        %v4296 = vperm.slane %v4065, 0
        %v4298 = vadd.f32 %v4294, %v4296
        %s4299 = scalar_lea.vmem %s55, 16
        %v4300 = vld [vmem:[%s4299] sm:$0xf]
        %v4301 = vld [vmem:[%s4299 + $0x4] sm:$0xf]
        %v4302 = vld [vmem:[%s4299 + $0x8] sm:$0xf]
        %v4303 = vld [vmem:[%s4299 + $0xc] sm:$0xf]
        %s4304 = scalar_lea.vmem %s57, 1
        %v4305 = vld [vmem:[%s4304] sm:$0x1]
        %s4306 = scalar_lea.vmem %s59, 16
        %v4307 = vld [vmem:[%s4306] sm:$0xf]
        %v4308 = vld [vmem:[%s4306 + $0x4] sm:$0xf]
        %v4309 = vld [vmem:[%s4306 + $0x8] sm:$0xf]
        %v4310 = vld [vmem:[%s4306 + $0xc] sm:$0xf]
        %s4311 = scalar_lea.vmem %s61, 1
        %v4312 = vld [vmem:[%s4311] sm:$0x1]
        %s4313 = scalar_lea.vmem %s63, 16
        %v4314 = vld [vmem:[%s4313] sm:$0xf]
        %v4315 = vld [vmem:[%s4313 + $0x4] sm:$0xf]
        %v4316 = vld [vmem:[%s4313 + $0x8] sm:$0xf]
        %v4317 = vld [vmem:[%s4313 + $0xc] sm:$0xf]
        %s4318 = scalar_lea.vmem %s65, 1
        %v4319 = vld [vmem:[%s4318] sm:$0x1]
        %s4320 = scalar_lea.vmem %s67, 1
        %v4321 = vld [vmem:[%s4320] sm:$0x1]
        %s4322 = scalar_lea.vmem %s69, 1
        %v4323 = vld [vmem:[%s4322] sm:$0x1]
        %v4324 = vpack.c.bf16 %v4298, %v4298
        %v4326 = vperm.slane %v4305, 0
        %v4332 = vunpack.c.l.b16 %v4300
        %v4333 = vunpack.c.l.b16 %v4301
        %v4334 = vunpack.c.l.b16 %v4302
        %v4335 = vunpack.c.l.b16 %v4303
        %v4336 = vpack.c.b16 %v4333, %v4332
        %v4337 = vpack.c.b16 %v4335, %v4334
        %v4341 = vsel %vm2282, %v4324, 0
        %4343 = vmatpush.bf16.msra.mxu0 0
        %4344 = vmatpush.bf16.msra.mxu0 0
        %4345 = vmatpush.bf16.msra.mxu0 0
        %4346 = vmatpush.bf16.msra.mxu0 0
        %4347 = vmatpush.bf16.msra.mxu0 0
        %4348 = vmatpush.bf16.msra.mxu0 0
        %4349 = vmatpush.bf16.msra.mxu0 %v4337
        %4350 = vmatpush.bf16.msra.mxu0 %v4336
        %4351 = vmatmul.bf16.gmra.mxu0 %v4341
        %v4352 = vpop.f32.mrf.mxu0
        %v4353 = vadd.f32 %v4326, %v4352
        %v4354 = vpop.f32.mrf.mxu0
        %4355 = vdwg.mxu0
        %v4357 = vperm.slane %v4312, 0
        %v4363 = vunpack.c.l.b16 %v4307
        %v4364 = vunpack.c.l.b16 %v4308
        %v4365 = vunpack.c.l.b16 %v4309
        %v4366 = vunpack.c.l.b16 %v4310
        %v4367 = vpack.c.b16 %v4364, %v4363
        %v4368 = vpack.c.b16 %v4366, %v4365
        %4371 = vmatpush.bf16.msra.mxu0 0
        %4372 = vmatpush.bf16.msra.mxu0 0
        %4373 = vmatpush.bf16.msra.mxu0 0
        %4374 = vmatpush.bf16.msra.mxu0 0
        %4375 = vmatpush.bf16.msra.mxu0 0
        %4376 = vmatpush.bf16.msra.mxu0 0
        %4377 = vmatpush.bf16.msra.mxu0 %v4368
        %4378 = vmatpush.bf16.msra.mxu0 %v4367
        %4379 = vmatmul.bf16.gmra.mxu0 %v4341
        %v4380 = vpop.f32.mrf.mxu0
        %v4381 = vadd.f32 %v4357, %v4380
        %v4382 = vpop.f32.mrf.mxu0
        %4383 = vdwg.mxu0
        %v4384 = vpack.c.bf16 %v4353, %v4353
        %v4385 = vpack.c.bf16 %v4381, %v4381
        %v4387 = vsel %vm2329, %v4384, 0
        %v4390 = vsel %vm2329, %v4385, 0
        %4392 = vmatpush.bf16.xpose.msra.mxu0 0
        %4393 = vmatpush.bf16.xpose.msra.mxu0 0
        %4394 = vmatpush.bf16.xpose.msra.mxu0 0
        %4395 = vmatpush.bf16.xpose.msra.mxu0 0
        %4396 = vmatpush.bf16.xpose.msra.mxu0 0
        %4397 = vmatpush.bf16.xpose.msra.mxu0 0
        %4398 = vmatpush.bf16.xpose.msra.mxu0 0
        %4399 = vmatpush.bf16.xpose.msra.mxu0 %v4390
        %4400 = vmatmul.bf16.gmra.mxu0 %v4387
        %v4401 = vpop.f32.mrf.mxu0
        %v4402 = vadd.f32 0.0, %v4401
        %v4403 = vpop.f32.mrf.mxu0
        %4404 = vdwg.mxu0
        %v4405 = vmul.f32 %v4402, 0.25
        %v4406 = vadd.f32 %v4405, %v3495
        %v4407 = vsel %vm2354, %v4406, -inf
        %4408 = vmax.xlane.f32.xlu0 %v4407
        %v4409 = vpop.xlane.xlu0 %4408
        %v4410 = vsub.f32 %v4406, %v4409
        %v4411 = vmul.f32 %v4410, 1.442695
        %v4412 = vpow.pop %v4411
        %v4413 = vsel %vm2354, %v4412, 0.0
        %4414 = vadd.xlane.f32.xlu0 %v4413
        %v4415 = vpop.xlane.xlu0 %4414
        %v4416 = vrcp.pop %v4415
        %v4417 = vmul.f32 %v4412, %v4416
        %v4418 = vpack.c.bf16 %v4417, %v4417
        %4420 = vrot.lane.b32.xlu0 %v4385, 96
        %v4421 = vpop.permute.xlu0 %4420
        %v4423 = vsel %vm2354, %v4418, 0
        %v4426 = vsel %vm2373, %v4421, 0
        %4428 = vmatpush.bf16.msra.mxu0 0
        %4429 = vmatpush.bf16.msra.mxu0 0
        %4430 = vmatpush.bf16.msra.mxu0 0
        %4431 = vmatpush.bf16.msra.mxu0 0
        %4432 = vmatpush.bf16.msra.mxu0 0
        %4433 = vmatpush.bf16.msra.mxu0 0
        %4434 = vmatpush.bf16.msra.mxu0 0
        %4435 = vmatpush.bf16.msra.mxu0 %v4426
        %4436 = vmatmul.bf16.gmra.mxu0 %v4423
        %v4437 = vpop.f32.mrf.mxu0
        %v4438 = vadd.f32 0.0, %v4437
        %v4439 = vpop.f32.mrf.mxu0
        %4440 = vdwg.mxu0
        %4442 = vrot.lane.b32.xlu0 %v4384, 112
        %v4443 = vpop.permute.xlu0 %4442
        %4444 = vrot.lane.b32.xlu0 %v4385, 112
        %v4445 = vpop.permute.xlu0 %4444
        %v4447 = vsel %vm2329, %v4443, 0
        %v4450 = vsel %vm2329, %v4445, 0
        %4452 = vmatpush.bf16.xpose.msra.mxu0 0
        %4453 = vmatpush.bf16.xpose.msra.mxu0 0
        %4454 = vmatpush.bf16.xpose.msra.mxu0 0
        %4455 = vmatpush.bf16.xpose.msra.mxu0 0
        %4456 = vmatpush.bf16.xpose.msra.mxu0 0
        %4457 = vmatpush.bf16.xpose.msra.mxu0 0
        %4458 = vmatpush.bf16.xpose.msra.mxu0 0
        %4459 = vmatpush.bf16.xpose.msra.mxu0 %v4450
        %4460 = vmatmul.bf16.gmra.mxu0 %v4447
        %v4461 = vpop.f32.mrf.mxu0
        %v4462 = vadd.f32 0.0, %v4461
        %v4463 = vpop.f32.mrf.mxu0
        %4464 = vdwg.mxu0
        %v4465 = vmul.f32 %v4462, 0.25
        %v4466 = vadd.f32 %v4465, %v3495
        %v4467 = vsel %vm2354, %v4466, -inf
        %4468 = vmax.xlane.f32.xlu0 %v4467
        %v4469 = vpop.xlane.xlu0 %4468
        %v4470 = vsub.f32 %v4466, %v4469
        %v4471 = vmul.f32 %v4470, 1.442695
        %v4472 = vpow.pop %v4471
        %v4473 = vsel %vm2354, %v4472, 0.0
        %4474 = vadd.xlane.f32.xlu0 %v4473
        %v4475 = vpop.xlane.xlu0 %4474
        %v4476 = vrcp.pop %v4475
        %v4477 = vmul.f32 %v4472, %v4476
        %v4478 = vpack.c.bf16 %v4477, %v4477
        %4479 = vrot.lane.b32.xlu0 %v4385, 80
        %v4480 = vpop.permute.xlu0 %4479
        %v4482 = vsel %vm2354, %v4478, 0
        %v4485 = vsel %vm2373, %v4480, 0
        %4487 = vmatpush.bf16.msra.mxu0 0
        %4488 = vmatpush.bf16.msra.mxu0 0
        %4489 = vmatpush.bf16.msra.mxu0 0
        %4490 = vmatpush.bf16.msra.mxu0 0
        %4491 = vmatpush.bf16.msra.mxu0 0
        %4492 = vmatpush.bf16.msra.mxu0 0
        %4493 = vmatpush.bf16.msra.mxu0 0
        %4494 = vmatpush.bf16.msra.mxu0 %v4485
        %4495 = vmatmul.bf16.gmra.mxu0 %v4482
        %v4496 = vpop.f32.mrf.mxu0
        %v4497 = vadd.f32 0.0, %v4496
        %v4498 = vpop.f32.mrf.mxu0
        %4499 = vdwg.mxu0
        %4501 = vrot.lane.b32.xlu0 %v4497, 16
        %v4502 = vpop.permute.xlu0 %4501
        %v4504 = vsel %vm2329, %v4438, %v4502
        %v4505 = vpack.c.bf16 %v4504, %v4504
        %v4507 = vperm.slane %v4319, 0
        %v4513 = vunpack.c.l.b16 %v4314
        %v4514 = vunpack.c.l.b16 %v4315
        %v4515 = vunpack.c.l.b16 %v4316
        %v4516 = vunpack.c.l.b16 %v4317
        %v4517 = vpack.c.b16 %v4514, %v4513
        %v4518 = vpack.c.b16 %v4516, %v4515
        %v4522 = vsel %vm2282, %v4505, 0
        %4524 = vmatpush.bf16.msra.mxu0 0
        %4525 = vmatpush.bf16.msra.mxu0 0
        %4526 = vmatpush.bf16.msra.mxu0 0
        %4527 = vmatpush.bf16.msra.mxu0 0
        %4528 = vmatpush.bf16.msra.mxu0 0
        %4529 = vmatpush.bf16.msra.mxu0 0
        %4530 = vmatpush.bf16.msra.mxu0 %v4518
        %4531 = vmatpush.bf16.msra.mxu0 %v4517
        %4532 = vmatmul.bf16.gmra.mxu0 %v4522
        %v4533 = vpop.f32.mrf.mxu0
        %v4534 = vadd.f32 %v4507, %v4533
        %v4535 = vpop.f32.mrf.mxu0
        %4536 = vdwg.mxu0
        %v4537 = vadd.f32 %v4298, %v4534
        %v4538 = vsel %vm2282, %v4537, 0.0
        %4539 = vadd.xlane.f32.xlu0 %v4538
        %v4540 = vpop.xlane.xlu0 %4539
        %v4541 = vmul.f32 %v4540, %v2496
        %v4542 = vsub.f32 %v4537, %v4541
        %v4543 = vmul.f32 %v4542, %v4542
        %v4544 = vsel %vm2282, %v4543, 0.0
        %4545 = vadd.xlane.f32.xlu0 %v4544
        %v4546 = vpop.xlane.xlu0 %4545
        %v4547 = vmul.f32 %v4546, %v2496
        %v4548 = vadd.f32 %v4547, 1e-05
        %v4549 = vrsqrt.pop %v4548
        %v4550 = vmul.f32 %v4549, %v4548
        %v4551 = vmul.f32 %v4550, %v4549
        %v4552 = vmul.f32 0.5, %v4551
        %v4553 = vsub.f32 1.5, %v4552
        %v4554 = vmul.f32 %v4549, %v4553
        %vm4555 = vweird.f32 %v4548
        %vm4556 = vweird.f32 %v4549
        %vm4557 = vmor %vm4555, %vm4556
        %v4558 = vsel %vm4557, %v4549, %v4554
        %v4559 = vmul.f32 %v4542, %v4558
        %v4561 = vperm.slane %v4321, 0
        %v4563 = vmul.f32 %v4559, %v4561
        %v4565 = vperm.slane %v4323, 0
        %v4567 = vadd.f32 %v4563, %v4565
        %4568 = vst.msk [vmem:[%s2240 + $0x10] sm:$0xff] %vm2354, %v4417
        %4569 = vst.msk [vmem:[%s2240 + $0x18] sm:$0xff] %vm2354, %v4477
        %s4570 = scalar_lea.vmem %s71, 16
        %v4571 = vld [vmem:[%s4570] sm:$0xf]
        %v4572 = vld [vmem:[%s4570 + $0x4] sm:$0xf]
        %v4573 = vld [vmem:[%s4570 + $0x8] sm:$0xf]
        %v4574 = vld [vmem:[%s4570 + $0xc] sm:$0xf]
        %s4575 = scalar_lea.vmem %s73, 1
        %v4576 = vld [vmem:[%s4575] sm:$0x1]
        %s4577 = scalar_lea.vmem %s75, 16
        %v4578 = vld [vmem:[%s4577] sm:$0xf]
        %v4579 = vld [vmem:[%s4577 + $0x4] sm:$0xf]
        %v4580 = vld [vmem:[%s4577 + $0x8] sm:$0xf]
        %v4581 = vld [vmem:[%s4577 + $0xc] sm:$0xf]
        %s4582 = scalar_lea.vmem %s77, 1
        %v4583 = vld [vmem:[%s4582] sm:$0x1]
        %s4584 = scalar_lea.vmem %s79, 16
        %v4585 = vld [vmem:[%s4584] sm:$0xf]
        %v4586 = vld [vmem:[%s4584 + $0x4] sm:$0xf]
        %v4587 = vld [vmem:[%s4584 + $0x8] sm:$0xf]
        %v4588 = vld [vmem:[%s4584 + $0xc] sm:$0xf]
        %s4589 = scalar_lea.vmem %s81, 1
        %v4590 = vld [vmem:[%s4589] sm:$0x1]
        %s4591 = scalar_lea.vmem %s83, 1
        %v4592 = vld [vmem:[%s4591] sm:$0x1]
        %s4593 = scalar_lea.vmem %s85, 1
        %v4594 = vld [vmem:[%s4593] sm:$0x1]
        %v4595 = vpack.c.bf16 %v4567, %v4567
        %v4597 = vperm.slane %v4576, 0
        %v4603 = vunpack.c.l.b16 %v4571
        %v4604 = vunpack.c.l.b16 %v4572
        %v4605 = vunpack.c.l.b16 %v4573
        %v4606 = vunpack.c.l.b16 %v4574
        %v4607 = vpack.c.b16 %v4604, %v4603
        %v4608 = vpack.c.b16 %v4606, %v4605
        %v4612 = vsel %vm2282, %v4595, 0
        %4614 = vmatpush.bf16.msra.mxu0 0
        %4615 = vmatpush.bf16.msra.mxu0 0
        %4616 = vmatpush.bf16.msra.mxu0 0
        %4617 = vmatpush.bf16.msra.mxu0 0
        %4618 = vmatpush.bf16.msra.mxu0 0
        %4619 = vmatpush.bf16.msra.mxu0 0
        %4620 = vmatpush.bf16.msra.mxu0 %v4608
        %4621 = vmatpush.bf16.msra.mxu0 %v4607
        %4622 = vmatmul.bf16.gmra.mxu0 %v4612
        %v4623 = vpop.f32.mrf.mxu0
        %v4624 = vadd.f32 %v4597, %v4623
        %v4625 = vpop.f32.mrf.mxu0
        %4626 = vdwg.mxu0
        %v4628 = vperm.slane %v4583, 0
        %v4634 = vunpack.c.l.b16 %v4578
        %v4635 = vunpack.c.l.b16 %v4579
        %v4636 = vunpack.c.l.b16 %v4580
        %v4637 = vunpack.c.l.b16 %v4581
        %v4638 = vpack.c.b16 %v4635, %v4634
        %v4639 = vpack.c.b16 %v4637, %v4636
        %4642 = vmatpush.bf16.msra.mxu0 0
        %4643 = vmatpush.bf16.msra.mxu0 0
        %4644 = vmatpush.bf16.msra.mxu0 0
        %4645 = vmatpush.bf16.msra.mxu0 0
        %4646 = vmatpush.bf16.msra.mxu0 0
        %4647 = vmatpush.bf16.msra.mxu0 0
        %4648 = vmatpush.bf16.msra.mxu0 %v4639
        %4649 = vmatpush.bf16.msra.mxu0 %v4638
        %4650 = vmatmul.bf16.gmra.mxu0 %v3825
        %v4651 = vpop.f32.mrf.mxu0
        %v4652 = vadd.f32 %v4628, %v4651
        %v4653 = vpop.f32.mrf.mxu0
        %4654 = vdwg.mxu0
        %v4655 = vpack.c.bf16 %v4624, %v4624
        %v4656 = vpack.c.bf16 %v4652, %v4652
        %v4658 = vsel %vm2329, %v4655, 0
        %v4661 = vsel %vm2329, %v4656, 0
        %4663 = vmatpush.bf16.xpose.msra.mxu0 0
        %4664 = vmatpush.bf16.xpose.msra.mxu0 0
        %4665 = vmatpush.bf16.xpose.msra.mxu0 0
        %4666 = vmatpush.bf16.xpose.msra.mxu0 0
        %4667 = vmatpush.bf16.xpose.msra.mxu0 0
        %4668 = vmatpush.bf16.xpose.msra.mxu0 0
        %4669 = vmatpush.bf16.xpose.msra.mxu0 0
        %4670 = vmatpush.bf16.xpose.msra.mxu0 %v4661
        %4671 = vmatmul.bf16.gmra.mxu0 %v4658
        %v4672 = vpop.f32.mrf.mxu0
        %v4673 = vadd.f32 0.0, %v4672
        %v4674 = vpop.f32.mrf.mxu0
        %4675 = vdwg.mxu0
        %v4676 = vmul.f32 %v4673, 0.25
        %v4677 = vadd.f32 %v4676, %v2351
        %v4678 = vsel %vm2354, %v4677, -inf
        %4679 = vmax.xlane.f32.xlu0 %v4678
        %v4680 = vpop.xlane.xlu0 %4679
        %v4681 = vsub.f32 %v4677, %v4680
        %v4682 = vmul.f32 %v4681, 1.442695
        %v4683 = vpow.pop %v4682
        %v4684 = vsel %vm2354, %v4683, 0.0
        %4685 = vadd.xlane.f32.xlu0 %v4684
        %v4686 = vpop.xlane.xlu0 %4685
        %v4687 = vrcp.pop %v4686
        %v4688 = vmul.f32 %v4683, %v4687
        %v4689 = vpack.c.bf16 %v4688, %v4688
        %4691 = vrot.lane.b32.xlu0 %v4656, 96
        %v4692 = vpop.permute.xlu0 %4691
        %v4694 = vsel %vm2354, %v4689, 0
        %v4697 = vsel %vm2373, %v4692, 0
        %4699 = vmatpush.bf16.msra.mxu0 0
        %4700 = vmatpush.bf16.msra.mxu0 0
        %4701 = vmatpush.bf16.msra.mxu0 0
        %4702 = vmatpush.bf16.msra.mxu0 0
        %4703 = vmatpush.bf16.msra.mxu0 0
        %4704 = vmatpush.bf16.msra.mxu0 0
        %4705 = vmatpush.bf16.msra.mxu0 0
        %4706 = vmatpush.bf16.msra.mxu0 %v4697
        %4707 = vmatmul.bf16.gmra.mxu0 %v4694
        %v4708 = vpop.f32.mrf.mxu0
        %v4709 = vadd.f32 0.0, %v4708
        %v4710 = vpop.f32.mrf.mxu0
        %4711 = vdwg.mxu0
        %4713 = vrot.lane.b32.xlu0 %v4655, 112
        %v4714 = vpop.permute.xlu0 %4713
        %4715 = vrot.lane.b32.xlu0 %v4656, 112
        %v4716 = vpop.permute.xlu0 %4715
        %v4718 = vsel %vm2329, %v4714, 0
        %v4721 = vsel %vm2329, %v4716, 0
        %4723 = vmatpush.bf16.xpose.msra.mxu0 0
        %4724 = vmatpush.bf16.xpose.msra.mxu0 0
        %4725 = vmatpush.bf16.xpose.msra.mxu0 0
        %4726 = vmatpush.bf16.xpose.msra.mxu0 0
        %4727 = vmatpush.bf16.xpose.msra.mxu0 0
        %4728 = vmatpush.bf16.xpose.msra.mxu0 0
        %4729 = vmatpush.bf16.xpose.msra.mxu0 0
        %4730 = vmatpush.bf16.xpose.msra.mxu0 %v4721
        %4731 = vmatmul.bf16.gmra.mxu0 %v4718
        %v4732 = vpop.f32.mrf.mxu0
        %v4733 = vadd.f32 0.0, %v4732
        %v4734 = vpop.f32.mrf.mxu0
        %4735 = vdwg.mxu0
        %v4736 = vmul.f32 %v4733, 0.25
        %v4737 = vadd.f32 %v4736, %v2351
        %v4738 = vsel %vm2354, %v4737, -inf
        %4739 = vmax.xlane.f32.xlu0 %v4738
        %v4740 = vpop.xlane.xlu0 %4739
        %v4741 = vsub.f32 %v4737, %v4740
        %v4742 = vmul.f32 %v4741, 1.442695
        %v4743 = vpow.pop %v4742
        %v4744 = vsel %vm2354, %v4743, 0.0
        %4745 = vadd.xlane.f32.xlu0 %v4744
        %v4746 = vpop.xlane.xlu0 %4745
        %v4747 = vrcp.pop %v4746
        %v4748 = vmul.f32 %v4743, %v4747
        %v4749 = vpack.c.bf16 %v4748, %v4748
        %4750 = vrot.lane.b32.xlu0 %v4656, 80
        %v4751 = vpop.permute.xlu0 %4750
        %v4753 = vsel %vm2354, %v4749, 0
        %v4756 = vsel %vm2373, %v4751, 0
        %4758 = vmatpush.bf16.msra.mxu0 0
        %4759 = vmatpush.bf16.msra.mxu0 0
        %4760 = vmatpush.bf16.msra.mxu0 0
        %4761 = vmatpush.bf16.msra.mxu0 0
        %4762 = vmatpush.bf16.msra.mxu0 0
        %4763 = vmatpush.bf16.msra.mxu0 0
        %4764 = vmatpush.bf16.msra.mxu0 0
        %4765 = vmatpush.bf16.msra.mxu0 %v4756
        %4766 = vmatmul.bf16.gmra.mxu0 %v4753
        %v4767 = vpop.f32.mrf.mxu0
        %v4768 = vadd.f32 0.0, %v4767
        %v4769 = vpop.f32.mrf.mxu0
        %4770 = vdwg.mxu0
        %4772 = vrot.lane.b32.xlu0 %v4768, 16
        %v4773 = vpop.permute.xlu0 %4772
        %v4775 = vsel %vm2329, %v4709, %v4773
        %v4776 = vpack.c.bf16 %v4775, %v4775
        %v4778 = vperm.slane %v4590, 0
        %v4784 = vunpack.c.l.b16 %v4585
        %v4785 = vunpack.c.l.b16 %v4586
        %v4786 = vunpack.c.l.b16 %v4587
        %v4787 = vunpack.c.l.b16 %v4588
        %v4788 = vpack.c.b16 %v4785, %v4784
        %v4789 = vpack.c.b16 %v4787, %v4786
        %v4793 = vsel %vm2282, %v4776, 0
        %4795 = vmatpush.bf16.msra.mxu0 0
        %4796 = vmatpush.bf16.msra.mxu0 0
        %4797 = vmatpush.bf16.msra.mxu0 0
        %4798 = vmatpush.bf16.msra.mxu0 0
        %4799 = vmatpush.bf16.msra.mxu0 0
        %4800 = vmatpush.bf16.msra.mxu0 0
        %4801 = vmatpush.bf16.msra.mxu0 %v4789
        %4802 = vmatpush.bf16.msra.mxu0 %v4788
        %4803 = vmatmul.bf16.gmra.mxu0 %v4793
        %v4804 = vpop.f32.mrf.mxu0
        %v4805 = vadd.f32 %v4778, %v4804
        %v4806 = vpop.f32.mrf.mxu0
        %4807 = vdwg.mxu0
        %v4808 = vadd.f32 %v4567, %v4805
        %v4809 = vsel %vm2282, %v4808, 0.0
        %4810 = vadd.xlane.f32.xlu0 %v4809
        %v4811 = vpop.xlane.xlu0 %4810
        %v4812 = vmul.f32 %v4811, %v2496
        %v4813 = vsub.f32 %v4808, %v4812
        %v4814 = vmul.f32 %v4813, %v4813
        %v4815 = vsel %vm2282, %v4814, 0.0
        %4816 = vadd.xlane.f32.xlu0 %v4815
        %v4817 = vpop.xlane.xlu0 %4816
        %v4818 = vmul.f32 %v4817, %v2496
        %v4819 = vadd.f32 %v4818, 1e-05
        %v4820 = vrsqrt.pop %v4819
        %v4821 = vmul.f32 %v4820, %v4819
        %v4822 = vmul.f32 %v4821, %v4820
        %v4823 = vmul.f32 0.5, %v4822
        %v4824 = vsub.f32 1.5, %v4823
        %v4825 = vmul.f32 %v4820, %v4824
        %vm4826 = vweird.f32 %v4819
        %vm4827 = vweird.f32 %v4820
        %vm4828 = vmor %vm4826, %vm4827
        %v4829 = vsel %vm4828, %v4820, %v4825
        %v4830 = vmul.f32 %v4813, %v4829
        %v4832 = vperm.slane %v4592, 0
        %v4834 = vmul.f32 %v4830, %v4832
        %v4836 = vperm.slane %v4594, 0
        %v4838 = vadd.f32 %v4834, %v4836
        %4839 = vst.msk [vmem:[%s2245 + $0x10] sm:$0xff] %vm2354, %v4688
        %4840 = vst.msk [vmem:[%s2245 + $0x18] sm:$0xff] %vm2354, %v4748
        %s4841 = scalar_lea.vmem %s87, 48
        %v4842 = vld [vmem:[%s4841] sm:$0xf]
        %v4843 = vld [vmem:[%s4841 + $0x4] sm:$0xf]
        %v4844 = vld [vmem:[%s4841 + $0x8] sm:$0xf]
        %v4845 = vld [vmem:[%s4841 + $0xc] sm:$0xf]
        %v4846 = vld [vmem:[%s4841 + $0x10] sm:$0xf]
        %v4847 = vld [vmem:[%s4841 + $0x14] sm:$0xf]
        %v4848 = vld [vmem:[%s4841 + $0x18] sm:$0xf]
        %v4849 = vld [vmem:[%s4841 + $0x1c] sm:$0xf]
        %v4850 = vld [vmem:[%s4841 + $0x20] sm:$0xf]
        %v4851 = vld [vmem:[%s4841 + $0x24] sm:$0xf]
        %v4852 = vld [vmem:[%s4841 + $0x28] sm:$0xf]
        %v4853 = vld [vmem:[%s4841 + $0x2c] sm:$0xf]
        %s4854 = scalar_lea.vmem %s89, 1
        %v4855 = vld [vmem:[%s4854] sm:$0x1]
        %s4856 = scalar_lea.vmem %s91, 96
        %v4857 = vld [vmem:[%s4856] sm:$0xf]
        %v4858 = vld [vmem:[%s4856 + $0x4] sm:$0xf]
        %v4859 = vld [vmem:[%s4856 + $0x8] sm:$0xf]
        %v4860 = vld [vmem:[%s4856 + $0xc] sm:$0xf]
        %v4861 = vld [vmem:[%s4856 + $0x10] sm:$0xf]
        %v4862 = vld [vmem:[%s4856 + $0x14] sm:$0xf]
        %v4863 = vld [vmem:[%s4856 + $0x18] sm:$0xf]
        %v4864 = vld [vmem:[%s4856 + $0x1c] sm:$0xf]
        %v4865 = vld [vmem:[%s4856 + $0x20] sm:$0xf]
        %v4866 = vld [vmem:[%s4856 + $0x24] sm:$0xf]
        %v4867 = vld [vmem:[%s4856 + $0x28] sm:$0xf]
        %v4868 = vld [vmem:[%s4856 + $0x2c] sm:$0xf]
        %v4869 = vld [vmem:[%s4856 + $0x30] sm:$0xf]
        %v4870 = vld [vmem:[%s4856 + $0x34] sm:$0xf]
        %v4871 = vld [vmem:[%s4856 + $0x38] sm:$0xf]
        %v4872 = vld [vmem:[%s4856 + $0x3c] sm:$0xf]
        %v4873 = vld [vmem:[%s4856 + $0x40] sm:$0xf]
        %v4874 = vld [vmem:[%s4856 + $0x44] sm:$0xf]
        %v4875 = vld [vmem:[%s4856 + $0x48] sm:$0xf]
        %v4876 = vld [vmem:[%s4856 + $0x4c] sm:$0xf]
        %v4877 = vld [vmem:[%s4856 + $0x50] sm:$0xf]
        %v4878 = vld [vmem:[%s4856 + $0x54] sm:$0xf]
        %v4879 = vld [vmem:[%s4856 + $0x58] sm:$0xf]
        %v4880 = vld [vmem:[%s4856 + $0x5c] sm:$0xf]
        %s4881 = scalar_lea.vmem %s93, 1
        %v4882 = vld [vmem:[%s4881] sm:$0x1]
        %s4883 = scalar_lea.vmem %s95, 1
        %v4884 = vld [vmem:[%s4883] sm:$0x1]
        %s4885 = scalar_lea.vmem %s97, 1
        %v4886 = vld [vmem:[%s4885] sm:$0x1]
        %v4888 = vrot.slane %v4838, 7
        %v4890 = vsel %vm2569, 0.0, %v4888
        %v4891 = vsel %vm2569, %v4888, 0.0
        %v4894 = vrot.slane %v4890, 1
        %v4895 = vrot.slane %v4891, 1
        %v4896 = vsel %vm2574, %v4894, %v4895
        %4897 = vrot.lane.b32.xlu0 %v4896, 32
        %v4898 = vpop.permute.xlu0 %4897
        %v4900 = vrot.slane %v4890, 2
        %v4901 = vrot.slane %v4891, 2
        %v4902 = vsel %vm2581, %v4900, %v4901
        %4903 = vrot.lane.b32.xlu0 %v4902, 64
        %v4904 = vpop.permute.xlu0 %4903
        %v4906 = vsel %vm2282, %v4890, %v4898
        %v4907 = vsel %vm2589, %v4906, %v4904
        %v4908 = vpack.c.bf16 %v4907, %v4907
        %v4910 = vperm.slane %v4855, 0
        %v4924 = vunpack.c.l.b16 %v4842
        %v4925 = vunpack.c.l.b16 %v4843
        %v4926 = vunpack.c.l.b16 %v4844
        %v4927 = vunpack.c.l.b16 %v4845
        %v4928 = vunpack.c.l.b16 %v4846
        %v4929 = vunpack.c.l.b16 %v4847
        %v4930 = vunpack.c.l.b16 %v4848
        %v4931 = vunpack.c.l.b16 %v4849
        %v4932 = vunpack.c.l.b16 %v4850
        %v4933 = vunpack.c.l.b16 %v4851
        %v4934 = vunpack.c.l.b16 %v4852
        %v4935 = vunpack.c.l.b16 %v4853
        %v4936 = vpack.c.b16 %v4925, %v4924
        %v4937 = vpack.c.b16 %v4927, %v4926
        %v4938 = vpack.c.b16 %v4929, %v4928
        %v4939 = vpack.c.b16 %v4931, %v4930
        %v4940 = vpack.c.b16 %v4933, %v4932
        %v4941 = vpack.c.b16 %v4935, %v4934
        %v4949 = vsel %vm2631, %v4908, 0
        %4951 = vmatpush.bf16.msra.mxu0 0
        %4952 = vmatpush.bf16.msra.mxu0 0
        %4953 = vmatpush.bf16.msra.mxu0 %v4941
        %4954 = vmatpush.bf16.msra.mxu0 %v4940
        %4955 = vmatpush.bf16.msra.mxu0 %v4939
        %4956 = vmatpush.bf16.msra.mxu0 %v4938
        %4957 = vmatpush.bf16.msra.mxu0 %v4937
        %4958 = vmatpush.bf16.msra.mxu0 %v4936
        %4959 = vmatmul.bf16.gmra.mxu0 %v4949
        %v4960 = vpop.f32.mrf.mxu0
        %v4961 = vadd.f32 %v4910, %v4960
        %v4962 = vpop.f32.mrf.mxu0
        %4963 = vdwg.mxu0
        %v4964 = vmax.f32 %v4961, 0.0
        %v4966 = vrot.slane %v4964, 7
        %v4968 = vsel %vm2569, 0.0, %v4966
        %v4969 = vsel %vm2569, %v4966, 0.0
        %v4972 = vrot.slane %v4968, 1
        %v4973 = vrot.slane %v4969, 1
        %v4974 = vsel %vm2574, %v4972, %v4973
        %4975 = vrot.lane.b32.xlu0 %v4974, 64
        %v4976 = vpop.permute.xlu0 %4975
        %v4978 = vrot.slane %v4968, 2
        %v4979 = vrot.slane %v4969, 2
        %v4980 = vsel %vm2581, %v4978, %v4979
        %v4982 = vsel %vm2589, %v4968, %v4976
        %v4983 = vpack.c.bf16 %v4982, %v4982
        %v4984 = vpack.c.bf16 %v4980, %v4980
        %v4986 = vperm.slane %v4882, 0
        %v5012 = vunpack.c.l.b16 %v4857
        %v5013 = vunpack.c.l.b16 %v4858
        %v5014 = vunpack.c.l.b16 %v4859
        %v5015 = vunpack.c.l.b16 %v4860
        %v5016 = vunpack.c.l.b16 %v4861
        %v5017 = vunpack.c.l.b16 %v4862
        %v5018 = vunpack.c.l.b16 %v4863
        %v5019 = vunpack.c.l.b16 %v4864
        %v5020 = vunpack.c.l.b16 %v4865
        %v5021 = vunpack.c.l.b16 %v4866
        %v5022 = vunpack.c.l.b16 %v4867
        %v5023 = vunpack.c.l.b16 %v4868
        %v5024 = vunpack.c.l.b16 %v4869
        %v5025 = vunpack.c.l.b16 %v4870
        %v5026 = vunpack.c.l.b16 %v4871
        %v5027 = vunpack.c.l.b16 %v4872
        %v5028 = vunpack.c.l.b16 %v4873
        %v5029 = vunpack.c.l.b16 %v4874
        %v5030 = vunpack.c.l.b16 %v4875
        %v5031 = vunpack.c.l.b16 %v4876
        %v5032 = vunpack.c.l.b16 %v4877
        %v5033 = vunpack.c.l.b16 %v4878
        %v5034 = vunpack.c.l.b16 %v4879
        %v5035 = vunpack.c.l.b16 %v4880
        %v5036 = vpack.c.b16 %v5013, %v5012
        %v5037 = vpack.c.b16 %v5015, %v5014
        %v5038 = vpack.c.b16 %v5017, %v5016
        %v5039 = vpack.c.b16 %v5019, %v5018
        %v5040 = vpack.c.b16 %v5021, %v5020
        %v5041 = vpack.c.b16 %v5023, %v5022
        %v5042 = vpack.c.b16 %v5025, %v5024
        %v5043 = vpack.c.b16 %v5027, %v5026
        %v5044 = vpack.c.b16 %v5029, %v5028
        %v5045 = vpack.c.b16 %v5031, %v5030
        %v5046 = vpack.c.b16 %v5033, %v5032
        %v5047 = vpack.c.b16 %v5035, %v5034
        %v5061 = vsel %vm2589, %v4984, 0
        %5063 = vmatpush.bf16.msra.mxu0 %v5043
        %5064 = vmatpush.bf16.msra.mxu0 %v5042
        %5065 = vmatpush.bf16.msra.mxu0 %v5041
        %5066 = vmatpush.bf16.msra.mxu0 %v5040
        %5067 = vmatpush.bf16.msra.mxu0 %v5039
        %5068 = vmatpush.bf16.msra.mxu0 %v5038
        %5069 = vmatpush.bf16.msra.mxu0 %v5037
        %5070 = vmatpush.bf16.msra.mxu0 %v5036
        %5071 = vmatmul.bf16.gmra.mxu0 %v4983
        %v5072 = vpop.f32.mrf.mxu0
        %v5073 = vadd.f32 %v4986, %v5072
        %v5074 = vpop.f32.mrf.mxu0
        %5075 = vdwg.mxu0
        %5076 = vmatpush.bf16.msra.mxu0 0
        %5077 = vmatpush.bf16.msra.mxu0 0
        %5078 = vmatpush.bf16.msra.mxu0 0
        %5079 = vmatpush.bf16.msra.mxu0 0
        %5080 = vmatpush.bf16.msra.mxu0 %v5047
        %5081 = vmatpush.bf16.msra.mxu0 %v5046
        %5082 = vmatpush.bf16.msra.mxu0 %v5045
        %5083 = vmatpush.bf16.msra.mxu0 %v5044
        %5084 = vmatmul.bf16.gmra.mxu0 %v5061
        %v5085 = vpop.f32.mrf.mxu0
        %v5086 = vadd.f32 %v5073, %v5085
        %v5087 = vpop.f32.mrf.mxu0
        %5088 = vdwg.mxu0
        %v5089 = vadd.f32 %v4838, %v5086
        %v5090 = vsel %vm2282, %v5089, 0.0
        %5091 = vadd.xlane.f32.xlu0 %v5090
        %v5092 = vpop.xlane.xlu0 %5091
        %v5093 = vmul.f32 %v5092, %v2496
        %v5094 = vsub.f32 %v5089, %v5093
        %v5095 = vmul.f32 %v5094, %v5094
        %v5096 = vsel %vm2282, %v5095, 0.0
        %5097 = vadd.xlane.f32.xlu0 %v5096
        %v5098 = vpop.xlane.xlu0 %5097
        %v5099 = vmul.f32 %v5098, %v2496
        %v5100 = vadd.f32 %v5099, 1e-05
        %v5101 = vrsqrt.pop %v5100
        %v5102 = vmul.f32 %v5101, %v5100
        %v5103 = vmul.f32 %v5102, %v5101
        %v5104 = vmul.f32 0.5, %v5103
        %v5105 = vsub.f32 1.5, %v5104
        %v5106 = vmul.f32 %v5101, %v5105
        %vm5107 = vweird.f32 %v5100
        %vm5108 = vweird.f32 %v5101
        %vm5109 = vmor %vm5107, %vm5108
        %v5110 = vsel %vm5109, %v5101, %v5106
        %v5111 = vmul.f32 %v5094, %v5110
        %v5113 = vperm.slane %v4884, 0
        %v5115 = vmul.f32 %v5111, %v5113
        %v5117 = vperm.slane %v4886, 0
        %v5119 = vadd.f32 %v5115, %v5117
        %v5120 = vld [vmem:[#allocation11] sm:$0x1]
        %v5121 = vld [vmem:[#allocation13] sm:$0x1]
        %v5122 = vsel %vm2282, %v5119, 0.0
        %5123 = vadd.xlane.f32.xlu0 %v5122
        %v5124 = vpop.xlane.xlu0 %5123
        %v5125 = vmul.f32 %v5124, %v2496
        %v5126 = vsub.f32 %v5119, %v5125
        %v5127 = vmul.f32 %v5126, %v5126
        %v5128 = vsel %vm2282, %v5127, 0.0
        %5129 = vadd.xlane.f32.xlu0 %v5128
        %v5130 = vpop.xlane.xlu0 %5129
        %v5131 = vmul.f32 %v5130, %v2496
        %v5132 = vadd.f32 %v5131, 1e-05
        %v5133 = vrsqrt.pop %v5132
        %v5134 = vmul.f32 %v5133, %v5132
        %v5135 = vmul.f32 %v5134, %v5133
        %v5136 = vmul.f32 0.5, %v5135
        %v5137 = vsub.f32 1.5, %v5136
        %v5138 = vmul.f32 %v5133, %v5137
        %vm5139 = vweird.f32 %v5132
        %vm5140 = vweird.f32 %v5133
        %vm5141 = vmor %vm5139, %vm5140
        %v5142 = vsel %vm5141, %v5133, %v5138
        %v5143 = vmul.f32 %v5126, %v5142
        %v5145 = vperm.slane %v5120, 0
        %v5147 = vmul.f32 %v5143, %v5145
        %v5149 = vperm.slane %v5121, 0
        %v5151 = vadd.f32 %v5147, %v5149
        %v5152 = vpack.c.bf16 %v5151, %v5151
        %v5153 = vld [vmem:[%s103] sm:$0xf]
        %v5154 = vld [vmem:[%s103 + $0x4] sm:$0xf]
        %v5155 = vld [vmem:[%s103 + $0x8] sm:$0xf]
        %v5156 = vld [vmem:[%s103 + $0xc] sm:$0xf]
        %v5157 = vld [vmem:[#allocation14] sm:$0x1]
        %v5159 = vperm.slane %v5157, 0
        %v5165 = vunpack.c.l.b16 %v5153
        %v5166 = vunpack.c.l.b16 %v5154
        %v5167 = vunpack.c.l.b16 %v5155
        %v5168 = vunpack.c.l.b16 %v5156
        %v5169 = vpack.c.b16 %v5166, %v5165
        %v5170 = vpack.c.b16 %v5168, %v5167
        %v5174 = vsel %vm2282, %v5152, 0
        %5176 = vmatpush.bf16.msra.mxu0 0
        %5177 = vmatpush.bf16.msra.mxu0 0
        %5178 = vmatpush.bf16.msra.mxu0 0
        %5179 = vmatpush.bf16.msra.mxu0 0
        %5180 = vmatpush.bf16.msra.mxu0 0
        %5181 = vmatpush.bf16.msra.mxu0 0
        %5182 = vmatpush.bf16.msra.mxu0 %v5170
        %5183 = vmatpush.bf16.msra.mxu0 %v5169
        %5184 = vmatmul.bf16.gmra.mxu0 %v5174
        %v5185 = vpop.f32.mrf.mxu0
        %v5186 = vadd.f32 %v5159, %v5185
        %v5187 = vpop.f32.mrf.mxu0
        %5188 = vdwg.mxu0
        %vm5189 = vcmask 138240
        %5190 = vst.msk [vmem:[%s2230] sm:$0xff] %vm5189, %v5186
        %v5191 = vld [vmem:[%s107] sm:$0xf]
        %v5192 = vld [vmem:[%s107 + $0x4] sm:$0xf]
        %v5193 = vld [vmem:[%s107 + $0x8] sm:$0xf]
        %v5194 = vld [vmem:[%s107 + $0xc] sm:$0xf]
        %v5195 = vld [vmem:[%s107 + $0x10] sm:$0xf]
        %v5196 = vld [vmem:[%s107 + $0x14] sm:$0xf]
        %v5197 = vld [vmem:[%s107 + $0x18] sm:$0xf]
        %v5198 = vld [vmem:[%s107 + $0x1c] sm:$0xf]
        %v5199 = vld [vmem:[%s107 + $0x20] sm:$0xf]
        %v5200 = vld [vmem:[%s107 + $0x24] sm:$0xf]
        %v5201 = vld [vmem:[#allocation16] sm:$0x1]
        %v5203 = vrot.slane %v5186, 6
        %vm5205 = vcmask 1041408
        %v5206 = vsel %vm5205, 0.0, %v5203
        %v5207 = vsel %vm5205, %v5203, 0.0
        %v5210 = vrot.slane %v5206, 1
        %v5211 = vrot.slane %v5207, 1
        %v5212 = vsel %vm2574, %v5210, %v5211
        %5213 = vrot.lane.b32.xlu0 %v5212, 16
        %v5214 = vpop.permute.xlu0 %5213
        %v5216 = vrot.slane %v5206, 2
        %v5217 = vrot.slane %v5207, 2
        %v5218 = vsel %vm2581, %v5216, %v5217
        %5219 = vrot.lane.b32.xlu0 %v5218, 32
        %v5220 = vpop.permute.xlu0 %5219
        %vm5222 = vcmask 1044480
        %v5223 = vrot.slane %v5206, 3
        %v5224 = vrot.slane %v5207, 3
        %v5225 = vsel %vm5222, %v5223, %v5224
        %5226 = vrot.lane.b32.xlu0 %v5225, 48
        %v5227 = vpop.permute.xlu0 %5226
        %v5229 = vrot.slane %v5206, 4
        %v5230 = vrot.slane %v5207, 4
        %v5231 = vsel %vm2373, %v5229, %v5230
        %5232 = vrot.lane.b32.xlu0 %v5231, 64
        %v5233 = vpop.permute.xlu0 %5232
        %v5235 = vsel %vm2329, %v5206, %v5214
        %v5236 = vsel %vm2282, %v5235, %v5220
        %vm5237 = vcmask 392192
        %v5238 = vsel %vm5237, %v5236, %v5227
        %v5239 = vsel %vm2589, %v5238, %v5233
        %v5240 = vpack.c.bf16 %v5239, %v5239
        %v5242 = vperm.slane %v5201, 0
        %v5254 = vunpack.c.l.b16 %v5191
        %v5255 = vunpack.c.l.b16 %v5192
        %v5256 = vunpack.c.l.b16 %v5193
        %v5257 = vunpack.c.l.b16 %v5194
        %v5258 = vunpack.c.l.b16 %v5195
        %v5259 = vunpack.c.l.b16 %v5196
        %v5260 = vunpack.c.l.b16 %v5197
        %v5261 = vunpack.c.l.b16 %v5198
        %v5262 = vunpack.c.l.b16 %v5199
        %v5263 = vunpack.c.l.b16 %v5200
        %v5264 = vpack.c.b16 %v5255, %v5254
        %v5265 = vpack.c.b16 %v5257, %v5256
        %v5266 = vpack.c.b16 %v5259, %v5258
        %v5267 = vpack.c.b16 %v5261, %v5260
        %v5268 = vpack.c.b16 %v5263, %v5262
        %vm5274 = vcmask 654336
        %v5276 = vsel %vm5274, %v5240, 0
        %5278 = vmatpush.bf16.msra.mxu0 0
        %5279 = vmatpush.bf16.msra.mxu0 0
        %5280 = vmatpush.bf16.msra.mxu0 0
        %5281 = vmatpush.bf16.msra.mxu0 %v5268
        %5282 = vmatpush.bf16.msra.mxu0 %v5267
        %5283 = vmatpush.bf16.msra.mxu0 %v5266
        %5284 = vmatpush.bf16.msra.mxu0 %v5265
        %5285 = vmatpush.bf16.msra.mxu0 %v5264
        %5286 = vmatmul.bf16.gmra.mxu0 %v5276
        %v5287 = vpop.f32.mrf.mxu0
        %v5288 = vadd.f32 %v5242, %v5287
        %v5289 = vpop.f32.mrf.mxu0
        %5290 = vdwg.mxu0
        %v5291 = vtanh.pop %v5288
        %v5292 = vld [vmem:[%s111] sm:$0xf]
        %v5293 = vld [vmem:[%s111 + $0x4] sm:$0xf]
        %v5294 = vld [vmem:[%s111 + $0x8] sm:$0xf]
        %v5295 = vld [vmem:[%s111 + $0xc] sm:$0xf]
        %v5296 = vld [vmem:[%s111 + $0x10] sm:$0xf]
        %v5297 = vld [vmem:[%s111 + $0x14] sm:$0xf]
        %v5298 = vld [vmem:[%s111 + $0x18] sm:$0xf]
        %v5299 = vld [vmem:[%s111 + $0x1c] sm:$0xf]
        %v5300 = vld [vmem:[%s111 + $0x20] sm:$0xf]
        %v5301 = vld [vmem:[%s111 + $0x24] sm:$0xf]
        %v5302 = vld [vmem:[%s111 + $0x28] sm:$0xf]
        %v5303 = vld [vmem:[%s111 + $0x2c] sm:$0xf]
        %v5304 = vld [vmem:[%s111 + $0x30] sm:$0xf]
        %v5305 = vld [vmem:[%s111 + $0x34] sm:$0xf]
        %v5306 = vld [vmem:[%s111 + $0x38] sm:$0xf]
        %v5307 = vld [vmem:[%s111 + $0x3c] sm:$0xf]
        %v5308 = vld [vmem:[%s111 + $0x40] sm:$0xf]
        %v5309 = vld [vmem:[%s111 + $0x44] sm:$0xf]
        %v5310 = vld [vmem:[%s111 + $0x48] sm:$0xf]
        %v5311 = vld [vmem:[%s111 + $0x4c] sm:$0xf]
        %v5312 = vld [vmem:[#allocation17] sm:$0x1]
        %v5314 = vrot.slane %v5291, 6
        %v5316 = vsel %vm5205, 0.0, %v5314
        %v5317 = vsel %vm5205, %v5314, 0.0
        %v5320 = vrot.slane %v5316, 1
        %v5321 = vrot.slane %v5317, 1
        %v5322 = vsel %vm2574, %v5320, %v5321
        %5323 = vrot.lane.b32.xlu0 %v5322, 32
        %v5324 = vpop.permute.xlu0 %5323
        %v5326 = vrot.slane %v5316, 2
        %v5327 = vrot.slane %v5317, 2
        %v5328 = vsel %vm2581, %v5326, %v5327
        %5329 = vrot.lane.b32.xlu0 %v5328, 64
        %v5330 = vpop.permute.xlu0 %5329
        %v5332 = vrot.slane %v5316, 3
        %v5333 = vrot.slane %v5317, 3
        %v5334 = vsel %vm5222, %v5332, %v5333
        %5335 = vrot.lane.b32.xlu0 %v5334, 96
        %v5336 = vpop.permute.xlu0 %5335
        %v5338 = vrot.slane %v5316, 4
        %v5339 = vrot.slane %v5317, 4
        %v5340 = vsel %vm2373, %v5338, %v5339
        %v5342 = vsel %vm2282, %v5316, %v5324
        %v5343 = vsel %vm2589, %v5342, %v5330
        %v5344 = vsel %vm2631, %v5343, %v5336
        %v5345 = vpack.c.bf16 %v5344, %v5344
        %v5346 = vpack.c.bf16 %v5340, %v5340
        %v5348 = vperm.slane %v5312, 0
        %v5370 = vunpack.c.l.b16 %v5292
        %v5371 = vunpack.c.l.b16 %v5293
        %v5372 = vunpack.c.l.b16 %v5294
        %v5373 = vunpack.c.l.b16 %v5295
        %v5374 = vunpack.c.l.b16 %v5296
        %v5375 = vunpack.c.l.b16 %v5297
        %v5376 = vunpack.c.l.b16 %v5298
        %v5377 = vunpack.c.l.b16 %v5299
        %v5378 = vunpack.c.l.b16 %v5300
        %v5379 = vunpack.c.l.b16 %v5301
        %v5380 = vunpack.c.l.b16 %v5302
        %v5381 = vunpack.c.l.b16 %v5303
        %v5382 = vunpack.c.l.b16 %v5304
        %v5383 = vunpack.c.l.b16 %v5305
        %v5384 = vunpack.c.l.b16 %v5306
        %v5385 = vunpack.c.l.b16 %v5307
        %v5386 = vunpack.c.l.b16 %v5308
        %v5387 = vunpack.c.l.b16 %v5309
        %v5388 = vunpack.c.l.b16 %v5310
        %v5389 = vunpack.c.l.b16 %v5311
        %v5390 = vpack.c.b16 %v5371, %v5370
        %v5391 = vpack.c.b16 %v5373, %v5372
        %v5392 = vpack.c.b16 %v5375, %v5374
        %v5393 = vpack.c.b16 %v5377, %v5376
        %v5394 = vpack.c.b16 %v5379, %v5378
        %v5395 = vpack.c.b16 %v5381, %v5380
        %v5396 = vpack.c.b16 %v5383, %v5382
        %v5397 = vpack.c.b16 %v5385, %v5384
        %v5398 = vpack.c.b16 %v5387, %v5386
        %v5399 = vpack.c.b16 %v5389, %v5388
        %v5411 = vsel %vm2282, %v5346, 0
        %5413 = vmatpush.bf16.msra.mxu0 %v5397
        %5414 = vmatpush.bf16.msra.mxu0 %v5396
        %5415 = vmatpush.bf16.msra.mxu0 %v5395
        %5416 = vmatpush.bf16.msra.mxu0 %v5394
        %5417 = vmatpush.bf16.msra.mxu0 %v5393
        %5418 = vmatpush.bf16.msra.mxu0 %v5392
        %5419 = vmatpush.bf16.msra.mxu0 %v5391
        %5420 = vmatpush.bf16.msra.mxu0 %v5390
        %5421 = vmatmul.bf16.gmra.mxu0 %v5345
        %v5422 = vpop.f32.mrf.mxu0
        %v5423 = vadd.f32 %v5348, %v5422
        %v5424 = vpop.f32.mrf.mxu0
        %5425 = vdwg.mxu0
        %5426 = vmatpush.bf16.msra.mxu0 0
        %5427 = vmatpush.bf16.msra.mxu0 0
        %5428 = vmatpush.bf16.msra.mxu0 0
        %5429 = vmatpush.bf16.msra.mxu0 0
        %5430 = vmatpush.bf16.msra.mxu0 0
        %5431 = vmatpush.bf16.msra.mxu0 0
        %5432 = vmatpush.bf16.msra.mxu0 %v5399
        %5433 = vmatpush.bf16.msra.mxu0 %v5398
        %5434 = vmatmul.bf16.gmra.mxu0 %v5411
        %v5435 = vpop.f32.mrf.mxu0
        %v5436 = vadd.f32 %v5423, %v5435
        %v5437 = vpop.f32.mrf.mxu0
        %5438 = vdwg.mxu0
        %v5439 = vtanh.pop %v5436
        %v5440 = vld [vmem:[%s115] sm:$0xf]
        %v5441 = vld [vmem:[%s115 + $0x4] sm:$0xf]
        %v5442 = vld [vmem:[%s115 + $0x8] sm:$0xf]
        %v5443 = vld [vmem:[%s115 + $0xc] sm:$0xf]
        %v5444 = vld [vmem:[%s115 + $0x10] sm:$0xf]
        %v5445 = vld [vmem:[%s115 + $0x14] sm:$0xf]
        %v5446 = vld [vmem:[%s115 + $0x18] sm:$0xf]
        %v5447 = vld [vmem:[%s115 + $0x1c] sm:$0xf]
        %v5448 = vld [vmem:[%s115 + $0x20] sm:$0xf]
        %v5449 = vld [vmem:[%s115 + $0x24] sm:$0xf]
        %v5450 = vld [vmem:[%s115 + $0x28] sm:$0xf]
        %v5451 = vld [vmem:[%s115 + $0x2c] sm:$0xf]
        %v5452 = vld [vmem:[%s115 + $0x30] sm:$0xf]
        %v5453 = vld [vmem:[%s115 + $0x34] sm:$0xf]
        %v5454 = vld [vmem:[%s115 + $0x38] sm:$0xf]
        %v5455 = vld [vmem:[%s115 + $0x3c] sm:$0xf]
        %v5456 = vld [vmem:[%s115 + $0x40] sm:$0xf]
        %v5457 = vld [vmem:[%s115 + $0x44] sm:$0xf]
        %v5458 = vld [vmem:[%s115 + $0x48] sm:$0xf]
        %v5459 = vld [vmem:[%s115 + $0x4c] sm:$0xf]
        %v5460 = vld [vmem:[#allocation19] sm:$0x1]
        %v5462 = vrot.slane %v5439, 6
        %v5464 = vsel %vm5205, 0.0, %v5462
        %v5465 = vsel %vm5205, %v5462, 0.0
        %v5468 = vrot.slane %v5464, 1
        %v5469 = vrot.slane %v5465, 1
        %v5470 = vsel %vm2574, %v5468, %v5469
        %5471 = vrot.lane.b32.xlu0 %v5470, 32
        %v5472 = vpop.permute.xlu0 %5471
        %v5474 = vrot.slane %v5464, 2
        %v5475 = vrot.slane %v5465, 2
        %v5476 = vsel %vm2581, %v5474, %v5475
        %5477 = vrot.lane.b32.xlu0 %v5476, 64
        %v5478 = vpop.permute.xlu0 %5477
        %v5480 = vrot.slane %v5464, 3
        %v5481 = vrot.slane %v5465, 3
        %v5482 = vsel %vm5222, %v5480, %v5481
        %5483 = vrot.lane.b32.xlu0 %v5482, 96
        %v5484 = vpop.permute.xlu0 %5483
        %v5486 = vrot.slane %v5464, 4
        %v5487 = vrot.slane %v5465, 4
        %v5488 = vsel %vm2373, %v5486, %v5487
        %v5490 = vsel %vm2282, %v5464, %v5472
        %v5491 = vsel %vm2589, %v5490, %v5478
        %v5492 = vsel %vm2631, %v5491, %v5484
        %v5493 = vpack.c.bf16 %v5492, %v5492
        %v5494 = vpack.c.bf16 %v5488, %v5488
        %v5496 = vperm.slane %v5460, 0
        %v5518 = vunpack.c.l.b16 %v5440
        %v5519 = vunpack.c.l.b16 %v5441
        %v5520 = vunpack.c.l.b16 %v5442
        %v5521 = vunpack.c.l.b16 %v5443
        %v5522 = vunpack.c.l.b16 %v5444
        %v5523 = vunpack.c.l.b16 %v5445
        %v5524 = vunpack.c.l.b16 %v5446
        %v5525 = vunpack.c.l.b16 %v5447
        %v5526 = vunpack.c.l.b16 %v5448
        %v5527 = vunpack.c.l.b16 %v5449
        %v5528 = vunpack.c.l.b16 %v5450
        %v5529 = vunpack.c.l.b16 %v5451
        %v5530 = vunpack.c.l.b16 %v5452
        %v5531 = vunpack.c.l.b16 %v5453
        %v5532 = vunpack.c.l.b16 %v5454
        %v5533 = vunpack.c.l.b16 %v5455
        %v5534 = vunpack.c.l.b16 %v5456
        %v5535 = vunpack.c.l.b16 %v5457
        %v5536 = vunpack.c.l.b16 %v5458
        %v5537 = vunpack.c.l.b16 %v5459
        %v5538 = vpack.c.b16 %v5519, %v5518
        %v5539 = vpack.c.b16 %v5521, %v5520
        %v5540 = vpack.c.b16 %v5523, %v5522
        %v5541 = vpack.c.b16 %v5525, %v5524
        %v5542 = vpack.c.b16 %v5527, %v5526
        %v5543 = vpack.c.b16 %v5529, %v5528
        %v5544 = vpack.c.b16 %v5531, %v5530
        %v5545 = vpack.c.b16 %v5533, %v5532
        %v5546 = vpack.c.b16 %v5535, %v5534
        %v5547 = vpack.c.b16 %v5537, %v5536
        %v5559 = vsel %vm2282, %v5494, 0
        %5561 = vmatpush.bf16.msra.mxu0 %v5545
        %5562 = vmatpush.bf16.msra.mxu0 %v5544
        %5563 = vmatpush.bf16.msra.mxu0 %v5543
        %5564 = vmatpush.bf16.msra.mxu0 %v5542
        %5565 = vmatpush.bf16.msra.mxu0 %v5541
        %5566 = vmatpush.bf16.msra.mxu0 %v5540
        %5567 = vmatpush.bf16.msra.mxu0 %v5539
        %5568 = vmatpush.bf16.msra.mxu0 %v5538
        %5569 = vmatmul.bf16.gmra.mxu0 %v5493
        %v5570 = vpop.f32.mrf.mxu0
        %v5571 = vadd.f32 %v5496, %v5570
        %v5572 = vpop.f32.mrf.mxu0
        %5573 = vdwg.mxu0
        %5574 = vmatpush.bf16.msra.mxu0 0
        %5575 = vmatpush.bf16.msra.mxu0 0
        %5576 = vmatpush.bf16.msra.mxu0 0
        %5577 = vmatpush.bf16.msra.mxu0 0
        %5578 = vmatpush.bf16.msra.mxu0 0
        %5579 = vmatpush.bf16.msra.mxu0 0
        %5580 = vmatpush.bf16.msra.mxu0 %v5547
        %5581 = vmatpush.bf16.msra.mxu0 %v5546
        %5582 = vmatmul.bf16.gmra.mxu0 %v5559
        %v5583 = vpop.f32.mrf.mxu0
        %v5584 = vadd.f32 %v5571, %v5583
        %v5585 = vpop.f32.mrf.mxu0
        %5586 = vdwg.mxu0
        %v5587 = vtanh.pop %v5584
        %v5588 = vld [vmem:[%s119] sm:$0xf]
        %v5589 = vld [vmem:[%s119 + $0x4] sm:$0xf]
        %v5590 = vld [vmem:[%s119 + $0x8] sm:$0xf]
        %v5591 = vld [vmem:[%s119 + $0xc] sm:$0xf]
        %v5592 = vld [vmem:[%s119 + $0x10] sm:$0xf]
        %v5593 = vld [vmem:[%s119 + $0x14] sm:$0xf]
        %v5594 = vld [vmem:[%s119 + $0x18] sm:$0xf]
        %v5595 = vld [vmem:[%s119 + $0x1c] sm:$0xf]
        %v5596 = vld [vmem:[%s119 + $0x20] sm:$0xf]
        %v5597 = vld [vmem:[%s119 + $0x24] sm:$0xf]
        %v5598 = vld [vmem:[%s119 + $0x28] sm:$0xf]
        %v5599 = vld [vmem:[%s119 + $0x2c] sm:$0xf]
        %v5600 = vld [vmem:[%s119 + $0x30] sm:$0xf]
        %v5601 = vld [vmem:[%s119 + $0x34] sm:$0xf]
        %v5602 = vld [vmem:[%s119 + $0x38] sm:$0xf]
        %v5603 = vld [vmem:[%s119 + $0x3c] sm:$0xf]
        %v5604 = vld [vmem:[%s119 + $0x40] sm:$0xf]
        %v5605 = vld [vmem:[%s119 + $0x44] sm:$0xf]
        %v5606 = vld [vmem:[%s119 + $0x48] sm:$0xf]
        %v5607 = vld [vmem:[%s119 + $0x4c] sm:$0xf]
        %v5608 = vld [vmem:[#allocation20] sm:$0x1]
        %v5610 = vrot.slane %v5587, 6
        %v5612 = vsel %vm5205, 0.0, %v5610
        %v5613 = vsel %vm5205, %v5610, 0.0
        %v5616 = vrot.slane %v5612, 1
        %v5617 = vrot.slane %v5613, 1
        %v5618 = vsel %vm2574, %v5616, %v5617
        %5619 = vrot.lane.b32.xlu0 %v5618, 32
        %v5620 = vpop.permute.xlu0 %5619
        %v5622 = vrot.slane %v5612, 2
        %v5623 = vrot.slane %v5613, 2
        %v5624 = vsel %vm2581, %v5622, %v5623
        %5625 = vrot.lane.b32.xlu0 %v5624, 64
        %v5626 = vpop.permute.xlu0 %5625
        %v5628 = vrot.slane %v5612, 3
        %v5629 = vrot.slane %v5613, 3
        %v5630 = vsel %vm5222, %v5628, %v5629
        %5631 = vrot.lane.b32.xlu0 %v5630, 96
        %v5632 = vpop.permute.xlu0 %5631
        %v5634 = vrot.slane %v5612, 4
        %v5635 = vrot.slane %v5613, 4
        %v5636 = vsel %vm2373, %v5634, %v5635
        %v5638 = vsel %vm2282, %v5612, %v5620
        %v5639 = vsel %vm2589, %v5638, %v5626
        %v5640 = vsel %vm2631, %v5639, %v5632
        %v5641 = vpack.c.bf16 %v5640, %v5640
        %v5642 = vpack.c.bf16 %v5636, %v5636
        %v5644 = vperm.slane %v5608, 0
        %v5666 = vunpack.c.l.b16 %v5588
        %v5667 = vunpack.c.l.b16 %v5589
        %v5668 = vunpack.c.l.b16 %v5590
        %v5669 = vunpack.c.l.b16 %v5591
        %v5670 = vunpack.c.l.b16 %v5592
        %v5671 = vunpack.c.l.b16 %v5593
        %v5672 = vunpack.c.l.b16 %v5594
        %v5673 = vunpack.c.l.b16 %v5595
        %v5674 = vunpack.c.l.b16 %v5596
        %v5675 = vunpack.c.l.b16 %v5597
        %v5676 = vunpack.c.l.b16 %v5598
        %v5677 = vunpack.c.l.b16 %v5599
        %v5678 = vunpack.c.l.b16 %v5600
        %v5679 = vunpack.c.l.b16 %v5601
        %v5680 = vunpack.c.l.b16 %v5602
        %v5681 = vunpack.c.l.b16 %v5603
        %v5682 = vunpack.c.l.b16 %v5604
        %v5683 = vunpack.c.l.b16 %v5605
        %v5684 = vunpack.c.l.b16 %v5606
        %v5685 = vunpack.c.l.b16 %v5607
        %v5686 = vpack.c.b16 %v5667, %v5666
        %v5687 = vpack.c.b16 %v5669, %v5668
        %v5688 = vpack.c.b16 %v5671, %v5670
        %v5689 = vpack.c.b16 %v5673, %v5672
        %v5690 = vpack.c.b16 %v5675, %v5674
        %v5691 = vpack.c.b16 %v5677, %v5676
        %v5692 = vpack.c.b16 %v5679, %v5678
        %v5693 = vpack.c.b16 %v5681, %v5680
        %v5694 = vpack.c.b16 %v5683, %v5682
        %v5695 = vpack.c.b16 %v5685, %v5684
        %v5707 = vsel %vm2282, %v5642, 0
        %5709 = vmatpush.bf16.msra.mxu0 %v5693
        %5710 = vmatpush.bf16.msra.mxu0 %v5692
        %5711 = vmatpush.bf16.msra.mxu0 %v5691
        %5712 = vmatpush.bf16.msra.mxu0 %v5690
        %5713 = vmatpush.bf16.msra.mxu0 %v5689
        %5714 = vmatpush.bf16.msra.mxu0 %v5688
        %5715 = vmatpush.bf16.msra.mxu0 %v5687
        %5716 = vmatpush.bf16.msra.mxu0 %v5686
        %5717 = vmatmul.bf16.gmra.mxu0 %v5641
        %v5718 = vpop.f32.mrf.mxu0
        %v5719 = vadd.f32 %v5644, %v5718
        %v5720 = vpop.f32.mrf.mxu0
        %5721 = vdwg.mxu0
        %5722 = vmatpush.bf16.msra.mxu0 0
        %5723 = vmatpush.bf16.msra.mxu0 0
        %5724 = vmatpush.bf16.msra.mxu0 0
        %5725 = vmatpush.bf16.msra.mxu0 0
        %5726 = vmatpush.bf16.msra.mxu0 0
        %5727 = vmatpush.bf16.msra.mxu0 0
        %5728 = vmatpush.bf16.msra.mxu0 %v5695
        %5729 = vmatpush.bf16.msra.mxu0 %v5694
        %5730 = vmatmul.bf16.gmra.mxu0 %v5707
        %v5731 = vpop.f32.mrf.mxu0
        %v5732 = vadd.f32 %v5719, %v5731
        %v5733 = vpop.f32.mrf.mxu0
        %5734 = vdwg.mxu0
        %v5735 = vtanh.pop %v5732
        %v5736 = vld [vmem:[%s123] sm:$0xf]
        %v5737 = vld [vmem:[%s123 + $0x4] sm:$0xf]
        %v5738 = vld [vmem:[%s123 + $0x8] sm:$0xf]
        %v5739 = vld [vmem:[%s123 + $0xc] sm:$0xf]
        %v5740 = vld [vmem:[%s123 + $0x10] sm:$0xf]
        %v5741 = vld [vmem:[%s123 + $0x14] sm:$0xf]
        %v5742 = vld [vmem:[%s123 + $0x18] sm:$0xf]
        %v5743 = vld [vmem:[%s123 + $0x1c] sm:$0xf]
        %v5744 = vld [vmem:[%s123 + $0x20] sm:$0xf]
        %v5745 = vld [vmem:[%s123 + $0x24] sm:$0xf]
        %v5746 = vld [vmem:[%s123 + $0x28] sm:$0xf]
        %v5747 = vld [vmem:[%s123 + $0x2c] sm:$0xf]
        %v5748 = vld [vmem:[%s123 + $0x30] sm:$0xf]
        %v5749 = vld [vmem:[%s123 + $0x34] sm:$0xf]
        %v5750 = vld [vmem:[%s123 + $0x38] sm:$0xf]
        %v5751 = vld [vmem:[%s123 + $0x3c] sm:$0xf]
        %v5752 = vld [vmem:[%s123 + $0x40] sm:$0xf]
        %v5753 = vld [vmem:[%s123 + $0x44] sm:$0xf]
        %v5754 = vld [vmem:[%s123 + $0x48] sm:$0xf]
        %v5755 = vld [vmem:[%s123 + $0x4c] sm:$0xf]
        %v5756 = vld [vmem:[#allocation22] sm:$0x1]
        %v5758 = vrot.slane %v5735, 6
        %v5760 = vsel %vm5205, 0.0, %v5758
        %v5761 = vsel %vm5205, %v5758, 0.0
        %v5764 = vrot.slane %v5760, 1
        %v5765 = vrot.slane %v5761, 1
        %v5766 = vsel %vm2574, %v5764, %v5765
        %5767 = vrot.lane.b32.xlu0 %v5766, 32
        %v5768 = vpop.permute.xlu0 %5767
        %v5770 = vrot.slane %v5760, 2
        %v5771 = vrot.slane %v5761, 2
        %v5772 = vsel %vm2581, %v5770, %v5771
        %5773 = vrot.lane.b32.xlu0 %v5772, 64
        %v5774 = vpop.permute.xlu0 %5773
        %v5776 = vrot.slane %v5760, 3
        %v5777 = vrot.slane %v5761, 3
        %v5778 = vsel %vm5222, %v5776, %v5777
        %5779 = vrot.lane.b32.xlu0 %v5778, 96
        %v5780 = vpop.permute.xlu0 %5779
        %v5782 = vrot.slane %v5760, 4
        %v5783 = vrot.slane %v5761, 4
        %v5784 = vsel %vm2373, %v5782, %v5783
        %v5786 = vsel %vm2282, %v5760, %v5768
        %v5787 = vsel %vm2589, %v5786, %v5774
        %v5788 = vsel %vm2631, %v5787, %v5780
        %v5789 = vpack.c.bf16 %v5788, %v5788
        %v5790 = vpack.c.bf16 %v5784, %v5784
        %v5792 = vperm.slane %v5756, 0
        %v5814 = vunpack.c.l.b16 %v5736
        %v5815 = vunpack.c.l.b16 %v5737
        %v5816 = vunpack.c.l.b16 %v5738
        %v5817 = vunpack.c.l.b16 %v5739
        %v5818 = vunpack.c.l.b16 %v5740
        %v5819 = vunpack.c.l.b16 %v5741
        %v5820 = vunpack.c.l.b16 %v5742
        %v5821 = vunpack.c.l.b16 %v5743
        %v5822 = vunpack.c.l.b16 %v5744
        %v5823 = vunpack.c.l.b16 %v5745
        %v5824 = vunpack.c.l.b16 %v5746
        %v5825 = vunpack.c.l.b16 %v5747
        %v5826 = vunpack.c.l.b16 %v5748
        %v5827 = vunpack.c.l.b16 %v5749
        %v5828 = vunpack.c.l.b16 %v5750
        %v5829 = vunpack.c.l.b16 %v5751
        %v5830 = vunpack.c.l.b16 %v5752
        %v5831 = vunpack.c.l.b16 %v5753
        %v5832 = vunpack.c.l.b16 %v5754
        %v5833 = vunpack.c.l.b16 %v5755
        %v5834 = vpack.c.b16 %v5815, %v5814
        %v5835 = vpack.c.b16 %v5817, %v5816
        %v5836 = vpack.c.b16 %v5819, %v5818
        %v5837 = vpack.c.b16 %v5821, %v5820
        %v5838 = vpack.c.b16 %v5823, %v5822
        %v5839 = vpack.c.b16 %v5825, %v5824
        %v5840 = vpack.c.b16 %v5827, %v5826
        %v5841 = vpack.c.b16 %v5829, %v5828
        %v5842 = vpack.c.b16 %v5831, %v5830
        %v5843 = vpack.c.b16 %v5833, %v5832
        %v5855 = vsel %vm2282, %v5790, 0
        %5857 = vmatpush.bf16.msra.mxu0 %v5841
        %5858 = vmatpush.bf16.msra.mxu0 %v5840
        %5859 = vmatpush.bf16.msra.mxu0 %v5839
        %5860 = vmatpush.bf16.msra.mxu0 %v5838
        %5861 = vmatpush.bf16.msra.mxu0 %v5837
        %5862 = vmatpush.bf16.msra.mxu0 %v5836
        %5863 = vmatpush.bf16.msra.mxu0 %v5835
        %5864 = vmatpush.bf16.msra.mxu0 %v5834
        %5865 = vmatmul.bf16.gmra.mxu0 %v5789
        %v5866 = vpop.f32.mrf.mxu0
        %v5867 = vadd.f32 %v5792, %v5866
        %v5868 = vpop.f32.mrf.mxu0
        %5869 = vdwg.mxu0
        %5870 = vmatpush.bf16.msra.mxu0 0
        %5871 = vmatpush.bf16.msra.mxu0 0
        %5872 = vmatpush.bf16.msra.mxu0 0
        %5873 = vmatpush.bf16.msra.mxu0 0
        %5874 = vmatpush.bf16.msra.mxu0 0
        %5875 = vmatpush.bf16.msra.mxu0 0
        %5876 = vmatpush.bf16.msra.mxu0 %v5843
        %5877 = vmatpush.bf16.msra.mxu0 %v5842
        %5878 = vmatmul.bf16.gmra.mxu0 %v5855
        %v5879 = vpop.f32.mrf.mxu0
        %v5880 = vadd.f32 %v5867, %v5879
        %v5881 = vpop.f32.mrf.mxu0
        %5882 = vdwg.mxu0
        %v5883 = vadd.f32 %v5186, %v5880
        %5884 = vst.msk [vmem:[%s2190] sm:$0xff] %vm2329, %v5883
        %p5885 = scmp.lt.s32.totalorder %s157, 1
        %s5886 = scalar_select %p5885, %s157, 1
        %s5887 = smul.addr %s5886, 8
        %s5888 = scalar_lea.vmem %s127, %s5887
        %s5889 = sand.u32 %s1534, 1
        %s5890 = scalar_lea.sflag [#allocation4], %s5889
        %s5891 = sand.u32 %s1534, 1
        %s5892 = smul.addr %s5891, 8
        %s5893 = scalar_lea.vmem [#allocation23], %s5892
        %p5894 = scmp.lt.s32.totalorder %s157, 1
        %s5895 = scalar_select %p5894, %s157, 1
        %s5896 = smul.addr %s5895, 4
        %s5897 = smul.addr %s5896, 8
        %s5898 = scalar_lea.vmem %s131, %s5897
        %p5899 = scmp.lt.s32.totalorder %s157, 1
        %s5900 = scalar_select %p5899, %s157, 1
        %s5901 = smul.addr %s5900, 4
        %s5902 = smul.addr %s5901, 8
        %s5903 = scalar_lea.vmem %s133, %s5902
        %p5904 = scmp.lt.s32.totalorder %s157, 1
        %s5905 = scalar_select %p5904, %s157, 1
        %s5906 = smul.addr %s5905, 4
        %s5907 = smul.addr %s5906, 8
        %s5908 = scalar_lea.vmem %s135, %s5907
        // Predicated region
        $region325: #{transformer_forward.1} parent=271 // pred_check
          %p5909 = pneg %p1518
        $region326: #{transformer_forward.1} parent=271 // pred_check_branch
          %5911 = sbr.rel (%p5909) target = $region328
        $region327: #{transformer_forward.1} parent=271 // pred_region
          _
        $region328: #{transformer_forward.1} parent=271 // pred_fallthru
          _
        // Predicated region
        $region329: #{transformer_forward.1} parent=271 // pred_check
          %p5912 = pneg %p1544
        $region330: #{transformer_forward.1} parent=271 // pred_check_branch
          %5914 = sbr.rel (%p5912) target = $region332
        $region331: #{transformer_forward.1} parent=271 // pred_region
          %5916 = vsyncadd %s5890, 0
          %s5917 = smul.addr %s157, 8
          %s5918 = scalar_lea.hbm %s129, %s5917
          %s5920 = sshll.u32 %s5893, 4
          %s5921 = int_to_ptr.vmem [resolvable:$true] %s5920
          %s5922 = sshll.u32 %s5918, 4
          %s5923 = int_to_ptr.hbm [resolvable:$true] %s5922
          %5925 = dma.vmem_to_hbm [thread:$0]  %s5921, 128, %s5923, %s5890
        $region332: #{transformer_forward.1} parent=271 // pred_fallthru
          _
        // Predicated region
        $region333: #{transformer_forward.1} parent=271 // pred_check
          %p5926 = pneg %p1570
        $region334: #{transformer_forward.1} parent=271 // pred_check_branch
          %5928 = sbr.rel (%p5926) target = $region336
        $region335: #{transformer_forward.1} parent=271 // pred_region
          _
        $region336: #{transformer_forward.1} parent=271 // pred_fallthru
          _
        // Predicated region
        $region337: #{transformer_forward.1} parent=271 // pred_check
          %p5929 = pneg %p1596
        $region338: #{transformer_forward.1} parent=271 // pred_check_branch
          %5931 = sbr.rel (%p5929) target = $region340
        $region339: #{transformer_forward.1} parent=271 // pred_region
          _
        $region340: #{transformer_forward.1} parent=271 // pred_fallthru
          _
        // Predicated region
        $region341: #{transformer_forward.1} parent=271 // pred_check
          %p5932 = pneg %p1622
        $region342: #{transformer_forward.1} parent=271 // pred_check_branch
          %5934 = sbr.rel (%p5932) target = $region344
        $region343: #{transformer_forward.1} parent=271 // pred_region
          _
        $region344: #{transformer_forward.1} parent=271 // pred_fallthru
          _
      $region272: #{transformer_forward.1} parent=5 // pred_fallthru
        _
      %p5935 = scmp.le.s32.totalorder 2, %s152
      // Predicated region
      $region345: #{transformer_forward.1} parent=5 // pred_check
        %p5936 = pneg %p5935
      $region346: #{transformer_forward.1} parent=5 // pred_check_branch
        %5938 = sbr.rel (%p5936) target = $region348
      $region347: #{transformer_forward.1} parent=5 // pred_region
        %s5939 = ssub.s32 %s152, 2
        // Predicated region
        $region349: #{transformer_forward.1} parent=347 // pred_check
          %p5940 = pneg %p1524
        $region350: #{transformer_forward.1} parent=347 // pred_check_branch
          %5942 = sbr.rel (%p5940) target = $region352
        $region351: #{transformer_forward.1} parent=347 // pred_region
          %p5943 = scmp.lt.s32.totalorder %s158, 1
          %s5944 = scalar_select %p5943, %s158, 1
          %s5945 = smul.addr %s5944, 8
          %s5946 = scalar_lea.vmem %s127, %s5945
        $region352: #{transformer_forward.1} parent=347 // pred_fallthru
          _
        // Predicated region
        $region353: #{transformer_forward.1} parent=347 // pred_check
          %p5947 = pneg %p1550
        $region354: #{transformer_forward.1} parent=347 // pred_check_branch
          %5949 = sbr.rel (%p5947) target = $region356
        $region355: #{transformer_forward.1} parent=347 // pred_region
          %s5950 = sand.u32 %s1535, 1
          %s5951 = scalar_lea.sflag [#allocation4], %s5950
          %s5952 = sand.u32 %s1535, 1
          %s5953 = smul.addr %s5952, 8
          %s5954 = scalar_lea.vmem [#allocation23], %s5953
          %5956 = dma.done %s5951, 128
        $region356: #{transformer_forward.1} parent=347 // pred_fallthru
          _
        // Predicated region
        $region357: #{transformer_forward.1} parent=347 // pred_check
          %p5957 = pneg %p1576
        $region358: #{transformer_forward.1} parent=347 // pred_check_branch
          %5959 = sbr.rel (%p5957) target = $region360
        $region359: #{transformer_forward.1} parent=347 // pred_region
          %p5960 = scmp.lt.s32.totalorder %s158, 1
          %s5961 = scalar_select %p5960, %s158, 1
          %s5962 = smul.addr %s5961, 4
          %s5963 = smul.addr %s5962, 8
          %s5964 = scalar_lea.vmem %s131, %s5963
        $region360: #{transformer_forward.1} parent=347 // pred_fallthru
          _
        // Predicated region
        $region361: #{transformer_forward.1} parent=347 // pred_check
          %p5965 = pneg %p1602
        $region362: #{transformer_forward.1} parent=347 // pred_check_branch
          %5967 = sbr.rel (%p5965) target = $region364
        $region363: #{transformer_forward.1} parent=347 // pred_region
          %p5968 = scmp.lt.s32.totalorder %s158, 1
          %s5969 = scalar_select %p5968, %s158, 1
          %s5970 = smul.addr %s5969, 4
          %s5971 = smul.addr %s5970, 8
          %s5972 = scalar_lea.vmem %s133, %s5971
        $region364: #{transformer_forward.1} parent=347 // pred_fallthru
          _
        // Predicated region
        $region365: #{transformer_forward.1} parent=347 // pred_check
          %p5973 = pneg %p1628
        $region366: #{transformer_forward.1} parent=347 // pred_check_branch
          %5975 = sbr.rel (%p5973) target = $region368
        $region367: #{transformer_forward.1} parent=347 // pred_region
          %p5976 = scmp.lt.s32.totalorder %s158, 1
          %s5977 = scalar_select %p5976, %s158, 1
          %s5978 = smul.addr %s5977, 4
          %s5979 = smul.addr %s5978, 8
          %s5980 = scalar_lea.vmem %s135, %s5979
        $region368: #{transformer_forward.1} parent=347 // pred_fallthru
          _
      $region348: #{transformer_forward.1} parent=5 // pred_fallthru
        _
    $region6: #{transformer_forward.1} parent=1 // loop_footer
      %s156 = sadd.s32 1, %s152
    $region7: #{transformer_forward.1} parent=1 // loop_footer_branch
      %151 = sbr.rel target = $region3
    $region8: #{transformer_forward.1} parent=1 // loop_exit
      _
    %5981 = vsyncpa [#allocation3], 1
    %s5982 = scalar_lea.sflag [#allocation3], 1
    %5983 = vsyncpa %s5982, 1
    %5984 = vsyncpa [#allocation6], 1
    %5985 = vsyncpa [#allocation9], 1
    %5986 = vsyncpa [#allocation12], 1
    %5987 = vsyncpa [#allocation15], 1
    %5988 = vsyncpa [#allocation18], 1
    %5989 = vsyncpa [#allocation21], 1
    %5990 = vsyncpa [#allocation4], 1
    %s5991 = scalar_lea.sflag [#allocation4], 1
    %5992 = vsyncpa %s5991, 1

</llo_original>
